<compile_context>
chip_gen: v5e
topology: v5e:2x2
jax: 0.10.0
libtpu: 0.0.40
codegen_flags: <defaults>
</compile_context>

<pallas_src>
import math

import jax
import jax.numpy as jnp
from jax.experimental import pallas as pl
from jax.experimental.pallas import tpu as pltpu

# Module hyper-parameters (PyTorch defaults of the reference module).
D_MODEL = 64
NHEAD = 4
HEAD_DIM = D_MODEL // NHEAD
DIM_FF = 2048          # nn.TransformerEncoderLayer default dim_feedforward
NUM_LAYERS = 2
LN_EPS = 1e-5

# Target MXU M-dimension fill per grid step.  tile_b = min(B, TARGET_ROWS // W).
# 512 rows keeps the (M, 2048) f32 FFN intermediate at ~4 MB, comfortably
# inside the default scoped-VMEM limit while halving grid-step overhead vs 256.
TARGET_ROWS = 512


# ----------------------------------------------------------------------------
# Fused Pallas kernel: one tile of `tile_b` batch elements per grid step.
# ----------------------------------------------------------------------------
def fused_transformer_kernel(x_ref, w_in_ref, b_in_ref,
                             wq_ref, bq_ref, wk_ref, bk_ref, wv_ref, bv_ref,
                             wo_ref, bo_ref, ln1g_ref, ln1b_ref,
                             w1_ref, b1_ref, w2_ref, b2_ref,
                             ln2g_ref, ln2b_ref,
                             fcw_ref, fcb_ref, o_ref):
    num_layers, nhead, d_model, head_dim = wq_ref.shape
    m_rows = x_ref.shape[0]                  # tile_b * W  (flattened rows)
    tile_b = o_ref.shape[0]
    w_len = m_rows // tile_b

    def layer_norm(y, g, b):
        mu = jnp.mean(y, axis=-1, keepdims=True)
        var = jnp.mean(jnp.square(y - mu), axis=-1, keepdims=True)
        return (y - mu) * jax.lax.rsqrt(var + LN_EPS) * g + b

    # ---- input_linear: Linear(1, d_model) == outer-product broadcast --------
    act = x_ref[...] * w_in_ref[...] + b_in_ref[...]        # (M,1)*(1,D) -> (M,D)

    # ---- encoder layers (static unroll over NUM_LAYERS) ----------------------
    for l in range(num_layers):
        wq_l, bq_l = wq_ref[l], bq_ref[l]        # (NH,D,HD), (NH,1,HD)  (pre-scaled)
        wk_l, bk_l = wk_ref[l], bk_ref[l]
        wv_l, bv_l = wv_ref[l], bv_ref[l]
        wo_l = wo_ref[l]                         # (NH,HD,D)

        # Multi-head self-attention (dropout omitted: eval semantics).
        attn = jnp.zeros((m_rows, d_model), jnp.float32)
        for h in range(nhead):
            # Per-head projections: the head split lives in the host-prepared
            # weight layout, so no lane slicing / transpose / concat in-kernel.
            qh = jnp.dot(act, wq_l[h], preferred_element_type=jnp.float32) + bq_l[h]
            kh = jnp.dot(act, wk_l[h], preferred_element_type=jnp.float32) + bk_l[h]
            vh = jnp.dot(act, wv_l[h], preferred_element_type=jnp.float32) + bv_l[h]

            q3 = qh.reshape(tile_b, w_len, head_dim)   # 1/sqrt(hd) folded in wq
            k3 = kh.reshape(tile_b, w_len, head_dim)
            v3 = vh.reshape(tile_b, w_len, head_dim)

            s = jnp.einsum("bqd,bkd->bqk", q3, k3,
                           preferred_element_type=jnp.float32)       # (tb,W,W)
            s = s - jnp.max(s, axis=-1, keepdims=True)
            p = jnp.exp(s)
            p = p * pl.reciprocal(jnp.sum(p, axis=-1, keepdims=True), approx=True)
            ctx = jnp.einsum("bqk,bkd->bqd", p, v3,
                             preferred_element_type=jnp.float32)     # (tb,W,HD)

            # Fold the per-head slice of the output projection into the
            # accumulation (mathematically == concat(heads) @ W_o^T).
            attn = attn + jnp.dot(ctx.reshape(m_rows, head_dim), wo_l[h],
                                  preferred_element_type=jnp.float32)
        attn = attn + bo_ref[l]

        # add & norm 1 (post-norm, nn.TransformerEncoderLayer default)
        y = layer_norm(act + attn, ln1g_ref[l], ln1b_ref[l])

        # feed-forward: bf16 operands, f32 accumulation on the MXU.
        h1 = jnp.dot(y.astype(jnp.bfloat16), w1_ref[l],
                     preferred_element_type=jnp.float32) + b1_ref[l]
        h1 = jnp.maximum(h1, 0.0)
        ff = jnp.dot(h1.astype(jnp.bfloat16), w2_ref[l],
                     preferred_element_type=jnp.float32) + b2_ref[l]

        # add & norm 2
        act = layer_norm(y + ff, ln2g_ref[l], ln2b_ref[l])

    # ---- AdaptiveAvgPool1d(1) over the sequence + Linear(d_model, 1) ---------
    pooled = jnp.mean(act.reshape(tile_b, w_len, d_model), axis=1)   # (tb, D)
    o_ref[...] = (jnp.sum(pooled * fcw_ref[...], axis=-1, keepdims=True)
                  + fcb_ref[...])


# ----------------------------------------------------------------------------
# Host-side parameter packing (PyTorch layout -> kernel layout)
# ----------------------------------------------------------------------------
def pack_params(params):
    """Transpose weights to (in, out), stack heads on a leading axis, fold the
    softmax scale into the Q weights, cast the FFN weights to bf16, and stack
    the per-layer arrays on a layer axis."""
    d, nh, hd = D_MODEL, NHEAD, HEAD_DIM
    scale = 1.0 / math.sqrt(hd)

    def per_layer(p):
        wq, wk, wv = (p["wqkv"][i * d:(i + 1) * d] for i in range(3))   # (D,D) out,in
        bq, bk, bv = (p["bqkv"][i * d:(i + 1) * d] for i in range(3))   # (D,)

        def head_w(w):      # (D_out, D_in) -> (NH, D_in, HD)
            return w.T.reshape(d, nh, hd).transpose(1, 0, 2)

        def head_b(b):      # (D,) -> (NH, 1, HD)
            return b.reshape(nh, 1, hd)

        return dict(
            # softmax scale folded into Q projection (saves an in-kernel mul)
            wq=head_w(wq) * scale, bq=head_b(bq) * scale,
            wk=head_w(wk), bk=head_b(bk),
            wv=head_w(wv), bv=head_b(bv),
            wo=p["wo"].T.reshape(nh, hd, d),             # (NH, HD, D)
            bo=p["bo"][None, :],
            ln1g=p["ln1_g"][None, :], ln1b=p["ln1_b"][None, :],
            w1=p["w1"].T.astype(jnp.bfloat16), b1=p["b1"][None, :],
            w2=p["w2"].T.astype(jnp.bfloat16), b2=p["b2"][None, :],
            ln2g=p["ln2_g"][None, :], ln2b=p["ln2_b"][None, :],
        )

    layers = [per_layer(lp) for lp in params["layers"]]
    stacked = {k: jnp.stack([lp[k] for lp in layers]) for k in layers[0]}
    return dict(
        w_in=params["w_in"].T,                # (1, D)
        b_in=params["b_in"][None, :],         # (1, D)
        fc_w=params["fc_w"],                  # (1, D)
        fc_b=params["fc_b"].reshape(1, 1),    # (1, 1)
        **stacked,
    )


_WEIGHT_ORDER = ["w_in", "b_in", "wq", "bq", "wk", "bk", "wv", "bv",
                 "wo", "bo", "ln1g", "ln1b", "w1", "b1", "w2", "b2",
                 "ln2g", "ln2b", "fc_w", "fc_b"]


@jax.jit
def transformer_forward(x, packed):
    B, W = x.shape
    # Batch tile so that M = tile_b * W approaches TARGET_ROWS MXU rows.
    tile_b = max(1, min(B, TARGET_ROWS // max(W, 1)))
    b_pad = ((B + tile_b - 1) // tile_b) * tile_b
    m_rows = tile_b * W

    # Flatten to a lane-light (B*W, 1) column: avoids any in-kernel relayout of x.
    xr = x.reshape(B * W, 1)
    if b_pad != B:
        xr = jnp.concatenate(
            [xr, jnp.zeros(((b_pad - B) * W, 1), x.dtype)], axis=0)

    weights = [packed[k] for k in _WEIGHT_ORDER]

    def full_spec(arr):
        nd = arr.ndim
        # Whole array resident in VMEM for every grid step (weights ~1.3 MB).
        return pl.BlockSpec(arr.shape, lambda b, _nd=nd: (0,) * _nd)

    in_specs = [pl.BlockSpec((m_rows, 1), lambda b: (b, 0))]
    in_specs += [full_spec(w) for w in weights]

    out = pl.pallas_call(
        fused_transformer_kernel,
        out_shape=jax.ShapeDtypeStruct((b_pad, 1), jnp.float32),
        grid_spec=pltpu.PrefetchScalarGridSpec(
            num_scalar_prefetch=0,
            grid=(b_pad // tile_b,),
            in_specs=in_specs,
            out_specs=pl.BlockSpec((tile_b, 1), lambda b: (b, 0)),
        ),
        compiler_params=pltpu.CompilerParams(
            # Batch tiles are independent -> shard across v7x's 2 TensorCores.
            dimension_semantics=("parallel",),
        ),
    )(xr, *weights)
    return out[:B, 0]


# ----------------------------------------------------------------------------
# Deterministic parameter initialization (PyTorch Linear-style uniform init)
# ----------------------------------------------------------------------------
def init_linear(key, fan_in, fan_out):
    kw, kb = jax.random.split(key)
    bound = 1.0 / math.sqrt(fan_in)
    w = jax.random.uniform(kw, (fan_out, fan_in), jnp.float32, -bound, bound)
    b = jax.random.uniform(kb, (fan_out,), jnp.float32, -bound, bound)
    return w, b


def init_params(key):
    keys = jax.random.split(key, 2 + NUM_LAYERS)
    w_in, b_in = init_linear(keys[0], 1, D_MODEL)        # (D,1), (D,)
    fc_w, fc_b = init_linear(keys[1], D_MODEL, 1)        # (1,D), (1,)
    layers = []
    for i in range(NUM_LAYERS):
        lk = jax.random.split(keys[2 + i], 4)
        wqkv, bqkv = init_linear(lk[0], D_MODEL, 3 * D_MODEL)
        wo, bo = init_linear(lk[1], D_MODEL, D_MODEL)
        w1, b1 = init_linear(lk[2], D_MODEL, DIM_FF)
        w2, b2 = init_linear(lk[3], DIM_FF, D_MODEL)
        layers.append(dict(
            wqkv=wqkv, bqkv=bqkv, wo=wo, bo=bo,
            w1=w1, b1=b1, w2=w2, b2=b2,
            ln1_g=jnp.ones((D_MODEL,), jnp.float32),
            ln1_b=jnp.zeros((D_MODEL,), jnp.float32),
            ln2_g=jnp.ones((D_MODEL,), jnp.float32),
            ln2_b=jnp.zeros((D_MODEL,), jnp.float32),
        ))
    return dict(w_in=w_in, b_in=b_in, fc_w=fc_w, fc_b=fc_b, layers=layers)


# ----------------------------------------------------------------------------
# Pure-JAX references (mirror PyTorch eval-mode forward)
# ----------------------------------------------------------------------------
def _layer_norm(x, g, b):
    mu = jnp.mean(x, axis=-1, keepdims=True)
    var = jnp.mean(jnp.square(x - mu), axis=-1, keepdims=True)
    return (x - mu) * jax.lax.rsqrt(var + LN_EPS) * g + b


def _ref_layer(x, p, ffn_bf16):
    B, W, D = x.shape
    qkv = x @ p["wqkv"].T + p["bqkv"]
    q, k, v = jnp.split(qkv, 3, axis=-1)

    def heads(t):
        return t.reshape(B, W, NHEAD, HEAD_DIM).transpose(0, 2, 1, 3)

    qh, kh, vh = heads(q), heads(k), heads(v)
    s = jnp.einsum("bhqd,bhkd->bhqk", qh, kh) / math.sqrt(HEAD_DIM)
    pa = jax.nn.softmax(s, axis=-1)
    ctx = jnp.einsum("bhqk,bhkd->bhqd", pa, vh).transpose(0, 2, 1, 3).reshape(B, W, D)
    attn = ctx @ p["wo"].T + p["bo"]
    y = _layer_norm(x + attn, p["ln1_g"], p["ln1_b"])
    if ffn_bf16:   # mirror the kernel's bf16-operand / f32-accumulate FFN
        h1 = jnp.dot(y.astype(jnp.bfloat16), p["w1"].T.astype(jnp.bfloat16),
                     preferred_element_type=jnp.float32) + p["b1"]
        h1 = jnp.maximum(h1, 0.0)
        ff = jnp.dot(h1.astype(jnp.bfloat16), p["w2"].T.astype(jnp.bfloat16),
                     preferred_element_type=jnp.float32) + p["b2"]
    else:
        h1 = jnp.maximum(y @ p["w1"].T + p["b1"], 0.0)
        ff = h1 @ p["w2"].T + p["b2"]
    return _layer_norm(y + ff, p["ln2_g"], p["ln2_b"])


def ref_forward(x, params, ffn_bf16=False):
    h = x[..., None] * params["w_in"][:, 0] + params["b_in"]
    for lp in params["layers"]:
        h = _ref_layer(h, lp, ffn_bf16)
    pooled = jnp.mean(h, axis=1)
    out = pooled @ params["fc_w"].T + params["fc_b"]
    return out[:, 0]


# ----------------------------------------------------------------------------
if __name__ == "__main__":
    B, W = 2, 8                      # batch=2, window_size (seq len)=8
    key = jax.random.PRNGKey(0)
    pkey, xkey = jax.random.split(key)
    params = init_params(pkey)
    x = jax.random.normal(xkey, (B, W), jnp.float32)

    packed = pack_params(params)
    out = transformer_forward(x, packed)
    out = jax.block_until_ready(out)
    assert out.shape == (B,)

    # Tight check vs. a reference that matches the kernel's FFN precision
    # (bf16 operands, f32 accumulation); residual diff is the approx reciprocal
    # in softmax + accumulation order.
    ref_matched = ref_forward(x, params, ffn_bf16=True)
    assert jnp.allclose(out, ref_matched, atol=1e-2, rtol=1e-2), (out, ref_matched)

    # Looser check vs. the full-f32 PyTorch-equivalent reference (difference is
    # only the bf16 FFN weight/activation rounding).
    ref_f32 = ref_forward(x, params, ffn_bf16=False)
    assert jnp.allclose(out, ref_f32, atol=5e-2, rtol=5e-2), (out, ref_f32)

    print("KERNEL_OK")
</pallas_src>

<mosaic_0001>
module attributes {stable_mosaic.version = 11 : i64} {
  func.func @fused_transformer_kernel(%arg0: i32, %arg1: memref<16x1xf32, #tpu.memory_space<vmem>>, %arg2: memref<1x64xf32, #tpu.memory_space<vmem>>, %arg3: memref<1x64xf32, #tpu.memory_space<vmem>>, %arg4: memref<2x4x64x16xf32, #tpu.memory_space<vmem>>, %arg5: memref<2x4x1x16xf32, #tpu.memory_space<vmem>>, %arg6: memref<2x4x64x16xf32, #tpu.memory_space<vmem>>, %arg7: memref<2x4x1x16xf32, #tpu.memory_space<vmem>>, %arg8: memref<2x4x64x16xf32, #tpu.memory_space<vmem>>, %arg9: memref<2x4x1x16xf32, #tpu.memory_space<vmem>>, %arg10: memref<2x4x16x64xf32, #tpu.memory_space<vmem>>, %arg11: memref<2x1x64xf32, #tpu.memory_space<vmem>>, %arg12: memref<2x1x64xf32, #tpu.memory_space<vmem>>, %arg13: memref<2x1x64xf32, #tpu.memory_space<vmem>>, %arg14: memref<2x64x2048xbf16, #tpu.memory_space<vmem>>, %arg15: memref<2x1x2048xf32, #tpu.memory_space<vmem>>, %arg16: memref<2x2048x64xbf16, #tpu.memory_space<vmem>>, %arg17: memref<2x1x64xf32, #tpu.memory_space<vmem>>, %arg18: memref<2x1x64xf32, #tpu.memory_space<vmem>>, %arg19: memref<2x1x64xf32, #tpu.memory_space<vmem>>, %arg20: memref<1x64xf32, #tpu.memory_space<vmem>>, %arg21: memref<1x1xf32, #tpu.memory_space<vmem>>, %arg22: memref<2x1xf32, #tpu.memory_space<vmem>>) attributes {dimension_semantics = [#tpu.dimension_semantics<parallel>], iteration_bounds = array<i64: 1>, scalar_prefetch = 0 : i64, scratch_operands = 0 : i64, tpu.core_type = #tpu.core_type<tc>, window_params = [{transform_indices = @transform_0, window_bounds = array<i64: 16, 1>}, {pipeline_mode = #tpu.pipeline_mode<synchronous>, transform_indices = @transform_1, window_bounds = array<i64: 1, 64>}, {pipeline_mode = #tpu.pipeline_mode<synchronous>, transform_indices = @transform_2, window_bounds = array<i64: 1, 64>}, {pipeline_mode = #tpu.pipeline_mode<synchronous>, transform_indices = @transform_3, window_bounds = array<i64: 2, 4, 64, 16>}, {pipeline_mode = #tpu.pipeline_mode<synchronous>, transform_indices = @transform_4, window_bounds = array<i64: 2, 4, 1, 16>}, {pipeline_mode = #tpu.pipeline_mode<synchronous>, transform_indices = @transform_5, window_bounds = array<i64: 2, 4, 64, 16>}, {pipeline_mode = #tpu.pipeline_mode<synchronous>, transform_indices = @transform_6, window_bounds = array<i64: 2, 4, 1, 16>}, {pipeline_mode = #tpu.pipeline_mode<synchronous>, transform_indices = @transform_7, window_bounds = array<i64: 2, 4, 64, 16>}, {pipeline_mode = #tpu.pipeline_mode<synchronous>, transform_indices = @transform_8, window_bounds = array<i64: 2, 4, 1, 16>}, {pipeline_mode = #tpu.pipeline_mode<synchronous>, transform_indices = @transform_9, window_bounds = array<i64: 2, 4, 16, 64>}, {pipeline_mode = #tpu.pipeline_mode<synchronous>, transform_indices = @transform_10, window_bounds = array<i64: 2, 1, 64>}, {pipeline_mode = #tpu.pipeline_mode<synchronous>, transform_indices = @transform_11, window_bounds = array<i64: 2, 1, 64>}, {pipeline_mode = #tpu.pipeline_mode<synchronous>, transform_indices = @transform_12, window_bounds = array<i64: 2, 1, 64>}, {pipeline_mode = #tpu.pipeline_mode<synchronous>, transform_indices = @transform_13, window_bounds = array<i64: 2, 64, 2048>}, {pipeline_mode = #tpu.pipeline_mode<synchronous>, transform_indices = @transform_14, window_bounds = array<i64: 2, 1, 2048>}, {pipeline_mode = #tpu.pipeline_mode<synchronous>, transform_indices = @transform_15, window_bounds = array<i64: 2, 2048, 64>}, {pipeline_mode = #tpu.pipeline_mode<synchronous>, transform_indices = @transform_16, window_bounds = array<i64: 2, 1, 64>}, {pipeline_mode = #tpu.pipeline_mode<synchronous>, transform_indices = @transform_17, window_bounds = array<i64: 2, 1, 64>}, {pipeline_mode = #tpu.pipeline_mode<synchronous>, transform_indices = @transform_18, window_bounds = array<i64: 2, 1, 64>}, {pipeline_mode = #tpu.pipeline_mode<synchronous>, transform_indices = @transform_19, window_bounds = array<i64: 1, 64>}, {pipeline_mode = #tpu.pipeline_mode<synchronous>, transform_indices = @transform_20, window_bounds = array<i64: 1, 1>}, {transform_indices = @transform_21, window_bounds = array<i64: 2, 1>}]} {
    %c0 = arith.constant 0 : index
    %c0_0 = arith.constant 0 : index
    %0 = vector.load %arg1[%c0, %c0_0] : memref<16x1xf32, #tpu.memory_space<vmem>>, vector<16x1xf32>
    %c0_1 = arith.constant 0 : index
    %c0_2 = arith.constant 0 : index
    %1 = vector.load %arg2[%c0_1, %c0_2] : memref<1x64xf32, #tpu.memory_space<vmem>>, vector<1x64xf32>
    %2 = vector.broadcast %0 : vector<16x1xf32> to vector<16x64xf32>
    %3 = vector.broadcast %1 : vector<1x64xf32> to vector<16x64xf32>
    %4 = arith.mulf %2, %3 : vector<16x64xf32>
    %c0_3 = arith.constant 0 : index
    %c0_4 = arith.constant 0 : index
    %5 = vector.load %arg3[%c0_3, %c0_4] : memref<1x64xf32, #tpu.memory_space<vmem>>, vector<1x64xf32>
    %6 = vector.broadcast %5 : vector<1x64xf32> to vector<16x64xf32>
    %7 = arith.addf %4, %6 : vector<16x64xf32>
    %c0_5 = arith.constant 0 : index
    %c0_6 = arith.constant 0 : index
    %c0_7 = arith.constant 0 : index
    %c0_8 = arith.constant 0 : index
    %8 = vector.load %arg4[%c0_5, %c0_6, %c0_7, %c0_8] : memref<2x4x64x16xf32, #tpu.memory_space<vmem>>, vector<1x4x64x16xf32>
    %9 = vector.shape_cast %8 : vector<1x4x64x16xf32> to vector<4x64x16xf32>
    %c0_9 = arith.constant 0 : index
    %c0_10 = arith.constant 0 : index
    %c0_11 = arith.constant 0 : index
    %c0_12 = arith.constant 0 : index
    %10 = vector.load %arg5[%c0_9, %c0_10, %c0_11, %c0_12] : memref<2x4x1x16xf32, #tpu.memory_space<vmem>>, vector<1x4x1x16xf32>
    %11 = vector.shape_cast %10 : vector<1x4x1x16xf32> to vector<4x1x16xf32>
    %c0_13 = arith.constant 0 : index
    %c0_14 = arith.constant 0 : index
    %c0_15 = arith.constant 0 : index
    %c0_16 = arith.constant 0 : index
    %12 = vector.load %arg6[%c0_13, %c0_14, %c0_15, %c0_16] : memref<2x4x64x16xf32, #tpu.memory_space<vmem>>, vector<1x4x64x16xf32>
    %13 = vector.shape_cast %12 : vector<1x4x64x16xf32> to vector<4x64x16xf32>
    %c0_17 = arith.constant 0 : index
    %c0_18 = arith.constant 0 : index
    %c0_19 = arith.constant 0 : index
    %c0_20 = arith.constant 0 : index
    %14 = vector.load %arg7[%c0_17, %c0_18, %c0_19, %c0_20] : memref<2x4x1x16xf32, #tpu.memory_space<vmem>>, vector<1x4x1x16xf32>
    %15 = vector.shape_cast %14 : vector<1x4x1x16xf32> to vector<4x1x16xf32>
    %c0_21 = arith.constant 0 : index
    %c0_22 = arith.constant 0 : index
    %c0_23 = arith.constant 0 : index
    %c0_24 = arith.constant 0 : index
    %16 = vector.load %arg8[%c0_21, %c0_22, %c0_23, %c0_24] : memref<2x4x64x16xf32, #tpu.memory_space<vmem>>, vector<1x4x64x16xf32>
    %17 = vector.shape_cast %16 : vector<1x4x64x16xf32> to vector<4x64x16xf32>
    %c0_25 = arith.constant 0 : index
    %c0_26 = arith.constant 0 : index
    %c0_27 = arith.constant 0 : index
    %c0_28 = arith.constant 0 : index
    %18 = vector.load %arg9[%c0_25, %c0_26, %c0_27, %c0_28] : memref<2x4x1x16xf32, #tpu.memory_space<vmem>>, vector<1x4x1x16xf32>
    %19 = vector.shape_cast %18 : vector<1x4x1x16xf32> to vector<4x1x16xf32>
    %c0_29 = arith.constant 0 : index
    %c0_30 = arith.constant 0 : index
    %c0_31 = arith.constant 0 : index
    %c0_32 = arith.constant 0 : index
    %20 = vector.load %arg10[%c0_29, %c0_30, %c0_31, %c0_32] : memref<2x4x16x64xf32, #tpu.memory_space<vmem>>, vector<1x4x16x64xf32>
    %21 = vector.shape_cast %20 : vector<1x4x16x64xf32> to vector<4x16x64xf32>
    %cst = arith.constant 0.000000e+00 : f32
    %22 = vector.broadcast %cst : f32 to vector<16x64xf32>
    %23 = vector.extract_strided_slice %9 {offsets = [0, 0, 0], sizes = [1, 64, 16], strides = [1, 1, 1]} : vector<4x64x16xf32> to vector<1x64x16xf32>
    %24 = vector.shape_cast %23 : vector<1x64x16xf32> to vector<64x16xf32>
    %cst_33 = arith.constant dense<0.000000e+00> : vector<16x16xf32>
    %25 = tpu.matmul %7, %24, %cst_33 {dimension_numbers = #tpu.dot_dimension_numbers<[1], [0], [0], [1], [0, 0, 1, 1], [], []>} : vector<16x64xf32>, vector<64x16xf32>, vector<16x16xf32> -> vector<16x16xf32>
    %26 = vector.extract_strided_slice %11 {offsets = [0, 0, 0], sizes = [1, 1, 16], strides = [1, 1, 1]} : vector<4x1x16xf32> to vector<1x1x16xf32>
    %27 = vector.shape_cast %26 : vector<1x1x16xf32> to vector<1x16xf32>
    %28 = vector.broadcast %27 : vector<1x16xf32> to vector<16x16xf32>
    %29 = arith.addf %25, %28 : vector<16x16xf32>
    %30 = vector.extract_strided_slice %13 {offsets = [0, 0, 0], sizes = [1, 64, 16], strides = [1, 1, 1]} : vector<4x64x16xf32> to vector<1x64x16xf32>
    %31 = vector.shape_cast %30 : vector<1x64x16xf32> to vector<64x16xf32>
    %cst_34 = arith.constant dense<0.000000e+00> : vector<16x16xf32>
    %32 = tpu.matmul %7, %31, %cst_34 {dimension_numbers = #tpu.dot_dimension_numbers<[1], [0], [0], [1], [0, 0, 1, 1], [], []>} : vector<16x64xf32>, vector<64x16xf32>, vector<16x16xf32> -> vector<16x16xf32>
    %33 = vector.extract_strided_slice %15 {offsets = [0, 0, 0], sizes = [1, 1, 16], strides = [1, 1, 1]} : vector<4x1x16xf32> to vector<1x1x16xf32>
    %34 = vector.shape_cast %33 : vector<1x1x16xf32> to vector<1x16xf32>
    %35 = vector.broadcast %34 : vector<1x16xf32> to vector<16x16xf32>
    %36 = arith.addf %32, %35 : vector<16x16xf32>
    %37 = vector.extract_strided_slice %17 {offsets = [0, 0, 0], sizes = [1, 64, 16], strides = [1, 1, 1]} : vector<4x64x16xf32> to vector<1x64x16xf32>
    %38 = vector.shape_cast %37 : vector<1x64x16xf32> to vector<64x16xf32>
    %cst_35 = arith.constant dense<0.000000e+00> : vector<16x16xf32>
    %39 = tpu.matmul %7, %38, %cst_35 {dimension_numbers = #tpu.dot_dimension_numbers<[1], [0], [0], [1], [0, 0, 1, 1], [], []>} : vector<16x64xf32>, vector<64x16xf32>, vector<16x16xf32> -> vector<16x16xf32>
    %40 = vector.extract_strided_slice %19 {offsets = [0, 0, 0], sizes = [1, 1, 16], strides = [1, 1, 1]} : vector<4x1x16xf32> to vector<1x1x16xf32>
    %41 = vector.shape_cast %40 : vector<1x1x16xf32> to vector<1x16xf32>
    %42 = vector.broadcast %41 : vector<1x16xf32> to vector<16x16xf32>
    %43 = arith.addf %39, %42 : vector<16x16xf32>
    %44 = vector.shape_cast %29 : vector<16x16xf32> to vector<2x8x16xf32>
    %45 = vector.shape_cast %36 : vector<16x16xf32> to vector<2x8x16xf32>
    %46 = vector.shape_cast %43 : vector<16x16xf32> to vector<2x8x16xf32>
    "tpu.trace_start"() <{level = 10 : i32, message = "bqd,bkd->bqk"}> : () -> ()
    %cst_36 = arith.constant dense<0.000000e+00> : vector<2x8x8xf32>
    %47 = tpu.matmul %44, %45, %cst_36 {dimension_numbers = #tpu.dot_dimension_numbers<[2], [2], [1], [1], [0, 0, 0, 1, 1, 1], [0], [0]>} : vector<2x8x16xf32>, vector<2x8x16xf32>, vector<2x8x8xf32> -> vector<2x8x8xf32>
    "tpu.trace_stop"() : () -> ()
    %cst_37 = arith.constant dense<0xFF800000> : vector<2x8xf32>
    %48 = vector.multi_reduction <maximumf>, %47, %cst_37 [2] : vector<2x8x8xf32> to vector<2x8xf32>
    %49 = vector.shape_cast %48 : vector<2x8xf32> to vector<2x8x1xf32>
    %50 = vector.broadcast %49 : vector<2x8x1xf32> to vector<2x8x8xf32>
    %51 = arith.subf %47, %50 : vector<2x8x8xf32>
    %52 = math.exp %51 : vector<2x8x8xf32>
    %cst_38 = arith.constant dense<0.000000e+00> : vector<2x8xf32>
    %53 = vector.multi_reduction <add>, %52, %cst_38 [2] : vector<2x8x8xf32> to vector<2x8xf32>
    %54 = vector.shape_cast %53 : vector<2x8xf32> to vector<2x8x1xf32>
    %55 = tpu.reciprocal %54 {approx = true} : vector<2x8x1xf32> -> vector<2x8x1xf32>
    %56 = vector.broadcast %55 : vector<2x8x1xf32> to vector<2x8x8xf32>
    %57 = arith.mulf %52, %56 : vector<2x8x8xf32>
    "tpu.trace_start"() <{level = 10 : i32, message = "bqk,bkd->bqd"}> : () -> ()
    %cst_39 = arith.constant dense<0.000000e+00> : vector<2x8x16xf32>
    %58 = tpu.matmul %57, %46, %cst_39 {dimension_numbers = #tpu.dot_dimension_numbers<[2], [1], [1], [2], [0, 0, 0, 1, 1, 2], [0], [0]>} : vector<2x8x8xf32>, vector<2x8x16xf32>, vector<2x8x16xf32> -> vector<2x8x16xf32>
    "tpu.trace_stop"() : () -> ()
    %59 = vector.shape_cast %58 : vector<2x8x16xf32> to vector<16x16xf32>
    %60 = vector.extract_strided_slice %21 {offsets = [0, 0, 0], sizes = [1, 16, 64], strides = [1, 1, 1]} : vector<4x16x64xf32> to vector<1x16x64xf32>
    %61 = vector.shape_cast %60 : vector<1x16x64xf32> to vector<16x64xf32>
    %cst_40 = arith.constant dense<0.000000e+00> : vector<16x64xf32>
    %62 = tpu.matmul %59, %61, %cst_40 {dimension_numbers = #tpu.dot_dimension_numbers<[1], [0], [0], [1], [0, 0, 1, 1], [], []>} : vector<16x16xf32>, vector<16x64xf32>, vector<16x64xf32> -> vector<16x64xf32>
    %63 = arith.addf %22, %62 : vector<16x64xf32>
    %64 = vector.extract_strided_slice %9 {offsets = [1, 0, 0], sizes = [1, 64, 16], strides = [1, 1, 1]} : vector<4x64x16xf32> to vector<1x64x16xf32>
    %65 = vector.shape_cast %64 : vector<1x64x16xf32> to vector<64x16xf32>
    %cst_41 = arith.constant dense<0.000000e+00> : vector<16x16xf32>
    %66 = tpu.matmul %7, %65, %cst_41 {dimension_numbers = #tpu.dot_dimension_numbers<[1], [0], [0], [1], [0, 0, 1, 1], [], []>} : vector<16x64xf32>, vector<64x16xf32>, vector<16x16xf32> -> vector<16x16xf32>
    %67 = vector.extract_strided_slice %11 {offsets = [1, 0, 0], sizes = [1, 1, 16], strides = [1, 1, 1]} : vector<4x1x16xf32> to vector<1x1x16xf32>
    %68 = vector.shape_cast %67 : vector<1x1x16xf32> to vector<1x16xf32>
    %69 = vector.broadcast %68 : vector<1x16xf32> to vector<16x16xf32>
    %70 = arith.addf %66, %69 : vector<16x16xf32>
    %71 = vector.extract_strided_slice %13 {offsets = [1, 0, 0], sizes = [1, 64, 16], strides = [1, 1, 1]} : vector<4x64x16xf32> to vector<1x64x16xf32>
    %72 = vector.shape_cast %71 : vector<1x64x16xf32> to vector<64x16xf32>
    %cst_42 = arith.constant dense<0.000000e+00> : vector<16x16xf32>
    %73 = tpu.matmul %7, %72, %cst_42 {dimension_numbers = #tpu.dot_dimension_numbers<[1], [0], [0], [1], [0, 0, 1, 1], [], []>} : vector<16x64xf32>, vector<64x16xf32>, vector<16x16xf32> -> vector<16x16xf32>
    %74 = vector.extract_strided_slice %15 {offsets = [1, 0, 0], sizes = [1, 1, 16], strides = [1, 1, 1]} : vector<4x1x16xf32> to vector<1x1x16xf32>
    %75 = vector.shape_cast %74 : vector<1x1x16xf32> to vector<1x16xf32>
    %76 = vector.broadcast %75 : vector<1x16xf32> to vector<16x16xf32>
    %77 = arith.addf %73, %76 : vector<16x16xf32>
    %78 = vector.extract_strided_slice %17 {offsets = [1, 0, 0], sizes = [1, 64, 16], strides = [1, 1, 1]} : vector<4x64x16xf32> to vector<1x64x16xf32>
    %79 = vector.shape_cast %78 : vector<1x64x16xf32> to vector<64x16xf32>
    %cst_43 = arith.constant dense<0.000000e+00> : vector<16x16xf32>
    %80 = tpu.matmul %7, %79, %cst_43 {dimension_numbers = #tpu.dot_dimension_numbers<[1], [0], [0], [1], [0, 0, 1, 1], [], []>} : vector<16x64xf32>, vector<64x16xf32>, vector<16x16xf32> -> vector<16x16xf32>
    %81 = vector.extract_strided_slice %19 {offsets = [1, 0, 0], sizes = [1, 1, 16], strides = [1, 1, 1]} : vector<4x1x16xf32> to vector<1x1x16xf32>
    %82 = vector.shape_cast %81 : vector<1x1x16xf32> to vector<1x16xf32>
    %83 = vector.broadcast %82 : vector<1x16xf32> to vector<16x16xf32>
    %84 = arith.addf %80, %83 : vector<16x16xf32>
    %85 = vector.shape_cast %70 : vector<16x16xf32> to vector<2x8x16xf32>
    %86 = vector.shape_cast %77 : vector<16x16xf32> to vector<2x8x16xf32>
    %87 = vector.shape_cast %84 : vector<16x16xf32> to vector<2x8x16xf32>
    "tpu.trace_start"() <{level = 10 : i32, message = "bqd,bkd->bqk"}> : () -> ()
    %cst_44 = arith.constant dense<0.000000e+00> : vector<2x8x8xf32>
    %88 = tpu.matmul %85, %86, %cst_44 {dimension_numbers = #tpu.dot_dimension_numbers<[2], [2], [1], [1], [0, 0, 0, 1, 1, 1], [0], [0]>} : vector<2x8x16xf32>, vector<2x8x16xf32>, vector<2x8x8xf32> -> vector<2x8x8xf32>
    "tpu.trace_stop"() : () -> ()
    %cst_45 = arith.constant dense<0xFF800000> : vector<2x8xf32>
    %89 = vector.multi_reduction <maximumf>, %88, %cst_45 [2] : vector<2x8x8xf32> to vector<2x8xf32>
    %90 = vector.shape_cast %89 : vector<2x8xf32> to vector<2x8x1xf32>
    %91 = vector.broadcast %90 : vector<2x8x1xf32> to vector<2x8x8xf32>
    %92 = arith.subf %88, %91 : vector<2x8x8xf32>
    %93 = math.exp %92 : vector<2x8x8xf32>
    %cst_46 = arith.constant dense<0.000000e+00> : vector<2x8xf32>
    %94 = vector.multi_reduction <add>, %93, %cst_46 [2] : vector<2x8x8xf32> to vector<2x8xf32>
    %95 = vector.shape_cast %94 : vector<2x8xf32> to vector<2x8x1xf32>
    %96 = tpu.reciprocal %95 {approx = true} : vector<2x8x1xf32> -> vector<2x8x1xf32>
    %97 = vector.broadcast %96 : vector<2x8x1xf32> to vector<2x8x8xf32>
    %98 = arith.mulf %93, %97 : vector<2x8x8xf32>
    "tpu.trace_start"() <{level = 10 : i32, message = "bqk,bkd->bqd"}> : () -> ()
    %cst_47 = arith.constant dense<0.000000e+00> : vector<2x8x16xf32>
    %99 = tpu.matmul %98, %87, %cst_47 {dimension_numbers = #tpu.dot_dimension_numbers<[2], [1], [1], [2], [0, 0, 0, 1, 1, 2], [0], [0]>} : vector<2x8x8xf32>, vector<2x8x16xf32>, vector<2x8x16xf32> -> vector<2x8x16xf32>
    "tpu.trace_stop"() : () -> ()
    %100 = vector.shape_cast %99 : vector<2x8x16xf32> to vector<16x16xf32>
    %101 = vector.extract_strided_slice %21 {offsets = [1, 0, 0], sizes = [1, 16, 64], strides = [1, 1, 1]} : vector<4x16x64xf32> to vector<1x16x64xf32>
    %102 = vector.shape_cast %101 : vector<1x16x64xf32> to vector<16x64xf32>
    %cst_48 = arith.constant dense<0.000000e+00> : vector<16x64xf32>
    %103 = tpu.matmul %100, %102, %cst_48 {dimension_numbers = #tpu.dot_dimension_numbers<[1], [0], [0], [1], [0, 0, 1, 1], [], []>} : vector<16x16xf32>, vector<16x64xf32>, vector<16x64xf32> -> vector<16x64xf32>
    %104 = arith.addf %63, %103 : vector<16x64xf32>
    %105 = vector.extract_strided_slice %9 {offsets = [2, 0, 0], sizes = [1, 64, 16], strides = [1, 1, 1]} : vector<4x64x16xf32> to vector<1x64x16xf32>
    %106 = vector.shape_cast %105 : vector<1x64x16xf32> to vector<64x16xf32>
    %cst_49 = arith.constant dense<0.000000e+00> : vector<16x16xf32>
    %107 = tpu.matmul %7, %106, %cst_49 {dimension_numbers = #tpu.dot_dimension_numbers<[1], [0], [0], [1], [0, 0, 1, 1], [], []>} : vector<16x64xf32>, vector<64x16xf32>, vector<16x16xf32> -> vector<16x16xf32>
    %108 = vector.extract_strided_slice %11 {offsets = [2, 0, 0], sizes = [1, 1, 16], strides = [1, 1, 1]} : vector<4x1x16xf32> to vector<1x1x16xf32>
    %109 = vector.shape_cast %108 : vector<1x1x16xf32> to vector<1x16xf32>
    %110 = vector.broadcast %109 : vector<1x16xf32> to vector<16x16xf32>
    %111 = arith.addf %107, %110 : vector<16x16xf32>
    %112 = vector.extract_strided_slice %13 {offsets = [2, 0, 0], sizes = [1, 64, 16], strides = [1, 1, 1]} : vector<4x64x16xf32> to vector<1x64x16xf32>
    %113 = vector.shape_cast %112 : vector<1x64x16xf32> to vector<64x16xf32>
    %cst_50 = arith.constant dense<0.000000e+00> : vector<16x16xf32>
    %114 = tpu.matmul %7, %113, %cst_50 {dimension_numbers = #tpu.dot_dimension_numbers<[1], [0], [0], [1], [0, 0, 1, 1], [], []>} : vector<16x64xf32>, vector<64x16xf32>, vector<16x16xf32> -> vector<16x16xf32>
    %115 = vector.extract_strided_slice %15 {offsets = [2, 0, 0], sizes = [1, 1, 16], strides = [1, 1, 1]} : vector<4x1x16xf32> to vector<1x1x16xf32>
    %116 = vector.shape_cast %115 : vector<1x1x16xf32> to vector<1x16xf32>
    %117 = vector.broadcast %116 : vector<1x16xf32> to vector<16x16xf32>
    %118 = arith.addf %114, %117 : vector<16x16xf32>
    %119 = vector.extract_strided_slice %17 {offsets = [2, 0, 0], sizes = [1, 64, 16], strides = [1, 1, 1]} : vector<4x64x16xf32> to vector<1x64x16xf32>
    %120 = vector.shape_cast %119 : vector<1x64x16xf32> to vector<64x16xf32>
    %cst_51 = arith.constant dense<0.000000e+00> : vector<16x16xf32>
    %121 = tpu.matmul %7, %120, %cst_51 {dimension_numbers = #tpu.dot_dimension_numbers<[1], [0], [0], [1], [0, 0, 1, 1], [], []>} : vector<16x64xf32>, vector<64x16xf32>, vector<16x16xf32> -> vector<16x16xf32>
    %122 = vector.extract_strided_slice %19 {offsets = [2, 0, 0], sizes = [1, 1, 16], strides = [1, 1, 1]} : vector<4x1x16xf32> to vector<1x1x16xf32>
    %123 = vector.shape_cast %122 : vector<1x1x16xf32> to vector<1x16xf32>
    %124 = vector.broadcast %123 : vector<1x16xf32> to vector<16x16xf32>
    %125 = arith.addf %121, %124 : vector<16x16xf32>
    %126 = vector.shape_cast %111 : vector<16x16xf32> to vector<2x8x16xf32>
    %127 = vector.shape_cast %118 : vector<16x16xf32> to vector<2x8x16xf32>
    %128 = vector.shape_cast %125 : vector<16x16xf32> to vector<2x8x16xf32>
    "tpu.trace_start"() <{level = 10 : i32, message = "bqd,bkd->bqk"}> : () -> ()
    %cst_52 = arith.constant dense<0.000000e+00> : vector<2x8x8xf32>
    %129 = tpu.matmul %126, %127, %cst_52 {dimension_numbers = #tpu.dot_dimension_numbers<[2], [2], [1], [1], [0, 0, 0, 1, 1, 1], [0], [0]>} : vector<2x8x16xf32>, vector<2x8x16xf32>, vector<2x8x8xf32> -> vector<2x8x8xf32>
    "tpu.trace_stop"() : () -> ()
    %cst_53 = arith.constant dense<0xFF800000> : vector<2x8xf32>
    %130 = vector.multi_reduction <maximumf>, %129, %cst_53 [2] : vector<2x8x8xf32> to vector<2x8xf32>
    %131 = vector.shape_cast %130 : vector<2x8xf32> to vector<2x8x1xf32>
    %132 = vector.broadcast %131 : vector<2x8x1xf32> to vector<2x8x8xf32>
    %133 = arith.subf %129, %132 : vector<2x8x8xf32>
    %134 = math.exp %133 : vector<2x8x8xf32>
    %cst_54 = arith.constant dense<0.000000e+00> : vector<2x8xf32>
    %135 = vector.multi_reduction <add>, %134, %cst_54 [2] : vector<2x8x8xf32> to vector<2x8xf32>
    %136 = vector.shape_cast %135 : vector<2x8xf32> to vector<2x8x1xf32>
    %137 = tpu.reciprocal %136 {approx = true} : vector<2x8x1xf32> -> vector<2x8x1xf32>
    %138 = vector.broadcast %137 : vector<2x8x1xf32> to vector<2x8x8xf32>
    %139 = arith.mulf %134, %138 : vector<2x8x8xf32>
    "tpu.trace_start"() <{level = 10 : i32, message = "bqk,bkd->bqd"}> : () -> ()
    %cst_55 = arith.constant dense<0.000000e+00> : vector<2x8x16xf32>
    %140 = tpu.matmul %139, %128, %cst_55 {dimension_numbers = #tpu.dot_dimension_numbers<[2], [1], [1], [2], [0, 0, 0, 1, 1, 2], [0], [0]>} : vector<2x8x8xf32>, vector<2x8x16xf32>, vector<2x8x16xf32> -> vector<2x8x16xf32>
    "tpu.trace_stop"() : () -> ()
    %141 = vector.shape_cast %140 : vector<2x8x16xf32> to vector<16x16xf32>
    %142 = vector.extract_strided_slice %21 {offsets = [2, 0, 0], sizes = [1, 16, 64], strides = [1, 1, 1]} : vector<4x16x64xf32> to vector<1x16x64xf32>
    %143 = vector.shape_cast %142 : vector<1x16x64xf32> to vector<16x64xf32>
    %cst_56 = arith.constant dense<0.000000e+00> : vector<16x64xf32>
    %144 = tpu.matmul %141, %143, %cst_56 {dimension_numbers = #tpu.dot_dimension_numbers<[1], [0], [0], [1], [0, 0, 1, 1], [], []>} : vector<16x16xf32>, vector<16x64xf32>, vector<16x64xf32> -> vector<16x64xf32>
    %145 = arith.addf %104, %144 : vector<16x64xf32>
    %146 = vector.extract_strided_slice %9 {offsets = [3, 0, 0], sizes = [1, 64, 16], strides = [1, 1, 1]} : vector<4x64x16xf32> to vector<1x64x16xf32>
    %147 = vector.shape_cast %146 : vector<1x64x16xf32> to vector<64x16xf32>
    %cst_57 = arith.constant dense<0.000000e+00> : vector<16x16xf32>
    %148 = tpu.matmul %7, %147, %cst_57 {dimension_numbers = #tpu.dot_dimension_numbers<[1], [0], [0], [1], [0, 0, 1, 1], [], []>} : vector<16x64xf32>, vector<64x16xf32>, vector<16x16xf32> -> vector<16x16xf32>
    %149 = vector.extract_strided_slice %11 {offsets = [3, 0, 0], sizes = [1, 1, 16], strides = [1, 1, 1]} : vector<4x1x16xf32> to vector<1x1x16xf32>
    %150 = vector.shape_cast %149 : vector<1x1x16xf32> to vector<1x16xf32>
    %151 = vector.broadcast %150 : vector<1x16xf32> to vector<16x16xf32>
    %152 = arith.addf %148, %151 : vector<16x16xf32>
    %153 = vector.extract_strided_slice %13 {offsets = [3, 0, 0], sizes = [1, 64, 16], strides = [1, 1, 1]} : vector<4x64x16xf32> to vector<1x64x16xf32>
    %154 = vector.shape_cast %153 : vector<1x64x16xf32> to vector<64x16xf32>
    %cst_58 = arith.constant dense<0.000000e+00> : vector<16x16xf32>
    %155 = tpu.matmul %7, %154, %cst_58 {dimension_numbers = #tpu.dot_dimension_numbers<[1], [0], [0], [1], [0, 0, 1, 1], [], []>} : vector<16x64xf32>, vector<64x16xf32>, vector<16x16xf32> -> vector<16x16xf32>
    %156 = vector.extract_strided_slice %15 {offsets = [3, 0, 0], sizes = [1, 1, 16], strides = [1, 1, 1]} : vector<4x1x16xf32> to vector<1x1x16xf32>
    %157 = vector.shape_cast %156 : vector<1x1x16xf32> to vector<1x16xf32>
    %158 = vector.broadcast %157 : vector<1x16xf32> to vector<16x16xf32>
    %159 = arith.addf %155, %158 : vector<16x16xf32>
    %160 = vector.extract_strided_slice %17 {offsets = [3, 0, 0], sizes = [1, 64, 16], strides = [1, 1, 1]} : vector<4x64x16xf32> to vector<1x64x16xf32>
    %161 = vector.shape_cast %160 : vector<1x64x16xf32> to vector<64x16xf32>
    %cst_59 = arith.constant dense<0.000000e+00> : vector<16x16xf32>
    %162 = tpu.matmul %7, %161, %cst_59 {dimension_numbers = #tpu.dot_dimension_numbers<[1], [0], [0], [1], [0, 0, 1, 1], [], []>} : vector<16x64xf32>, vector<64x16xf32>, vector<16x16xf32> -> vector<16x16xf32>
    %163 = vector.extract_strided_slice %19 {offsets = [3, 0, 0], sizes = [1, 1, 16], strides = [1, 1, 1]} : vector<4x1x16xf32> to vector<1x1x16xf32>
    %164 = vector.shape_cast %163 : vector<1x1x16xf32> to vector<1x16xf32>
    %165 = vector.broadcast %164 : vector<1x16xf32> to vector<16x16xf32>
    %166 = arith.addf %162, %165 : vector<16x16xf32>
    %167 = vector.shape_cast %152 : vector<16x16xf32> to vector<2x8x16xf32>
    %168 = vector.shape_cast %159 : vector<16x16xf32> to vector<2x8x16xf32>
    %169 = vector.shape_cast %166 : vector<16x16xf32> to vector<2x8x16xf32>
    "tpu.trace_start"() <{level = 10 : i32, message = "bqd,bkd->bqk"}> : () -> ()
    %cst_60 = arith.constant dense<0.000000e+00> : vector<2x8x8xf32>
    %170 = tpu.matmul %167, %168, %cst_60 {dimension_numbers = #tpu.dot_dimension_numbers<[2], [2], [1], [1], [0, 0, 0, 1, 1, 1], [0], [0]>} : vector<2x8x16xf32>, vector<2x8x16xf32>, vector<2x8x8xf32> -> vector<2x8x8xf32>
    "tpu.trace_stop"() : () -> ()
    %cst_61 = arith.constant dense<0xFF800000> : vector<2x8xf32>
    %171 = vector.multi_reduction <maximumf>, %170, %cst_61 [2] : vector<2x8x8xf32> to vector<2x8xf32>
    %172 = vector.shape_cast %171 : vector<2x8xf32> to vector<2x8x1xf32>
    %173 = vector.broadcast %172 : vector<2x8x1xf32> to vector<2x8x8xf32>
    %174 = arith.subf %170, %173 : vector<2x8x8xf32>
    %175 = math.exp %174 : vector<2x8x8xf32>
    %cst_62 = arith.constant dense<0.000000e+00> : vector<2x8xf32>
    %176 = vector.multi_reduction <add>, %175, %cst_62 [2] : vector<2x8x8xf32> to vector<2x8xf32>
    %177 = vector.shape_cast %176 : vector<2x8xf32> to vector<2x8x1xf32>
    %178 = tpu.reciprocal %177 {approx = true} : vector<2x8x1xf32> -> vector<2x8x1xf32>
    %179 = vector.broadcast %178 : vector<2x8x1xf32> to vector<2x8x8xf32>
    %180 = arith.mulf %175, %179 : vector<2x8x8xf32>
    "tpu.trace_start"() <{level = 10 : i32, message = "bqk,bkd->bqd"}> : () -> ()
    %cst_63 = arith.constant dense<0.000000e+00> : vector<2x8x16xf32>
    %181 = tpu.matmul %180, %169, %cst_63 {dimension_numbers = #tpu.dot_dimension_numbers<[2], [1], [1], [2], [0, 0, 0, 1, 1, 2], [0], [0]>} : vector<2x8x8xf32>, vector<2x8x16xf32>, vector<2x8x16xf32> -> vector<2x8x16xf32>
    "tpu.trace_stop"() : () -> ()
    %182 = vector.shape_cast %181 : vector<2x8x16xf32> to vector<16x16xf32>
    %183 = vector.extract_strided_slice %21 {offsets = [3, 0, 0], sizes = [1, 16, 64], strides = [1, 1, 1]} : vector<4x16x64xf32> to vector<1x16x64xf32>
    %184 = vector.shape_cast %183 : vector<1x16x64xf32> to vector<16x64xf32>
    %cst_64 = arith.constant dense<0.000000e+00> : vector<16x64xf32>
    %185 = tpu.matmul %182, %184, %cst_64 {dimension_numbers = #tpu.dot_dimension_numbers<[1], [0], [0], [1], [0, 0, 1, 1], [], []>} : vector<16x16xf32>, vector<16x64xf32>, vector<16x64xf32> -> vector<16x64xf32>
    %186 = arith.addf %145, %185 : vector<16x64xf32>
    %c0_65 = arith.constant 0 : index
    %c0_66 = arith.constant 0 : index
    %c0_67 = arith.constant 0 : index
    %187 = vector.load %arg11[%c0_65, %c0_66, %c0_67] : memref<2x1x64xf32, #tpu.memory_space<vmem>>, vector<1x1x64xf32>
    %188 = vector.shape_cast %187 : vector<1x1x64xf32> to vector<1x64xf32>
    %189 = vector.broadcast %188 : vector<1x64xf32> to vector<16x64xf32>
    %190 = arith.addf %186, %189 : vector<16x64xf32>
    %191 = arith.addf %7, %190 : vector<16x64xf32>
    %c0_68 = arith.constant 0 : index
    %c0_69 = arith.constant 0 : index
    %c0_70 = arith.constant 0 : index
    %192 = vector.load %arg12[%c0_68, %c0_69, %c0_70] : memref<2x1x64xf32, #tpu.memory_space<vmem>>, vector<1x1x64xf32>
    %193 = vector.shape_cast %192 : vector<1x1x64xf32> to vector<1x64xf32>
    %c0_71 = arith.constant 0 : index
    %c0_72 = arith.constant 0 : index
    %c0_73 = arith.constant 0 : index
    %194 = vector.load %arg13[%c0_71, %c0_72, %c0_73] : memref<2x1x64xf32, #tpu.memory_space<vmem>>, vector<1x1x64xf32>
    %195 = vector.shape_cast %194 : vector<1x1x64xf32> to vector<1x64xf32>
    %cst_74 = arith.constant dense<0.000000e+00> : vector<16xf32>
    %196 = vector.multi_reduction <add>, %191, %cst_74 [1] : vector<16x64xf32> to vector<16xf32>
    %197 = vector.shape_cast %196 : vector<16xf32> to vector<16x1xf32>
    %cst_75 = arith.constant 6.400000e+01 : f32
    %198 = vector.broadcast %cst_75 : f32 to vector<16x1xf32>
    %199 = arith.divf %197, %198 : vector<16x1xf32>
    %200 = vector.broadcast %199 : vector<16x1xf32> to vector<16x64xf32>
    %201 = arith.subf %191, %200 : vector<16x64xf32>
    %202 = arith.mulf %201, %201 : vector<16x64xf32>
    %cst_76 = arith.constant dense<0.000000e+00> : vector<16xf32>
    %203 = vector.multi_reduction <add>, %202, %cst_76 [1] : vector<16x64xf32> to vector<16xf32>
    %204 = vector.shape_cast %203 : vector<16xf32> to vector<16x1xf32>
    %cst_77 = arith.constant 6.400000e+01 : f32
    %205 = vector.broadcast %cst_77 : f32 to vector<16x1xf32>
    %206 = arith.divf %204, %205 : vector<16x1xf32>
    %207 = vector.broadcast %199 : vector<16x1xf32> to vector<16x64xf32>
    %208 = arith.subf %191, %207 : vector<16x64xf32>
    %cst_78 = arith.constant 9.99999974E-6 : f32
    %209 = vector.broadcast %cst_78 : f32 to vector<16x1xf32>
    %210 = arith.addf %206, %209 : vector<16x1xf32>
    %211 = math.rsqrt %210 : vector<16x1xf32>
    %212 = vector.broadcast %211 : vector<16x1xf32> to vector<16x64xf32>
    %213 = arith.mulf %208, %212 : vector<16x64xf32>
    %214 = vector.broadcast %193 : vector<1x64xf32> to vector<16x64xf32>
    %215 = arith.mulf %213, %214 : vector<16x64xf32>
    %216 = vector.broadcast %195 : vector<1x64xf32> to vector<16x64xf32>
    %217 = arith.addf %215, %216 : vector<16x64xf32>
    %218 = arith.truncf %217 : vector<16x64xf32> to vector<16x64xbf16>
    %c0_79 = arith.constant 0 : index
    %c0_80 = arith.constant 0 : index
    %c0_81 = arith.constant 0 : index
    %219 = vector.load %arg14[%c0_79, %c0_80, %c0_81] : memref<2x64x2048xbf16, #tpu.memory_space<vmem>>, vector<1x64x2048xbf16>
    %220 = vector.shape_cast %219 : vector<1x64x2048xbf16> to vector<64x2048xbf16>
    %cst_82 = arith.constant dense<0.000000e+00> : vector<16x2048xf32>
    %221 = tpu.matmul %218, %220, %cst_82 {dimension_numbers = #tpu.dot_dimension_numbers<[1], [0], [0], [1], [0, 0, 1, 1], [], []>} : vector<16x64xbf16>, vector<64x2048xbf16>, vector<16x2048xf32> -> vector<16x2048xf32>
    %c0_83 = arith.constant 0 : index
    %c0_84 = arith.constant 0 : index
    %c0_85 = arith.constant 0 : index
    %222 = vector.load %arg15[%c0_83, %c0_84, %c0_85] : memref<2x1x2048xf32, #tpu.memory_space<vmem>>, vector<1x1x2048xf32>
    %223 = vector.shape_cast %222 : vector<1x1x2048xf32> to vector<1x2048xf32>
    %224 = vector.broadcast %223 : vector<1x2048xf32> to vector<16x2048xf32>
    %225 = arith.addf %221, %224 : vector<16x2048xf32>
    %cst_86 = arith.constant 0.000000e+00 : f32
    %226 = vector.broadcast %cst_86 : f32 to vector<16x2048xf32>
    %227 = arith.maximumf %225, %226 : vector<16x2048xf32>
    %228 = arith.truncf %227 : vector<16x2048xf32> to vector<16x2048xbf16>
    %c0_87 = arith.constant 0 : index
    %c0_88 = arith.constant 0 : index
    %c0_89 = arith.constant 0 : index
    %229 = vector.load %arg16[%c0_87, %c0_88, %c0_89] : memref<2x2048x64xbf16, #tpu.memory_space<vmem>>, vector<1x2048x64xbf16>
    %230 = vector.shape_cast %229 : vector<1x2048x64xbf16> to vector<2048x64xbf16>
    %cst_90 = arith.constant dense<0.000000e+00> : vector<16x64xf32>
    %231 = tpu.matmul %228, %230, %cst_90 {dimension_numbers = #tpu.dot_dimension_numbers<[1], [0], [0], [1], [0, 0, 1, 1], [], []>} : vector<16x2048xbf16>, vector<2048x64xbf16>, vector<16x64xf32> -> vector<16x64xf32>
    %c0_91 = arith.constant 0 : index
    %c0_92 = arith.constant 0 : index
    %c0_93 = arith.constant 0 : index
    %232 = vector.load %arg17[%c0_91, %c0_92, %c0_93] : memref<2x1x64xf32, #tpu.memory_space<vmem>>, vector<1x1x64xf32>
    %233 = vector.shape_cast %232 : vector<1x1x64xf32> to vector<1x64xf32>
    %234 = vector.broadcast %233 : vector<1x64xf32> to vector<16x64xf32>
    %235 = arith.addf %231, %234 : vector<16x64xf32>
    %236 = arith.addf %217, %235 : vector<16x64xf32>
    %c0_94 = arith.constant 0 : index
    %c0_95 = arith.constant 0 : index
    %c0_96 = arith.constant 0 : index
    %237 = vector.load %arg18[%c0_94, %c0_95, %c0_96] : memref<2x1x64xf32, #tpu.memory_space<vmem>>, vector<1x1x64xf32>
    %238 = vector.shape_cast %237 : vector<1x1x64xf32> to vector<1x64xf32>
    %c0_97 = arith.constant 0 : index
    %c0_98 = arith.constant 0 : index
    %c0_99 = arith.constant 0 : index
    %239 = vector.load %arg19[%c0_97, %c0_98, %c0_99] : memref<2x1x64xf32, #tpu.memory_space<vmem>>, vector<1x1x64xf32>
    %240 = vector.shape_cast %239 : vector<1x1x64xf32> to vector<1x64xf32>
    %cst_100 = arith.constant dense<0.000000e+00> : vector<16xf32>
    %241 = vector.multi_reduction <add>, %236, %cst_100 [1] : vector<16x64xf32> to vector<16xf32>
    %242 = vector.shape_cast %241 : vector<16xf32> to vector<16x1xf32>
    %cst_101 = arith.constant 6.400000e+01 : f32
    %243 = vector.broadcast %cst_101 : f32 to vector<16x1xf32>
    %244 = arith.divf %242, %243 : vector<16x1xf32>
    %245 = vector.broadcast %244 : vector<16x1xf32> to vector<16x64xf32>
    %246 = arith.subf %236, %245 : vector<16x64xf32>
    %247 = arith.mulf %246, %246 : vector<16x64xf32>
    %cst_102 = arith.constant dense<0.000000e+00> : vector<16xf32>
    %248 = vector.multi_reduction <add>, %247, %cst_102 [1] : vector<16x64xf32> to vector<16xf32>
    %249 = vector.shape_cast %248 : vector<16xf32> to vector<16x1xf32>
    %cst_103 = arith.constant 6.400000e+01 : f32
    %250 = vector.broadcast %cst_103 : f32 to vector<16x1xf32>
    %251 = arith.divf %249, %250 : vector<16x1xf32>
    %252 = vector.broadcast %244 : vector<16x1xf32> to vector<16x64xf32>
    %253 = arith.subf %236, %252 : vector<16x64xf32>
    %cst_104 = arith.constant 9.99999974E-6 : f32
    %254 = vector.broadcast %cst_104 : f32 to vector<16x1xf32>
    %255 = arith.addf %251, %254 : vector<16x1xf32>
    %256 = math.rsqrt %255 : vector<16x1xf32>
    %257 = vector.broadcast %256 : vector<16x1xf32> to vector<16x64xf32>
    %258 = arith.mulf %253, %257 : vector<16x64xf32>
    %259 = vector.broadcast %238 : vector<1x64xf32> to vector<16x64xf32>
    %260 = arith.mulf %258, %259 : vector<16x64xf32>
    %261 = vector.broadcast %240 : vector<1x64xf32> to vector<16x64xf32>
    %262 = arith.addf %260, %261 : vector<16x64xf32>
    %c1 = arith.constant 1 : index
    %c0_105 = arith.constant 0 : index
    %c0_106 = arith.constant 0 : index
    %c0_107 = arith.constant 0 : index
    %263 = vector.load %arg4[%c1, %c0_105, %c0_106, %c0_107] : memref<2x4x64x16xf32, #tpu.memory_space<vmem>>, vector<1x4x64x16xf32>
    %264 = vector.shape_cast %263 : vector<1x4x64x16xf32> to vector<4x64x16xf32>
    %c1_108 = arith.constant 1 : index
    %c0_109 = arith.constant 0 : index
    %c0_110 = arith.constant 0 : index
    %c0_111 = arith.constant 0 : index
    %265 = vector.load %arg5[%c1_108, %c0_109, %c0_110, %c0_111] : memref<2x4x1x16xf32, #tpu.memory_space<vmem>>, vector<1x4x1x16xf32>
    %266 = vector.shape_cast %265 : vector<1x4x1x16xf32> to vector<4x1x16xf32>
    %c1_112 = arith.constant 1 : index
    %c0_113 = arith.constant 0 : index
    %c0_114 = arith.constant 0 : index
    %c0_115 = arith.constant 0 : index
    %267 = vector.load %arg6[%c1_112, %c0_113, %c0_114, %c0_115] : memref<2x4x64x16xf32, #tpu.memory_space<vmem>>, vector<1x4x64x16xf32>
    %268 = vector.shape_cast %267 : vector<1x4x64x16xf32> to vector<4x64x16xf32>
    %c1_116 = arith.constant 1 : index
    %c0_117 = arith.constant 0 : index
    %c0_118 = arith.constant 0 : index
    %c0_119 = arith.constant 0 : index
    %269 = vector.load %arg7[%c1_116, %c0_117, %c0_118, %c0_119] : memref<2x4x1x16xf32, #tpu.memory_space<vmem>>, vector<1x4x1x16xf32>
    %270 = vector.shape_cast %269 : vector<1x4x1x16xf32> to vector<4x1x16xf32>
    %c1_120 = arith.constant 1 : index
    %c0_121 = arith.constant 0 : index
    %c0_122 = arith.constant 0 : index
    %c0_123 = arith.constant 0 : index
    %271 = vector.load %arg8[%c1_120, %c0_121, %c0_122, %c0_123] : memref<2x4x64x16xf32, #tpu.memory_space<vmem>>, vector<1x4x64x16xf32>
    %272 = vector.shape_cast %271 : vector<1x4x64x16xf32> to vector<4x64x16xf32>
    %c1_124 = arith.constant 1 : index
    %c0_125 = arith.constant 0 : index
    %c0_126 = arith.constant 0 : index
    %c0_127 = arith.constant 0 : index
    %273 = vector.load %arg9[%c1_124, %c0_125, %c0_126, %c0_127] : memref<2x4x1x16xf32, #tpu.memory_space<vmem>>, vector<1x4x1x16xf32>
    %274 = vector.shape_cast %273 : vector<1x4x1x16xf32> to vector<4x1x16xf32>
    %c1_128 = arith.constant 1 : index
    %c0_129 = arith.constant 0 : index
    %c0_130 = arith.constant 0 : index
    %c0_131 = arith.constant 0 : index
    %275 = vector.load %arg10[%c1_128, %c0_129, %c0_130, %c0_131] : memref<2x4x16x64xf32, #tpu.memory_space<vmem>>, vector<1x4x16x64xf32>
    %276 = vector.shape_cast %275 : vector<1x4x16x64xf32> to vector<4x16x64xf32>
    %cst_132 = arith.constant 0.000000e+00 : f32
    %277 = vector.broadcast %cst_132 : f32 to vector<16x64xf32>
    %278 = vector.extract_strided_slice %264 {offsets = [0, 0, 0], sizes = [1, 64, 16], strides = [1, 1, 1]} : vector<4x64x16xf32> to vector<1x64x16xf32>
    %279 = vector.shape_cast %278 : vector<1x64x16xf32> to vector<64x16xf32>
    %cst_133 = arith.constant dense<0.000000e+00> : vector<16x16xf32>
    %280 = tpu.matmul %262, %279, %cst_133 {dimension_numbers = #tpu.dot_dimension_numbers<[1], [0], [0], [1], [0, 0, 1, 1], [], []>} : vector<16x64xf32>, vector<64x16xf32>, vector<16x16xf32> -> vector<16x16xf32>
    %281 = vector.extract_strided_slice %266 {offsets = [0, 0, 0], sizes = [1, 1, 16], strides = [1, 1, 1]} : vector<4x1x16xf32> to vector<1x1x16xf32>
    %282 = vector.shape_cast %281 : vector<1x1x16xf32> to vector<1x16xf32>
    %283 = vector.broadcast %282 : vector<1x16xf32> to vector<16x16xf32>
    %284 = arith.addf %280, %283 : vector<16x16xf32>
    %285 = vector.extract_strided_slice %268 {offsets = [0, 0, 0], sizes = [1, 64, 16], strides = [1, 1, 1]} : vector<4x64x16xf32> to vector<1x64x16xf32>
    %286 = vector.shape_cast %285 : vector<1x64x16xf32> to vector<64x16xf32>
    %cst_134 = arith.constant dense<0.000000e+00> : vector<16x16xf32>
    %287 = tpu.matmul %262, %286, %cst_134 {dimension_numbers = #tpu.dot_dimension_numbers<[1], [0], [0], [1], [0, 0, 1, 1], [], []>} : vector<16x64xf32>, vector<64x16xf32>, vector<16x16xf32> -> vector<16x16xf32>
    %288 = vector.extract_strided_slice %270 {offsets = [0, 0, 0], sizes = [1, 1, 16], strides = [1, 1, 1]} : vector<4x1x16xf32> to vector<1x1x16xf32>
    %289 = vector.shape_cast %288 : vector<1x1x16xf32> to vector<1x16xf32>
    %290 = vector.broadcast %289 : vector<1x16xf32> to vector<16x16xf32>
    %291 = arith.addf %287, %290 : vector<16x16xf32>
    %292 = vector.extract_strided_slice %272 {offsets = [0, 0, 0], sizes = [1, 64, 16], strides = [1, 1, 1]} : vector<4x64x16xf32> to vector<1x64x16xf32>
    %293 = vector.shape_cast %292 : vector<1x64x16xf32> to vector<64x16xf32>
    %cst_135 = arith.constant dense<0.000000e+00> : vector<16x16xf32>
    %294 = tpu.matmul %262, %293, %cst_135 {dimension_numbers = #tpu.dot_dimension_numbers<[1], [0], [0], [1], [0, 0, 1, 1], [], []>} : vector<16x64xf32>, vector<64x16xf32>, vector<16x16xf32> -> vector<16x16xf32>
    %295 = vector.extract_strided_slice %274 {offsets = [0, 0, 0], sizes = [1, 1, 16], strides = [1, 1, 1]} : vector<4x1x16xf32> to vector<1x1x16xf32>
    %296 = vector.shape_cast %295 : vector<1x1x16xf32> to vector<1x16xf32>
    %297 = vector.broadcast %296 : vector<1x16xf32> to vector<16x16xf32>
    %298 = arith.addf %294, %297 : vector<16x16xf32>
    %299 = vector.shape_cast %284 : vector<16x16xf32> to vector<2x8x16xf32>
    %300 = vector.shape_cast %291 : vector<16x16xf32> to vector<2x8x16xf32>
    %301 = vector.shape_cast %298 : vector<16x16xf32> to vector<2x8x16xf32>
    "tpu.trace_start"() <{level = 10 : i32, message = "bqd,bkd->bqk"}> : () -> ()
    %cst_136 = arith.constant dense<0.000000e+00> : vector<2x8x8xf32>
    %302 = tpu.matmul %299, %300, %cst_136 {dimension_numbers = #tpu.dot_dimension_numbers<[2], [2], [1], [1], [0, 0, 0, 1, 1, 1], [0], [0]>} : vector<2x8x16xf32>, vector<2x8x16xf32>, vector<2x8x8xf32> -> vector<2x8x8xf32>
    "tpu.trace_stop"() : () -> ()
    %cst_137 = arith.constant dense<0xFF800000> : vector<2x8xf32>
    %303 = vector.multi_reduction <maximumf>, %302, %cst_137 [2] : vector<2x8x8xf32> to vector<2x8xf32>
    %304 = vector.shape_cast %303 : vector<2x8xf32> to vector<2x8x1xf32>
    %305 = vector.broadcast %304 : vector<2x8x1xf32> to vector<2x8x8xf32>
    %306 = arith.subf %302, %305 : vector<2x8x8xf32>
    %307 = math.exp %306 : vector<2x8x8xf32>
    %cst_138 = arith.constant dense<0.000000e+00> : vector<2x8xf32>
    %308 = vector.multi_reduction <add>, %307, %cst_138 [2] : vector<2x8x8xf32> to vector<2x8xf32>
    %309 = vector.shape_cast %308 : vector<2x8xf32> to vector<2x8x1xf32>
    %310 = tpu.reciprocal %309 {approx = true} : vector<2x8x1xf32> -> vector<2x8x1xf32>
    %311 = vector.broadcast %310 : vector<2x8x1xf32> to vector<2x8x8xf32>
    %312 = arith.mulf %307, %311 : vector<2x8x8xf32>
    "tpu.trace_start"() <{level = 10 : i32, message = "bqk,bkd->bqd"}> : () -> ()
    %cst_139 = arith.constant dense<0.000000e+00> : vector<2x8x16xf32>
    %313 = tpu.matmul %312, %301, %cst_139 {dimension_numbers = #tpu.dot_dimension_numbers<[2], [1], [1], [2], [0, 0, 0, 1, 1, 2], [0], [0]>} : vector<2x8x8xf32>, vector<2x8x16xf32>, vector<2x8x16xf32> -> vector<2x8x16xf32>
    "tpu.trace_stop"() : () -> ()
    %314 = vector.shape_cast %313 : vector<2x8x16xf32> to vector<16x16xf32>
    %315 = vector.extract_strided_slice %276 {offsets = [0, 0, 0], sizes = [1, 16, 64], strides = [1, 1, 1]} : vector<4x16x64xf32> to vector<1x16x64xf32>
    %316 = vector.shape_cast %315 : vector<1x16x64xf32> to vector<16x64xf32>
    %cst_140 = arith.constant dense<0.000000e+00> : vector<16x64xf32>
    %317 = tpu.matmul %314, %316, %cst_140 {dimension_numbers = #tpu.dot_dimension_numbers<[1], [0], [0], [1], [0, 0, 1, 1], [], []>} : vector<16x16xf32>, vector<16x64xf32>, vector<16x64xf32> -> vector<16x64xf32>
    %318 = arith.addf %277, %317 : vector<16x64xf32>
    %319 = vector.extract_strided_slice %264 {offsets = [1, 0, 0], sizes = [1, 64, 16], strides = [1, 1, 1]} : vector<4x64x16xf32> to vector<1x64x16xf32>
    %320 = vector.shape_cast %319 : vector<1x64x16xf32> to vector<64x16xf32>
    %cst_141 = arith.constant dense<0.000000e+00> : vector<16x16xf32>
    %321 = tpu.matmul %262, %320, %cst_141 {dimension_numbers = #tpu.dot_dimension_numbers<[1], [0], [0], [1], [0, 0, 1, 1], [], []>} : vector<16x64xf32>, vector<64x16xf32>, vector<16x16xf32> -> vector<16x16xf32>
    %322 = vector.extract_strided_slice %266 {offsets = [1, 0, 0], sizes = [1, 1, 16], strides = [1, 1, 1]} : vector<4x1x16xf32> to vector<1x1x16xf32>
    %323 = vector.shape_cast %322 : vector<1x1x16xf32> to vector<1x16xf32>
    %324 = vector.broadcast %323 : vector<1x16xf32> to vector<16x16xf32>
    %325 = arith.addf %321, %324 : vector<16x16xf32>
    %326 = vector.extract_strided_slice %268 {offsets = [1, 0, 0], sizes = [1, 64, 16], strides = [1, 1, 1]} : vector<4x64x16xf32> to vector<1x64x16xf32>
    %327 = vector.shape_cast %326 : vector<1x64x16xf32> to vector<64x16xf32>
    %cst_142 = arith.constant dense<0.000000e+00> : vector<16x16xf32>
    %328 = tpu.matmul %262, %327, %cst_142 {dimension_numbers = #tpu.dot_dimension_numbers<[1], [0], [0], [1], [0, 0, 1, 1], [], []>} : vector<16x64xf32>, vector<64x16xf32>, vector<16x16xf32> -> vector<16x16xf32>
    %329 = vector.extract_strided_slice %270 {offsets = [1, 0, 0], sizes = [1, 1, 16], strides = [1, 1, 1]} : vector<4x1x16xf32> to vector<1x1x16xf32>
    %330 = vector.shape_cast %329 : vector<1x1x16xf32> to vector<1x16xf32>
    %331 = vector.broadcast %330 : vector<1x16xf32> to vector<16x16xf32>
    %332 = arith.addf %328, %331 : vector<16x16xf32>
    %333 = vector.extract_strided_slice %272 {offsets = [1, 0, 0], sizes = [1, 64, 16], strides = [1, 1, 1]} : vector<4x64x16xf32> to vector<1x64x16xf32>
    %334 = vector.shape_cast %333 : vector<1x64x16xf32> to vector<64x16xf32>
    %cst_143 = arith.constant dense<0.000000e+00> : vector<16x16xf32>
    %335 = tpu.matmul %262, %334, %cst_143 {dimension_numbers = #tpu.dot_dimension_numbers<[1], [0], [0], [1], [0, 0, 1, 1], [], []>} : vector<16x64xf32>, vector<64x16xf32>, vector<16x16xf32> -> vector<16x16xf32>
    %336 = vector.extract_strided_slice %274 {offsets = [1, 0, 0], sizes = [1, 1, 16], strides = [1, 1, 1]} : vector<4x1x16xf32> to vector<1x1x16xf32>
    %337 = vector.shape_cast %336 : vector<1x1x16xf32> to vector<1x16xf32>
    %338 = vector.broadcast %337 : vector<1x16xf32> to vector<16x16xf32>
    %339 = arith.addf %335, %338 : vector<16x16xf32>
    %340 = vector.shape_cast %325 : vector<16x16xf32> to vector<2x8x16xf32>
    %341 = vector.shape_cast %332 : vector<16x16xf32> to vector<2x8x16xf32>
    %342 = vector.shape_cast %339 : vector<16x16xf32> to vector<2x8x16xf32>
    "tpu.trace_start"() <{level = 10 : i32, message = "bqd,bkd->bqk"}> : () -> ()
    %cst_144 = arith.constant dense<0.000000e+00> : vector<2x8x8xf32>
    %343 = tpu.matmul %340, %341, %cst_144 {dimension_numbers = #tpu.dot_dimension_numbers<[2], [2], [1], [1], [0, 0, 0, 1, 1, 1], [0], [0]>} : vector<2x8x16xf32>, vector<2x8x16xf32>, vector<2x8x8xf32> -> vector<2x8x8xf32>
    "tpu.trace_stop"() : () -> ()
    %cst_145 = arith.constant dense<0xFF800000> : vector<2x8xf32>
    %344 = vector.multi_reduction <maximumf>, %343, %cst_145 [2] : vector<2x8x8xf32> to vector<2x8xf32>
    %345 = vector.shape_cast %344 : vector<2x8xf32> to vector<2x8x1xf32>
    %346 = vector.broadcast %345 : vector<2x8x1xf32> to vector<2x8x8xf32>
    %347 = arith.subf %343, %346 : vector<2x8x8xf32>
    %348 = math.exp %347 : vector<2x8x8xf32>
    %cst_146 = arith.constant dense<0.000000e+00> : vector<2x8xf32>
    %349 = vector.multi_reduction <add>, %348, %cst_146 [2] : vector<2x8x8xf32> to vector<2x8xf32>
    %350 = vector.shape_cast %349 : vector<2x8xf32> to vector<2x8x1xf32>
    %351 = tpu.reciprocal %350 {approx = true} : vector<2x8x1xf32> -> vector<2x8x1xf32>
    %352 = vector.broadcast %351 : vector<2x8x1xf32> to vector<2x8x8xf32>
    %353 = arith.mulf %348, %352 : vector<2x8x8xf32>
    "tpu.trace_start"() <{level = 10 : i32, message = "bqk,bkd->bqd"}> : () -> ()
    %cst_147 = arith.constant dense<0.000000e+00> : vector<2x8x16xf32>
    %354 = tpu.matmul %353, %342, %cst_147 {dimension_numbers = #tpu.dot_dimension_numbers<[2], [1], [1], [2], [0, 0, 0, 1, 1, 2], [0], [0]>} : vector<2x8x8xf32>, vector<2x8x16xf32>, vector<2x8x16xf32> -> vector<2x8x16xf32>
    "tpu.trace_stop"() : () -> ()
    %355 = vector.shape_cast %354 : vector<2x8x16xf32> to vector<16x16xf32>
    %356 = vector.extract_strided_slice %276 {offsets = [1, 0, 0], sizes = [1, 16, 64], strides = [1, 1, 1]} : vector<4x16x64xf32> to vector<1x16x64xf32>
    %357 = vector.shape_cast %356 : vector<1x16x64xf32> to vector<16x64xf32>
    %cst_148 = arith.constant dense<0.000000e+00> : vector<16x64xf32>
    %358 = tpu.matmul %355, %357, %cst_148 {dimension_numbers = #tpu.dot_dimension_numbers<[1], [0], [0], [1], [0, 0, 1, 1], [], []>} : vector<16x16xf32>, vector<16x64xf32>, vector<16x64xf32> -> vector<16x64xf32>
    %359 = arith.addf %318, %358 : vector<16x64xf32>
    %360 = vector.extract_strided_slice %264 {offsets = [2, 0, 0], sizes = [1, 64, 16], strides = [1, 1, 1]} : vector<4x64x16xf32> to vector<1x64x16xf32>
    %361 = vector.shape_cast %360 : vector<1x64x16xf32> to vector<64x16xf32>
    %cst_149 = arith.constant dense<0.000000e+00> : vector<16x16xf32>
    %362 = tpu.matmul %262, %361, %cst_149 {dimension_numbers = #tpu.dot_dimension_numbers<[1], [0], [0], [1], [0, 0, 1, 1], [], []>} : vector<16x64xf32>, vector<64x16xf32>, vector<16x16xf32> -> vector<16x16xf32>
    %363 = vector.extract_strided_slice %266 {offsets = [2, 0, 0], sizes = [1, 1, 16], strides = [1, 1, 1]} : vector<4x1x16xf32> to vector<1x1x16xf32>
    %364 = vector.shape_cast %363 : vector<1x1x16xf32> to vector<1x16xf32>
    %365 = vector.broadcast %364 : vector<1x16xf32> to vector<16x16xf32>
    %366 = arith.addf %362, %365 : vector<16x16xf32>
    %367 = vector.extract_strided_slice %268 {offsets = [2, 0, 0], sizes = [1, 64, 16], strides = [1, 1, 1]} : vector<4x64x16xf32> to vector<1x64x16xf32>
    %368 = vector.shape_cast %367 : vector<1x64x16xf32> to vector<64x16xf32>
    %cst_150 = arith.constant dense<0.000000e+00> : vector<16x16xf32>
    %369 = tpu.matmul %262, %368, %cst_150 {dimension_numbers = #tpu.dot_dimension_numbers<[1], [0], [0], [1], [0, 0, 1, 1], [], []>} : vector<16x64xf32>, vector<64x16xf32>, vector<16x16xf32> -> vector<16x16xf32>
    %370 = vector.extract_strided_slice %270 {offsets = [2, 0, 0], sizes = [1, 1, 16], strides = [1, 1, 1]} : vector<4x1x16xf32> to vector<1x1x16xf32>
    %371 = vector.shape_cast %370 : vector<1x1x16xf32> to vector<1x16xf32>
    %372 = vector.broadcast %371 : vector<1x16xf32> to vector<16x16xf32>
    %373 = arith.addf %369, %372 : vector<16x16xf32>
    %374 = vector.extract_strided_slice %272 {offsets = [2, 0, 0], sizes = [1, 64, 16], strides = [1, 1, 1]} : vector<4x64x16xf32> to vector<1x64x16xf32>
    %375 = vector.shape_cast %374 : vector<1x64x16xf32> to vector<64x16xf32>
    %cst_151 = arith.constant dense<0.000000e+00> : vector<16x16xf32>
    %376 = tpu.matmul %262, %375, %cst_151 {dimension_numbers = #tpu.dot_dimension_numbers<[1], [0], [0], [1], [0, 0, 1, 1], [], []>} : vector<16x64xf32>, vector<64x16xf32>, vector<16x16xf32> -> vector<16x16xf32>
    %377 = vector.extract_strided_slice %274 {offsets = [2, 0, 0], sizes = [1, 1, 16], strides = [1, 1, 1]} : vector<4x1x16xf32> to vector<1x1x16xf32>
    %378 = vector.shape_cast %377 : vector<1x1x16xf32> to vector<1x16xf32>
    %379 = vector.broadcast %378 : vector<1x16xf32> to vector<16x16xf32>
    %380 = arith.addf %376, %379 : vector<16x16xf32>
    %381 = vector.shape_cast %366 : vector<16x16xf32> to vector<2x8x16xf32>
    %382 = vector.shape_cast %373 : vector<16x16xf32> to vector<2x8x16xf32>
    %383 = vector.shape_cast %380 : vector<16x16xf32> to vector<2x8x16xf32>
    "tpu.trace_start"() <{level = 10 : i32, message = "bqd,bkd->bqk"}> : () -> ()
    %cst_152 = arith.constant dense<0.000000e+00> : vector<2x8x8xf32>
    %384 = tpu.matmul %381, %382, %cst_152 {dimension_numbers = #tpu.dot_dimension_numbers<[2], [2], [1], [1], [0, 0, 0, 1, 1, 1], [0], [0]>} : vector<2x8x16xf32>, vector<2x8x16xf32>, vector<2x8x8xf32> -> vector<2x8x8xf32>
    "tpu.trace_stop"() : () -> ()
    %cst_153 = arith.constant dense<0xFF800000> : vector<2x8xf32>
    %385 = vector.multi_reduction <maximumf>, %384, %cst_153 [2] : vector<2x8x8xf32> to vector<2x8xf32>
    %386 = vector.shape_cast %385 : vector<2x8xf32> to vector<2x8x1xf32>
    %387 = vector.broadcast %386 : vector<2x8x1xf32> to vector<2x8x8xf32>
    %388 = arith.subf %384, %387 : vector<2x8x8xf32>
    %389 = math.exp %388 : vector<2x8x8xf32>
    %cst_154 = arith.constant dense<0.000000e+00> : vector<2x8xf32>
    %390 = vector.multi_reduction <add>, %389, %cst_154 [2] : vector<2x8x8xf32> to vector<2x8xf32>
    %391 = vector.shape_cast %390 : vector<2x8xf32> to vector<2x8x1xf32>
    %392 = tpu.reciprocal %391 {approx = true} : vector<2x8x1xf32> -> vector<2x8x1xf32>
    %393 = vector.broadcast %392 : vector<2x8x1xf32> to vector<2x8x8xf32>
    %394 = arith.mulf %389, %393 : vector<2x8x8xf32>
    "tpu.trace_start"() <{level = 10 : i32, message = "bqk,bkd->bqd"}> : () -> ()
    %cst_155 = arith.constant dense<0.000000e+00> : vector<2x8x16xf32>
    %395 = tpu.matmul %394, %383, %cst_155 {dimension_numbers = #tpu.dot_dimension_numbers<[2], [1], [1], [2], [0, 0, 0, 1, 1, 2], [0], [0]>} : vector<2x8x8xf32>, vector<2x8x16xf32>, vector<2x8x16xf32> -> vector<2x8x16xf32>
    "tpu.trace_stop"() : () -> ()
    %396 = vector.shape_cast %395 : vector<2x8x16xf32> to vector<16x16xf32>
    %397 = vector.extract_strided_slice %276 {offsets = [2, 0, 0], sizes = [1, 16, 64], strides = [1, 1, 1]} : vector<4x16x64xf32> to vector<1x16x64xf32>
    %398 = vector.shape_cast %397 : vector<1x16x64xf32> to vector<16x64xf32>
    %cst_156 = arith.constant dense<0.000000e+00> : vector<16x64xf32>
    %399 = tpu.matmul %396, %398, %cst_156 {dimension_numbers = #tpu.dot_dimension_numbers<[1], [0], [0], [1], [0, 0, 1, 1], [], []>} : vector<16x16xf32>, vector<16x64xf32>, vector<16x64xf32> -> vector<16x64xf32>
    %400 = arith.addf %359, %399 : vector<16x64xf32>
    %401 = vector.extract_strided_slice %264 {offsets = [3, 0, 0], sizes = [1, 64, 16], strides = [1, 1, 1]} : vector<4x64x16xf32> to vector<1x64x16xf32>
    %402 = vector.shape_cast %401 : vector<1x64x16xf32> to vector<64x16xf32>
    %cst_157 = arith.constant dense<0.000000e+00> : vector<16x16xf32>
    %403 = tpu.matmul %262, %402, %cst_157 {dimension_numbers = #tpu.dot_dimension_numbers<[1], [0], [0], [1], [0, 0, 1, 1], [], []>} : vector<16x64xf32>, vector<64x16xf32>, vector<16x16xf32> -> vector<16x16xf32>
    %404 = vector.extract_strided_slice %266 {offsets = [3, 0, 0], sizes = [1, 1, 16], strides = [1, 1, 1]} : vector<4x1x16xf32> to vector<1x1x16xf32>
    %405 = vector.shape_cast %404 : vector<1x1x16xf32> to vector<1x16xf32>
    %406 = vector.broadcast %405 : vector<1x16xf32> to vector<16x16xf32>
    %407 = arith.addf %403, %406 : vector<16x16xf32>
    %408 = vector.extract_strided_slice %268 {offsets = [3, 0, 0], sizes = [1, 64, 16], strides = [1, 1, 1]} : vector<4x64x16xf32> to vector<1x64x16xf32>
    %409 = vector.shape_cast %408 : vector<1x64x16xf32> to vector<64x16xf32>
    %cst_158 = arith.constant dense<0.000000e+00> : vector<16x16xf32>
    %410 = tpu.matmul %262, %409, %cst_158 {dimension_numbers = #tpu.dot_dimension_numbers<[1], [0], [0], [1], [0, 0, 1, 1], [], []>} : vector<16x64xf32>, vector<64x16xf32>, vector<16x16xf32> -> vector<16x16xf32>
    %411 = vector.extract_strided_slice %270 {offsets = [3, 0, 0], sizes = [1, 1, 16], strides = [1, 1, 1]} : vector<4x1x16xf32> to vector<1x1x16xf32>
    %412 = vector.shape_cast %411 : vector<1x1x16xf32> to vector<1x16xf32>
    %413 = vector.broadcast %412 : vector<1x16xf32> to vector<16x16xf32>
    %414 = arith.addf %410, %413 : vector<16x16xf32>
    %415 = vector.extract_strided_slice %272 {offsets = [3, 0, 0], sizes = [1, 64, 16], strides = [1, 1, 1]} : vector<4x64x16xf32> to vector<1x64x16xf32>
    %416 = vector.shape_cast %415 : vector<1x64x16xf32> to vector<64x16xf32>
    %cst_159 = arith.constant dense<0.000000e+00> : vector<16x16xf32>
    %417 = tpu.matmul %262, %416, %cst_159 {dimension_numbers = #tpu.dot_dimension_numbers<[1], [0], [0], [1], [0, 0, 1, 1], [], []>} : vector<16x64xf32>, vector<64x16xf32>, vector<16x16xf32> -> vector<16x16xf32>
    %418 = vector.extract_strided_slice %274 {offsets = [3, 0, 0], sizes = [1, 1, 16], strides = [1, 1, 1]} : vector<4x1x16xf32> to vector<1x1x16xf32>
    %419 = vector.shape_cast %418 : vector<1x1x16xf32> to vector<1x16xf32>
    %420 = vector.broadcast %419 : vector<1x16xf32> to vector<16x16xf32>
    %421 = arith.addf %417, %420 : vector<16x16xf32>
    %422 = vector.shape_cast %407 : vector<16x16xf32> to vector<2x8x16xf32>
    %423 = vector.shape_cast %414 : vector<16x16xf32> to vector<2x8x16xf32>
    %424 = vector.shape_cast %421 : vector<16x16xf32> to vector<2x8x16xf32>
    "tpu.trace_start"() <{level = 10 : i32, message = "bqd,bkd->bqk"}> : () -> ()
    %cst_160 = arith.constant dense<0.000000e+00> : vector<2x8x8xf32>
    %425 = tpu.matmul %422, %423, %cst_160 {dimension_numbers = #tpu.dot_dimension_numbers<[2], [2], [1], [1], [0, 0, 0, 1, 1, 1], [0], [0]>} : vector<2x8x16xf32>, vector<2x8x16xf32>, vector<2x8x8xf32> -> vector<2x8x8xf32>
    "tpu.trace_stop"() : () -> ()
    %cst_161 = arith.constant dense<0xFF800000> : vector<2x8xf32>
    %426 = vector.multi_reduction <maximumf>, %425, %cst_161 [2] : vector<2x8x8xf32> to vector<2x8xf32>
    %427 = vector.shape_cast %426 : vector<2x8xf32> to vector<2x8x1xf32>
    %428 = vector.broadcast %427 : vector<2x8x1xf32> to vector<2x8x8xf32>
    %429 = arith.subf %425, %428 : vector<2x8x8xf32>
    %430 = math.exp %429 : vector<2x8x8xf32>
    %cst_162 = arith.constant dense<0.000000e+00> : vector<2x8xf32>
    %431 = vector.multi_reduction <add>, %430, %cst_162 [2] : vector<2x8x8xf32> to vector<2x8xf32>
    %432 = vector.shape_cast %431 : vector<2x8xf32> to vector<2x8x1xf32>
    %433 = tpu.reciprocal %432 {approx = true} : vector<2x8x1xf32> -> vector<2x8x1xf32>
    %434 = vector.broadcast %433 : vector<2x8x1xf32> to vector<2x8x8xf32>
    %435 = arith.mulf %430, %434 : vector<2x8x8xf32>
    "tpu.trace_start"() <{level = 10 : i32, message = "bqk,bkd->bqd"}> : () -> ()
    %cst_163 = arith.constant dense<0.000000e+00> : vector<2x8x16xf32>
    %436 = tpu.matmul %435, %424, %cst_163 {dimension_numbers = #tpu.dot_dimension_numbers<[2], [1], [1], [2], [0, 0, 0, 1, 1, 2], [0], [0]>} : vector<2x8x8xf32>, vector<2x8x16xf32>, vector<2x8x16xf32> -> vector<2x8x16xf32>
    "tpu.trace_stop"() : () -> ()
    %437 = vector.shape_cast %436 : vector<2x8x16xf32> to vector<16x16xf32>
    %438 = vector.extract_strided_slice %276 {offsets = [3, 0, 0], sizes = [1, 16, 64], strides = [1, 1, 1]} : vector<4x16x64xf32> to vector<1x16x64xf32>
    %439 = vector.shape_cast %438 : vector<1x16x64xf32> to vector<16x64xf32>
    %cst_164 = arith.constant dense<0.000000e+00> : vector<16x64xf32>
    %440 = tpu.matmul %437, %439, %cst_164 {dimension_numbers = #tpu.dot_dimension_numbers<[1], [0], [0], [1], [0, 0, 1, 1], [], []>} : vector<16x16xf32>, vector<16x64xf32>, vector<16x64xf32> -> vector<16x64xf32>
    %441 = arith.addf %400, %440 : vector<16x64xf32>
    %c1_165 = arith.constant 1 : index
    %c0_166 = arith.constant 0 : index
    %c0_167 = arith.constant 0 : index
    %442 = vector.load %arg11[%c1_165, %c0_166, %c0_167] : memref<2x1x64xf32, #tpu.memory_space<vmem>>, vector<1x1x64xf32>
    %443 = vector.shape_cast %442 : vector<1x1x64xf32> to vector<1x64xf32>
    %444 = vector.broadcast %443 : vector<1x64xf32> to vector<16x64xf32>
    %445 = arith.addf %441, %444 : vector<16x64xf32>
    %446 = arith.addf %262, %445 : vector<16x64xf32>
    %c1_168 = arith.constant 1 : index
    %c0_169 = arith.constant 0 : index
    %c0_170 = arith.constant 0 : index
    %447 = vector.load %arg12[%c1_168, %c0_169, %c0_170] : memref<2x1x64xf32, #tpu.memory_space<vmem>>, vector<1x1x64xf32>
    %448 = vector.shape_cast %447 : vector<1x1x64xf32> to vector<1x64xf32>
    %c1_171 = arith.constant 1 : index
    %c0_172 = arith.constant 0 : index
    %c0_173 = arith.constant 0 : index
    %449 = vector.load %arg13[%c1_171, %c0_172, %c0_173] : memref<2x1x64xf32, #tpu.memory_space<vmem>>, vector<1x1x64xf32>
    %450 = vector.shape_cast %449 : vector<1x1x64xf32> to vector<1x64xf32>
    %cst_174 = arith.constant dense<0.000000e+00> : vector<16xf32>
    %451 = vector.multi_reduction <add>, %446, %cst_174 [1] : vector<16x64xf32> to vector<16xf32>
    %452 = vector.shape_cast %451 : vector<16xf32> to vector<16x1xf32>
    %cst_175 = arith.constant 6.400000e+01 : f32
    %453 = vector.broadcast %cst_175 : f32 to vector<16x1xf32>
    %454 = arith.divf %452, %453 : vector<16x1xf32>
    %455 = vector.broadcast %454 : vector<16x1xf32> to vector<16x64xf32>
    %456 = arith.subf %446, %455 : vector<16x64xf32>
    %457 = arith.mulf %456, %456 : vector<16x64xf32>
    %cst_176 = arith.constant dense<0.000000e+00> : vector<16xf32>
    %458 = vector.multi_reduction <add>, %457, %cst_176 [1] : vector<16x64xf32> to vector<16xf32>
    %459 = vector.shape_cast %458 : vector<16xf32> to vector<16x1xf32>
    %cst_177 = arith.constant 6.400000e+01 : f32
    %460 = vector.broadcast %cst_177 : f32 to vector<16x1xf32>
    %461 = arith.divf %459, %460 : vector<16x1xf32>
    %462 = vector.broadcast %454 : vector<16x1xf32> to vector<16x64xf32>
    %463 = arith.subf %446, %462 : vector<16x64xf32>
    %cst_178 = arith.constant 9.99999974E-6 : f32
    %464 = vector.broadcast %cst_178 : f32 to vector<16x1xf32>
    %465 = arith.addf %461, %464 : vector<16x1xf32>
    %466 = math.rsqrt %465 : vector<16x1xf32>
    %467 = vector.broadcast %466 : vector<16x1xf32> to vector<16x64xf32>
    %468 = arith.mulf %463, %467 : vector<16x64xf32>
    %469 = vector.broadcast %448 : vector<1x64xf32> to vector<16x64xf32>
    %470 = arith.mulf %468, %469 : vector<16x64xf32>
    %471 = vector.broadcast %450 : vector<1x64xf32> to vector<16x64xf32>
    %472 = arith.addf %470, %471 : vector<16x64xf32>
    %473 = arith.truncf %472 : vector<16x64xf32> to vector<16x64xbf16>
    %c1_179 = arith.constant 1 : index
    %c0_180 = arith.constant 0 : index
    %c0_181 = arith.constant 0 : index
    %474 = vector.load %arg14[%c1_179, %c0_180, %c0_181] : memref<2x64x2048xbf16, #tpu.memory_space<vmem>>, vector<1x64x2048xbf16>
    %475 = vector.shape_cast %474 : vector<1x64x2048xbf16> to vector<64x2048xbf16>
    %cst_182 = arith.constant dense<0.000000e+00> : vector<16x2048xf32>
    %476 = tpu.matmul %473, %475, %cst_182 {dimension_numbers = #tpu.dot_dimension_numbers<[1], [0], [0], [1], [0, 0, 1, 1], [], []>} : vector<16x64xbf16>, vector<64x2048xbf16>, vector<16x2048xf32> -> vector<16x2048xf32>
    %c1_183 = arith.constant 1 : index
    %c0_184 = arith.constant 0 : index
    %c0_185 = arith.constant 0 : index
    %477 = vector.load %arg15[%c1_183, %c0_184, %c0_185] : memref<2x1x2048xf32, #tpu.memory_space<vmem>>, vector<1x1x2048xf32>
    %478 = vector.shape_cast %477 : vector<1x1x2048xf32> to vector<1x2048xf32>
    %479 = vector.broadcast %478 : vector<1x2048xf32> to vector<16x2048xf32>
    %480 = arith.addf %476, %479 : vector<16x2048xf32>
    %cst_186 = arith.constant 0.000000e+00 : f32
    %481 = vector.broadcast %cst_186 : f32 to vector<16x2048xf32>
    %482 = arith.maximumf %480, %481 : vector<16x2048xf32>
    %483 = arith.truncf %482 : vector<16x2048xf32> to vector<16x2048xbf16>
    %c1_187 = arith.constant 1 : index
    %c0_188 = arith.constant 0 : index
    %c0_189 = arith.constant 0 : index
    %484 = vector.load %arg16[%c1_187, %c0_188, %c0_189] : memref<2x2048x64xbf16, #tpu.memory_space<vmem>>, vector<1x2048x64xbf16>
    %485 = vector.shape_cast %484 : vector<1x2048x64xbf16> to vector<2048x64xbf16>
    %cst_190 = arith.constant dense<0.000000e+00> : vector<16x64xf32>
    %486 = tpu.matmul %483, %485, %cst_190 {dimension_numbers = #tpu.dot_dimension_numbers<[1], [0], [0], [1], [0, 0, 1, 1], [], []>} : vector<16x2048xbf16>, vector<2048x64xbf16>, vector<16x64xf32> -> vector<16x64xf32>
    %c1_191 = arith.constant 1 : index
    %c0_192 = arith.constant 0 : index
    %c0_193 = arith.constant 0 : index
    %487 = vector.load %arg17[%c1_191, %c0_192, %c0_193] : memref<2x1x64xf32, #tpu.memory_space<vmem>>, vector<1x1x64xf32>
    %488 = vector.shape_cast %487 : vector<1x1x64xf32> to vector<1x64xf32>
    %489 = vector.broadcast %488 : vector<1x64xf32> to vector<16x64xf32>
    %490 = arith.addf %486, %489 : vector<16x64xf32>
    %491 = arith.addf %472, %490 : vector<16x64xf32>
    %c1_194 = arith.constant 1 : index
    %c0_195 = arith.constant 0 : index
    %c0_196 = arith.constant 0 : index
    %492 = vector.load %arg18[%c1_194, %c0_195, %c0_196] : memref<2x1x64xf32, #tpu.memory_space<vmem>>, vector<1x1x64xf32>
    %493 = vector.shape_cast %492 : vector<1x1x64xf32> to vector<1x64xf32>
    %c1_197 = arith.constant 1 : index
    %c0_198 = arith.constant 0 : index
    %c0_199 = arith.constant 0 : index
    %494 = vector.load %arg19[%c1_197, %c0_198, %c0_199] : memref<2x1x64xf32, #tpu.memory_space<vmem>>, vector<1x1x64xf32>
    %495 = vector.shape_cast %494 : vector<1x1x64xf32> to vector<1x64xf32>
    %cst_200 = arith.constant dense<0.000000e+00> : vector<16xf32>
    %496 = vector.multi_reduction <add>, %491, %cst_200 [1] : vector<16x64xf32> to vector<16xf32>
    %497 = vector.shape_cast %496 : vector<16xf32> to vector<16x1xf32>
    %cst_201 = arith.constant 6.400000e+01 : f32
    %498 = vector.broadcast %cst_201 : f32 to vector<16x1xf32>
    %499 = arith.divf %497, %498 : vector<16x1xf32>
    %500 = vector.broadcast %499 : vector<16x1xf32> to vector<16x64xf32>
    %501 = arith.subf %491, %500 : vector<16x64xf32>
    %502 = arith.mulf %501, %501 : vector<16x64xf32>
    %cst_202 = arith.constant dense<0.000000e+00> : vector<16xf32>
    %503 = vector.multi_reduction <add>, %502, %cst_202 [1] : vector<16x64xf32> to vector<16xf32>
    %504 = vector.shape_cast %503 : vector<16xf32> to vector<16x1xf32>
    %cst_203 = arith.constant 6.400000e+01 : f32
    %505 = vector.broadcast %cst_203 : f32 to vector<16x1xf32>
    %506 = arith.divf %504, %505 : vector<16x1xf32>
    %507 = vector.broadcast %499 : vector<16x1xf32> to vector<16x64xf32>
    %508 = arith.subf %491, %507 : vector<16x64xf32>
    %cst_204 = arith.constant 9.99999974E-6 : f32
    %509 = vector.broadcast %cst_204 : f32 to vector<16x1xf32>
    %510 = arith.addf %506, %509 : vector<16x1xf32>
    %511 = math.rsqrt %510 : vector<16x1xf32>
    %512 = vector.broadcast %511 : vector<16x1xf32> to vector<16x64xf32>
    %513 = arith.mulf %508, %512 : vector<16x64xf32>
    %514 = vector.broadcast %493 : vector<1x64xf32> to vector<16x64xf32>
    %515 = arith.mulf %513, %514 : vector<16x64xf32>
    %516 = vector.broadcast %495 : vector<1x64xf32> to vector<16x64xf32>
    %517 = arith.addf %515, %516 : vector<16x64xf32>
    %518 = vector.shape_cast %517 : vector<16x64xf32> to vector<2x8x64xf32>
    %cst_205 = arith.constant dense<0.000000e+00> : vector<2x64xf32>
    %519 = vector.multi_reduction <add>, %518, %cst_205 [1] : vector<2x8x64xf32> to vector<2x64xf32>
    %cst_206 = arith.constant 8.000000e+00 : f32
    %520 = vector.broadcast %cst_206 : f32 to vector<2x64xf32>
    %521 = arith.divf %519, %520 : vector<2x64xf32>
    %c0_207 = arith.constant 0 : index
    %c0_208 = arith.constant 0 : index
    %522 = vector.load %arg20[%c0_207, %c0_208] : memref<1x64xf32, #tpu.memory_space<vmem>>, vector<1x64xf32>
    %523 = vector.broadcast %522 : vector<1x64xf32> to vector<2x64xf32>
    %524 = arith.mulf %521, %523 : vector<2x64xf32>
    %cst_209 = arith.constant dense<0.000000e+00> : vector<2xf32>
    %525 = vector.multi_reduction <add>, %524, %cst_209 [1] : vector<2x64xf32> to vector<2xf32>
    %526 = vector.shape_cast %525 : vector<2xf32> to vector<2x1xf32>
    %c0_210 = arith.constant 0 : index
    %c0_211 = arith.constant 0 : index
    %527 = vector.load %arg21[%c0_210, %c0_211] : memref<1x1xf32, #tpu.memory_space<vmem>>, vector<1x1xf32>
    %528 = vector.broadcast %527 : vector<1x1xf32> to vector<2x1xf32>
    %529 = arith.addf %526, %528 : vector<2x1xf32>
    %c0_212 = arith.constant 0 : index
    %c0_213 = arith.constant 0 : index
    %530 = vector.load %arg22[%c0_212, %c0_213] : memref<2x1xf32, #tpu.memory_space<vmem>>, vector<2x1xf32>
    tpu.vector_store %arg22[%c0_212, %c0_213], %529 {strides = array<i32>} : memref<2x1xf32, #tpu.memory_space<vmem>>, vector<2x1xf32>,
    return
  }
  func.func @transform_0(%arg0: i32) -> (i32, i32) {
    %c0_i32 = arith.constant 0 : i32
    %c0_i32_0 = arith.constant 0 : i32
    return %arg0, %c0_i32 : i32, i32
  }
  func.func @transform_1(%arg0: i32) -> (i32, i32) {
    %c0_i32 = arith.constant 0 : i32
    %c0_i32_0 = arith.constant 0 : i32
    %c0_i32_1 = arith.constant 0 : i32
    return %c0_i32, %c0_i32_0 : i32, i32
  }
  func.func @transform_2(%arg0: i32) -> (i32, i32) {
    %c0_i32 = arith.constant 0 : i32
    %c0_i32_0 = arith.constant 0 : i32
    %c0_i32_1 = arith.constant 0 : i32
    return %c0_i32, %c0_i32_0 : i32, i32
  }
  func.func @transform_3(%arg0: i32) -> (i32, i32, i32, i32) {
    %c0_i32 = arith.constant 0 : i32
    %c0_i32_0 = arith.constant 0 : i32
    %c0_i32_1 = arith.constant 0 : i32
    %c0_i32_2 = arith.constant 0 : i32
    %c0_i32_3 = arith.constant 0 : i32
    return %c0_i32, %c0_i32_0, %c0_i32_1, %c0_i32_2 : i32, i32, i32, i32
  }
  func.func @transform_4(%arg0: i32) -> (i32, i32, i32, i32) {
    %c0_i32 = arith.constant 0 : i32
    %c0_i32_0 = arith.constant 0 : i32
    %c0_i32_1 = arith.constant 0 : i32
    %c0_i32_2 = arith.constant 0 : i32
    %c0_i32_3 = arith.constant 0 : i32
    return %c0_i32, %c0_i32_0, %c0_i32_1, %c0_i32_2 : i32, i32, i32, i32
  }
  func.func @transform_5(%arg0: i32) -> (i32, i32, i32, i32) {
    %c0_i32 = arith.constant 0 : i32
    %c0_i32_0 = arith.constant 0 : i32
    %c0_i32_1 = arith.constant 0 : i32
    %c0_i32_2 = arith.constant 0 : i32
    %c0_i32_3 = arith.constant 0 : i32
    return %c0_i32, %c0_i32_0, %c0_i32_1, %c0_i32_2 : i32, i32, i32, i32
  }
  func.func @transform_6(%arg0: i32) -> (i32, i32, i32, i32) {
    %c0_i32 = arith.constant 0 : i32
    %c0_i32_0 = arith.constant 0 : i32
    %c0_i32_1 = arith.constant 0 : i32
    %c0_i32_2 = arith.constant 0 : i32
    %c0_i32_3 = arith.constant 0 : i32
    return %c0_i32, %c0_i32_0, %c0_i32_1, %c0_i32_2 : i32, i32, i32, i32
  }
  func.func @transform_7(%arg0: i32) -> (i32, i32, i32, i32) {
    %c0_i32 = arith.constant 0 : i32
    %c0_i32_0 = arith.constant 0 : i32
    %c0_i32_1 = arith.constant 0 : i32
    %c0_i32_2 = arith.constant 0 : i32
    %c0_i32_3 = arith.constant 0 : i32
    return %c0_i32, %c0_i32_0, %c0_i32_1, %c0_i32_2 : i32, i32, i32, i32
  }
  func.func @transform_8(%arg0: i32) -> (i32, i32, i32, i32) {
    %c0_i32 = arith.constant 0 : i32
    %c0_i32_0 = arith.constant 0 : i32
    %c0_i32_1 = arith.constant 0 : i32
    %c0_i32_2 = arith.constant 0 : i32
    %c0_i32_3 = arith.constant 0 : i32
    return %c0_i32, %c0_i32_0, %c0_i32_1, %c0_i32_2 : i32, i32, i32, i32
  }
  func.func @transform_9(%arg0: i32) -> (i32, i32, i32, i32) {
    %c0_i32 = arith.constant 0 : i32
    %c0_i32_0 = arith.constant 0 : i32
    %c0_i32_1 = arith.constant 0 : i32
    %c0_i32_2 = arith.constant 0 : i32
    %c0_i32_3 = arith.constant 0 : i32
    return %c0_i32, %c0_i32_0, %c0_i32_1, %c0_i32_2 : i32, i32, i32, i32
  }
  func.func @transform_10(%arg0: i32) -> (i32, i32, i32) {
    %c0_i32 = arith.constant 0 : i32
    %c0_i32_0 = arith.constant 0 : i32
    %c0_i32_1 = arith.constant 0 : i32
    %c0_i32_2 = arith.constant 0 : i32
    return %c0_i32, %c0_i32_0, %c0_i32_1 : i32, i32, i32
  }
  func.func @transform_11(%arg0: i32) -> (i32, i32, i32) {
    %c0_i32 = arith.constant 0 : i32
    %c0_i32_0 = arith.constant 0 : i32
    %c0_i32_1 = arith.constant 0 : i32
    %c0_i32_2 = arith.constant 0 : i32
    return %c0_i32, %c0_i32_0, %c0_i32_1 : i32, i32, i32
  }
  func.func @transform_12(%arg0: i32) -> (i32, i32, i32) {
    %c0_i32 = arith.constant 0 : i32
    %c0_i32_0 = arith.constant 0 : i32
    %c0_i32_1 = arith.constant 0 : i32
    %c0_i32_2 = arith.constant 0 : i32
    return %c0_i32, %c0_i32_0, %c0_i32_1 : i32, i32, i32
  }
  func.func @transform_13(%arg0: i32) -> (i32, i32, i32) {
    %c0_i32 = arith.constant 0 : i32
    %c0_i32_0 = arith.constant 0 : i32
    %c0_i32_1 = arith.constant 0 : i32
    %c0_i32_2 = arith.constant 0 : i32
    return %c0_i32, %c0_i32_0, %c0_i32_1 : i32, i32, i32
  }
  func.func @transform_14(%arg0: i32) -> (i32, i32, i32) {
    %c0_i32 = arith.constant 0 : i32
    %c0_i32_0 = arith.constant 0 : i32
    %c0_i32_1 = arith.constant 0 : i32
    %c0_i32_2 = arith.constant 0 : i32
    return %c0_i32, %c0_i32_0, %c0_i32_1 : i32, i32, i32
  }
  func.func @transform_15(%arg0: i32) -> (i32, i32, i32) {
    %c0_i32 = arith.constant 0 : i32
    %c0_i32_0 = arith.constant 0 : i32
    %c0_i32_1 = arith.constant 0 : i32
    %c0_i32_2 = arith.constant 0 : i32
    return %c0_i32, %c0_i32_0, %c0_i32_1 : i32, i32, i32
  }
  func.func @transform_16(%arg0: i32) -> (i32, i32, i32) {
    %c0_i32 = arith.constant 0 : i32
    %c0_i32_0 = arith.constant 0 : i32
    %c0_i32_1 = arith.constant 0 : i32
    %c0_i32_2 = arith.constant 0 : i32
    return %c0_i32, %c0_i32_0, %c0_i32_1 : i32, i32, i32
  }
  func.func @transform_17(%arg0: i32) -> (i32, i32, i32) {
    %c0_i32 = arith.constant 0 : i32
    %c0_i32_0 = arith.constant 0 : i32
    %c0_i32_1 = arith.constant 0 : i32
    %c0_i32_2 = arith.constant 0 : i32
    return %c0_i32, %c0_i32_0, %c0_i32_1 : i32, i32, i32
  }
  func.func @transform_18(%arg0: i32) -> (i32, i32, i32) {
    %c0_i32 = arith.constant 0 : i32
    %c0_i32_0 = arith.constant 0 : i32
    %c0_i32_1 = arith.constant 0 : i32
    %c0_i32_2 = arith.constant 0 : i32
    return %c0_i32, %c0_i32_0, %c0_i32_1 : i32, i32, i32
  }
  func.func @transform_19(%arg0: i32) -> (i32, i32) {
    %c0_i32 = arith.constant 0 : i32
    %c0_i32_0 = arith.constant 0 : i32
    %c0_i32_1 = arith.constant 0 : i32
    return %c0_i32, %c0_i32_0 : i32, i32
  }
  func.func @transform_20(%arg0: i32) -> (i32, i32) {
    %c0_i32 = arith.constant 0 : i32
    %c0_i32_0 = arith.constant 0 : i32
    %c0_i32_1 = arith.constant 0 : i32
    return %c0_i32, %c0_i32_0 : i32, i32
  }
  func.func @transform_21(%arg0: i32) -> (i32, i32) {
    %c0_i32 = arith.constant 0 : i32
    %c0_i32_0 = arith.constant 0 : i32
    return %arg0, %c0_i32 : i32, i32
  }
}

</mosaic_0001>

<llo_original>
// kernel: transformer_forward.1
$region0: #{transformer_forward.1}
  #allocation0 [shape = 'u32[]', space=smem, size = 0x4, offset = 0x4, fixed_abs, tag = 'smem constant byte address 0x4 - core index']
  #allocation1 [shape = 'u32[72,128]{1,0:T(1,128)}', space=vmem, size = 0x9000, scoped, tag = 'internal scratch']
  #allocation2 [shape = 'f32[1,1]{1,0:T(1,128)S(1)}', space=vmem, size = 0x200, scoped, tag = 'scoped memory for transformer_forward.1']
  %s0 = inlined_call_operand.vmem [shape: f32[16,1], index: 0, kind: input, shape index: {}]
  %s1 = inlined_call_operand.vmem [shape: f32[1,64], index: 1, kind: input, shape index: {}]
  %s2 = inlined_call_operand.vmem [shape: f32[1,64], index: 2, kind: input, shape index: {}]
  %s3 = inlined_call_operand.vmem [shape: f32[2,4,64,16], index: 3, kind: input, shape index: {}]
  %s4 = inlined_call_operand.vmem [shape: f32[2,4,1,16], index: 4, kind: input, shape index: {}]
  %s5 = inlined_call_operand.vmem [shape: f32[2,4,64,16], index: 5, kind: input, shape index: {}]
  %s6 = inlined_call_operand.vmem [shape: f32[2,4,1,16], index: 6, kind: input, shape index: {}]
  %s7 = inlined_call_operand.vmem [shape: f32[2,4,64,16], index: 7, kind: input, shape index: {}]
  %s8 = inlined_call_operand.vmem [shape: f32[2,4,1,16], index: 8, kind: input, shape index: {}]
  %s9 = inlined_call_operand.vmem [shape: f32[2,4,16,64], index: 9, kind: input, shape index: {}]
  %s10 = inlined_call_operand.vmem [shape: f32[2,1,64], index: 10, kind: input, shape index: {}]
  %s11 = inlined_call_operand.vmem [shape: f32[2,1,64], index: 11, kind: input, shape index: {}]
  %s12 = inlined_call_operand.vmem [shape: f32[2,1,64], index: 12, kind: input, shape index: {}]
  %s13 = inlined_call_operand.vmem [shape: bf16[2,64,2048], index: 13, kind: input, shape index: {}]
  %s14 = inlined_call_operand.vmem [shape: f32[2,1,2048], index: 14, kind: input, shape index: {}]
  %s15 = inlined_call_operand.vmem [shape: bf16[2,2048,64], index: 15, kind: input, shape index: {}]
  %s16 = inlined_call_operand.vmem [shape: f32[2,1,64], index: 16, kind: input, shape index: {}]
  %s17 = inlined_call_operand.vmem [shape: f32[2,1,64], index: 17, kind: input, shape index: {}]
  %s18 = inlined_call_operand.vmem [shape: f32[2,1,64], index: 18, kind: input, shape index: {}]
  %s19 = inlined_call_operand.vmem [shape: f32[1,64], index: 19, kind: input, shape index: {}]
  %s20 = inlined_call_operand.<no memory space> [shape: f32[1,1], index: 20, kind: input, shape index: {}]
  %s21 = inlined_call_operand.vmem [shape: f32[2,1], index: 21, kind: output, shape index: {}]
  %s22 = sld [smem:[#allocation0]]
  $region94: #{transformer_forward.1} parent=0
    _
  %s24 = ssub.s32 1, %s22
  %s25 = scalar_select 0, %s24, %s22
  %v26 = vstv %s20
  %27 = vst [vmem:[#allocation2] sm:$0x1] %v26
  // Predicated region
  $region2: #{transformer_forward.1} parent=0 // pred_check
    _
  $region3: #{transformer_forward.1} parent=0 // pred_check_branch
    %29 = sbr.rel (0) target = $region5
  $region4: #{transformer_forward.1} parent=0 // pred_region
    _
  $region5: #{transformer_forward.1} parent=0 // pred_fallthru
    _
  // Predicated region
  $region6: #{transformer_forward.1} parent=0 // pred_check
    _
  $region7: #{transformer_forward.1} parent=0 // pred_check_branch
    %31 = sbr.rel (0) target = $region9
  $region8: #{transformer_forward.1} parent=0 // pred_region
    _
  $region9: #{transformer_forward.1} parent=0 // pred_fallthru
    _
  // Predicated region
  $region10: #{transformer_forward.1} parent=0 // pred_check
    _
  $region11: #{transformer_forward.1} parent=0 // pred_check_branch
    %33 = sbr.rel (0) target = $region13
  $region12: #{transformer_forward.1} parent=0 // pred_region
    _
  $region13: #{transformer_forward.1} parent=0 // pred_fallthru
    _
  // Predicated region
  $region14: #{transformer_forward.1} parent=0 // pred_check
    _
  $region15: #{transformer_forward.1} parent=0 // pred_check_branch
    %35 = sbr.rel (0) target = $region17
  $region16: #{transformer_forward.1} parent=0 // pred_region
    _
  $region17: #{transformer_forward.1} parent=0 // pred_fallthru
    _
  // Predicated region
  $region18: #{transformer_forward.1} parent=0 // pred_check
    _
  $region19: #{transformer_forward.1} parent=0 // pred_check_branch
    %37 = sbr.rel (0) target = $region21
  $region20: #{transformer_forward.1} parent=0 // pred_region
    _
  $region21: #{transformer_forward.1} parent=0 // pred_fallthru
    _
  // Predicated region
  $region22: #{transformer_forward.1} parent=0 // pred_check
    _
  $region23: #{transformer_forward.1} parent=0 // pred_check_branch
    %39 = sbr.rel (0) target = $region25
  $region24: #{transformer_forward.1} parent=0 // pred_region
    _
  $region25: #{transformer_forward.1} parent=0 // pred_fallthru
    _
  // Predicated region
  $region26: #{transformer_forward.1} parent=0 // pred_check
    _
  $region27: #{transformer_forward.1} parent=0 // pred_check_branch
    %41 = sbr.rel (0) target = $region29
  $region28: #{transformer_forward.1} parent=0 // pred_region
    _
  $region29: #{transformer_forward.1} parent=0 // pred_fallthru
    _
  // Predicated region
  $region30: #{transformer_forward.1} parent=0 // pred_check
    _
  $region31: #{transformer_forward.1} parent=0 // pred_check_branch
    %43 = sbr.rel (0) target = $region33
  $region32: #{transformer_forward.1} parent=0 // pred_region
    _
  $region33: #{transformer_forward.1} parent=0 // pred_fallthru
    _
  // Predicated region
  $region34: #{transformer_forward.1} parent=0 // pred_check
    _
  $region35: #{transformer_forward.1} parent=0 // pred_check_branch
    %45 = sbr.rel (0) target = $region37
  $region36: #{transformer_forward.1} parent=0 // pred_region
    _
  $region37: #{transformer_forward.1} parent=0 // pred_fallthru
    _
  // Predicated region
  $region38: #{transformer_forward.1} parent=0 // pred_check
    _
  $region39: #{transformer_forward.1} parent=0 // pred_check_branch
    %47 = sbr.rel (0) target = $region41
  $region40: #{transformer_forward.1} parent=0 // pred_region
    _
  $region41: #{transformer_forward.1} parent=0 // pred_fallthru
    _
  // Predicated region
  $region42: #{transformer_forward.1} parent=0 // pred_check
    _
  $region43: #{transformer_forward.1} parent=0 // pred_check_branch
    %49 = sbr.rel (0) target = $region45
  $region44: #{transformer_forward.1} parent=0 // pred_region
    _
  $region45: #{transformer_forward.1} parent=0 // pred_fallthru
    _
  // Predicated region
  $region46: #{transformer_forward.1} parent=0 // pred_check
    _
  $region47: #{transformer_forward.1} parent=0 // pred_check_branch
    %51 = sbr.rel (0) target = $region49
  $region48: #{transformer_forward.1} parent=0 // pred_region
    _
  $region49: #{transformer_forward.1} parent=0 // pred_fallthru
    _
  // Predicated region
  $region50: #{transformer_forward.1} parent=0 // pred_check
    _
  $region51: #{transformer_forward.1} parent=0 // pred_check_branch
    %53 = sbr.rel (0) target = $region53
  $region52: #{transformer_forward.1} parent=0 // pred_region
    _
  $region53: #{transformer_forward.1} parent=0 // pred_fallthru
    _
  // Predicated region
  $region54: #{transformer_forward.1} parent=0 // pred_check
    _
  $region55: #{transformer_forward.1} parent=0 // pred_check_branch
    %55 = sbr.rel (0) target = $region57
  $region56: #{transformer_forward.1} parent=0 // pred_region
    _
  $region57: #{transformer_forward.1} parent=0 // pred_fallthru
    _
  // Predicated region
  $region58: #{transformer_forward.1} parent=0 // pred_check
    _
  $region59: #{transformer_forward.1} parent=0 // pred_check_branch
    %57 = sbr.rel (0) target = $region61
  $region60: #{transformer_forward.1} parent=0 // pred_region
    _
  $region61: #{transformer_forward.1} parent=0 // pred_fallthru
    _
  // Predicated region
  $region62: #{transformer_forward.1} parent=0 // pred_check
    _
  $region63: #{transformer_forward.1} parent=0 // pred_check_branch
    %59 = sbr.rel (0) target = $region65
  $region64: #{transformer_forward.1} parent=0 // pred_region
    _
  $region65: #{transformer_forward.1} parent=0 // pred_fallthru
    _
  // Predicated region
  $region66: #{transformer_forward.1} parent=0 // pred_check
    _
  $region67: #{transformer_forward.1} parent=0 // pred_check_branch
    %61 = sbr.rel (0) target = $region69
  $region68: #{transformer_forward.1} parent=0 // pred_region
    _
  $region69: #{transformer_forward.1} parent=0 // pred_fallthru
    _
  // Predicated region
  $region70: #{transformer_forward.1} parent=0 // pred_check
    _
  $region71: #{transformer_forward.1} parent=0 // pred_check_branch
    %63 = sbr.rel (0) target = $region73
  $region72: #{transformer_forward.1} parent=0 // pred_region
    _
  $region73: #{transformer_forward.1} parent=0 // pred_fallthru
    _
  // Predicated region
  $region74: #{transformer_forward.1} parent=0 // pred_check
    _
  $region75: #{transformer_forward.1} parent=0 // pred_check_branch
    %65 = sbr.rel (0) target = $region77
  $region76: #{transformer_forward.1} parent=0 // pred_region
    _
  $region77: #{transformer_forward.1} parent=0 // pred_fallthru
    _
  // Predicated region
  $region78: #{transformer_forward.1} parent=0 // pred_check
    _
  $region79: #{transformer_forward.1} parent=0 // pred_check_branch
    %67 = sbr.rel (0) target = $region81
  $region80: #{transformer_forward.1} parent=0 // pred_region
    _
  $region81: #{transformer_forward.1} parent=0 // pred_fallthru
    _
  // Predicated region
  $region82: #{transformer_forward.1} parent=0 // pred_check
    _
  $region83: #{transformer_forward.1} parent=0 // pred_check_branch
    %69 = sbr.rel (0) target = $region85
  $region84: #{transformer_forward.1} parent=0 // pred_region
    _
  $region85: #{transformer_forward.1} parent=0 // pred_fallthru
    _
  %v71 = vld [vmem:[%s0] sm:$0xff]
  %v72 = vld [vmem:[%s0 + $0x8] sm:$0xff]
  %v73 = vld [vmem:[%s1] sm:$0x1]
  %75 = vset.pattern.permute.xlu0 0
  %76 = vperm.xlu0 %75, %v71
  %v77 = vpop.permute.xlu0 %76
  %80 = vset.pattern.permute.xlu0 0
  %81 = vperm.xlu0 %80, %v72
  %v82 = vpop.permute.xlu0 %81
  %v85 = vperm.slane %v73, 0
  %v87 = vmul.f32 %v77, %v85
  %v88 = vmul.f32 %v82, %v85
  %v89 = vld [vmem:[%s2] sm:$0x1]
  %v91 = vperm.slane %v89, 0
  %v93 = vadd.f32 %v87, %v91
  %v94 = vadd.f32 %v88, %v91
  %v95 = vld [vmem:[%s3] sm:$0xff]
  %v96 = vld [vmem:[%s3 + $0x8] sm:$0xff]
  %v97 = vld [vmem:[%s3 + $0x10] sm:$0xff]
  %v98 = vld [vmem:[%s3 + $0x18] sm:$0xff]
  %v99 = vld [vmem:[%s3 + $0x20] sm:$0xff]
  %v100 = vld [vmem:[%s3 + $0x28] sm:$0xff]
  %v101 = vld [vmem:[%s3 + $0x30] sm:$0xff]
  %v102 = vld [vmem:[%s3 + $0x38] sm:$0xff]
  %v103 = vld [vmem:[%s3 + $0x40] sm:$0xff]
  %v104 = vld [vmem:[%s3 + $0x48] sm:$0xff]
  %v105 = vld [vmem:[%s3 + $0x50] sm:$0xff]
  %v106 = vld [vmem:[%s3 + $0x58] sm:$0xff]
  %v107 = vld [vmem:[%s3 + $0x60] sm:$0xff]
  %v108 = vld [vmem:[%s3 + $0x68] sm:$0xff]
  %v109 = vld [vmem:[%s3 + $0x70] sm:$0xff]
  %v110 = vld [vmem:[%s3 + $0x78] sm:$0xff]
  %v111 = vld [vmem:[%s3 + $0x80] sm:$0xff]
  %v112 = vld [vmem:[%s3 + $0x88] sm:$0xff]
  %v113 = vld [vmem:[%s3 + $0x90] sm:$0xff]
  %v114 = vld [vmem:[%s3 + $0x98] sm:$0xff]
  %v115 = vld [vmem:[%s3 + $0xa0] sm:$0xff]
  %v116 = vld [vmem:[%s3 + $0xa8] sm:$0xff]
  %v117 = vld [vmem:[%s3 + $0xb0] sm:$0xff]
  %v118 = vld [vmem:[%s3 + $0xb8] sm:$0xff]
  %v119 = vld [vmem:[%s3 + $0xc0] sm:$0xff]
  %v120 = vld [vmem:[%s3 + $0xc8] sm:$0xff]
  %v121 = vld [vmem:[%s3 + $0xd0] sm:$0xff]
  %v122 = vld [vmem:[%s3 + $0xd8] sm:$0xff]
  %v123 = vld [vmem:[%s3 + $0xe0] sm:$0xff]
  %v124 = vld [vmem:[%s3 + $0xe8] sm:$0xff]
  %v125 = vld [vmem:[%s3 + $0xf0] sm:$0xff]
  %v126 = vld [vmem:[%s3 + $0xf8] sm:$0xff]
  %v127 = vld [vmem:[%s4] sm:$0x1]
  %v128 = vld [vmem:[%s4 + $0x1] sm:$0x1]
  %v129 = vld [vmem:[%s4 + $0x2] sm:$0x1]
  %v130 = vld [vmem:[%s4 + $0x3] sm:$0x1]
  %v131 = vld [vmem:[%s5] sm:$0xff]
  %v132 = vld [vmem:[%s5 + $0x8] sm:$0xff]
  %v133 = vld [vmem:[%s5 + $0x10] sm:$0xff]
  %v134 = vld [vmem:[%s5 + $0x18] sm:$0xff]
  %v135 = vld [vmem:[%s5 + $0x20] sm:$0xff]
  %v136 = vld [vmem:[%s5 + $0x28] sm:$0xff]
  %v137 = vld [vmem:[%s5 + $0x30] sm:$0xff]
  %v138 = vld [vmem:[%s5 + $0x38] sm:$0xff]
  %v139 = vld [vmem:[%s5 + $0x40] sm:$0xff]
  %v140 = vld [vmem:[%s5 + $0x48] sm:$0xff]
  %v141 = vld [vmem:[%s5 + $0x50] sm:$0xff]
  %v142 = vld [vmem:[%s5 + $0x58] sm:$0xff]
  %v143 = vld [vmem:[%s5 + $0x60] sm:$0xff]
  %v144 = vld [vmem:[%s5 + $0x68] sm:$0xff]
  %v145 = vld [vmem:[%s5 + $0x70] sm:$0xff]
  %v146 = vld [vmem:[%s5 + $0x78] sm:$0xff]
  %v147 = vld [vmem:[%s5 + $0x80] sm:$0xff]
  %v148 = vld [vmem:[%s5 + $0x88] sm:$0xff]
  %v149 = vld [vmem:[%s5 + $0x90] sm:$0xff]
  %v150 = vld [vmem:[%s5 + $0x98] sm:$0xff]
  %v151 = vld [vmem:[%s5 + $0xa0] sm:$0xff]
  %v152 = vld [vmem:[%s5 + $0xa8] sm:$0xff]
  %v153 = vld [vmem:[%s5 + $0xb0] sm:$0xff]
  %v154 = vld [vmem:[%s5 + $0xb8] sm:$0xff]
  %v155 = vld [vmem:[%s5 + $0xc0] sm:$0xff]
  %v156 = vld [vmem:[%s5 + $0xc8] sm:$0xff]
  %v157 = vld [vmem:[%s5 + $0xd0] sm:$0xff]
  %v158 = vld [vmem:[%s5 + $0xd8] sm:$0xff]
  %v159 = vld [vmem:[%s5 + $0xe0] sm:$0xff]
  %v160 = vld [vmem:[%s5 + $0xe8] sm:$0xff]
  %v161 = vld [vmem:[%s5 + $0xf0] sm:$0xff]
  %v162 = vld [vmem:[%s5 + $0xf8] sm:$0xff]
  %v163 = vld [vmem:[%s6] sm:$0x1]
  %v164 = vld [vmem:[%s6 + $0x1] sm:$0x1]
  %v165 = vld [vmem:[%s6 + $0x2] sm:$0x1]
  %v166 = vld [vmem:[%s6 + $0x3] sm:$0x1]
  %v167 = vld [vmem:[%s7] sm:$0xff]
  %v168 = vld [vmem:[%s7 + $0x8] sm:$0xff]
  %v169 = vld [vmem:[%s7 + $0x10] sm:$0xff]
  %v170 = vld [vmem:[%s7 + $0x18] sm:$0xff]
  %v171 = vld [vmem:[%s7 + $0x20] sm:$0xff]
  %v172 = vld [vmem:[%s7 + $0x28] sm:$0xff]
  %v173 = vld [vmem:[%s7 + $0x30] sm:$0xff]
  %v174 = vld [vmem:[%s7 + $0x38] sm:$0xff]
  %v175 = vld [vmem:[%s7 + $0x40] sm:$0xff]
  %v176 = vld [vmem:[%s7 + $0x48] sm:$0xff]
  %v177 = vld [vmem:[%s7 + $0x50] sm:$0xff]
  %v178 = vld [vmem:[%s7 + $0x58] sm:$0xff]
  %v179 = vld [vmem:[%s7 + $0x60] sm:$0xff]
  %v180 = vld [vmem:[%s7 + $0x68] sm:$0xff]
  %v181 = vld [vmem:[%s7 + $0x70] sm:$0xff]
  %v182 = vld [vmem:[%s7 + $0x78] sm:$0xff]
  %v183 = vld [vmem:[%s7 + $0x80] sm:$0xff]
  %v184 = vld [vmem:[%s7 + $0x88] sm:$0xff]
  %v185 = vld [vmem:[%s7 + $0x90] sm:$0xff]
  %v186 = vld [vmem:[%s7 + $0x98] sm:$0xff]
  %v187 = vld [vmem:[%s7 + $0xa0] sm:$0xff]
  %v188 = vld [vmem:[%s7 + $0xa8] sm:$0xff]
  %v189 = vld [vmem:[%s7 + $0xb0] sm:$0xff]
  %v190 = vld [vmem:[%s7 + $0xb8] sm:$0xff]
  %v191 = vld [vmem:[%s7 + $0xc0] sm:$0xff]
  %v192 = vld [vmem:[%s7 + $0xc8] sm:$0xff]
  %v193 = vld [vmem:[%s7 + $0xd0] sm:$0xff]
  %v194 = vld [vmem:[%s7 + $0xd8] sm:$0xff]
  %v195 = vld [vmem:[%s7 + $0xe0] sm:$0xff]
  %v196 = vld [vmem:[%s7 + $0xe8] sm:$0xff]
  %v197 = vld [vmem:[%s7 + $0xf0] sm:$0xff]
  %v198 = vld [vmem:[%s7 + $0xf8] sm:$0xff]
  %v199 = vld [vmem:[%s8] sm:$0x1]
  %v200 = vld [vmem:[%s8 + $0x1] sm:$0x1]
  %v201 = vld [vmem:[%s8 + $0x2] sm:$0x1]
  %v202 = vld [vmem:[%s8 + $0x3] sm:$0x1]
  %v203 = vld [vmem:[%s9] sm:$0xff]
  %v204 = vld [vmem:[%s9 + $0x8] sm:$0xff]
  %v205 = vld [vmem:[%s9 + $0x10] sm:$0xff]
  %v206 = vld [vmem:[%s9 + $0x18] sm:$0xff]
  %v207 = vld [vmem:[%s9 + $0x20] sm:$0xff]
  %v208 = vld [vmem:[%s9 + $0x28] sm:$0xff]
  %v209 = vld [vmem:[%s9 + $0x30] sm:$0xff]
  %v210 = vld [vmem:[%s9 + $0x38] sm:$0xff]
  %v212 = vperm.slane %v127, 0
  %vm214 = vcmask 523264
  %v216 = vsel %vm214, %v93, 0
  %v219 = vsel %vm214, %v94, 0
  %221 = vmatpush.msra.mxu0 0.0
  %222 = vmatpush.msra.mxu0 0.0
  %223 = vmatpush.msra.mxu0 0.0
  %224 = vmatpush.msra.mxu0 0.0
  %225 = vmatpush.msra.mxu0 0.0
  %226 = vmatpush.msra.mxu0 0.0
  %227 = vmatpush.msra.mxu0 0.0
  %228 = vmatpush.msra.mxu0 0.0
  %229 = vmatpush.msra.mxu0 %v102
  %230 = vmatpush.msra.mxu0 %v101
  %231 = vmatpush.msra.mxu0 %v100
  %232 = vmatpush.msra.mxu0 %v99
  %233 = vmatpush.msra.mxu0 %v98
  %234 = vmatpush.msra.mxu0 %v97
  %235 = vmatpush.msra.mxu0 %v96
  %236 = vmatpush.msra.mxu0 %v95
  %237 = vmatmul.f32.gmra.mxu0 %v216
  %v238 = vpop.f32.mrf.mxu0
  %v239 = vadd.f32 %v212, %v238
  %240 = vmatmul.f32.gmra.mxu0 %v219
  %v241 = vpop.f32.mrf.mxu0
  %v242 = vadd.f32 %v212, %v241
  %243 = vdwg.mxu0
  %v245 = vperm.slane %v163, 0
  %247 = vmatpush.msra.mxu0 0.0
  %248 = vmatpush.msra.mxu0 0.0
  %249 = vmatpush.msra.mxu0 0.0
  %250 = vmatpush.msra.mxu0 0.0
  %251 = vmatpush.msra.mxu0 0.0
  %252 = vmatpush.msra.mxu0 0.0
  %253 = vmatpush.msra.mxu0 0.0
  %254 = vmatpush.msra.mxu0 0.0
  %255 = vmatpush.msra.mxu0 %v138
  %256 = vmatpush.msra.mxu0 %v137
  %257 = vmatpush.msra.mxu0 %v136
  %258 = vmatpush.msra.mxu0 %v135
  %259 = vmatpush.msra.mxu0 %v134
  %260 = vmatpush.msra.mxu0 %v133
  %261 = vmatpush.msra.mxu0 %v132
  %262 = vmatpush.msra.mxu0 %v131
  %263 = vmatmul.f32.gmra.mxu0 %v216
  %v264 = vpop.f32.mrf.mxu0
  %v265 = vadd.f32 %v245, %v264
  %266 = vmatmul.f32.gmra.mxu0 %v219
  %v267 = vpop.f32.mrf.mxu0
  %v268 = vadd.f32 %v245, %v267
  %269 = vdwg.mxu0
  %v271 = vperm.slane %v199, 0
  %273 = vmatpush.msra.mxu0 0.0
  %274 = vmatpush.msra.mxu0 0.0
  %275 = vmatpush.msra.mxu0 0.0
  %276 = vmatpush.msra.mxu0 0.0
  %277 = vmatpush.msra.mxu0 0.0
  %278 = vmatpush.msra.mxu0 0.0
  %279 = vmatpush.msra.mxu0 0.0
  %280 = vmatpush.msra.mxu0 0.0
  %281 = vmatpush.msra.mxu0 %v174
  %282 = vmatpush.msra.mxu0 %v173
  %283 = vmatpush.msra.mxu0 %v172
  %284 = vmatpush.msra.mxu0 %v171
  %285 = vmatpush.msra.mxu0 %v170
  %286 = vmatpush.msra.mxu0 %v169
  %287 = vmatpush.msra.mxu0 %v168
  %288 = vmatpush.msra.mxu0 %v167
  %289 = vmatmul.f32.gmra.mxu0 %v216
  %v290 = vpop.f32.mrf.mxu0
  %v291 = vadd.f32 %v271, %v290
  %292 = vmatmul.f32.gmra.mxu0 %v219
  %v293 = vpop.f32.mrf.mxu0
  %v294 = vadd.f32 %v271, %v293
  %295 = vdwg.mxu0
  %vm296 = vcmask 130048
  %v298 = vsel %vm296, %v239, 0
  %v301 = vsel %vm296, %v265, 0
  %303 = vmatpush.xpose.msra.mxu0 0.0
  %304 = vmatpush.xpose.msra.mxu0 0.0
  %305 = vmatpush.xpose.msra.mxu0 0.0
  %306 = vmatpush.xpose.msra.mxu0 0.0
  %307 = vmatpush.xpose.msra.mxu0 0.0
  %308 = vmatpush.xpose.msra.mxu0 0.0
  %309 = vmatpush.xpose.msra.mxu0 0.0
  %310 = vmatpush.xpose.msra.mxu0 0.0
  %311 = vmatpush.xpose.msra.mxu0 0.0
  %312 = vmatpush.xpose.msra.mxu0 0.0
  %313 = vmatpush.xpose.msra.mxu0 0.0
  %314 = vmatpush.xpose.msra.mxu0 0.0
  %315 = vmatpush.xpose.msra.mxu0 0.0
  %316 = vmatpush.xpose.msra.mxu0 0.0
  %317 = vmatpush.xpose.msra.mxu0 0.0
  %318 = vmatpush.xpose.msra.mxu0 %v301
  %319 = vmatmul.f32.gmra.mxu0 %v298
  %v320 = vpop.f32.mrf.mxu0
  %v321 = vadd.f32 0.0, %v320
  %322 = vdwg.mxu0
  %v324 = vsel %vm296, %v242, 0
  %v327 = vsel %vm296, %v268, 0
  %329 = vmatpush.xpose.msra.mxu0 0.0
  %330 = vmatpush.xpose.msra.mxu0 0.0
  %331 = vmatpush.xpose.msra.mxu0 0.0
  %332 = vmatpush.xpose.msra.mxu0 0.0
  %333 = vmatpush.xpose.msra.mxu0 0.0
  %334 = vmatpush.xpose.msra.mxu0 0.0
  %335 = vmatpush.xpose.msra.mxu0 0.0
  %336 = vmatpush.xpose.msra.mxu0 0.0
  %337 = vmatpush.xpose.msra.mxu0 0.0
  %338 = vmatpush.xpose.msra.mxu0 0.0
  %339 = vmatpush.xpose.msra.mxu0 0.0
  %340 = vmatpush.xpose.msra.mxu0 0.0
  %341 = vmatpush.xpose.msra.mxu0 0.0
  %342 = vmatpush.xpose.msra.mxu0 0.0
  %343 = vmatpush.xpose.msra.mxu0 0.0
  %344 = vmatpush.xpose.msra.mxu0 %v327
  %345 = vmatmul.f32.gmra.mxu0 %v324
  %v346 = vpop.f32.mrf.mxu0
  %v347 = vadd.f32 0.0, %v346
  %348 = vdwg.mxu0
  %vm349 = vcmask 64512
  %v350 = vsel %vm349, %v321, -inf
  %351 = vmax.xlane.f32.xlu0 %v350
  %v352 = vpop.xlane.xlu0 %351
  %v353 = vsel %vm349, %v347, -inf
  %354 = vmax.xlane.f32.xlu0 %v353
  %v355 = vpop.xlane.xlu0 %354
  %v356 = vsub.f32 %v321, %v352
  %v357 = vsub.f32 %v347, %v355
  %v358 = vmul.f32 %v356, 1.442695
  %v359 = vpow.pop %v358
  %v360 = vmul.f32 %v357, 1.442695
  %v361 = vpow.pop %v360
  %v362 = vsel %vm349, %v359, 0.0
  %363 = vadd.xlane.f32.xlu0 %v362
  %v364 = vpop.xlane.xlu0 %363
  %v365 = vsel %vm349, %v361, 0.0
  %366 = vadd.xlane.f32.xlu0 %v365
  %v367 = vpop.xlane.xlu0 %366
  %v368 = vrcp.pop %v364
  %v369 = vrcp.pop %v367
  %v370 = vmul.f32 %v359, %v368
  %v371 = vmul.f32 %v361, %v369
  %v373 = vsel %vm349, %v370, 0
  %375 = vmatpush.msra.mxu0 0.0
  %376 = vmatpush.msra.mxu0 0.0
  %377 = vmatpush.msra.mxu0 0.0
  %378 = vmatpush.msra.mxu0 0.0
  %379 = vmatpush.msra.mxu0 0.0
  %380 = vmatpush.msra.mxu0 0.0
  %381 = vmatpush.msra.mxu0 0.0
  %382 = vmatpush.msra.mxu0 0.0
  %383 = vmatpush.msra.mxu0 0.0
  %384 = vmatpush.msra.mxu0 0.0
  %385 = vmatpush.msra.mxu0 0.0
  %386 = vmatpush.msra.mxu0 0.0
  %387 = vmatpush.msra.mxu0 0.0
  %388 = vmatpush.msra.mxu0 0.0
  %389 = vmatpush.msra.mxu0 0.0
  %390 = vmatpush.msra.mxu0 %v291
  %391 = vmatmul.f32.gmra.mxu0 %v373
  %v392 = vpop.f32.mrf.mxu0
  %v393 = vadd.f32 0.0, %v392
  %394 = vdwg.mxu0
  %v396 = vsel %vm349, %v371, 0
  %398 = vmatpush.msra.mxu0 0.0
  %399 = vmatpush.msra.mxu0 0.0
  %400 = vmatpush.msra.mxu0 0.0
  %401 = vmatpush.msra.mxu0 0.0
  %402 = vmatpush.msra.mxu0 0.0
  %403 = vmatpush.msra.mxu0 0.0
  %404 = vmatpush.msra.mxu0 0.0
  %405 = vmatpush.msra.mxu0 0.0
  %406 = vmatpush.msra.mxu0 0.0
  %407 = vmatpush.msra.mxu0 0.0
  %408 = vmatpush.msra.mxu0 0.0
  %409 = vmatpush.msra.mxu0 0.0
  %410 = vmatpush.msra.mxu0 0.0
  %411 = vmatpush.msra.mxu0 0.0
  %412 = vmatpush.msra.mxu0 0.0
  %413 = vmatpush.msra.mxu0 %v294
  %414 = vmatmul.f32.gmra.mxu0 %v396
  %v415 = vpop.f32.mrf.mxu0
  %v416 = vadd.f32 0.0, %v415
  %417 = vdwg.mxu0
  %v419 = vperm.slane %v128, 0
  %421 = vmatpush.msra.mxu0 0.0
  %422 = vmatpush.msra.mxu0 0.0
  %423 = vmatpush.msra.mxu0 0.0
  %424 = vmatpush.msra.mxu0 0.0
  %425 = vmatpush.msra.mxu0 0.0
  %426 = vmatpush.msra.mxu0 0.0
  %427 = vmatpush.msra.mxu0 0.0
  %428 = vmatpush.msra.mxu0 0.0
  %429 = vmatpush.msra.mxu0 %v110
  %430 = vmatpush.msra.mxu0 %v109
  %431 = vmatpush.msra.mxu0 %v108
  %432 = vmatpush.msra.mxu0 %v107
  %433 = vmatpush.msra.mxu0 %v106
  %434 = vmatpush.msra.mxu0 %v105
  %435 = vmatpush.msra.mxu0 %v104
  %436 = vmatpush.msra.mxu0 %v103
  %437 = vmatmul.f32.gmra.mxu0 %v216
  %v438 = vpop.f32.mrf.mxu0
  %v439 = vadd.f32 %v419, %v438
  %440 = vmatmul.f32.gmra.mxu0 %v219
  %v441 = vpop.f32.mrf.mxu0
  %v442 = vadd.f32 %v419, %v441
  %443 = vdwg.mxu0
  %v445 = vperm.slane %v164, 0
  %447 = vmatpush.msra.mxu0 0.0
  %448 = vmatpush.msra.mxu0 0.0
  %449 = vmatpush.msra.mxu0 0.0
  %450 = vmatpush.msra.mxu0 0.0
  %451 = vmatpush.msra.mxu0 0.0
  %452 = vmatpush.msra.mxu0 0.0
  %453 = vmatpush.msra.mxu0 0.0
  %454 = vmatpush.msra.mxu0 0.0
  %455 = vmatpush.msra.mxu0 %v146
  %456 = vmatpush.msra.mxu0 %v145
  %457 = vmatpush.msra.mxu0 %v144
  %458 = vmatpush.msra.mxu0 %v143
  %459 = vmatpush.msra.mxu0 %v142
  %460 = vmatpush.msra.mxu0 %v141
  %461 = vmatpush.msra.mxu0 %v140
  %462 = vmatpush.msra.mxu0 %v139
  %463 = vmatmul.f32.gmra.mxu0 %v216
  %v464 = vpop.f32.mrf.mxu0
  %v465 = vadd.f32 %v445, %v464
  %466 = vmatmul.f32.gmra.mxu0 %v219
  %v467 = vpop.f32.mrf.mxu0
  %v468 = vadd.f32 %v445, %v467
  %469 = vdwg.mxu0
  %v471 = vperm.slane %v200, 0
  %473 = vmatpush.msra.mxu0 0.0
  %474 = vmatpush.msra.mxu0 0.0
  %475 = vmatpush.msra.mxu0 0.0
  %476 = vmatpush.msra.mxu0 0.0
  %477 = vmatpush.msra.mxu0 0.0
  %478 = vmatpush.msra.mxu0 0.0
  %479 = vmatpush.msra.mxu0 0.0
  %480 = vmatpush.msra.mxu0 0.0
  %481 = vmatpush.msra.mxu0 %v182
  %482 = vmatpush.msra.mxu0 %v181
  %483 = vmatpush.msra.mxu0 %v180
  %484 = vmatpush.msra.mxu0 %v179
  %485 = vmatpush.msra.mxu0 %v178
  %486 = vmatpush.msra.mxu0 %v177
  %487 = vmatpush.msra.mxu0 %v176
  %488 = vmatpush.msra.mxu0 %v175
  %489 = vmatmul.f32.gmra.mxu0 %v216
  %v490 = vpop.f32.mrf.mxu0
  %v491 = vadd.f32 %v471, %v490
  %492 = vmatmul.f32.gmra.mxu0 %v219
  %v493 = vpop.f32.mrf.mxu0
  %v494 = vadd.f32 %v471, %v493
  %495 = vdwg.mxu0
  %v497 = vsel %vm296, %v439, 0
  %v500 = vsel %vm296, %v465, 0
  %502 = vmatpush.xpose.msra.mxu0 0.0
  %503 = vmatpush.xpose.msra.mxu0 0.0
  %504 = vmatpush.xpose.msra.mxu0 0.0
  %505 = vmatpush.xpose.msra.mxu0 0.0
  %506 = vmatpush.xpose.msra.mxu0 0.0
  %507 = vmatpush.xpose.msra.mxu0 0.0
  %508 = vmatpush.xpose.msra.mxu0 0.0
  %509 = vmatpush.xpose.msra.mxu0 0.0
  %510 = vmatpush.xpose.msra.mxu0 0.0
  %511 = vmatpush.xpose.msra.mxu0 0.0
  %512 = vmatpush.xpose.msra.mxu0 0.0
  %513 = vmatpush.xpose.msra.mxu0 0.0
  %514 = vmatpush.xpose.msra.mxu0 0.0
  %515 = vmatpush.xpose.msra.mxu0 0.0
  %516 = vmatpush.xpose.msra.mxu0 0.0
  %517 = vmatpush.xpose.msra.mxu0 %v500
  %518 = vmatmul.f32.gmra.mxu0 %v497
  %v519 = vpop.f32.mrf.mxu0
  %v520 = vadd.f32 0.0, %v519
  %521 = vdwg.mxu0
  %v523 = vsel %vm296, %v442, 0
  %v526 = vsel %vm296, %v468, 0
  %528 = vmatpush.xpose.msra.mxu0 0.0
  %529 = vmatpush.xpose.msra.mxu0 0.0
  %530 = vmatpush.xpose.msra.mxu0 0.0
  %531 = vmatpush.xpose.msra.mxu0 0.0
  %532 = vmatpush.xpose.msra.mxu0 0.0
  %533 = vmatpush.xpose.msra.mxu0 0.0
  %534 = vmatpush.xpose.msra.mxu0 0.0
  %535 = vmatpush.xpose.msra.mxu0 0.0
  %536 = vmatpush.xpose.msra.mxu0 0.0
  %537 = vmatpush.xpose.msra.mxu0 0.0
  %538 = vmatpush.xpose.msra.mxu0 0.0
  %539 = vmatpush.xpose.msra.mxu0 0.0
  %540 = vmatpush.xpose.msra.mxu0 0.0
  %541 = vmatpush.xpose.msra.mxu0 0.0
  %542 = vmatpush.xpose.msra.mxu0 0.0
  %543 = vmatpush.xpose.msra.mxu0 %v526
  %544 = vmatmul.f32.gmra.mxu0 %v523
  %v545 = vpop.f32.mrf.mxu0
  %v546 = vadd.f32 0.0, %v545
  %547 = vdwg.mxu0
  %v548 = vsel %vm349, %v520, -inf
  %549 = vmax.xlane.f32.xlu0 %v548
  %v550 = vpop.xlane.xlu0 %549
  %v551 = vsel %vm349, %v546, -inf
  %552 = vmax.xlane.f32.xlu0 %v551
  %v553 = vpop.xlane.xlu0 %552
  %v554 = vsub.f32 %v520, %v550
  %v555 = vsub.f32 %v546, %v553
  %v556 = vmul.f32 %v554, 1.442695
  %v557 = vpow.pop %v556
  %v558 = vmul.f32 %v555, 1.442695
  %v559 = vpow.pop %v558
  %v560 = vsel %vm349, %v557, 0.0
  %561 = vadd.xlane.f32.xlu0 %v560
  %v562 = vpop.xlane.xlu0 %561
  %v563 = vsel %vm349, %v559, 0.0
  %564 = vadd.xlane.f32.xlu0 %v563
  %v565 = vpop.xlane.xlu0 %564
  %v566 = vrcp.pop %v562
  %v567 = vrcp.pop %v565
  %v568 = vmul.f32 %v557, %v566
  %v569 = vmul.f32 %v559, %v567
  %v571 = vsel %vm349, %v568, 0
  %573 = vmatpush.msra.mxu0 0.0
  %574 = vmatpush.msra.mxu0 0.0
  %575 = vmatpush.msra.mxu0 0.0
  %576 = vmatpush.msra.mxu0 0.0
  %577 = vmatpush.msra.mxu0 0.0
  %578 = vmatpush.msra.mxu0 0.0
  %579 = vmatpush.msra.mxu0 0.0
  %580 = vmatpush.msra.mxu0 0.0
  %581 = vmatpush.msra.mxu0 0.0
  %582 = vmatpush.msra.mxu0 0.0
  %583 = vmatpush.msra.mxu0 0.0
  %584 = vmatpush.msra.mxu0 0.0
  %585 = vmatpush.msra.mxu0 0.0
  %586 = vmatpush.msra.mxu0 0.0
  %587 = vmatpush.msra.mxu0 0.0
  %588 = vmatpush.msra.mxu0 %v491
  %589 = vmatmul.f32.gmra.mxu0 %v571
  %v590 = vpop.f32.mrf.mxu0
  %v591 = vadd.f32 0.0, %v590
  %592 = vdwg.mxu0
  %v594 = vsel %vm349, %v569, 0
  %596 = vmatpush.msra.mxu0 0.0
  %597 = vmatpush.msra.mxu0 0.0
  %598 = vmatpush.msra.mxu0 0.0
  %599 = vmatpush.msra.mxu0 0.0
  %600 = vmatpush.msra.mxu0 0.0
  %601 = vmatpush.msra.mxu0 0.0
  %602 = vmatpush.msra.mxu0 0.0
  %603 = vmatpush.msra.mxu0 0.0
  %604 = vmatpush.msra.mxu0 0.0
  %605 = vmatpush.msra.mxu0 0.0
  %606 = vmatpush.msra.mxu0 0.0
  %607 = vmatpush.msra.mxu0 0.0
  %608 = vmatpush.msra.mxu0 0.0
  %609 = vmatpush.msra.mxu0 0.0
  %610 = vmatpush.msra.mxu0 0.0
  %611 = vmatpush.msra.mxu0 %v494
  %612 = vmatmul.f32.gmra.mxu0 %v594
  %v613 = vpop.f32.mrf.mxu0
  %v614 = vadd.f32 0.0, %v613
  %615 = vdwg.mxu0
  %v617 = vsel %vm296, %v591, 0
  %v620 = vsel %vm296, %v614, 0
  %622 = vmatpush.msra.mxu0 0.0
  %623 = vmatpush.msra.mxu0 0.0
  %624 = vmatpush.msra.mxu0 0.0
  %625 = vmatpush.msra.mxu0 0.0
  %626 = vmatpush.msra.mxu0 0.0
  %627 = vmatpush.msra.mxu0 0.0
  %628 = vmatpush.msra.mxu0 0.0
  %629 = vmatpush.msra.mxu0 0.0
  %630 = vmatpush.msra.mxu0 0.0
  %631 = vmatpush.msra.mxu0 0.0
  %632 = vmatpush.msra.mxu0 0.0
  %633 = vmatpush.msra.mxu0 0.0
  %634 = vmatpush.msra.mxu0 0.0
  %635 = vmatpush.msra.mxu0 0.0
  %636 = vmatpush.msra.mxu0 %v206
  %637 = vmatpush.msra.mxu0 %v205
  %638 = vmatmul.f32.gmra.mxu0 %v617
  %v639 = vpop.f32.mrf.mxu0
  %v640 = vadd.f32 0.0, %v639
  %641 = vmatmul.f32.gmra.mxu0 %v620
  %v642 = vpop.f32.mrf.mxu0
  %v643 = vadd.f32 0.0, %v642
  %644 = vdwg.mxu0
  %v646 = vsel %vm296, %v393, 0
  %v649 = vsel %vm296, %v416, 0
  %651 = vmatpush.msra.mxu0 0.0
  %652 = vmatpush.msra.mxu0 0.0
  %653 = vmatpush.msra.mxu0 0.0
  %654 = vmatpush.msra.mxu0 0.0
  %655 = vmatpush.msra.mxu0 0.0
  %656 = vmatpush.msra.mxu0 0.0
  %657 = vmatpush.msra.mxu0 0.0
  %658 = vmatpush.msra.mxu0 0.0
  %659 = vmatpush.msra.mxu0 0.0
  %660 = vmatpush.msra.mxu0 0.0
  %661 = vmatpush.msra.mxu0 0.0
  %662 = vmatpush.msra.mxu0 0.0
  %663 = vmatpush.msra.mxu0 0.0
  %664 = vmatpush.msra.mxu0 0.0
  %665 = vmatpush.msra.mxu0 %v204
  %666 = vmatpush.msra.mxu0 %v203
  %667 = vmatmul.f32.gmra.mxu0 %v646
  %v668 = vpop.f32.mrf.mxu0
  %v669 = vadd.f32 %v640, %v668
  %670 = vmatmul.f32.gmra.mxu0 %v649
  %v671 = vpop.f32.mrf.mxu0
  %v672 = vadd.f32 %v643, %v671
  %673 = vdwg.mxu0
  %v675 = vperm.slane %v129, 0
  %677 = vmatpush.msra.mxu0 0.0
  %678 = vmatpush.msra.mxu0 0.0
  %679 = vmatpush.msra.mxu0 0.0
  %680 = vmatpush.msra.mxu0 0.0
  %681 = vmatpush.msra.mxu0 0.0
  %682 = vmatpush.msra.mxu0 0.0
  %683 = vmatpush.msra.mxu0 0.0
  %684 = vmatpush.msra.mxu0 0.0
  %685 = vmatpush.msra.mxu0 %v118
  %686 = vmatpush.msra.mxu0 %v117
  %687 = vmatpush.msra.mxu0 %v116
  %688 = vmatpush.msra.mxu0 %v115
  %689 = vmatpush.msra.mxu0 %v114
  %690 = vmatpush.msra.mxu0 %v113
  %691 = vmatpush.msra.mxu0 %v112
  %692 = vmatpush.msra.mxu0 %v111
  %693 = vmatmul.f32.gmra.mxu0 %v216
  %v694 = vpop.f32.mrf.mxu0
  %v695 = vadd.f32 %v675, %v694
  %696 = vmatmul.f32.gmra.mxu0 %v219
  %v697 = vpop.f32.mrf.mxu0
  %v698 = vadd.f32 %v675, %v697
  %699 = vdwg.mxu0
  %v701 = vperm.slane %v165, 0
  %703 = vmatpush.msra.mxu0 0.0
  %704 = vmatpush.msra.mxu0 0.0
  %705 = vmatpush.msra.mxu0 0.0
  %706 = vmatpush.msra.mxu0 0.0
  %707 = vmatpush.msra.mxu0 0.0
  %708 = vmatpush.msra.mxu0 0.0
  %709 = vmatpush.msra.mxu0 0.0
  %710 = vmatpush.msra.mxu0 0.0
  %711 = vmatpush.msra.mxu0 %v154
  %712 = vmatpush.msra.mxu0 %v153
  %713 = vmatpush.msra.mxu0 %v152
  %714 = vmatpush.msra.mxu0 %v151
  %715 = vmatpush.msra.mxu0 %v150
  %716 = vmatpush.msra.mxu0 %v149
  %717 = vmatpush.msra.mxu0 %v148
  %718 = vmatpush.msra.mxu0 %v147
  %719 = vmatmul.f32.gmra.mxu0 %v216
  %v720 = vpop.f32.mrf.mxu0
  %v721 = vadd.f32 %v701, %v720
  %722 = vmatmul.f32.gmra.mxu0 %v219
  %v723 = vpop.f32.mrf.mxu0
  %v724 = vadd.f32 %v701, %v723
  %725 = vdwg.mxu0
  %v727 = vperm.slane %v201, 0
  %729 = vmatpush.msra.mxu0 0.0
  %730 = vmatpush.msra.mxu0 0.0
  %731 = vmatpush.msra.mxu0 0.0
  %732 = vmatpush.msra.mxu0 0.0
  %733 = vmatpush.msra.mxu0 0.0
  %734 = vmatpush.msra.mxu0 0.0
  %735 = vmatpush.msra.mxu0 0.0
  %736 = vmatpush.msra.mxu0 0.0
  %737 = vmatpush.msra.mxu0 %v190
  %738 = vmatpush.msra.mxu0 %v189
  %739 = vmatpush.msra.mxu0 %v188
  %740 = vmatpush.msra.mxu0 %v187
  %741 = vmatpush.msra.mxu0 %v186
  %742 = vmatpush.msra.mxu0 %v185
  %743 = vmatpush.msra.mxu0 %v184
  %744 = vmatpush.msra.mxu0 %v183
  %745 = vmatmul.f32.gmra.mxu0 %v216
  %v746 = vpop.f32.mrf.mxu0
  %v747 = vadd.f32 %v727, %v746
  %748 = vmatmul.f32.gmra.mxu0 %v219
  %v749 = vpop.f32.mrf.mxu0
  %v750 = vadd.f32 %v727, %v749
  %751 = vdwg.mxu0
  %v753 = vsel %vm296, %v695, 0
  %v756 = vsel %vm296, %v721, 0
  %758 = vmatpush.xpose.msra.mxu0 0.0
  %759 = vmatpush.xpose.msra.mxu0 0.0
  %760 = vmatpush.xpose.msra.mxu0 0.0
  %761 = vmatpush.xpose.msra.mxu0 0.0
  %762 = vmatpush.xpose.msra.mxu0 0.0
  %763 = vmatpush.xpose.msra.mxu0 0.0
  %764 = vmatpush.xpose.msra.mxu0 0.0
  %765 = vmatpush.xpose.msra.mxu0 0.0
  %766 = vmatpush.xpose.msra.mxu0 0.0
  %767 = vmatpush.xpose.msra.mxu0 0.0
  %768 = vmatpush.xpose.msra.mxu0 0.0
  %769 = vmatpush.xpose.msra.mxu0 0.0
  %770 = vmatpush.xpose.msra.mxu0 0.0
  %771 = vmatpush.xpose.msra.mxu0 0.0
  %772 = vmatpush.xpose.msra.mxu0 0.0
  %773 = vmatpush.xpose.msra.mxu0 %v756
  %774 = vmatmul.f32.gmra.mxu0 %v753
  %v775 = vpop.f32.mrf.mxu0
  %v776 = vadd.f32 0.0, %v775
  %777 = vdwg.mxu0
  %v779 = vsel %vm296, %v698, 0
  %v782 = vsel %vm296, %v724, 0
  %784 = vmatpush.xpose.msra.mxu0 0.0
  %785 = vmatpush.xpose.msra.mxu0 0.0
  %786 = vmatpush.xpose.msra.mxu0 0.0
  %787 = vmatpush.xpose.msra.mxu0 0.0
  %788 = vmatpush.xpose.msra.mxu0 0.0
  %789 = vmatpush.xpose.msra.mxu0 0.0
  %790 = vmatpush.xpose.msra.mxu0 0.0
  %791 = vmatpush.xpose.msra.mxu0 0.0
  %792 = vmatpush.xpose.msra.mxu0 0.0
  %793 = vmatpush.xpose.msra.mxu0 0.0
  %794 = vmatpush.xpose.msra.mxu0 0.0
  %795 = vmatpush.xpose.msra.mxu0 0.0
  %796 = vmatpush.xpose.msra.mxu0 0.0
  %797 = vmatpush.xpose.msra.mxu0 0.0
  %798 = vmatpush.xpose.msra.mxu0 0.0
  %799 = vmatpush.xpose.msra.mxu0 %v782
  %800 = vmatmul.f32.gmra.mxu0 %v779
  %v801 = vpop.f32.mrf.mxu0
  %v802 = vadd.f32 0.0, %v801
  %803 = vdwg.mxu0
  %v804 = vsel %vm349, %v776, -inf
  %805 = vmax.xlane.f32.xlu0 %v804
  %v806 = vpop.xlane.xlu0 %805
  %v807 = vsel %vm349, %v802, -inf
  %808 = vmax.xlane.f32.xlu0 %v807
  %v809 = vpop.xlane.xlu0 %808
  %v810 = vsub.f32 %v776, %v806
  %v811 = vsub.f32 %v802, %v809
  %v812 = vmul.f32 %v810, 1.442695
  %v813 = vpow.pop %v812
  %v814 = vmul.f32 %v811, 1.442695
  %v815 = vpow.pop %v814
  %v816 = vsel %vm349, %v813, 0.0
  %817 = vadd.xlane.f32.xlu0 %v816
  %v818 = vpop.xlane.xlu0 %817
  %v819 = vsel %vm349, %v815, 0.0
  %820 = vadd.xlane.f32.xlu0 %v819
  %v821 = vpop.xlane.xlu0 %820
  %v822 = vrcp.pop %v818
  %v823 = vrcp.pop %v821
  %v824 = vmul.f32 %v813, %v822
  %v825 = vmul.f32 %v815, %v823
  %v827 = vsel %vm349, %v824, 0
  %829 = vmatpush.msra.mxu0 0.0
  %830 = vmatpush.msra.mxu0 0.0
  %831 = vmatpush.msra.mxu0 0.0
  %832 = vmatpush.msra.mxu0 0.0
  %833 = vmatpush.msra.mxu0 0.0
  %834 = vmatpush.msra.mxu0 0.0
  %835 = vmatpush.msra.mxu0 0.0
  %836 = vmatpush.msra.mxu0 0.0
  %837 = vmatpush.msra.mxu0 0.0
  %838 = vmatpush.msra.mxu0 0.0
  %839 = vmatpush.msra.mxu0 0.0
  %840 = vmatpush.msra.mxu0 0.0
  %841 = vmatpush.msra.mxu0 0.0
  %842 = vmatpush.msra.mxu0 0.0
  %843 = vmatpush.msra.mxu0 0.0
  %844 = vmatpush.msra.mxu0 %v747
  %845 = vmatmul.f32.gmra.mxu0 %v827
  %v846 = vpop.f32.mrf.mxu0
  %v847 = vadd.f32 0.0, %v846
  %848 = vdwg.mxu0
  %v850 = vsel %vm349, %v825, 0
  %852 = vmatpush.msra.mxu0 0.0
  %853 = vmatpush.msra.mxu0 0.0
  %854 = vmatpush.msra.mxu0 0.0
  %855 = vmatpush.msra.mxu0 0.0
  %856 = vmatpush.msra.mxu0 0.0
  %857 = vmatpush.msra.mxu0 0.0
  %858 = vmatpush.msra.mxu0 0.0
  %859 = vmatpush.msra.mxu0 0.0
  %860 = vmatpush.msra.mxu0 0.0
  %861 = vmatpush.msra.mxu0 0.0
  %862 = vmatpush.msra.mxu0 0.0
  %863 = vmatpush.msra.mxu0 0.0
  %864 = vmatpush.msra.mxu0 0.0
  %865 = vmatpush.msra.mxu0 0.0
  %866 = vmatpush.msra.mxu0 0.0
  %867 = vmatpush.msra.mxu0 %v750
  %868 = vmatmul.f32.gmra.mxu0 %v850
  %v869 = vpop.f32.mrf.mxu0
  %v870 = vadd.f32 0.0, %v869
  %871 = vdwg.mxu0
  %v873 = vsel %vm296, %v847, 0
  %v876 = vsel %vm296, %v870, 0
  %878 = vmatpush.msra.mxu0 0.0
  %879 = vmatpush.msra.mxu0 0.0
  %880 = vmatpush.msra.mxu0 0.0
  %881 = vmatpush.msra.mxu0 0.0
  %882 = vmatpush.msra.mxu0 0.0
  %883 = vmatpush.msra.mxu0 0.0
  %884 = vmatpush.msra.mxu0 0.0
  %885 = vmatpush.msra.mxu0 0.0
  %886 = vmatpush.msra.mxu0 0.0
  %887 = vmatpush.msra.mxu0 0.0
  %888 = vmatpush.msra.mxu0 0.0
  %889 = vmatpush.msra.mxu0 0.0
  %890 = vmatpush.msra.mxu0 0.0
  %891 = vmatpush.msra.mxu0 0.0
  %892 = vmatpush.msra.mxu0 %v208
  %893 = vmatpush.msra.mxu0 %v207
  %894 = vmatmul.f32.gmra.mxu0 %v873
  %v895 = vpop.f32.mrf.mxu0
  %v896 = vadd.f32 0.0, %v895
  %897 = vmatmul.f32.gmra.mxu0 %v876
  %v898 = vpop.f32.mrf.mxu0
  %v899 = vadd.f32 0.0, %v898
  %900 = vdwg.mxu0
  %v901 = vadd.f32 %v669, %v896
  %v902 = vadd.f32 %v672, %v899
  %v904 = vperm.slane %v130, 0
  %906 = vmatpush.msra.mxu0 0.0
  %907 = vmatpush.msra.mxu0 0.0
  %908 = vmatpush.msra.mxu0 0.0
  %909 = vmatpush.msra.mxu0 0.0
  %910 = vmatpush.msra.mxu0 0.0
  %911 = vmatpush.msra.mxu0 0.0
  %912 = vmatpush.msra.mxu0 0.0
  %913 = vmatpush.msra.mxu0 0.0
  %914 = vmatpush.msra.mxu0 %v126
  %915 = vmatpush.msra.mxu0 %v125
  %916 = vmatpush.msra.mxu0 %v124
  %917 = vmatpush.msra.mxu0 %v123
  %918 = vmatpush.msra.mxu0 %v122
  %919 = vmatpush.msra.mxu0 %v121
  %920 = vmatpush.msra.mxu0 %v120
  %921 = vmatpush.msra.mxu0 %v119
  %922 = vmatmul.f32.gmra.mxu0 %v216
  %v923 = vpop.f32.mrf.mxu0
  %v924 = vadd.f32 %v904, %v923
  %925 = vmatmul.f32.gmra.mxu0 %v219
  %v926 = vpop.f32.mrf.mxu0
  %v927 = vadd.f32 %v904, %v926
  %928 = vdwg.mxu0
  %v930 = vperm.slane %v166, 0
  %932 = vmatpush.msra.mxu0 0.0
  %933 = vmatpush.msra.mxu0 0.0
  %934 = vmatpush.msra.mxu0 0.0
  %935 = vmatpush.msra.mxu0 0.0
  %936 = vmatpush.msra.mxu0 0.0
  %937 = vmatpush.msra.mxu0 0.0
  %938 = vmatpush.msra.mxu0 0.0
  %939 = vmatpush.msra.mxu0 0.0
  %940 = vmatpush.msra.mxu0 %v162
  %941 = vmatpush.msra.mxu0 %v161
  %942 = vmatpush.msra.mxu0 %v160
  %943 = vmatpush.msra.mxu0 %v159
  %944 = vmatpush.msra.mxu0 %v158
  %945 = vmatpush.msra.mxu0 %v157
  %946 = vmatpush.msra.mxu0 %v156
  %947 = vmatpush.msra.mxu0 %v155
  %948 = vmatmul.f32.gmra.mxu0 %v216
  %v949 = vpop.f32.mrf.mxu0
  %v950 = vadd.f32 %v930, %v949
  %951 = vmatmul.f32.gmra.mxu0 %v219
  %v952 = vpop.f32.mrf.mxu0
  %v953 = vadd.f32 %v930, %v952
  %954 = vdwg.mxu0
  %v956 = vperm.slane %v202, 0
  %958 = vmatpush.msra.mxu0 0.0
  %959 = vmatpush.msra.mxu0 0.0
  %960 = vmatpush.msra.mxu0 0.0
  %961 = vmatpush.msra.mxu0 0.0
  %962 = vmatpush.msra.mxu0 0.0
  %963 = vmatpush.msra.mxu0 0.0
  %964 = vmatpush.msra.mxu0 0.0
  %965 = vmatpush.msra.mxu0 0.0
  %966 = vmatpush.msra.mxu0 %v198
  %967 = vmatpush.msra.mxu0 %v197
  %968 = vmatpush.msra.mxu0 %v196
  %969 = vmatpush.msra.mxu0 %v195
  %970 = vmatpush.msra.mxu0 %v194
  %971 = vmatpush.msra.mxu0 %v193
  %972 = vmatpush.msra.mxu0 %v192
  %973 = vmatpush.msra.mxu0 %v191
  %974 = vmatmul.f32.gmra.mxu0 %v216
  %v975 = vpop.f32.mrf.mxu0
  %v976 = vadd.f32 %v956, %v975
  %977 = vmatmul.f32.gmra.mxu0 %v219
  %v978 = vpop.f32.mrf.mxu0
  %v979 = vadd.f32 %v956, %v978
  %980 = vdwg.mxu0
  %v982 = vsel %vm296, %v924, 0
  %v985 = vsel %vm296, %v950, 0
  %987 = vmatpush.xpose.msra.mxu0 0.0
  %988 = vmatpush.xpose.msra.mxu0 0.0
  %989 = vmatpush.xpose.msra.mxu0 0.0
  %990 = vmatpush.xpose.msra.mxu0 0.0
  %991 = vmatpush.xpose.msra.mxu0 0.0
  %992 = vmatpush.xpose.msra.mxu0 0.0
  %993 = vmatpush.xpose.msra.mxu0 0.0
  %994 = vmatpush.xpose.msra.mxu0 0.0
  %995 = vmatpush.xpose.msra.mxu0 0.0
  %996 = vmatpush.xpose.msra.mxu0 0.0
  %997 = vmatpush.xpose.msra.mxu0 0.0
  %998 = vmatpush.xpose.msra.mxu0 0.0
  %999 = vmatpush.xpose.msra.mxu0 0.0
  %1000 = vmatpush.xpose.msra.mxu0 0.0
  %1001 = vmatpush.xpose.msra.mxu0 0.0
  %1002 = vmatpush.xpose.msra.mxu0 %v985
  %1003 = vmatmul.f32.gmra.mxu0 %v982
  %v1004 = vpop.f32.mrf.mxu0
  %v1005 = vadd.f32 0.0, %v1004
  %1006 = vdwg.mxu0
  %v1008 = vsel %vm296, %v927, 0
  %v1011 = vsel %vm296, %v953, 0
  %1013 = vmatpush.xpose.msra.mxu0 0.0
  %1014 = vmatpush.xpose.msra.mxu0 0.0
  %1015 = vmatpush.xpose.msra.mxu0 0.0
  %1016 = vmatpush.xpose.msra.mxu0 0.0
  %1017 = vmatpush.xpose.msra.mxu0 0.0
  %1018 = vmatpush.xpose.msra.mxu0 0.0
  %1019 = vmatpush.xpose.msra.mxu0 0.0
  %1020 = vmatpush.xpose.msra.mxu0 0.0
  %1021 = vmatpush.xpose.msra.mxu0 0.0
  %1022 = vmatpush.xpose.msra.mxu0 0.0
  %1023 = vmatpush.xpose.msra.mxu0 0.0
  %1024 = vmatpush.xpose.msra.mxu0 0.0
  %1025 = vmatpush.xpose.msra.mxu0 0.0
  %1026 = vmatpush.xpose.msra.mxu0 0.0
  %1027 = vmatpush.xpose.msra.mxu0 0.0
  %1028 = vmatpush.xpose.msra.mxu0 %v1011
  %1029 = vmatmul.f32.gmra.mxu0 %v1008
  %v1030 = vpop.f32.mrf.mxu0
  %v1031 = vadd.f32 0.0, %v1030
  %1032 = vdwg.mxu0
  %v1033 = vsel %vm349, %v1005, -inf
  %1034 = vmax.xlane.f32.xlu0 %v1033
  %v1035 = vpop.xlane.xlu0 %1034
  %v1036 = vsel %vm349, %v1031, -inf
  %1037 = vmax.xlane.f32.xlu0 %v1036
  %v1038 = vpop.xlane.xlu0 %1037
  %v1039 = vsub.f32 %v1005, %v1035
  %v1040 = vsub.f32 %v1031, %v1038
  %v1041 = vmul.f32 %v1039, 1.442695
  %v1042 = vpow.pop %v1041
  %v1043 = vmul.f32 %v1040, 1.442695
  %v1044 = vpow.pop %v1043
  %v1045 = vsel %vm349, %v1042, 0.0
  %1046 = vadd.xlane.f32.xlu0 %v1045
  %v1047 = vpop.xlane.xlu0 %1046
  %v1048 = vsel %vm349, %v1044, 0.0
  %1049 = vadd.xlane.f32.xlu0 %v1048
  %v1050 = vpop.xlane.xlu0 %1049
  %v1051 = vrcp.pop %v1047
  %v1052 = vrcp.pop %v1050
  %v1053 = vmul.f32 %v1042, %v1051
  %v1054 = vmul.f32 %v1044, %v1052
  %v1056 = vsel %vm349, %v1053, 0
  %1058 = vmatpush.msra.mxu0 0.0
  %1059 = vmatpush.msra.mxu0 0.0
  %1060 = vmatpush.msra.mxu0 0.0
  %1061 = vmatpush.msra.mxu0 0.0
  %1062 = vmatpush.msra.mxu0 0.0
  %1063 = vmatpush.msra.mxu0 0.0
  %1064 = vmatpush.msra.mxu0 0.0
  %1065 = vmatpush.msra.mxu0 0.0
  %1066 = vmatpush.msra.mxu0 0.0
  %1067 = vmatpush.msra.mxu0 0.0
  %1068 = vmatpush.msra.mxu0 0.0
  %1069 = vmatpush.msra.mxu0 0.0
  %1070 = vmatpush.msra.mxu0 0.0
  %1071 = vmatpush.msra.mxu0 0.0
  %1072 = vmatpush.msra.mxu0 0.0
  %1073 = vmatpush.msra.mxu0 %v976
  %1074 = vmatmul.f32.gmra.mxu0 %v1056
  %v1075 = vpop.f32.mrf.mxu0
  %v1076 = vadd.f32 0.0, %v1075
  %1077 = vdwg.mxu0
  %v1079 = vsel %vm349, %v1054, 0
  %1081 = vmatpush.msra.mxu0 0.0
  %1082 = vmatpush.msra.mxu0 0.0
  %1083 = vmatpush.msra.mxu0 0.0
  %1084 = vmatpush.msra.mxu0 0.0
  %1085 = vmatpush.msra.mxu0 0.0
  %1086 = vmatpush.msra.mxu0 0.0
  %1087 = vmatpush.msra.mxu0 0.0
  %1088 = vmatpush.msra.mxu0 0.0
  %1089 = vmatpush.msra.mxu0 0.0
  %1090 = vmatpush.msra.mxu0 0.0
  %1091 = vmatpush.msra.mxu0 0.0
  %1092 = vmatpush.msra.mxu0 0.0
  %1093 = vmatpush.msra.mxu0 0.0
  %1094 = vmatpush.msra.mxu0 0.0
  %1095 = vmatpush.msra.mxu0 0.0
  %1096 = vmatpush.msra.mxu0 %v979
  %1097 = vmatmul.f32.gmra.mxu0 %v1079
  %v1098 = vpop.f32.mrf.mxu0
  %v1099 = vadd.f32 0.0, %v1098
  %1100 = vdwg.mxu0
  %v1102 = vsel %vm296, %v1076, 0
  %v1105 = vsel %vm296, %v1099, 0
  %1107 = vmatpush.msra.mxu0 0.0
  %1108 = vmatpush.msra.mxu0 0.0
  %1109 = vmatpush.msra.mxu0 0.0
  %1110 = vmatpush.msra.mxu0 0.0
  %1111 = vmatpush.msra.mxu0 0.0
  %1112 = vmatpush.msra.mxu0 0.0
  %1113 = vmatpush.msra.mxu0 0.0
  %1114 = vmatpush.msra.mxu0 0.0
  %1115 = vmatpush.msra.mxu0 0.0
  %1116 = vmatpush.msra.mxu0 0.0
  %1117 = vmatpush.msra.mxu0 0.0
  %1118 = vmatpush.msra.mxu0 0.0
  %1119 = vmatpush.msra.mxu0 0.0
  %1120 = vmatpush.msra.mxu0 0.0
  %1121 = vmatpush.msra.mxu0 %v210
  %1122 = vmatpush.msra.mxu0 %v209
  %1123 = vmatmul.f32.gmra.mxu0 %v1102
  %v1124 = vpop.f32.mrf.mxu0
  %v1125 = vadd.f32 0.0, %v1124
  %1126 = vmatmul.f32.gmra.mxu0 %v1105
  %v1127 = vpop.f32.mrf.mxu0
  %v1128 = vadd.f32 0.0, %v1127
  %1129 = vdwg.mxu0
  %v1130 = vadd.f32 %v901, %v1125
  %v1131 = vadd.f32 %v902, %v1128
  %v1132 = vld [vmem:[%s10] sm:$0x1]
  %v1134 = vperm.slane %v1132, 0
  %v1136 = vadd.f32 %v1130, %v1134
  %v1137 = vadd.f32 %v1131, %v1134
  %v1138 = vadd.f32 %v93, %v1136
  %v1139 = vadd.f32 %v94, %v1137
  %v1140 = vld [vmem:[%s11] sm:$0x1]
  %v1141 = vld [vmem:[%s12] sm:$0x1]
  %v1142 = vsel %vm214, %v1138, 0.0
  %1143 = vadd.xlane.f32.xlu0 %v1142
  %v1144 = vpop.xlane.xlu0 %1143
  %v1145 = vsel %vm214, %v1139, 0.0
  %1146 = vadd.xlane.f32.xlu0 %v1145
  %v1147 = vpop.xlane.xlu0 %1146
  %v1148 = vrcp.pop 64.0
  %v1149 = vmul.f32 64.0, %v1148
  %v1150 = vsub.f32 1.0, %v1149
  %v1151 = vmul.f32 %v1148, %v1150
  %v1152 = vadd.f32 %v1148, %v1151
  %vm1153 = vweird.f32 %v1148
  %v1154 = vsel %vm1153, %v1148, %v1152
  %v1155 = vmul.f32 %v1144, %v1154
  %v1156 = vmul.f32 %v1147, %v1154
  %v1157 = vsub.f32 %v1138, %v1155
  %v1158 = vsub.f32 %v1139, %v1156
  %v1159 = vmul.f32 %v1157, %v1157
  %v1160 = vmul.f32 %v1158, %v1158
  %v1161 = vsel %vm214, %v1159, 0.0
  %1162 = vadd.xlane.f32.xlu0 %v1161
  %v1163 = vpop.xlane.xlu0 %1162
  %v1164 = vsel %vm214, %v1160, 0.0
  %1165 = vadd.xlane.f32.xlu0 %v1164
  %v1166 = vpop.xlane.xlu0 %1165
  %v1167 = vmul.f32 %v1163, %v1154
  %v1168 = vmul.f32 %v1166, %v1154
  %v1169 = vadd.f32 %v1167, 1e-05
  %v1170 = vadd.f32 %v1168, 1e-05
  %v1171 = vrsqrt.pop %v1169
  %v1172 = vmul.f32 %v1171, %v1169
  %v1173 = vmul.f32 %v1172, %v1171
  %v1174 = vmul.f32 0.5, %v1173
  %v1175 = vsub.f32 1.5, %v1174
  %v1176 = vmul.f32 %v1171, %v1175
  %vm1177 = vweird.f32 %v1169
  %vm1178 = vweird.f32 %v1171
  %vm1179 = vmor %vm1177, %vm1178
  %v1180 = vsel %vm1179, %v1171, %v1176
  %v1181 = vrsqrt.pop %v1170
  %v1182 = vmul.f32 %v1181, %v1170
  %v1183 = vmul.f32 %v1182, %v1181
  %v1184 = vmul.f32 0.5, %v1183
  %v1185 = vsub.f32 1.5, %v1184
  %v1186 = vmul.f32 %v1181, %v1185
  %vm1187 = vweird.f32 %v1170
  %vm1188 = vweird.f32 %v1181
  %vm1189 = vmor %vm1187, %vm1188
  %v1190 = vsel %vm1189, %v1181, %v1186
  %v1191 = vmul.f32 %v1157, %v1180
  %v1192 = vmul.f32 %v1158, %v1190
  %v1194 = vperm.slane %v1140, 0
  %v1196 = vmul.f32 %v1191, %v1194
  %v1197 = vmul.f32 %v1192, %v1194
  %v1199 = vperm.slane %v1141, 0
  %v1201 = vadd.f32 %v1196, %v1199
  %v1202 = vadd.f32 %v1197, %v1199
  %v1203 = vpack.c.bf16 %v1202, %v1201
  %v1204 = vld [vmem:[%s13] sm:$0xff]
  %v1205 = vld [vmem:[%s13 + $0x8] sm:$0xff]
  %v1206 = vld [vmem:[%s13 + $0x10] sm:$0xff]
  %v1207 = vld [vmem:[%s13 + $0x18] sm:$0xff]
  %v1208 = vld [vmem:[%s13 + $0x20] sm:$0xff]
  %v1209 = vld [vmem:[%s13 + $0x28] sm:$0xff]
  %v1210 = vld [vmem:[%s13 + $0x30] sm:$0xff]
  %v1211 = vld [vmem:[%s13 + $0x38] sm:$0xff]
  %v1212 = vld [vmem:[%s13 + $0x40] sm:$0xff]
  %v1213 = vld [vmem:[%s13 + $0x48] sm:$0xff]
  %v1214 = vld [vmem:[%s13 + $0x50] sm:$0xff]
  %v1215 = vld [vmem:[%s13 + $0x58] sm:$0xff]
  %v1216 = vld [vmem:[%s13 + $0x60] sm:$0xff]
  %v1217 = vld [vmem:[%s13 + $0x68] sm:$0xff]
  %v1218 = vld [vmem:[%s13 + $0x70] sm:$0xff]
  %v1219 = vld [vmem:[%s13 + $0x78] sm:$0xff]
  %v1220 = vld [vmem:[%s13 + $0x80] sm:$0xff]
  %v1221 = vld [vmem:[%s13 + $0x88] sm:$0xff]
  %v1222 = vld [vmem:[%s13 + $0x90] sm:$0xff]
  %v1223 = vld [vmem:[%s13 + $0x98] sm:$0xff]
  %v1224 = vld [vmem:[%s13 + $0xa0] sm:$0xff]
  %v1225 = vld [vmem:[%s13 + $0xa8] sm:$0xff]
  %v1226 = vld [vmem:[%s13 + $0xb0] sm:$0xff]
  %v1227 = vld [vmem:[%s13 + $0xb8] sm:$0xff]
  %v1228 = vld [vmem:[%s13 + $0xc0] sm:$0xff]
  %v1229 = vld [vmem:[%s13 + $0xc8] sm:$0xff]
  %v1230 = vld [vmem:[%s13 + $0xd0] sm:$0xff]
  %v1231 = vld [vmem:[%s13 + $0xd8] sm:$0xff]
  %v1232 = vld [vmem:[%s13 + $0xe0] sm:$0xff]
  %v1233 = vld [vmem:[%s13 + $0xe8] sm:$0xff]
  %v1234 = vld [vmem:[%s13 + $0xf0] sm:$0xff]
  %v1235 = vld [vmem:[%s13 + $0xf8] sm:$0xff]
  %v1236 = vld [vmem:[%s13 + $0x100] sm:$0xff]
  %v1237 = vld [vmem:[%s13 + $0x108] sm:$0xff]
  %v1238 = vld [vmem:[%s13 + $0x110] sm:$0xff]
  %v1239 = vld [vmem:[%s13 + $0x118] sm:$0xff]
  %v1240 = vld [vmem:[%s13 + $0x120] sm:$0xff]
  %v1241 = vld [vmem:[%s13 + $0x128] sm:$0xff]
  %v1242 = vld [vmem:[%s13 + $0x130] sm:$0xff]
  %v1243 = vld [vmem:[%s13 + $0x138] sm:$0xff]
  %v1244 = vld [vmem:[%s13 + $0x140] sm:$0xff]
  %v1245 = vld [vmem:[%s13 + $0x148] sm:$0xff]
  %v1246 = vld [vmem:[%s13 + $0x150] sm:$0xff]
  %v1247 = vld [vmem:[%s13 + $0x158] sm:$0xff]
  %v1248 = vld [vmem:[%s13 + $0x160] sm:$0xff]
  %v1249 = vld [vmem:[%s13 + $0x168] sm:$0xff]
  %v1250 = vld [vmem:[%s13 + $0x170] sm:$0xff]
  %v1251 = vld [vmem:[%s13 + $0x178] sm:$0xff]
  %v1252 = vld [vmem:[%s13 + $0x180] sm:$0xff]
  %v1253 = vld [vmem:[%s13 + $0x188] sm:$0xff]
  %v1254 = vld [vmem:[%s13 + $0x190] sm:$0xff]
  %v1255 = vld [vmem:[%s13 + $0x198] sm:$0xff]
  %v1256 = vld [vmem:[%s13 + $0x1a0] sm:$0xff]
  %v1257 = vld [vmem:[%s13 + $0x1a8] sm:$0xff]
  %v1258 = vld [vmem:[%s13 + $0x1b0] sm:$0xff]
  %v1259 = vld [vmem:[%s13 + $0x1b8] sm:$0xff]
  %v1260 = vld [vmem:[%s13 + $0x1c0] sm:$0xff]
  %v1261 = vld [vmem:[%s13 + $0x1c8] sm:$0xff]
  %v1262 = vld [vmem:[%s13 + $0x1d0] sm:$0xff]
  %v1263 = vld [vmem:[%s13 + $0x1d8] sm:$0xff]
  %v1264 = vld [vmem:[%s13 + $0x1e0] sm:$0xff]
  %v1265 = vld [vmem:[%s13 + $0x1e8] sm:$0xff]
  %v1266 = vld [vmem:[%s13 + $0x1f0] sm:$0xff]
  %v1267 = vld [vmem:[%s13 + $0x1f8] sm:$0xff]
  %v1268 = vld [vmem:[%s14] sm:$0xff]
  %v1269 = vld [vmem:[%s14 + $0x8] sm:$0xff]
  %v1272 = vperm.slane %v1268, 0
  %v1273 = vperm.slane %v1268, 1
  %v1274 = vperm.slane %v1268, 2
  %v1275 = vperm.slane %v1268, 3
  %v1276 = vperm.slane %v1268, 4
  %v1277 = vperm.slane %v1268, 5
  %v1278 = vperm.slane %v1268, 6
  %v1279 = vperm.slane %v1268, 7
  %v1280 = vperm.slane %v1269, 0
  %v1281 = vperm.slane %v1269, 1
  %v1282 = vperm.slane %v1269, 2
  %v1283 = vperm.slane %v1269, 3
  %v1284 = vperm.slane %v1269, 4
  %v1285 = vperm.slane %v1269, 5
  %v1286 = vperm.slane %v1269, 6
  %v1287 = vperm.slane %v1269, 7
  %v1368 = vunpack.c.l.b16 %v1204
  %v1369 = vunpack.c.h.b16 %v1204
  %v1370 = vunpack.c.l.b16 %v1205
  %v1371 = vunpack.c.h.b16 %v1205
  %v1372 = vunpack.c.l.b16 %v1206
  %v1373 = vunpack.c.h.b16 %v1206
  %v1374 = vunpack.c.l.b16 %v1207
  %v1375 = vunpack.c.h.b16 %v1207
  %v1376 = vunpack.c.l.b16 %v1208
  %v1377 = vunpack.c.h.b16 %v1208
  %v1378 = vunpack.c.l.b16 %v1209
  %v1379 = vunpack.c.h.b16 %v1209
  %v1380 = vunpack.c.l.b16 %v1210
  %v1381 = vunpack.c.h.b16 %v1210
  %v1382 = vunpack.c.l.b16 %v1211
  %v1383 = vunpack.c.h.b16 %v1211
  %v1384 = vunpack.c.l.b16 %v1212
  %v1385 = vunpack.c.h.b16 %v1212
  %v1386 = vunpack.c.l.b16 %v1213
  %v1387 = vunpack.c.h.b16 %v1213
  %v1388 = vunpack.c.l.b16 %v1214
  %v1389 = vunpack.c.h.b16 %v1214
  %v1390 = vunpack.c.l.b16 %v1215
  %v1391 = vunpack.c.h.b16 %v1215
  %v1392 = vunpack.c.l.b16 %v1216
  %v1393 = vunpack.c.h.b16 %v1216
  %v1394 = vunpack.c.l.b16 %v1217
  %v1395 = vunpack.c.h.b16 %v1217
  %v1396 = vunpack.c.l.b16 %v1218
  %v1397 = vunpack.c.h.b16 %v1218
  %v1398 = vunpack.c.l.b16 %v1219
  %v1399 = vunpack.c.h.b16 %v1219
  %v1400 = vunpack.c.l.b16 %v1220
  %v1401 = vunpack.c.h.b16 %v1220
  %v1402 = vunpack.c.l.b16 %v1221
  %v1403 = vunpack.c.h.b16 %v1221
  %v1404 = vunpack.c.l.b16 %v1222
  %v1405 = vunpack.c.h.b16 %v1222
  %v1406 = vunpack.c.l.b16 %v1223
  %v1407 = vunpack.c.h.b16 %v1223
  %v1408 = vunpack.c.l.b16 %v1224
  %v1409 = vunpack.c.h.b16 %v1224
  %v1410 = vunpack.c.l.b16 %v1225
  %v1411 = vunpack.c.h.b16 %v1225
  %v1412 = vunpack.c.l.b16 %v1226
  %v1413 = vunpack.c.h.b16 %v1226
  %v1414 = vunpack.c.l.b16 %v1227
  %v1415 = vunpack.c.h.b16 %v1227
  %v1416 = vunpack.c.l.b16 %v1228
  %v1417 = vunpack.c.h.b16 %v1228
  %v1418 = vunpack.c.l.b16 %v1229
  %v1419 = vunpack.c.h.b16 %v1229
  %v1420 = vunpack.c.l.b16 %v1230
  %v1421 = vunpack.c.h.b16 %v1230
  %v1422 = vunpack.c.l.b16 %v1231
  %v1423 = vunpack.c.h.b16 %v1231
  %v1424 = vunpack.c.l.b16 %v1232
  %v1425 = vunpack.c.h.b16 %v1232
  %v1426 = vunpack.c.l.b16 %v1233
  %v1427 = vunpack.c.h.b16 %v1233
  %v1428 = vunpack.c.l.b16 %v1234
  %v1429 = vunpack.c.h.b16 %v1234
  %v1430 = vunpack.c.l.b16 %v1235
  %v1431 = vunpack.c.h.b16 %v1235
  %v1432 = vunpack.c.l.b16 %v1236
  %v1433 = vunpack.c.h.b16 %v1236
  %v1434 = vunpack.c.l.b16 %v1237
  %v1435 = vunpack.c.h.b16 %v1237
  %v1436 = vunpack.c.l.b16 %v1238
  %v1437 = vunpack.c.h.b16 %v1238
  %v1438 = vunpack.c.l.b16 %v1239
  %v1439 = vunpack.c.h.b16 %v1239
  %v1440 = vunpack.c.l.b16 %v1240
  %v1441 = vunpack.c.h.b16 %v1240
  %v1442 = vunpack.c.l.b16 %v1241
  %v1443 = vunpack.c.h.b16 %v1241
  %v1444 = vunpack.c.l.b16 %v1242
  %v1445 = vunpack.c.h.b16 %v1242
  %v1446 = vunpack.c.l.b16 %v1243
  %v1447 = vunpack.c.h.b16 %v1243
  %v1448 = vunpack.c.l.b16 %v1244
  %v1449 = vunpack.c.h.b16 %v1244
  %v1450 = vunpack.c.l.b16 %v1245
  %v1451 = vunpack.c.h.b16 %v1245
  %v1452 = vunpack.c.l.b16 %v1246
  %v1453 = vunpack.c.h.b16 %v1246
  %v1454 = vunpack.c.l.b16 %v1247
  %v1455 = vunpack.c.h.b16 %v1247
  %v1456 = vunpack.c.l.b16 %v1248
  %v1457 = vunpack.c.h.b16 %v1248
  %v1458 = vunpack.c.l.b16 %v1249
  %v1459 = vunpack.c.h.b16 %v1249
  %v1460 = vunpack.c.l.b16 %v1250
  %v1461 = vunpack.c.h.b16 %v1250
  %v1462 = vunpack.c.l.b16 %v1251
  %v1463 = vunpack.c.h.b16 %v1251
  %v1464 = vunpack.c.l.b16 %v1252
  %v1465 = vunpack.c.h.b16 %v1252
  %v1466 = vunpack.c.l.b16 %v1253
  %v1467 = vunpack.c.h.b16 %v1253
  %v1468 = vunpack.c.l.b16 %v1254
  %v1469 = vunpack.c.h.b16 %v1254
  %v1470 = vunpack.c.l.b16 %v1255
  %v1471 = vunpack.c.h.b16 %v1255
  %v1472 = vunpack.c.l.b16 %v1256
  %v1473 = vunpack.c.h.b16 %v1256
  %v1474 = vunpack.c.l.b16 %v1257
  %v1475 = vunpack.c.h.b16 %v1257
  %v1476 = vunpack.c.l.b16 %v1258
  %v1477 = vunpack.c.h.b16 %v1258
  %v1478 = vunpack.c.l.b16 %v1259
  %v1479 = vunpack.c.h.b16 %v1259
  %v1480 = vunpack.c.l.b16 %v1260
  %v1481 = vunpack.c.h.b16 %v1260
  %v1482 = vunpack.c.l.b16 %v1261
  %v1483 = vunpack.c.h.b16 %v1261
  %v1484 = vunpack.c.l.b16 %v1262
  %v1485 = vunpack.c.h.b16 %v1262
  %v1486 = vunpack.c.l.b16 %v1263
  %v1487 = vunpack.c.h.b16 %v1263
  %v1488 = vunpack.c.l.b16 %v1264
  %v1489 = vunpack.c.h.b16 %v1264
  %v1490 = vunpack.c.l.b16 %v1265
  %v1491 = vunpack.c.h.b16 %v1265
  %v1492 = vunpack.c.l.b16 %v1266
  %v1493 = vunpack.c.h.b16 %v1266
  %v1494 = vunpack.c.l.b16 %v1267
  %v1495 = vunpack.c.h.b16 %v1267
  %v1496 = vpack.c.b16 %v1384, %v1368
  %v1497 = vpack.c.b16 %v1385, %v1369
  %v1498 = vpack.c.b16 %v1386, %v1370
  %v1499 = vpack.c.b16 %v1387, %v1371
  %v1500 = vpack.c.b16 %v1388, %v1372
  %v1501 = vpack.c.b16 %v1389, %v1373
  %v1502 = vpack.c.b16 %v1390, %v1374
  %v1503 = vpack.c.b16 %v1391, %v1375
  %v1504 = vpack.c.b16 %v1392, %v1376
  %v1505 = vpack.c.b16 %v1393, %v1377
  %v1506 = vpack.c.b16 %v1394, %v1378
  %v1507 = vpack.c.b16 %v1395, %v1379
  %v1508 = vpack.c.b16 %v1396, %v1380
  %v1509 = vpack.c.b16 %v1397, %v1381
  %v1510 = vpack.c.b16 %v1398, %v1382
  %v1511 = vpack.c.b16 %v1399, %v1383
  %v1512 = vpack.c.b16 %v1416, %v1400
  %v1513 = vpack.c.b16 %v1417, %v1401
  %v1514 = vpack.c.b16 %v1418, %v1402
  %v1515 = vpack.c.b16 %v1419, %v1403
  %v1516 = vpack.c.b16 %v1420, %v1404
  %v1517 = vpack.c.b16 %v1421, %v1405
  %v1518 = vpack.c.b16 %v1422, %v1406
  %v1519 = vpack.c.b16 %v1423, %v1407
  %v1520 = vpack.c.b16 %v1424, %v1408
  %v1521 = vpack.c.b16 %v1425, %v1409
  %v1522 = vpack.c.b16 %v1426, %v1410
  %v1523 = vpack.c.b16 %v1427, %v1411
  %v1524 = vpack.c.b16 %v1428, %v1412
  %v1525 = vpack.c.b16 %v1429, %v1413
  %v1526 = vpack.c.b16 %v1430, %v1414
  %v1527 = vpack.c.b16 %v1431, %v1415
  %v1528 = vpack.c.b16 %v1448, %v1432
  %v1529 = vpack.c.b16 %v1449, %v1433
  %v1530 = vpack.c.b16 %v1450, %v1434
  %v1531 = vpack.c.b16 %v1451, %v1435
  %v1532 = vpack.c.b16 %v1452, %v1436
  %v1533 = vpack.c.b16 %v1453, %v1437
  %v1534 = vpack.c.b16 %v1454, %v1438
  %v1535 = vpack.c.b16 %v1455, %v1439
  %v1536 = vpack.c.b16 %v1456, %v1440
  %v1537 = vpack.c.b16 %v1457, %v1441
  %v1538 = vpack.c.b16 %v1458, %v1442
  %v1539 = vpack.c.b16 %v1459, %v1443
  %v1540 = vpack.c.b16 %v1460, %v1444
  %v1541 = vpack.c.b16 %v1461, %v1445
  %v1542 = vpack.c.b16 %v1462, %v1446
  %v1543 = vpack.c.b16 %v1463, %v1447
  %v1544 = vpack.c.b16 %v1480, %v1464
  %v1545 = vpack.c.b16 %v1481, %v1465
  %v1546 = vpack.c.b16 %v1482, %v1466
  %v1547 = vpack.c.b16 %v1483, %v1467
  %v1548 = vpack.c.b16 %v1484, %v1468
  %v1549 = vpack.c.b16 %v1485, %v1469
  %v1550 = vpack.c.b16 %v1486, %v1470
  %v1551 = vpack.c.b16 %v1487, %v1471
  %v1552 = vpack.c.b16 %v1488, %v1472
  %v1553 = vpack.c.b16 %v1489, %v1473
  %v1554 = vpack.c.b16 %v1490, %v1474
  %v1555 = vpack.c.b16 %v1491, %v1475
  %v1556 = vpack.c.b16 %v1492, %v1476
  %v1557 = vpack.c.b16 %v1493, %v1477
  %v1558 = vpack.c.b16 %v1494, %v1478
  %v1559 = vpack.c.b16 %v1495, %v1479
  %v1625 = vsel %vm214, %v1203, 0
  %1627 = vmatpush.bf16.msra.mxu0 0
  %1628 = vmatpush.bf16.msra.mxu0 0
  %1629 = vmatpush.bf16.msra.mxu0 0
  %1630 = vmatpush.bf16.msra.mxu0 0
  %1631 = vmatpush.bf16.msra.mxu0 %v1544
  %1632 = vmatpush.bf16.msra.mxu0 %v1528
  %1633 = vmatpush.bf16.msra.mxu0 %v1512
  %1634 = vmatpush.bf16.msra.mxu0 %v1496
  %1635 = vmatmul.bf16.gmra.mxu0 %v1625
  %v1636 = vpop.f32.mrf.mxu0
  %v1637 = vadd.f32 %v1272, %v1636
  %v1638 = vpop.f32.mrf.mxu0
  %v1639 = vadd.f32 %v1272, %v1638
  %1640 = vdwg.mxu0
  %1641 = vmatpush.bf16.msra.mxu0 0
  %1642 = vmatpush.bf16.msra.mxu0 0
  %1643 = vmatpush.bf16.msra.mxu0 0
  %1644 = vmatpush.bf16.msra.mxu0 0
  %1645 = vmatpush.bf16.msra.mxu0 %v1545
  %1646 = vmatpush.bf16.msra.mxu0 %v1529
  %1647 = vmatpush.bf16.msra.mxu0 %v1513
  %1648 = vmatpush.bf16.msra.mxu0 %v1497
  %1649 = vmatmul.bf16.gmra.mxu0 %v1625
  %v1650 = vpop.f32.mrf.mxu0
  %v1651 = vadd.f32 %v1273, %v1650
  %v1652 = vpop.f32.mrf.mxu0
  %v1653 = vadd.f32 %v1273, %v1652
  %1654 = vdwg.mxu0
  %1655 = vmatpush.bf16.msra.mxu0 0
  %1656 = vmatpush.bf16.msra.mxu0 0
  %1657 = vmatpush.bf16.msra.mxu0 0
  %1658 = vmatpush.bf16.msra.mxu0 0
  %1659 = vmatpush.bf16.msra.mxu0 %v1546
  %1660 = vmatpush.bf16.msra.mxu0 %v1530
  %1661 = vmatpush.bf16.msra.mxu0 %v1514
  %1662 = vmatpush.bf16.msra.mxu0 %v1498
  %1663 = vmatmul.bf16.gmra.mxu0 %v1625
  %v1664 = vpop.f32.mrf.mxu0
  %v1665 = vadd.f32 %v1274, %v1664
  %v1666 = vpop.f32.mrf.mxu0
  %v1667 = vadd.f32 %v1274, %v1666
  %1668 = vdwg.mxu0
  %1669 = vmatpush.bf16.msra.mxu0 0
  %1670 = vmatpush.bf16.msra.mxu0 0
  %1671 = vmatpush.bf16.msra.mxu0 0
  %1672 = vmatpush.bf16.msra.mxu0 0
  %1673 = vmatpush.bf16.msra.mxu0 %v1547
  %1674 = vmatpush.bf16.msra.mxu0 %v1531
  %1675 = vmatpush.bf16.msra.mxu0 %v1515
  %1676 = vmatpush.bf16.msra.mxu0 %v1499
  %1677 = vmatmul.bf16.gmra.mxu0 %v1625
  %v1678 = vpop.f32.mrf.mxu0
  %v1679 = vadd.f32 %v1275, %v1678
  %v1680 = vpop.f32.mrf.mxu0
  %v1681 = vadd.f32 %v1275, %v1680
  %1682 = vdwg.mxu0
  %1683 = vmatpush.bf16.msra.mxu0 0
  %1684 = vmatpush.bf16.msra.mxu0 0
  %1685 = vmatpush.bf16.msra.mxu0 0
  %1686 = vmatpush.bf16.msra.mxu0 0
  %1687 = vmatpush.bf16.msra.mxu0 %v1548
  %1688 = vmatpush.bf16.msra.mxu0 %v1532
  %1689 = vmatpush.bf16.msra.mxu0 %v1516
  %1690 = vmatpush.bf16.msra.mxu0 %v1500
  %1691 = vmatmul.bf16.gmra.mxu0 %v1625
  %v1692 = vpop.f32.mrf.mxu0
  %v1693 = vadd.f32 %v1276, %v1692
  %v1694 = vpop.f32.mrf.mxu0
  %v1695 = vadd.f32 %v1276, %v1694
  %1696 = vdwg.mxu0
  %1697 = vmatpush.bf16.msra.mxu0 0
  %1698 = vmatpush.bf16.msra.mxu0 0
  %1699 = vmatpush.bf16.msra.mxu0 0
  %1700 = vmatpush.bf16.msra.mxu0 0
  %1701 = vmatpush.bf16.msra.mxu0 %v1549
  %1702 = vmatpush.bf16.msra.mxu0 %v1533
  %1703 = vmatpush.bf16.msra.mxu0 %v1517
  %1704 = vmatpush.bf16.msra.mxu0 %v1501
  %1705 = vmatmul.bf16.gmra.mxu0 %v1625
  %v1706 = vpop.f32.mrf.mxu0
  %v1707 = vadd.f32 %v1277, %v1706
  %v1708 = vpop.f32.mrf.mxu0
  %v1709 = vadd.f32 %v1277, %v1708
  %1710 = vdwg.mxu0
  %1711 = vmatpush.bf16.msra.mxu0 0
  %1712 = vmatpush.bf16.msra.mxu0 0
  %1713 = vmatpush.bf16.msra.mxu0 0
  %1714 = vmatpush.bf16.msra.mxu0 0
  %1715 = vmatpush.bf16.msra.mxu0 %v1550
  %1716 = vmatpush.bf16.msra.mxu0 %v1534
  %1717 = vmatpush.bf16.msra.mxu0 %v1518
  %1718 = vmatpush.bf16.msra.mxu0 %v1502
  %1719 = vmatmul.bf16.gmra.mxu0 %v1625
  %v1720 = vpop.f32.mrf.mxu0
  %v1721 = vadd.f32 %v1278, %v1720
  %v1722 = vpop.f32.mrf.mxu0
  %v1723 = vadd.f32 %v1278, %v1722
  %1724 = vdwg.mxu0
  %1725 = vmatpush.bf16.msra.mxu0 0
  %1726 = vmatpush.bf16.msra.mxu0 0
  %1727 = vmatpush.bf16.msra.mxu0 0
  %1728 = vmatpush.bf16.msra.mxu0 0
  %1729 = vmatpush.bf16.msra.mxu0 %v1551
  %1730 = vmatpush.bf16.msra.mxu0 %v1535
  %1731 = vmatpush.bf16.msra.mxu0 %v1519
  %1732 = vmatpush.bf16.msra.mxu0 %v1503
  %1733 = vmatmul.bf16.gmra.mxu0 %v1625
  %v1734 = vpop.f32.mrf.mxu0
  %v1735 = vadd.f32 %v1279, %v1734
  %v1736 = vpop.f32.mrf.mxu0
  %v1737 = vadd.f32 %v1279, %v1736
  %1738 = vdwg.mxu0
  %1739 = vmatpush.bf16.msra.mxu0 0
  %1740 = vmatpush.bf16.msra.mxu0 0
  %1741 = vmatpush.bf16.msra.mxu0 0
  %1742 = vmatpush.bf16.msra.mxu0 0
  %1743 = vmatpush.bf16.msra.mxu0 %v1552
  %1744 = vmatpush.bf16.msra.mxu0 %v1536
  %1745 = vmatpush.bf16.msra.mxu0 %v1520
  %1746 = vmatpush.bf16.msra.mxu0 %v1504
  %1747 = vmatmul.bf16.gmra.mxu0 %v1625
  %v1748 = vpop.f32.mrf.mxu0
  %v1749 = vadd.f32 %v1280, %v1748
  %v1750 = vpop.f32.mrf.mxu0
  %v1751 = vadd.f32 %v1280, %v1750
  %1752 = vdwg.mxu0
  %1753 = vmatpush.bf16.msra.mxu0 0
  %1754 = vmatpush.bf16.msra.mxu0 0
  %1755 = vmatpush.bf16.msra.mxu0 0
  %1756 = vmatpush.bf16.msra.mxu0 0
  %1757 = vmatpush.bf16.msra.mxu0 %v1553
  %1758 = vmatpush.bf16.msra.mxu0 %v1537
  %1759 = vmatpush.bf16.msra.mxu0 %v1521
  %1760 = vmatpush.bf16.msra.mxu0 %v1505
  %1761 = vmatmul.bf16.gmra.mxu0 %v1625
  %v1762 = vpop.f32.mrf.mxu0
  %v1763 = vadd.f32 %v1281, %v1762
  %v1764 = vpop.f32.mrf.mxu0
  %v1765 = vadd.f32 %v1281, %v1764
  %1766 = vdwg.mxu0
  %1767 = vmatpush.bf16.msra.mxu0 0
  %1768 = vmatpush.bf16.msra.mxu0 0
  %1769 = vmatpush.bf16.msra.mxu0 0
  %1770 = vmatpush.bf16.msra.mxu0 0
  %1771 = vmatpush.bf16.msra.mxu0 %v1554
  %1772 = vmatpush.bf16.msra.mxu0 %v1538
  %1773 = vmatpush.bf16.msra.mxu0 %v1522
  %1774 = vmatpush.bf16.msra.mxu0 %v1506
  %1775 = vmatmul.bf16.gmra.mxu0 %v1625
  %v1776 = vpop.f32.mrf.mxu0
  %v1777 = vadd.f32 %v1282, %v1776
  %v1778 = vpop.f32.mrf.mxu0
  %v1779 = vadd.f32 %v1282, %v1778
  %1780 = vdwg.mxu0
  %1781 = vmatpush.bf16.msra.mxu0 0
  %1782 = vmatpush.bf16.msra.mxu0 0
  %1783 = vmatpush.bf16.msra.mxu0 0
  %1784 = vmatpush.bf16.msra.mxu0 0
  %1785 = vmatpush.bf16.msra.mxu0 %v1555
  %1786 = vmatpush.bf16.msra.mxu0 %v1539
  %1787 = vmatpush.bf16.msra.mxu0 %v1523
  %1788 = vmatpush.bf16.msra.mxu0 %v1507
  %1789 = vmatmul.bf16.gmra.mxu0 %v1625
  %v1790 = vpop.f32.mrf.mxu0
  %v1791 = vadd.f32 %v1283, %v1790
  %v1792 = vpop.f32.mrf.mxu0
  %v1793 = vadd.f32 %v1283, %v1792
  %1794 = vdwg.mxu0
  %1795 = vmatpush.bf16.msra.mxu0 0
  %1796 = vmatpush.bf16.msra.mxu0 0
  %1797 = vmatpush.bf16.msra.mxu0 0
  %1798 = vmatpush.bf16.msra.mxu0 0
  %1799 = vmatpush.bf16.msra.mxu0 %v1556
  %1800 = vmatpush.bf16.msra.mxu0 %v1540
  %1801 = vmatpush.bf16.msra.mxu0 %v1524
  %1802 = vmatpush.bf16.msra.mxu0 %v1508
  %1803 = vmatmul.bf16.gmra.mxu0 %v1625
  %v1804 = vpop.f32.mrf.mxu0
  %v1805 = vadd.f32 %v1284, %v1804
  %v1806 = vpop.f32.mrf.mxu0
  %v1807 = vadd.f32 %v1284, %v1806
  %1808 = vdwg.mxu0
  %1809 = vmatpush.bf16.msra.mxu0 0
  %1810 = vmatpush.bf16.msra.mxu0 0
  %1811 = vmatpush.bf16.msra.mxu0 0
  %1812 = vmatpush.bf16.msra.mxu0 0
  %1813 = vmatpush.bf16.msra.mxu0 %v1557
  %1814 = vmatpush.bf16.msra.mxu0 %v1541
  %1815 = vmatpush.bf16.msra.mxu0 %v1525
  %1816 = vmatpush.bf16.msra.mxu0 %v1509
  %1817 = vmatmul.bf16.gmra.mxu0 %v1625
  %v1818 = vpop.f32.mrf.mxu0
  %v1819 = vadd.f32 %v1285, %v1818
  %v1820 = vpop.f32.mrf.mxu0
  %v1821 = vadd.f32 %v1285, %v1820
  %1822 = vdwg.mxu0
  %1823 = vmatpush.bf16.msra.mxu0 0
  %1824 = vmatpush.bf16.msra.mxu0 0
  %1825 = vmatpush.bf16.msra.mxu0 0
  %1826 = vmatpush.bf16.msra.mxu0 0
  %1827 = vmatpush.bf16.msra.mxu0 %v1558
  %1828 = vmatpush.bf16.msra.mxu0 %v1542
  %1829 = vmatpush.bf16.msra.mxu0 %v1526
  %1830 = vmatpush.bf16.msra.mxu0 %v1510
  %1831 = vmatmul.bf16.gmra.mxu0 %v1625
  %v1832 = vpop.f32.mrf.mxu0
  %v1833 = vadd.f32 %v1286, %v1832
  %v1834 = vpop.f32.mrf.mxu0
  %v1835 = vadd.f32 %v1286, %v1834
  %1836 = vdwg.mxu0
  %1837 = vmatpush.bf16.msra.mxu0 0
  %1838 = vmatpush.bf16.msra.mxu0 0
  %1839 = vmatpush.bf16.msra.mxu0 0
  %1840 = vmatpush.bf16.msra.mxu0 0
  %1841 = vmatpush.bf16.msra.mxu0 %v1559
  %1842 = vmatpush.bf16.msra.mxu0 %v1543
  %1843 = vmatpush.bf16.msra.mxu0 %v1527
  %1844 = vmatpush.bf16.msra.mxu0 %v1511
  %1845 = vmatmul.bf16.gmra.mxu0 %v1625
  %v1846 = vpop.f32.mrf.mxu0
  %v1847 = vadd.f32 %v1287, %v1846
  %v1848 = vpop.f32.mrf.mxu0
  %v1849 = vadd.f32 %v1287, %v1848
  %1850 = vdwg.mxu0
  %v1851 = vmax.f32 %v1637, 0.0
  %v1852 = vmax.f32 %v1651, 0.0
  %v1853 = vmax.f32 %v1665, 0.0
  %v1854 = vmax.f32 %v1679, 0.0
  %v1855 = vmax.f32 %v1693, 0.0
  %v1856 = vmax.f32 %v1707, 0.0
  %v1857 = vmax.f32 %v1721, 0.0
  %v1858 = vmax.f32 %v1735, 0.0
  %v1859 = vmax.f32 %v1749, 0.0
  %v1860 = vmax.f32 %v1763, 0.0
  %v1861 = vmax.f32 %v1777, 0.0
  %v1862 = vmax.f32 %v1791, 0.0
  %v1863 = vmax.f32 %v1805, 0.0
  %v1864 = vmax.f32 %v1819, 0.0
  %v1865 = vmax.f32 %v1833, 0.0
  %v1866 = vmax.f32 %v1847, 0.0
  %v1867 = vmax.f32 %v1639, 0.0
  %v1868 = vmax.f32 %v1653, 0.0
  %v1869 = vmax.f32 %v1667, 0.0
  %v1870 = vmax.f32 %v1681, 0.0
  %v1871 = vmax.f32 %v1695, 0.0
  %v1872 = vmax.f32 %v1709, 0.0
  %v1873 = vmax.f32 %v1723, 0.0
  %v1874 = vmax.f32 %v1737, 0.0
  %v1875 = vmax.f32 %v1751, 0.0
  %v1876 = vmax.f32 %v1765, 0.0
  %v1877 = vmax.f32 %v1779, 0.0
  %v1878 = vmax.f32 %v1793, 0.0
  %v1879 = vmax.f32 %v1807, 0.0
  %v1880 = vmax.f32 %v1821, 0.0
  %v1881 = vmax.f32 %v1835, 0.0
  %v1882 = vmax.f32 %v1849, 0.0
  %v1883 = vpack.c.bf16 %v1867, %v1851
  %v1884 = vpack.c.bf16 %v1868, %v1852
  %v1885 = vpack.c.bf16 %v1869, %v1853
  %v1886 = vpack.c.bf16 %v1870, %v1854
  %v1887 = vpack.c.bf16 %v1871, %v1855
  %v1888 = vpack.c.bf16 %v1872, %v1856
  %v1889 = vpack.c.bf16 %v1873, %v1857
  %v1890 = vpack.c.bf16 %v1874, %v1858
  %v1891 = vpack.c.bf16 %v1875, %v1859
  %v1892 = vpack.c.bf16 %v1876, %v1860
  %v1893 = vpack.c.bf16 %v1877, %v1861
  %v1894 = vpack.c.bf16 %v1878, %v1862
  %v1895 = vpack.c.bf16 %v1879, %v1863
  %v1896 = vpack.c.bf16 %v1880, %v1864
  %v1897 = vpack.c.bf16 %v1881, %v1865
  %v1898 = vpack.c.bf16 %v1882, %v1866
  %v1899 = vld [vmem:[%s15] sm:$0xf]
  %v1900 = vld [vmem:[%s15 + $0x4] sm:$0xf]
  %v1901 = vld [vmem:[%s15 + $0x8] sm:$0xf]
  %v1902 = vld [vmem:[%s15 + $0xc] sm:$0xf]
  %v1903 = vld [vmem:[%s15 + $0x10] sm:$0xf]
  %v1904 = vld [vmem:[%s15 + $0x14] sm:$0xf]
  %v1905 = vld [vmem:[%s15 + $0x18] sm:$0xf]
  %v1906 = vld [vmem:[%s15 + $0x1c] sm:$0xf]
  %v1907 = vld [vmem:[%s15 + $0x20] sm:$0xf]
  %v1908 = vld [vmem:[%s15 + $0x24] sm:$0xf]
  %v1909 = vld [vmem:[%s15 + $0x28] sm:$0xf]
  %v1910 = vld [vmem:[%s15 + $0x2c] sm:$0xf]
  %v1911 = vld [vmem:[%s15 + $0x30] sm:$0xf]
  %v1912 = vld [vmem:[%s15 + $0x34] sm:$0xf]
  %v1913 = vld [vmem:[%s15 + $0x38] sm:$0xf]
  %v1914 = vld [vmem:[%s15 + $0x3c] sm:$0xf]
  %v1915 = vld [vmem:[%s15 + $0x40] sm:$0xf]
  %v1916 = vld [vmem:[%s15 + $0x44] sm:$0xf]
  %v1917 = vld [vmem:[%s15 + $0x48] sm:$0xf]
  %v1918 = vld [vmem:[%s15 + $0x4c] sm:$0xf]
  %v1919 = vld [vmem:[%s15 + $0x50] sm:$0xf]
  %v1920 = vld [vmem:[%s15 + $0x54] sm:$0xf]
  %v1921 = vld [vmem:[%s15 + $0x58] sm:$0xf]
  %v1922 = vld [vmem:[%s15 + $0x5c] sm:$0xf]
  %v1923 = vld [vmem:[%s15 + $0x60] sm:$0xf]
  %v1924 = vld [vmem:[%s15 + $0x64] sm:$0xf]
  %v1925 = vld [vmem:[%s15 + $0x68] sm:$0xf]
  %v1926 = vld [vmem:[%s15 + $0x6c] sm:$0xf]
  %v1927 = vld [vmem:[%s15 + $0x70] sm:$0xf]
  %v1928 = vld [vmem:[%s15 + $0x74] sm:$0xf]
  %v1929 = vld [vmem:[%s15 + $0x78] sm:$0xf]
  %v1930 = vld [vmem:[%s15 + $0x7c] sm:$0xf]
  %v1931 = vld [vmem:[%s15 + $0x80] sm:$0xf]
  %v1932 = vld [vmem:[%s15 + $0x84] sm:$0xf]
  %v1933 = vld [vmem:[%s15 + $0x88] sm:$0xf]
  %v1934 = vld [vmem:[%s15 + $0x8c] sm:$0xf]
  %v1935 = vld [vmem:[%s15 + $0x90] sm:$0xf]
  %v1936 = vld [vmem:[%s15 + $0x94] sm:$0xf]
  %v1937 = vld [vmem:[%s15 + $0x98] sm:$0xf]
  %v1938 = vld [vmem:[%s15 + $0x9c] sm:$0xf]
  %v1939 = vld [vmem:[%s15 + $0xa0] sm:$0xf]
  %v1940 = vld [vmem:[%s15 + $0xa4] sm:$0xf]
  %v1941 = vld [vmem:[%s15 + $0xa8] sm:$0xf]
  %v1942 = vld [vmem:[%s15 + $0xac] sm:$0xf]
  %v1943 = vld [vmem:[%s15 + $0xb0] sm:$0xf]
  %v1944 = vld [vmem:[%s15 + $0xb4] sm:$0xf]
  %v1945 = vld [vmem:[%s15 + $0xb8] sm:$0xf]
  %v1946 = vld [vmem:[%s15 + $0xbc] sm:$0xf]
  %v1947 = vld [vmem:[%s15 + $0xc0] sm:$0xf]
  %v1948 = vld [vmem:[%s15 + $0xc4] sm:$0xf]
  %v1949 = vld [vmem:[%s15 + $0xc8] sm:$0xf]
  %v1950 = vld [vmem:[%s15 + $0xcc] sm:$0xf]
  %v1951 = vld [vmem:[%s15 + $0xd0] sm:$0xf]
  %v1952 = vld [vmem:[%s15 + $0xd4] sm:$0xf]
  %v1953 = vld [vmem:[%s15 + $0xd8] sm:$0xf]
  %v1954 = vld [vmem:[%s15 + $0xdc] sm:$0xf]
  %v1955 = vld [vmem:[%s15 + $0xe0] sm:$0xf]
  %v1956 = vld [vmem:[%s15 + $0xe4] sm:$0xf]
  %v1957 = vld [vmem:[%s15 + $0xe8] sm:$0xf]
  %v1958 = vld [vmem:[%s15 + $0xec] sm:$0xf]
  %v1959 = vld [vmem:[%s15 + $0xf0] sm:$0xf]
  %v1960 = vld [vmem:[%s15 + $0xf4] sm:$0xf]
  %v1961 = vld [vmem:[%s15 + $0xf8] sm:$0xf]
  %v1962 = vld [vmem:[%s15 + $0xfc] sm:$0xf]
  %v1963 = vld [vmem:[%s15 + $0x100] sm:$0xf]
  %v1964 = vld [vmem:[%s15 + $0x104] sm:$0xf]
  %v1965 = vld [vmem:[%s15 + $0x108] sm:$0xf]
  %v1966 = vld [vmem:[%s15 + $0x10c] sm:$0xf]
  %v1967 = vld [vmem:[%s15 + $0x110] sm:$0xf]
  %v1968 = vld [vmem:[%s15 + $0x114] sm:$0xf]
  %v1969 = vld [vmem:[%s15 + $0x118] sm:$0xf]
  %v1970 = vld [vmem:[%s15 + $0x11c] sm:$0xf]
  %v1971 = vld [vmem:[%s15 + $0x120] sm:$0xf]
  %v1972 = vld [vmem:[%s15 + $0x124] sm:$0xf]
  %v1973 = vld [vmem:[%s15 + $0x128] sm:$0xf]
  %v1974 = vld [vmem:[%s15 + $0x12c] sm:$0xf]
  %v1975 = vld [vmem:[%s15 + $0x130] sm:$0xf]
  %v1976 = vld [vmem:[%s15 + $0x134] sm:$0xf]
  %v1977 = vld [vmem:[%s15 + $0x138] sm:$0xf]
  %v1978 = vld [vmem:[%s15 + $0x13c] sm:$0xf]
  %v1979 = vld [vmem:[%s15 + $0x140] sm:$0xf]
  %v1980 = vld [vmem:[%s15 + $0x144] sm:$0xf]
  %v1981 = vld [vmem:[%s15 + $0x148] sm:$0xf]
  %v1982 = vld [vmem:[%s15 + $0x14c] sm:$0xf]
  %v1983 = vld [vmem:[%s15 + $0x150] sm:$0xf]
  %v1984 = vld [vmem:[%s15 + $0x154] sm:$0xf]
  %v1985 = vld [vmem:[%s15 + $0x158] sm:$0xf]
  %v1986 = vld [vmem:[%s15 + $0x15c] sm:$0xf]
  %v1987 = vld [vmem:[%s15 + $0x160] sm:$0xf]
  %v1988 = vld [vmem:[%s15 + $0x164] sm:$0xf]
  %v1989 = vld [vmem:[%s15 + $0x168] sm:$0xf]
  %v1990 = vld [vmem:[%s15 + $0x16c] sm:$0xf]
  %v1991 = vld [vmem:[%s15 + $0x170] sm:$0xf]
  %v1992 = vld [vmem:[%s15 + $0x174] sm:$0xf]
  %v1993 = vld [vmem:[%s15 + $0x178] sm:$0xf]
  %v1994 = vld [vmem:[%s15 + $0x17c] sm:$0xf]
  %v1995 = vld [vmem:[%s15 + $0x180] sm:$0xf]
  %v1996 = vld [vmem:[%s15 + $0x184] sm:$0xf]
  %v1997 = vld [vmem:[%s15 + $0x188] sm:$0xf]
  %v1998 = vld [vmem:[%s15 + $0x18c] sm:$0xf]
  %v1999 = vld [vmem:[%s15 + $0x190] sm:$0xf]
  %v2000 = vld [vmem:[%s15 + $0x194] sm:$0xf]
  %v2001 = vld [vmem:[%s15 + $0x198] sm:$0xf]
  %v2002 = vld [vmem:[%s15 + $0x19c] sm:$0xf]
  %v2003 = vld [vmem:[%s15 + $0x1a0] sm:$0xf]
  %v2004 = vld [vmem:[%s15 + $0x1a4] sm:$0xf]
  %v2005 = vld [vmem:[%s15 + $0x1a8] sm:$0xf]
  %v2006 = vld [vmem:[%s15 + $0x1ac] sm:$0xf]
  %v2007 = vld [vmem:[%s15 + $0x1b0] sm:$0xf]
  %v2008 = vld [vmem:[%s15 + $0x1b4] sm:$0xf]
  %v2009 = vld [vmem:[%s15 + $0x1b8] sm:$0xf]
  %v2010 = vld [vmem:[%s15 + $0x1bc] sm:$0xf]
  %v2011 = vld [vmem:[%s15 + $0x1c0] sm:$0xf]
  %v2012 = vld [vmem:[%s15 + $0x1c4] sm:$0xf]
  %v2013 = vld [vmem:[%s15 + $0x1c8] sm:$0xf]
  %v2014 = vld [vmem:[%s15 + $0x1cc] sm:$0xf]
  %v2015 = vld [vmem:[%s15 + $0x1d0] sm:$0xf]
  %v2016 = vld [vmem:[%s15 + $0x1d4] sm:$0xf]
  %v2017 = vld [vmem:[%s15 + $0x1d8] sm:$0xf]
  %v2018 = vld [vmem:[%s15 + $0x1dc] sm:$0xf]
  %v2019 = vld [vmem:[%s15 + $0x1e0] sm:$0xf]
  %v2020 = vld [vmem:[%s15 + $0x1e4] sm:$0xf]
  %v2021 = vld [vmem:[%s15 + $0x1e8] sm:$0xf]
  %v2022 = vld [vmem:[%s15 + $0x1ec] sm:$0xf]
  %v2023 = vld [vmem:[%s15 + $0x1f0] sm:$0xf]
  %v2024 = vld [vmem:[%s15 + $0x1f4] sm:$0xf]
  %v2025 = vld [vmem:[%s15 + $0x1f8] sm:$0xf]
  %v2026 = vld [vmem:[%s15 + $0x1fc] sm:$0xf]
  %v2027 = vld [vmem:[%s15 + $0x200] sm:$0xf]
  %v2028 = vld [vmem:[%s15 + $0x204] sm:$0xf]
  %v2029 = vld [vmem:[%s15 + $0x208] sm:$0xf]
  %v2030 = vld [vmem:[%s15 + $0x20c] sm:$0xf]
  %v2031 = vld [vmem:[%s15 + $0x210] sm:$0xf]
  %v2032 = vld [vmem:[%s15 + $0x214] sm:$0xf]
  %v2033 = vld [vmem:[%s15 + $0x218] sm:$0xf]
  %v2034 = vld [vmem:[%s15 + $0x21c] sm:$0xf]
  %v2035 = vld [vmem:[%s15 + $0x220] sm:$0xf]
  %v2036 = vld [vmem:[%s15 + $0x224] sm:$0xf]
  %v2037 = vld [vmem:[%s15 + $0x228] sm:$0xf]
  %v2038 = vld [vmem:[%s15 + $0x22c] sm:$0xf]
  %v2039 = vld [vmem:[%s15 + $0x230] sm:$0xf]
  %v2040 = vld [vmem:[%s15 + $0x234] sm:$0xf]
  %v2041 = vld [vmem:[%s15 + $0x238] sm:$0xf]
  %v2042 = vld [vmem:[%s15 + $0x23c] sm:$0xf]
  %v2043 = vld [vmem:[%s15 + $0x240] sm:$0xf]
  %v2044 = vld [vmem:[%s15 + $0x244] sm:$0xf]
  %v2045 = vld [vmem:[%s15 + $0x248] sm:$0xf]
  %v2046 = vld [vmem:[%s15 + $0x24c] sm:$0xf]
  %v2047 = vld [vmem:[%s15 + $0x250] sm:$0xf]
  %v2048 = vld [vmem:[%s15 + $0x254] sm:$0xf]
  %v2049 = vld [vmem:[%s15 + $0x258] sm:$0xf]
  %v2050 = vld [vmem:[%s15 + $0x25c] sm:$0xf]
  %v2051 = vld [vmem:[%s15 + $0x260] sm:$0xf]
  %v2052 = vld [vmem:[%s15 + $0x264] sm:$0xf]
  %v2053 = vld [vmem:[%s15 + $0x268] sm:$0xf]
  %v2054 = vld [vmem:[%s15 + $0x26c] sm:$0xf]
  %v2055 = vld [vmem:[%s15 + $0x270] sm:$0xf]
  %v2056 = vld [vmem:[%s15 + $0x274] sm:$0xf]
  %v2057 = vld [vmem:[%s15 + $0x278] sm:$0xf]
  %v2058 = vld [vmem:[%s15 + $0x27c] sm:$0xf]
  %v2059 = vld [vmem:[%s15 + $0x280] sm:$0xf]
  %v2060 = vld [vmem:[%s15 + $0x284] sm:$0xf]
  %v2061 = vld [vmem:[%s15 + $0x288] sm:$0xf]
  %v2062 = vld [vmem:[%s15 + $0x28c] sm:$0xf]
  %v2063 = vld [vmem:[%s15 + $0x290] sm:$0xf]
  %v2064 = vld [vmem:[%s15 + $0x294] sm:$0xf]
  %v2065 = vld [vmem:[%s15 + $0x298] sm:$0xf]
  %v2066 = vld [vmem:[%s15 + $0x29c] sm:$0xf]
  %v2067 = vld [vmem:[%s15 + $0x2a0] sm:$0xf]
  %v2068 = vld [vmem:[%s15 + $0x2a4] sm:$0xf]
  %v2069 = vld [vmem:[%s15 + $0x2a8] sm:$0xf]
  %v2070 = vld [vmem:[%s15 + $0x2ac] sm:$0xf]
  %v2071 = vld [vmem:[%s15 + $0x2b0] sm:$0xf]
  %v2072 = vld [vmem:[%s15 + $0x2b4] sm:$0xf]
  %v2073 = vld [vmem:[%s15 + $0x2b8] sm:$0xf]
  %v2074 = vld [vmem:[%s15 + $0x2bc] sm:$0xf]
  %v2075 = vld [vmem:[%s15 + $0x2c0] sm:$0xf]
  %v2076 = vld [vmem:[%s15 + $0x2c4] sm:$0xf]
  %v2077 = vld [vmem:[%s15 + $0x2c8] sm:$0xf]
  %v2078 = vld [vmem:[%s15 + $0x2cc] sm:$0xf]
  %v2079 = vld [vmem:[%s15 + $0x2d0] sm:$0xf]
  %v2080 = vld [vmem:[%s15 + $0x2d4] sm:$0xf]
  %v2081 = vld [vmem:[%s15 + $0x2d8] sm:$0xf]
  %v2082 = vld [vmem:[%s15 + $0x2dc] sm:$0xf]
  %v2083 = vld [vmem:[%s15 + $0x2e0] sm:$0xf]
  %v2084 = vld [vmem:[%s15 + $0x2e4] sm:$0xf]
  %v2085 = vld [vmem:[%s15 + $0x2e8] sm:$0xf]
  %v2086 = vld [vmem:[%s15 + $0x2ec] sm:$0xf]
  %v2087 = vld [vmem:[%s15 + $0x2f0] sm:$0xf]
  %v2088 = vld [vmem:[%s15 + $0x2f4] sm:$0xf]
  %v2089 = vld [vmem:[%s15 + $0x2f8] sm:$0xf]
  %v2090 = vld [vmem:[%s15 + $0x2fc] sm:$0xf]
  %v2091 = vld [vmem:[%s15 + $0x300] sm:$0xf]
  %v2092 = vld [vmem:[%s15 + $0x304] sm:$0xf]
  %v2093 = vld [vmem:[%s15 + $0x308] sm:$0xf]
  %v2094 = vld [vmem:[%s15 + $0x30c] sm:$0xf]
  %v2095 = vld [vmem:[%s15 + $0x310] sm:$0xf]
  %v2096 = vld [vmem:[%s15 + $0x314] sm:$0xf]
  %v2097 = vld [vmem:[%s15 + $0x318] sm:$0xf]
  %v2098 = vld [vmem:[%s15 + $0x31c] sm:$0xf]
  %v2099 = vld [vmem:[%s15 + $0x320] sm:$0xf]
  %v2100 = vld [vmem:[%s15 + $0x324] sm:$0xf]
  %v2101 = vld [vmem:[%s15 + $0x328] sm:$0xf]
  %v2102 = vld [vmem:[%s15 + $0x32c] sm:$0xf]
  %v2103 = vld [vmem:[%s15 + $0x330] sm:$0xf]
  %v2104 = vld [vmem:[%s15 + $0x334] sm:$0xf]
  %v2105 = vld [vmem:[%s15 + $0x338] sm:$0xf]
  %v2106 = vld [vmem:[%s15 + $0x33c] sm:$0xf]
  %v2107 = vld [vmem:[%s15 + $0x340] sm:$0xf]
  %v2108 = vld [vmem:[%s15 + $0x344] sm:$0xf]
  %v2109 = vld [vmem:[%s15 + $0x348] sm:$0xf]
  %v2110 = vld [vmem:[%s15 + $0x34c] sm:$0xf]
  %v2111 = vld [vmem:[%s15 + $0x350] sm:$0xf]
  %v2112 = vld [vmem:[%s15 + $0x354] sm:$0xf]
  %v2113 = vld [vmem:[%s15 + $0x358] sm:$0xf]
  %v2114 = vld [vmem:[%s15 + $0x35c] sm:$0xf]
  %v2115 = vld [vmem:[%s15 + $0x360] sm:$0xf]
  %v2116 = vld [vmem:[%s15 + $0x364] sm:$0xf]
  %v2117 = vld [vmem:[%s15 + $0x368] sm:$0xf]
  %v2118 = vld [vmem:[%s15 + $0x36c] sm:$0xf]
  %v2119 = vld [vmem:[%s15 + $0x370] sm:$0xf]
  %v2120 = vld [vmem:[%s15 + $0x374] sm:$0xf]
  %v2121 = vld [vmem:[%s15 + $0x378] sm:$0xf]
  %v2122 = vld [vmem:[%s15 + $0x37c] sm:$0xf]
  %v2123 = vld [vmem:[%s15 + $0x380] sm:$0xf]
  %v2124 = vld [vmem:[%s15 + $0x384] sm:$0xf]
  %v2125 = vld [vmem:[%s15 + $0x388] sm:$0xf]
  %v2126 = vld [vmem:[%s15 + $0x38c] sm:$0xf]
  %v2127 = vld [vmem:[%s15 + $0x390] sm:$0xf]
  %v2128 = vld [vmem:[%s15 + $0x394] sm:$0xf]
  %v2129 = vld [vmem:[%s15 + $0x398] sm:$0xf]
  %v2130 = vld [vmem:[%s15 + $0x39c] sm:$0xf]
  %v2131 = vld [vmem:[%s15 + $0x3a0] sm:$0xf]
  %v2132 = vld [vmem:[%s15 + $0x3a4] sm:$0xf]
  %v2133 = vld [vmem:[%s15 + $0x3a8] sm:$0xf]
  %v2134 = vld [vmem:[%s15 + $0x3ac] sm:$0xf]
  %v2135 = vld [vmem:[%s15 + $0x3b0] sm:$0xf]
  %v2136 = vld [vmem:[%s15 + $0x3b4] sm:$0xf]
  %v2137 = vld [vmem:[%s15 + $0x3b8] sm:$0xf]
  %v2138 = vld [vmem:[%s15 + $0x3bc] sm:$0xf]
  %v2139 = vld [vmem:[%s15 + $0x3c0] sm:$0xf]
  %v2140 = vld [vmem:[%s15 + $0x3c4] sm:$0xf]
  %v2141 = vld [vmem:[%s15 + $0x3c8] sm:$0xf]
  %v2142 = vld [vmem:[%s15 + $0x3cc] sm:$0xf]
  %v2143 = vld [vmem:[%s15 + $0x3d0] sm:$0xf]
  %v2144 = vld [vmem:[%s15 + $0x3d4] sm:$0xf]
  %v2145 = vld [vmem:[%s15 + $0x3d8] sm:$0xf]
  %v2146 = vld [vmem:[%s15 + $0x3dc] sm:$0xf]
  %v2147 = vld [vmem:[%s15 + $0x3e0] sm:$0xf]
  %v2148 = vld [vmem:[%s15 + $0x3e4] sm:$0xf]
  %v2149 = vld [vmem:[%s15 + $0x3e8] sm:$0xf]
  %v2150 = vld [vmem:[%s15 + $0x3ec] sm:$0xf]
  %v2151 = vld [vmem:[%s15 + $0x3f0] sm:$0xf]
  %v2152 = vld [vmem:[%s15 + $0x3f4] sm:$0xf]
  %v2153 = vld [vmem:[%s15 + $0x3f8] sm:$0xf]
  %v2154 = vld [vmem:[%s15 + $0x3fc] sm:$0xf]
  %v2155 = vld [vmem:[%s16] sm:$0x1]
  %v2157 = vperm.slane %v2155, 0
  %v2415 = vunpack.c.l.b16 %v1899
  %v2416 = vunpack.c.l.b16 %v1900
  %v2417 = vunpack.c.l.b16 %v1901
  %v2418 = vunpack.c.l.b16 %v1902
  %v2419 = vunpack.c.l.b16 %v1903
  %v2420 = vunpack.c.l.b16 %v1904
  %v2421 = vunpack.c.l.b16 %v1905
  %v2422 = vunpack.c.l.b16 %v1906
  %v2423 = vunpack.c.l.b16 %v1907
  %v2424 = vunpack.c.l.b16 %v1908
  %v2425 = vunpack.c.l.b16 %v1909
  %v2426 = vunpack.c.l.b16 %v1910
  %v2427 = vunpack.c.l.b16 %v1911
  %v2428 = vunpack.c.l.b16 %v1912
  %v2429 = vunpack.c.l.b16 %v1913
  %v2430 = vunpack.c.l.b16 %v1914
  %v2431 = vunpack.c.l.b16 %v1915
  %v2432 = vunpack.c.l.b16 %v1916
  %v2433 = vunpack.c.l.b16 %v1917
  %v2434 = vunpack.c.l.b16 %v1918
  %v2435 = vunpack.c.l.b16 %v1919
  %v2436 = vunpack.c.l.b16 %v1920
  %v2437 = vunpack.c.l.b16 %v1921
  %v2438 = vunpack.c.l.b16 %v1922
  %v2439 = vunpack.c.l.b16 %v1923
  %v2440 = vunpack.c.l.b16 %v1924
  %v2441 = vunpack.c.l.b16 %v1925
  %v2442 = vunpack.c.l.b16 %v1926
  %v2443 = vunpack.c.l.b16 %v1927
  %v2444 = vunpack.c.l.b16 %v1928
  %v2445 = vunpack.c.l.b16 %v1929
  %v2446 = vunpack.c.l.b16 %v1930
  %v2447 = vunpack.c.l.b16 %v1931
  %v2448 = vunpack.c.l.b16 %v1932
  %v2449 = vunpack.c.l.b16 %v1933
  %v2450 = vunpack.c.l.b16 %v1934
  %v2451 = vunpack.c.l.b16 %v1935
  %v2452 = vunpack.c.l.b16 %v1936
  %v2453 = vunpack.c.l.b16 %v1937
  %v2454 = vunpack.c.l.b16 %v1938
  %v2455 = vunpack.c.l.b16 %v1939
  %v2456 = vunpack.c.l.b16 %v1940
  %v2457 = vunpack.c.l.b16 %v1941
  %v2458 = vunpack.c.l.b16 %v1942
  %v2459 = vunpack.c.l.b16 %v1943
  %v2460 = vunpack.c.l.b16 %v1944
  %v2461 = vunpack.c.l.b16 %v1945
  %v2462 = vunpack.c.l.b16 %v1946
  %v2463 = vunpack.c.l.b16 %v1947
  %v2464 = vunpack.c.l.b16 %v1948
  %v2465 = vunpack.c.l.b16 %v1949
  %v2466 = vunpack.c.l.b16 %v1950
  %v2467 = vunpack.c.l.b16 %v1951
  %v2468 = vunpack.c.l.b16 %v1952
  %v2469 = vunpack.c.l.b16 %v1953
  %v2470 = vunpack.c.l.b16 %v1954
  %v2471 = vunpack.c.l.b16 %v1955
  %v2472 = vunpack.c.l.b16 %v1956
  %v2473 = vunpack.c.l.b16 %v1957
  %v2474 = vunpack.c.l.b16 %v1958
  %v2475 = vunpack.c.l.b16 %v1959
  %v2476 = vunpack.c.l.b16 %v1960
  %v2477 = vunpack.c.l.b16 %v1961
  %v2478 = vunpack.c.l.b16 %v1962
  %v2479 = vunpack.c.l.b16 %v1963
  %v2480 = vunpack.c.l.b16 %v1964
  %v2481 = vunpack.c.l.b16 %v1965
  %v2482 = vunpack.c.l.b16 %v1966
  %v2483 = vunpack.c.l.b16 %v1967
  %v2484 = vunpack.c.l.b16 %v1968
  %v2485 = vunpack.c.l.b16 %v1969
  %v2486 = vunpack.c.l.b16 %v1970
  %v2487 = vunpack.c.l.b16 %v1971
  %v2488 = vunpack.c.l.b16 %v1972
  %v2489 = vunpack.c.l.b16 %v1973
  %v2490 = vunpack.c.l.b16 %v1974
  %v2491 = vunpack.c.l.b16 %v1975
  %v2492 = vunpack.c.l.b16 %v1976
  %v2493 = vunpack.c.l.b16 %v1977
  %v2494 = vunpack.c.l.b16 %v1978
  %v2495 = vunpack.c.l.b16 %v1979
  %v2496 = vunpack.c.l.b16 %v1980
  %v2497 = vunpack.c.l.b16 %v1981
  %v2498 = vunpack.c.l.b16 %v1982
  %v2499 = vunpack.c.l.b16 %v1983
  %v2500 = vunpack.c.l.b16 %v1984
  %v2501 = vunpack.c.l.b16 %v1985
  %v2502 = vunpack.c.l.b16 %v1986
  %v2503 = vunpack.c.l.b16 %v1987
  %v2504 = vunpack.c.l.b16 %v1988
  %v2505 = vunpack.c.l.b16 %v1989
  %v2506 = vunpack.c.l.b16 %v1990
  %v2507 = vunpack.c.l.b16 %v1991
  %v2508 = vunpack.c.l.b16 %v1992
  %v2509 = vunpack.c.l.b16 %v1993
  %v2510 = vunpack.c.l.b16 %v1994
  %v2511 = vunpack.c.l.b16 %v1995
  %v2512 = vunpack.c.l.b16 %v1996
  %v2513 = vunpack.c.l.b16 %v1997
  %v2514 = vunpack.c.l.b16 %v1998
  %v2515 = vunpack.c.l.b16 %v1999
  %v2516 = vunpack.c.l.b16 %v2000
  %v2517 = vunpack.c.l.b16 %v2001
  %v2518 = vunpack.c.l.b16 %v2002
  %v2519 = vunpack.c.l.b16 %v2003
  %v2520 = vunpack.c.l.b16 %v2004
  %v2521 = vunpack.c.l.b16 %v2005
  %v2522 = vunpack.c.l.b16 %v2006
  %v2523 = vunpack.c.l.b16 %v2007
  %v2524 = vunpack.c.l.b16 %v2008
  %v2525 = vunpack.c.l.b16 %v2009
  %v2526 = vunpack.c.l.b16 %v2010
  %v2527 = vunpack.c.l.b16 %v2011
  %v2528 = vunpack.c.l.b16 %v2012
  %v2529 = vunpack.c.l.b16 %v2013
  %v2530 = vunpack.c.l.b16 %v2014
  %v2531 = vunpack.c.l.b16 %v2015
  %v2532 = vunpack.c.l.b16 %v2016
  %v2533 = vunpack.c.l.b16 %v2017
  %v2534 = vunpack.c.l.b16 %v2018
  %v2535 = vunpack.c.l.b16 %v2019
  %v2536 = vunpack.c.l.b16 %v2020
  %v2537 = vunpack.c.l.b16 %v2021
  %v2538 = vunpack.c.l.b16 %v2022
  %v2539 = vunpack.c.l.b16 %v2023
  %v2540 = vunpack.c.l.b16 %v2024
  %v2541 = vunpack.c.l.b16 %v2025
  %v2542 = vunpack.c.l.b16 %v2026
  %v2543 = vunpack.c.l.b16 %v2027
  %v2544 = vunpack.c.l.b16 %v2028
  %v2545 = vunpack.c.l.b16 %v2029
  %v2546 = vunpack.c.l.b16 %v2030
  %v2547 = vunpack.c.l.b16 %v2031
  %v2548 = vunpack.c.l.b16 %v2032
  %v2549 = vunpack.c.l.b16 %v2033
  %v2550 = vunpack.c.l.b16 %v2034
  %v2551 = vunpack.c.l.b16 %v2035
  %v2552 = vunpack.c.l.b16 %v2036
  %v2553 = vunpack.c.l.b16 %v2037
  %v2554 = vunpack.c.l.b16 %v2038
  %v2555 = vunpack.c.l.b16 %v2039
  %v2556 = vunpack.c.l.b16 %v2040
  %v2557 = vunpack.c.l.b16 %v2041
  %v2558 = vunpack.c.l.b16 %v2042
  %v2559 = vunpack.c.l.b16 %v2043
  %v2560 = vunpack.c.l.b16 %v2044
  %v2561 = vunpack.c.l.b16 %v2045
  %v2562 = vunpack.c.l.b16 %v2046
  %v2563 = vunpack.c.l.b16 %v2047
  %v2564 = vunpack.c.l.b16 %v2048
  %v2565 = vunpack.c.l.b16 %v2049
  %v2566 = vunpack.c.l.b16 %v2050
  %v2567 = vunpack.c.l.b16 %v2051
  %v2568 = vunpack.c.l.b16 %v2052
  %v2569 = vunpack.c.l.b16 %v2053
  %v2570 = vunpack.c.l.b16 %v2054
  %v2571 = vunpack.c.l.b16 %v2055
  %v2572 = vunpack.c.l.b16 %v2056
  %v2573 = vunpack.c.l.b16 %v2057
  %v2574 = vunpack.c.l.b16 %v2058
  %v2575 = vunpack.c.l.b16 %v2059
  %v2576 = vunpack.c.l.b16 %v2060
  %v2577 = vunpack.c.l.b16 %v2061
  %v2578 = vunpack.c.l.b16 %v2062
  %v2579 = vunpack.c.l.b16 %v2063
  %v2580 = vunpack.c.l.b16 %v2064
  %v2581 = vunpack.c.l.b16 %v2065
  %v2582 = vunpack.c.l.b16 %v2066
  %v2583 = vunpack.c.l.b16 %v2067
  %v2584 = vunpack.c.l.b16 %v2068
  %v2585 = vunpack.c.l.b16 %v2069
  %v2586 = vunpack.c.l.b16 %v2070
  %v2587 = vunpack.c.l.b16 %v2071
  %v2588 = vunpack.c.l.b16 %v2072
  %v2589 = vunpack.c.l.b16 %v2073
  %v2590 = vunpack.c.l.b16 %v2074
  %v2591 = vunpack.c.l.b16 %v2075
  %v2592 = vunpack.c.l.b16 %v2076
  %v2593 = vunpack.c.l.b16 %v2077
  %v2594 = vunpack.c.l.b16 %v2078
  %v2595 = vunpack.c.l.b16 %v2079
  %v2596 = vunpack.c.l.b16 %v2080
  %v2597 = vunpack.c.l.b16 %v2081
  %v2598 = vunpack.c.l.b16 %v2082
  %v2599 = vunpack.c.l.b16 %v2083
  %v2600 = vunpack.c.l.b16 %v2084
  %v2601 = vunpack.c.l.b16 %v2085
  %v2602 = vunpack.c.l.b16 %v2086
  %v2603 = vunpack.c.l.b16 %v2087
  %v2604 = vunpack.c.l.b16 %v2088
  %v2605 = vunpack.c.l.b16 %v2089
  %v2606 = vunpack.c.l.b16 %v2090
  %v2607 = vunpack.c.l.b16 %v2091
  %v2608 = vunpack.c.l.b16 %v2092
  %v2609 = vunpack.c.l.b16 %v2093
  %v2610 = vunpack.c.l.b16 %v2094
  %v2611 = vunpack.c.l.b16 %v2095
  %v2612 = vunpack.c.l.b16 %v2096
  %v2613 = vunpack.c.l.b16 %v2097
  %v2614 = vunpack.c.l.b16 %v2098
  %v2615 = vunpack.c.l.b16 %v2099
  %v2616 = vunpack.c.l.b16 %v2100
  %v2617 = vunpack.c.l.b16 %v2101
  %v2618 = vunpack.c.l.b16 %v2102
  %v2619 = vunpack.c.l.b16 %v2103
  %v2620 = vunpack.c.l.b16 %v2104
  %v2621 = vunpack.c.l.b16 %v2105
  %v2622 = vunpack.c.l.b16 %v2106
  %v2623 = vunpack.c.l.b16 %v2107
  %v2624 = vunpack.c.l.b16 %v2108
  %v2625 = vunpack.c.l.b16 %v2109
  %v2626 = vunpack.c.l.b16 %v2110
  %v2627 = vunpack.c.l.b16 %v2111
  %v2628 = vunpack.c.l.b16 %v2112
  %v2629 = vunpack.c.l.b16 %v2113
  %v2630 = vunpack.c.l.b16 %v2114
  %v2631 = vunpack.c.l.b16 %v2115
  %v2632 = vunpack.c.l.b16 %v2116
  %v2633 = vunpack.c.l.b16 %v2117
  %v2634 = vunpack.c.l.b16 %v2118
  %v2635 = vunpack.c.l.b16 %v2119
  %v2636 = vunpack.c.l.b16 %v2120
  %v2637 = vunpack.c.l.b16 %v2121
  %v2638 = vunpack.c.l.b16 %v2122
  %v2639 = vunpack.c.l.b16 %v2123
  %v2640 = vunpack.c.l.b16 %v2124
  %v2641 = vunpack.c.l.b16 %v2125
  %v2642 = vunpack.c.l.b16 %v2126
  %v2643 = vunpack.c.l.b16 %v2127
  %v2644 = vunpack.c.l.b16 %v2128
  %v2645 = vunpack.c.l.b16 %v2129
  %v2646 = vunpack.c.l.b16 %v2130
  %v2647 = vunpack.c.l.b16 %v2131
  %v2648 = vunpack.c.l.b16 %v2132
  %v2649 = vunpack.c.l.b16 %v2133
  %v2650 = vunpack.c.l.b16 %v2134
  %v2651 = vunpack.c.l.b16 %v2135
  %v2652 = vunpack.c.l.b16 %v2136
  %v2653 = vunpack.c.l.b16 %v2137
  %v2654 = vunpack.c.l.b16 %v2138
  %v2655 = vunpack.c.l.b16 %v2139
  %v2656 = vunpack.c.l.b16 %v2140
  %v2657 = vunpack.c.l.b16 %v2141
  %v2658 = vunpack.c.l.b16 %v2142
  %v2659 = vunpack.c.l.b16 %v2143
  %v2660 = vunpack.c.l.b16 %v2144
  %v2661 = vunpack.c.l.b16 %v2145
  %v2662 = vunpack.c.l.b16 %v2146
  %v2663 = vunpack.c.l.b16 %v2147
  %v2664 = vunpack.c.l.b16 %v2148
  %v2665 = vunpack.c.l.b16 %v2149
  %v2666 = vunpack.c.l.b16 %v2150
  %v2667 = vunpack.c.l.b16 %v2151
  %v2668 = vunpack.c.l.b16 %v2152
  %v2669 = vunpack.c.l.b16 %v2153
  %v2670 = vunpack.c.l.b16 %v2154
  %v2671 = vpack.c.b16 %v2416, %v2415
  %v2672 = vpack.c.b16 %v2418, %v2417
  %v2673 = vpack.c.b16 %v2420, %v2419
  %v2674 = vpack.c.b16 %v2422, %v2421
  %v2675 = vpack.c.b16 %v2424, %v2423
  %v2676 = vpack.c.b16 %v2426, %v2425
  %v2677 = vpack.c.b16 %v2428, %v2427
  %v2678 = vpack.c.b16 %v2430, %v2429
  %v2679 = vpack.c.b16 %v2432, %v2431
  %v2680 = vpack.c.b16 %v2434, %v2433
  %v2681 = vpack.c.b16 %v2436, %v2435
  %v2682 = vpack.c.b16 %v2438, %v2437
  %v2683 = vpack.c.b16 %v2440, %v2439
  %v2684 = vpack.c.b16 %v2442, %v2441
  %v2685 = vpack.c.b16 %v2444, %v2443
  %v2686 = vpack.c.b16 %v2446, %v2445
  %v2687 = vpack.c.b16 %v2448, %v2447
  %v2688 = vpack.c.b16 %v2450, %v2449
  %v2689 = vpack.c.b16 %v2452, %v2451
  %v2690 = vpack.c.b16 %v2454, %v2453
  %v2691 = vpack.c.b16 %v2456, %v2455
  %v2692 = vpack.c.b16 %v2458, %v2457
  %v2693 = vpack.c.b16 %v2460, %v2459
  %v2694 = vpack.c.b16 %v2462, %v2461
  %v2695 = vpack.c.b16 %v2464, %v2463
  %v2696 = vpack.c.b16 %v2466, %v2465
  %v2697 = vpack.c.b16 %v2468, %v2467
  %v2698 = vpack.c.b16 %v2470, %v2469
  %v2699 = vpack.c.b16 %v2472, %v2471
  %v2700 = vpack.c.b16 %v2474, %v2473
  %v2701 = vpack.c.b16 %v2476, %v2475
  %v2702 = vpack.c.b16 %v2478, %v2477
  %v2703 = vpack.c.b16 %v2480, %v2479
  %v2704 = vpack.c.b16 %v2482, %v2481
  %v2705 = vpack.c.b16 %v2484, %v2483
  %v2706 = vpack.c.b16 %v2486, %v2485
  %v2707 = vpack.c.b16 %v2488, %v2487
  %v2708 = vpack.c.b16 %v2490, %v2489
  %v2709 = vpack.c.b16 %v2492, %v2491
  %v2710 = vpack.c.b16 %v2494, %v2493
  %v2711 = vpack.c.b16 %v2496, %v2495
  %v2712 = vpack.c.b16 %v2498, %v2497
  %v2713 = vpack.c.b16 %v2500, %v2499
  %v2714 = vpack.c.b16 %v2502, %v2501
  %v2715 = vpack.c.b16 %v2504, %v2503
  %v2716 = vpack.c.b16 %v2506, %v2505
  %v2717 = vpack.c.b16 %v2508, %v2507
  %v2718 = vpack.c.b16 %v2510, %v2509
  %v2719 = vpack.c.b16 %v2512, %v2511
  %v2720 = vpack.c.b16 %v2514, %v2513
  %v2721 = vpack.c.b16 %v2516, %v2515
  %v2722 = vpack.c.b16 %v2518, %v2517
  %v2723 = vpack.c.b16 %v2520, %v2519
  %v2724 = vpack.c.b16 %v2522, %v2521
  %v2725 = vpack.c.b16 %v2524, %v2523
  %v2726 = vpack.c.b16 %v2526, %v2525
  %v2727 = vpack.c.b16 %v2528, %v2527
  %v2728 = vpack.c.b16 %v2530, %v2529
  %v2729 = vpack.c.b16 %v2532, %v2531
  %v2730 = vpack.c.b16 %v2534, %v2533
  %v2731 = vpack.c.b16 %v2536, %v2535
  %v2732 = vpack.c.b16 %v2538, %v2537
  %v2733 = vpack.c.b16 %v2540, %v2539
  %v2734 = vpack.c.b16 %v2542, %v2541
  %v2735 = vpack.c.b16 %v2544, %v2543
  %v2736 = vpack.c.b16 %v2546, %v2545
  %v2737 = vpack.c.b16 %v2548, %v2547
  %v2738 = vpack.c.b16 %v2550, %v2549
  %v2739 = vpack.c.b16 %v2552, %v2551
  %v2740 = vpack.c.b16 %v2554, %v2553
  %v2741 = vpack.c.b16 %v2556, %v2555
  %v2742 = vpack.c.b16 %v2558, %v2557
  %v2743 = vpack.c.b16 %v2560, %v2559
  %v2744 = vpack.c.b16 %v2562, %v2561
  %v2745 = vpack.c.b16 %v2564, %v2563
  %v2746 = vpack.c.b16 %v2566, %v2565
  %v2747 = vpack.c.b16 %v2568, %v2567
  %v2748 = vpack.c.b16 %v2570, %v2569
  %v2749 = vpack.c.b16 %v2572, %v2571
  %v2750 = vpack.c.b16 %v2574, %v2573
  %v2751 = vpack.c.b16 %v2576, %v2575
  %v2752 = vpack.c.b16 %v2578, %v2577
  %v2753 = vpack.c.b16 %v2580, %v2579
  %v2754 = vpack.c.b16 %v2582, %v2581
  %v2755 = vpack.c.b16 %v2584, %v2583
  %v2756 = vpack.c.b16 %v2586, %v2585
  %v2757 = vpack.c.b16 %v2588, %v2587
  %v2758 = vpack.c.b16 %v2590, %v2589
  %v2759 = vpack.c.b16 %v2592, %v2591
  %v2760 = vpack.c.b16 %v2594, %v2593
  %v2761 = vpack.c.b16 %v2596, %v2595
  %v2762 = vpack.c.b16 %v2598, %v2597
  %v2763 = vpack.c.b16 %v2600, %v2599
  %v2764 = vpack.c.b16 %v2602, %v2601
  %v2765 = vpack.c.b16 %v2604, %v2603
  %v2766 = vpack.c.b16 %v2606, %v2605
  %v2767 = vpack.c.b16 %v2608, %v2607
  %v2768 = vpack.c.b16 %v2610, %v2609
  %v2769 = vpack.c.b16 %v2612, %v2611
  %v2770 = vpack.c.b16 %v2614, %v2613
  %v2771 = vpack.c.b16 %v2616, %v2615
  %v2772 = vpack.c.b16 %v2618, %v2617
  %v2773 = vpack.c.b16 %v2620, %v2619
  %v2774 = vpack.c.b16 %v2622, %v2621
  %v2775 = vpack.c.b16 %v2624, %v2623
  %v2776 = vpack.c.b16 %v2626, %v2625
  %v2777 = vpack.c.b16 %v2628, %v2627
  %v2778 = vpack.c.b16 %v2630, %v2629
  %v2779 = vpack.c.b16 %v2632, %v2631
  %v2780 = vpack.c.b16 %v2634, %v2633
  %v2781 = vpack.c.b16 %v2636, %v2635
  %v2782 = vpack.c.b16 %v2638, %v2637
  %v2783 = vpack.c.b16 %v2640, %v2639
  %v2784 = vpack.c.b16 %v2642, %v2641
  %v2785 = vpack.c.b16 %v2644, %v2643
  %v2786 = vpack.c.b16 %v2646, %v2645
  %v2787 = vpack.c.b16 %v2648, %v2647
  %v2788 = vpack.c.b16 %v2650, %v2649
  %v2789 = vpack.c.b16 %v2652, %v2651
  %v2790 = vpack.c.b16 %v2654, %v2653
  %v2791 = vpack.c.b16 %v2656, %v2655
  %v2792 = vpack.c.b16 %v2658, %v2657
  %v2793 = vpack.c.b16 %v2660, %v2659
  %v2794 = vpack.c.b16 %v2662, %v2661
  %v2795 = vpack.c.b16 %v2664, %v2663
  %v2796 = vpack.c.b16 %v2666, %v2665
  %v2797 = vpack.c.b16 %v2668, %v2667
  %v2798 = vpack.c.b16 %v2670, %v2669
  %2927 = vmatpush.bf16.msra.mxu0 %v2678
  %2928 = vmatpush.bf16.msra.mxu0 %v2677
  %2929 = vmatpush.bf16.msra.mxu0 %v2676
  %2930 = vmatpush.bf16.msra.mxu0 %v2675
  %2931 = vmatpush.bf16.msra.mxu0 %v2674
  %2932 = vmatpush.bf16.msra.mxu0 %v2673
  %2933 = vmatpush.bf16.msra.mxu0 %v2672
  %2934 = vmatpush.bf16.msra.mxu0 %v2671
  %2935 = vmatmul.bf16.gmra.mxu0 %v1883
  %v2936 = vpop.f32.mrf.mxu0
  %v2937 = vadd.f32 %v2157, %v2936
  %v2938 = vpop.f32.mrf.mxu0
  %v2939 = vadd.f32 %v2157, %v2938
  %2940 = vdwg.mxu0
  %2941 = vmatpush.bf16.msra.mxu0 %v2686
  %2942 = vmatpush.bf16.msra.mxu0 %v2685
  %2943 = vmatpush.bf16.msra.mxu0 %v2684
  %2944 = vmatpush.bf16.msra.mxu0 %v2683
  %2945 = vmatpush.bf16.msra.mxu0 %v2682
  %2946 = vmatpush.bf16.msra.mxu0 %v2681
  %2947 = vmatpush.bf16.msra.mxu0 %v2680
  %2948 = vmatpush.bf16.msra.mxu0 %v2679
  %2949 = vmatmul.bf16.gmra.mxu0 %v1884
  %v2950 = vpop.f32.mrf.mxu0
  %v2951 = vadd.f32 %v2937, %v2950
  %v2952 = vpop.f32.mrf.mxu0
  %v2953 = vadd.f32 %v2939, %v2952
  %2954 = vdwg.mxu0
  %2955 = vmatpush.bf16.msra.mxu0 %v2694
  %2956 = vmatpush.bf16.msra.mxu0 %v2693
  %2957 = vmatpush.bf16.msra.mxu0 %v2692
  %2958 = vmatpush.bf16.msra.mxu0 %v2691
  %2959 = vmatpush.bf16.msra.mxu0 %v2690
  %2960 = vmatpush.bf16.msra.mxu0 %v2689
  %2961 = vmatpush.bf16.msra.mxu0 %v2688
  %2962 = vmatpush.bf16.msra.mxu0 %v2687
  %2963 = vmatmul.bf16.gmra.mxu0 %v1885
  %v2964 = vpop.f32.mrf.mxu0
  %v2965 = vadd.f32 %v2951, %v2964
  %v2966 = vpop.f32.mrf.mxu0
  %v2967 = vadd.f32 %v2953, %v2966
  %2968 = vdwg.mxu0
  %2969 = vmatpush.bf16.msra.mxu0 %v2702
  %2970 = vmatpush.bf16.msra.mxu0 %v2701
  %2971 = vmatpush.bf16.msra.mxu0 %v2700
  %2972 = vmatpush.bf16.msra.mxu0 %v2699
  %2973 = vmatpush.bf16.msra.mxu0 %v2698
  %2974 = vmatpush.bf16.msra.mxu0 %v2697
  %2975 = vmatpush.bf16.msra.mxu0 %v2696
  %2976 = vmatpush.bf16.msra.mxu0 %v2695
  %2977 = vmatmul.bf16.gmra.mxu0 %v1886
  %v2978 = vpop.f32.mrf.mxu0
  %v2979 = vadd.f32 %v2965, %v2978
  %v2980 = vpop.f32.mrf.mxu0
  %v2981 = vadd.f32 %v2967, %v2980
  %2982 = vdwg.mxu0
  %2983 = vmatpush.bf16.msra.mxu0 %v2710
  %2984 = vmatpush.bf16.msra.mxu0 %v2709
  %2985 = vmatpush.bf16.msra.mxu0 %v2708
  %2986 = vmatpush.bf16.msra.mxu0 %v2707
  %2987 = vmatpush.bf16.msra.mxu0 %v2706
  %2988 = vmatpush.bf16.msra.mxu0 %v2705
  %2989 = vmatpush.bf16.msra.mxu0 %v2704
  %2990 = vmatpush.bf16.msra.mxu0 %v2703
  %2991 = vmatmul.bf16.gmra.mxu0 %v1887
  %v2992 = vpop.f32.mrf.mxu0
  %v2993 = vadd.f32 %v2979, %v2992
  %v2994 = vpop.f32.mrf.mxu0
  %v2995 = vadd.f32 %v2981, %v2994
  %2996 = vdwg.mxu0
  %2997 = vmatpush.bf16.msra.mxu0 %v2718
  %2998 = vmatpush.bf16.msra.mxu0 %v2717
  %2999 = vmatpush.bf16.msra.mxu0 %v2716
  %3000 = vmatpush.bf16.msra.mxu0 %v2715
  %3001 = vmatpush.bf16.msra.mxu0 %v2714
  %3002 = vmatpush.bf16.msra.mxu0 %v2713
  %3003 = vmatpush.bf16.msra.mxu0 %v2712
  %3004 = vmatpush.bf16.msra.mxu0 %v2711
  %3005 = vmatmul.bf16.gmra.mxu0 %v1888
  %v3006 = vpop.f32.mrf.mxu0
  %v3007 = vadd.f32 %v2993, %v3006
  %v3008 = vpop.f32.mrf.mxu0
  %v3009 = vadd.f32 %v2995, %v3008
  %3010 = vdwg.mxu0
  %3011 = vmatpush.bf16.msra.mxu0 %v2726
  %3012 = vmatpush.bf16.msra.mxu0 %v2725
  %3013 = vmatpush.bf16.msra.mxu0 %v2724
  %3014 = vmatpush.bf16.msra.mxu0 %v2723
  %3015 = vmatpush.bf16.msra.mxu0 %v2722
  %3016 = vmatpush.bf16.msra.mxu0 %v2721
  %3017 = vmatpush.bf16.msra.mxu0 %v2720
  %3018 = vmatpush.bf16.msra.mxu0 %v2719
  %3019 = vmatmul.bf16.gmra.mxu0 %v1889
  %v3020 = vpop.f32.mrf.mxu0
  %v3021 = vadd.f32 %v3007, %v3020
  %v3022 = vpop.f32.mrf.mxu0
  %v3023 = vadd.f32 %v3009, %v3022
  %3024 = vdwg.mxu0
  %3025 = vmatpush.bf16.msra.mxu0 %v2734
  %3026 = vmatpush.bf16.msra.mxu0 %v2733
  %3027 = vmatpush.bf16.msra.mxu0 %v2732
  %3028 = vmatpush.bf16.msra.mxu0 %v2731
  %3029 = vmatpush.bf16.msra.mxu0 %v2730
  %3030 = vmatpush.bf16.msra.mxu0 %v2729
  %3031 = vmatpush.bf16.msra.mxu0 %v2728
  %3032 = vmatpush.bf16.msra.mxu0 %v2727
  %3033 = vmatmul.bf16.gmra.mxu0 %v1890
  %v3034 = vpop.f32.mrf.mxu0
  %v3035 = vadd.f32 %v3021, %v3034
  %v3036 = vpop.f32.mrf.mxu0
  %v3037 = vadd.f32 %v3023, %v3036
  %3038 = vdwg.mxu0
  %3039 = vmatpush.bf16.msra.mxu0 %v2742
  %3040 = vmatpush.bf16.msra.mxu0 %v2741
  %3041 = vmatpush.bf16.msra.mxu0 %v2740
  %3042 = vmatpush.bf16.msra.mxu0 %v2739
  %3043 = vmatpush.bf16.msra.mxu0 %v2738
  %3044 = vmatpush.bf16.msra.mxu0 %v2737
  %3045 = vmatpush.bf16.msra.mxu0 %v2736
  %3046 = vmatpush.bf16.msra.mxu0 %v2735
  %3047 = vmatmul.bf16.gmra.mxu0 %v1891
  %v3048 = vpop.f32.mrf.mxu0
  %v3049 = vadd.f32 %v3035, %v3048
  %v3050 = vpop.f32.mrf.mxu0
  %v3051 = vadd.f32 %v3037, %v3050
  %3052 = vdwg.mxu0
  %3053 = vmatpush.bf16.msra.mxu0 %v2750
  %3054 = vmatpush.bf16.msra.mxu0 %v2749
  %3055 = vmatpush.bf16.msra.mxu0 %v2748
  %3056 = vmatpush.bf16.msra.mxu0 %v2747
  %3057 = vmatpush.bf16.msra.mxu0 %v2746
  %3058 = vmatpush.bf16.msra.mxu0 %v2745
  %3059 = vmatpush.bf16.msra.mxu0 %v2744
  %3060 = vmatpush.bf16.msra.mxu0 %v2743
  %3061 = vmatmul.bf16.gmra.mxu0 %v1892
  %v3062 = vpop.f32.mrf.mxu0
  %v3063 = vadd.f32 %v3049, %v3062
  %v3064 = vpop.f32.mrf.mxu0
  %v3065 = vadd.f32 %v3051, %v3064
  %3066 = vdwg.mxu0
  %3067 = vmatpush.bf16.msra.mxu0 %v2758
  %3068 = vmatpush.bf16.msra.mxu0 %v2757
  %3069 = vmatpush.bf16.msra.mxu0 %v2756
  %3070 = vmatpush.bf16.msra.mxu0 %v2755
  %3071 = vmatpush.bf16.msra.mxu0 %v2754
  %3072 = vmatpush.bf16.msra.mxu0 %v2753
  %3073 = vmatpush.bf16.msra.mxu0 %v2752
  %3074 = vmatpush.bf16.msra.mxu0 %v2751
  %3075 = vmatmul.bf16.gmra.mxu0 %v1893
  %v3076 = vpop.f32.mrf.mxu0
  %v3077 = vadd.f32 %v3063, %v3076
  %v3078 = vpop.f32.mrf.mxu0
  %v3079 = vadd.f32 %v3065, %v3078
  %3080 = vdwg.mxu0
  %3081 = vmatpush.bf16.msra.mxu0 %v2766
  %3082 = vmatpush.bf16.msra.mxu0 %v2765
  %3083 = vmatpush.bf16.msra.mxu0 %v2764
  %3084 = vmatpush.bf16.msra.mxu0 %v2763
  %3085 = vmatpush.bf16.msra.mxu0 %v2762
  %3086 = vmatpush.bf16.msra.mxu0 %v2761
  %3087 = vmatpush.bf16.msra.mxu0 %v2760
  %3088 = vmatpush.bf16.msra.mxu0 %v2759
  %3089 = vmatmul.bf16.gmra.mxu0 %v1894
  %v3090 = vpop.f32.mrf.mxu0
  %v3091 = vadd.f32 %v3077, %v3090
  %v3092 = vpop.f32.mrf.mxu0
  %v3093 = vadd.f32 %v3079, %v3092
  %3094 = vdwg.mxu0
  %3095 = vmatpush.bf16.msra.mxu0 %v2774
  %3096 = vmatpush.bf16.msra.mxu0 %v2773
  %3097 = vmatpush.bf16.msra.mxu0 %v2772
  %3098 = vmatpush.bf16.msra.mxu0 %v2771
  %3099 = vmatpush.bf16.msra.mxu0 %v2770
  %3100 = vmatpush.bf16.msra.mxu0 %v2769
  %3101 = vmatpush.bf16.msra.mxu0 %v2768
  %3102 = vmatpush.bf16.msra.mxu0 %v2767
  %3103 = vmatmul.bf16.gmra.mxu0 %v1895
  %v3104 = vpop.f32.mrf.mxu0
  %v3105 = vadd.f32 %v3091, %v3104
  %v3106 = vpop.f32.mrf.mxu0
  %v3107 = vadd.f32 %v3093, %v3106
  %3108 = vdwg.mxu0
  %3109 = vmatpush.bf16.msra.mxu0 %v2782
  %3110 = vmatpush.bf16.msra.mxu0 %v2781
  %3111 = vmatpush.bf16.msra.mxu0 %v2780
  %3112 = vmatpush.bf16.msra.mxu0 %v2779
  %3113 = vmatpush.bf16.msra.mxu0 %v2778
  %3114 = vmatpush.bf16.msra.mxu0 %v2777
  %3115 = vmatpush.bf16.msra.mxu0 %v2776
  %3116 = vmatpush.bf16.msra.mxu0 %v2775
  %3117 = vmatmul.bf16.gmra.mxu0 %v1896
  %v3118 = vpop.f32.mrf.mxu0
  %v3119 = vadd.f32 %v3105, %v3118
  %v3120 = vpop.f32.mrf.mxu0
  %v3121 = vadd.f32 %v3107, %v3120
  %3122 = vdwg.mxu0
  %3123 = vmatpush.bf16.msra.mxu0 %v2790
  %3124 = vmatpush.bf16.msra.mxu0 %v2789
  %3125 = vmatpush.bf16.msra.mxu0 %v2788
  %3126 = vmatpush.bf16.msra.mxu0 %v2787
  %3127 = vmatpush.bf16.msra.mxu0 %v2786
  %3128 = vmatpush.bf16.msra.mxu0 %v2785
  %3129 = vmatpush.bf16.msra.mxu0 %v2784
  %3130 = vmatpush.bf16.msra.mxu0 %v2783
  %3131 = vmatmul.bf16.gmra.mxu0 %v1897
  %v3132 = vpop.f32.mrf.mxu0
  %v3133 = vadd.f32 %v3119, %v3132
  %v3134 = vpop.f32.mrf.mxu0
  %v3135 = vadd.f32 %v3121, %v3134
  %3136 = vdwg.mxu0
  %3137 = vmatpush.bf16.msra.mxu0 %v2798
  %3138 = vmatpush.bf16.msra.mxu0 %v2797
  %3139 = vmatpush.bf16.msra.mxu0 %v2796
  %3140 = vmatpush.bf16.msra.mxu0 %v2795
  %3141 = vmatpush.bf16.msra.mxu0 %v2794
  %3142 = vmatpush.bf16.msra.mxu0 %v2793
  %3143 = vmatpush.bf16.msra.mxu0 %v2792
  %3144 = vmatpush.bf16.msra.mxu0 %v2791
  %3145 = vmatmul.bf16.gmra.mxu0 %v1898
  %v3146 = vpop.f32.mrf.mxu0
  %v3147 = vadd.f32 %v3133, %v3146
  %v3148 = vpop.f32.mrf.mxu0
  %v3149 = vadd.f32 %v3135, %v3148
  %3150 = vdwg.mxu0
  %v3151 = vadd.f32 %v1201, %v3147
  %v3152 = vadd.f32 %v1202, %v3149
  %v3153 = vld [vmem:[%s17] sm:$0x1]
  %v3154 = vld [vmem:[%s18] sm:$0x1]
  %v3155 = vsel %vm214, %v3151, 0.0
  %3156 = vadd.xlane.f32.xlu0 %v3155
  %v3157 = vpop.xlane.xlu0 %3156
  %v3158 = vsel %vm214, %v3152, 0.0
  %3159 = vadd.xlane.f32.xlu0 %v3158
  %v3160 = vpop.xlane.xlu0 %3159
  %v3161 = vmul.f32 %v3157, %v1154
  %v3162 = vmul.f32 %v3160, %v1154
  %v3163 = vsub.f32 %v3151, %v3161
  %v3164 = vsub.f32 %v3152, %v3162
  %v3165 = vmul.f32 %v3163, %v3163
  %v3166 = vmul.f32 %v3164, %v3164
  %v3167 = vsel %vm214, %v3165, 0.0
  %3168 = vadd.xlane.f32.xlu0 %v3167
  %v3169 = vpop.xlane.xlu0 %3168
  %v3170 = vsel %vm214, %v3166, 0.0
  %3171 = vadd.xlane.f32.xlu0 %v3170
  %v3172 = vpop.xlane.xlu0 %3171
  %v3173 = vmul.f32 %v3169, %v1154
  %v3174 = vmul.f32 %v3172, %v1154
  %v3175 = vadd.f32 %v3173, 1e-05
  %v3176 = vadd.f32 %v3174, 1e-05
  %v3177 = vrsqrt.pop %v3175
  %v3178 = vmul.f32 %v3177, %v3175
  %v3179 = vmul.f32 %v3178, %v3177
  %v3180 = vmul.f32 0.5, %v3179
  %v3181 = vsub.f32 1.5, %v3180
  %v3182 = vmul.f32 %v3177, %v3181
  %vm3183 = vweird.f32 %v3175
  %vm3184 = vweird.f32 %v3177
  %vm3185 = vmor %vm3183, %vm3184
  %v3186 = vsel %vm3185, %v3177, %v3182
  %v3187 = vrsqrt.pop %v3176
  %v3188 = vmul.f32 %v3187, %v3176
  %v3189 = vmul.f32 %v3188, %v3187
  %v3190 = vmul.f32 0.5, %v3189
  %v3191 = vsub.f32 1.5, %v3190
  %v3192 = vmul.f32 %v3187, %v3191
  %vm3193 = vweird.f32 %v3176
  %vm3194 = vweird.f32 %v3187
  %vm3195 = vmor %vm3193, %vm3194
  %v3196 = vsel %vm3195, %v3187, %v3192
  %v3197 = vmul.f32 %v3163, %v3186
  %v3198 = vmul.f32 %v3164, %v3196
  %v3200 = vperm.slane %v3153, 0
  %v3202 = vmul.f32 %v3197, %v3200
  %v3203 = vmul.f32 %v3198, %v3200
  %v3205 = vperm.slane %v3154, 0
  %v3207 = vadd.f32 %v3202, %v3205
  %v3208 = vadd.f32 %v3203, %v3205
  %s3209 = scalar_lea.vmem %s3, 256
  %v3210 = vld [vmem:[%s3209] sm:$0xff]
  %v3211 = vld [vmem:[%s3209 + $0x8] sm:$0xff]
  %v3212 = vld [vmem:[%s3209 + $0x10] sm:$0xff]
  %v3213 = vld [vmem:[%s3209 + $0x18] sm:$0xff]
  %v3214 = vld [vmem:[%s3209 + $0x20] sm:$0xff]
  %v3215 = vld [vmem:[%s3209 + $0x28] sm:$0xff]
  %v3216 = vld [vmem:[%s3209 + $0x30] sm:$0xff]
  %v3217 = vld [vmem:[%s3209 + $0x38] sm:$0xff]
  %v3218 = vld [vmem:[%s3209 + $0x40] sm:$0xff]
  %v3219 = vld [vmem:[%s3209 + $0x48] sm:$0xff]
  %v3220 = vld [vmem:[%s3209 + $0x50] sm:$0xff]
  %v3221 = vld [vmem:[%s3209 + $0x58] sm:$0xff]
  %v3222 = vld [vmem:[%s3209 + $0x60] sm:$0xff]
  %v3223 = vld [vmem:[%s3209 + $0x68] sm:$0xff]
  %v3224 = vld [vmem:[%s3209 + $0x70] sm:$0xff]
  %v3225 = vld [vmem:[%s3209 + $0x78] sm:$0xff]
  %v3226 = vld [vmem:[%s3209 + $0x80] sm:$0xff]
  %v3227 = vld [vmem:[%s3209 + $0x88] sm:$0xff]
  %v3228 = vld [vmem:[%s3209 + $0x90] sm:$0xff]
  %v3229 = vld [vmem:[%s3209 + $0x98] sm:$0xff]
  %v3230 = vld [vmem:[%s3209 + $0xa0] sm:$0xff]
  %v3231 = vld [vmem:[%s3209 + $0xa8] sm:$0xff]
  %v3232 = vld [vmem:[%s3209 + $0xb0] sm:$0xff]
  %v3233 = vld [vmem:[%s3209 + $0xb8] sm:$0xff]
  %v3234 = vld [vmem:[%s3209 + $0xc0] sm:$0xff]
  %v3235 = vld [vmem:[%s3209 + $0xc8] sm:$0xff]
  %v3236 = vld [vmem:[%s3209 + $0xd0] sm:$0xff]
  %v3237 = vld [vmem:[%s3209 + $0xd8] sm:$0xff]
  %v3238 = vld [vmem:[%s3209 + $0xe0] sm:$0xff]
  %v3239 = vld [vmem:[%s3209 + $0xe8] sm:$0xff]
  %v3240 = vld [vmem:[%s3209 + $0xf0] sm:$0xff]
  %v3241 = vld [vmem:[%s3209 + $0xf8] sm:$0xff]
  %s3242 = scalar_lea.vmem %s4, 4
  %v3243 = vld [vmem:[%s3242] sm:$0x1]
  %v3244 = vld [vmem:[%s3242 + $0x1] sm:$0x1]
  %v3245 = vld [vmem:[%s3242 + $0x2] sm:$0x1]
  %v3246 = vld [vmem:[%s3242 + $0x3] sm:$0x1]
  %s3247 = scalar_lea.vmem %s5, 256
  %v3248 = vld [vmem:[%s3247] sm:$0xff]
  %v3249 = vld [vmem:[%s3247 + $0x8] sm:$0xff]
  %v3250 = vld [vmem:[%s3247 + $0x10] sm:$0xff]
  %v3251 = vld [vmem:[%s3247 + $0x18] sm:$0xff]
  %v3252 = vld [vmem:[%s3247 + $0x20] sm:$0xff]
  %v3253 = vld [vmem:[%s3247 + $0x28] sm:$0xff]
  %v3254 = vld [vmem:[%s3247 + $0x30] sm:$0xff]
  %v3255 = vld [vmem:[%s3247 + $0x38] sm:$0xff]
  %v3256 = vld [vmem:[%s3247 + $0x40] sm:$0xff]
  %v3257 = vld [vmem:[%s3247 + $0x48] sm:$0xff]
  %v3258 = vld [vmem:[%s3247 + $0x50] sm:$0xff]
  %v3259 = vld [vmem:[%s3247 + $0x58] sm:$0xff]
  %v3260 = vld [vmem:[%s3247 + $0x60] sm:$0xff]
  %v3261 = vld [vmem:[%s3247 + $0x68] sm:$0xff]
  %v3262 = vld [vmem:[%s3247 + $0x70] sm:$0xff]
  %v3263 = vld [vmem:[%s3247 + $0x78] sm:$0xff]
  %v3264 = vld [vmem:[%s3247 + $0x80] sm:$0xff]
  %v3265 = vld [vmem:[%s3247 + $0x88] sm:$0xff]
  %v3266 = vld [vmem:[%s3247 + $0x90] sm:$0xff]
  %v3267 = vld [vmem:[%s3247 + $0x98] sm:$0xff]
  %v3268 = vld [vmem:[%s3247 + $0xa0] sm:$0xff]
  %v3269 = vld [vmem:[%s3247 + $0xa8] sm:$0xff]
  %v3270 = vld [vmem:[%s3247 + $0xb0] sm:$0xff]
  %v3271 = vld [vmem:[%s3247 + $0xb8] sm:$0xff]
  %v3272 = vld [vmem:[%s3247 + $0xc0] sm:$0xff]
  %v3273 = vld [vmem:[%s3247 + $0xc8] sm:$0xff]
  %v3274 = vld [vmem:[%s3247 + $0xd0] sm:$0xff]
  %v3275 = vld [vmem:[%s3247 + $0xd8] sm:$0xff]
  %v3276 = vld [vmem:[%s3247 + $0xe0] sm:$0xff]
  %v3277 = vld [vmem:[%s3247 + $0xe8] sm:$0xff]
  %v3278 = vld [vmem:[%s3247 + $0xf0] sm:$0xff]
  %v3279 = vld [vmem:[%s3247 + $0xf8] sm:$0xff]
  %s3280 = scalar_lea.vmem %s6, 4
  %v3281 = vld [vmem:[%s3280] sm:$0x1]
  %v3282 = vld [vmem:[%s3280 + $0x1] sm:$0x1]
  %v3283 = vld [vmem:[%s3280 + $0x2] sm:$0x1]
  %v3284 = vld [vmem:[%s3280 + $0x3] sm:$0x1]
  %s3285 = scalar_lea.vmem %s7, 256
  %v3286 = vld [vmem:[%s3285] sm:$0xff]
  %v3287 = vld [vmem:[%s3285 + $0x8] sm:$0xff]
  %v3288 = vld [vmem:[%s3285 + $0x10] sm:$0xff]
  %v3289 = vld [vmem:[%s3285 + $0x18] sm:$0xff]
  %v3290 = vld [vmem:[%s3285 + $0x20] sm:$0xff]
  %v3291 = vld [vmem:[%s3285 + $0x28] sm:$0xff]
  %v3292 = vld [vmem:[%s3285 + $0x30] sm:$0xff]
  %v3293 = vld [vmem:[%s3285 + $0x38] sm:$0xff]
  %v3294 = vld [vmem:[%s3285 + $0x40] sm:$0xff]
  %v3295 = vld [vmem:[%s3285 + $0x48] sm:$0xff]
  %v3296 = vld [vmem:[%s3285 + $0x50] sm:$0xff]
  %v3297 = vld [vmem:[%s3285 + $0x58] sm:$0xff]
  %v3298 = vld [vmem:[%s3285 + $0x60] sm:$0xff]
  %v3299 = vld [vmem:[%s3285 + $0x68] sm:$0xff]
  %v3300 = vld [vmem:[%s3285 + $0x70] sm:$0xff]
  %v3301 = vld [vmem:[%s3285 + $0x78] sm:$0xff]
  %v3302 = vld [vmem:[%s3285 + $0x80] sm:$0xff]
  %v3303 = vld [vmem:[%s3285 + $0x88] sm:$0xff]
  %v3304 = vld [vmem:[%s3285 + $0x90] sm:$0xff]
  %v3305 = vld [vmem:[%s3285 + $0x98] sm:$0xff]
  %v3306 = vld [vmem:[%s3285 + $0xa0] sm:$0xff]
  %v3307 = vld [vmem:[%s3285 + $0xa8] sm:$0xff]
  %v3308 = vld [vmem:[%s3285 + $0xb0] sm:$0xff]
  %v3309 = vld [vmem:[%s3285 + $0xb8] sm:$0xff]
  %v3310 = vld [vmem:[%s3285 + $0xc0] sm:$0xff]
  %v3311 = vld [vmem:[%s3285 + $0xc8] sm:$0xff]
  %v3312 = vld [vmem:[%s3285 + $0xd0] sm:$0xff]
  %v3313 = vld [vmem:[%s3285 + $0xd8] sm:$0xff]
  %v3314 = vld [vmem:[%s3285 + $0xe0] sm:$0xff]
  %v3315 = vld [vmem:[%s3285 + $0xe8] sm:$0xff]
  %v3316 = vld [vmem:[%s3285 + $0xf0] sm:$0xff]
  %v3317 = vld [vmem:[%s3285 + $0xf8] sm:$0xff]
  %s3318 = scalar_lea.vmem %s8, 4
  %v3319 = vld [vmem:[%s3318] sm:$0x1]
  %v3320 = vld [vmem:[%s3318 + $0x1] sm:$0x1]
  %v3321 = vld [vmem:[%s3318 + $0x2] sm:$0x1]
  %v3322 = vld [vmem:[%s3318 + $0x3] sm:$0x1]
  %s3323 = scalar_lea.vmem %s9, 64
  %v3324 = vld [vmem:[%s3323] sm:$0xff]
  %v3325 = vld [vmem:[%s3323 + $0x8] sm:$0xff]
  %v3326 = vld [vmem:[%s3323 + $0x10] sm:$0xff]
  %v3327 = vld [vmem:[%s3323 + $0x18] sm:$0xff]
  %v3328 = vld [vmem:[%s3323 + $0x20] sm:$0xff]
  %v3329 = vld [vmem:[%s3323 + $0x28] sm:$0xff]
  %v3330 = vld [vmem:[%s3323 + $0x30] sm:$0xff]
  %v3331 = vld [vmem:[%s3323 + $0x38] sm:$0xff]
  %v3333 = vperm.slane %v3243, 0
  %v3336 = vsel %vm214, %v3207, 0
  %v3339 = vsel %vm214, %v3208, 0
  %3341 = vmatpush.msra.mxu0 0.0
  %3342 = vmatpush.msra.mxu0 0.0
  %3343 = vmatpush.msra.mxu0 0.0
  %3344 = vmatpush.msra.mxu0 0.0
  %3345 = vmatpush.msra.mxu0 0.0
  %3346 = vmatpush.msra.mxu0 0.0
  %3347 = vmatpush.msra.mxu0 0.0
  %3348 = vmatpush.msra.mxu0 0.0
  %3349 = vmatpush.msra.mxu0 %v3217
  %3350 = vmatpush.msra.mxu0 %v3216
  %3351 = vmatpush.msra.mxu0 %v3215
  %3352 = vmatpush.msra.mxu0 %v3214
  %3353 = vmatpush.msra.mxu0 %v3213
  %3354 = vmatpush.msra.mxu0 %v3212
  %3355 = vmatpush.msra.mxu0 %v3211
  %3356 = vmatpush.msra.mxu0 %v3210
  %3357 = vmatmul.f32.gmra.mxu0 %v3336
  %v3358 = vpop.f32.mrf.mxu0
  %v3359 = vadd.f32 %v3333, %v3358
  %3360 = vmatmul.f32.gmra.mxu0 %v3339
  %v3361 = vpop.f32.mrf.mxu0
  %v3362 = vadd.f32 %v3333, %v3361
  %3363 = vdwg.mxu0
  %v3365 = vperm.slane %v3281, 0
  %3367 = vmatpush.msra.mxu0 0.0
  %3368 = vmatpush.msra.mxu0 0.0
  %3369 = vmatpush.msra.mxu0 0.0
  %3370 = vmatpush.msra.mxu0 0.0
  %3371 = vmatpush.msra.mxu0 0.0
  %3372 = vmatpush.msra.mxu0 0.0
  %3373 = vmatpush.msra.mxu0 0.0
  %3374 = vmatpush.msra.mxu0 0.0
  %3375 = vmatpush.msra.mxu0 %v3255
  %3376 = vmatpush.msra.mxu0 %v3254
  %3377 = vmatpush.msra.mxu0 %v3253
  %3378 = vmatpush.msra.mxu0 %v3252
  %3379 = vmatpush.msra.mxu0 %v3251
  %3380 = vmatpush.msra.mxu0 %v3250
  %3381 = vmatpush.msra.mxu0 %v3249
  %3382 = vmatpush.msra.mxu0 %v3248
  %3383 = vmatmul.f32.gmra.mxu0 %v3336
  %v3384 = vpop.f32.mrf.mxu0
  %v3385 = vadd.f32 %v3365, %v3384
  %3386 = vmatmul.f32.gmra.mxu0 %v3339
  %v3387 = vpop.f32.mrf.mxu0
  %v3388 = vadd.f32 %v3365, %v3387
  %3389 = vdwg.mxu0
  %v3391 = vperm.slane %v3319, 0
  %3393 = vmatpush.msra.mxu0 0.0
  %3394 = vmatpush.msra.mxu0 0.0
  %3395 = vmatpush.msra.mxu0 0.0
  %3396 = vmatpush.msra.mxu0 0.0
  %3397 = vmatpush.msra.mxu0 0.0
  %3398 = vmatpush.msra.mxu0 0.0
  %3399 = vmatpush.msra.mxu0 0.0
  %3400 = vmatpush.msra.mxu0 0.0
  %3401 = vmatpush.msra.mxu0 %v3293
  %3402 = vmatpush.msra.mxu0 %v3292
  %3403 = vmatpush.msra.mxu0 %v3291
  %3404 = vmatpush.msra.mxu0 %v3290
  %3405 = vmatpush.msra.mxu0 %v3289
  %3406 = vmatpush.msra.mxu0 %v3288
  %3407 = vmatpush.msra.mxu0 %v3287
  %3408 = vmatpush.msra.mxu0 %v3286
  %3409 = vmatmul.f32.gmra.mxu0 %v3336
  %v3410 = vpop.f32.mrf.mxu0
  %v3411 = vadd.f32 %v3391, %v3410
  %3412 = vmatmul.f32.gmra.mxu0 %v3339
  %v3413 = vpop.f32.mrf.mxu0
  %v3414 = vadd.f32 %v3391, %v3413
  %3415 = vdwg.mxu0
  %v3417 = vsel %vm296, %v3359, 0
  %v3420 = vsel %vm296, %v3385, 0
  %3422 = vmatpush.xpose.msra.mxu0 0.0
  %3423 = vmatpush.xpose.msra.mxu0 0.0
  %3424 = vmatpush.xpose.msra.mxu0 0.0
  %3425 = vmatpush.xpose.msra.mxu0 0.0
  %3426 = vmatpush.xpose.msra.mxu0 0.0
  %3427 = vmatpush.xpose.msra.mxu0 0.0
  %3428 = vmatpush.xpose.msra.mxu0 0.0
  %3429 = vmatpush.xpose.msra.mxu0 0.0
  %3430 = vmatpush.xpose.msra.mxu0 0.0
  %3431 = vmatpush.xpose.msra.mxu0 0.0
  %3432 = vmatpush.xpose.msra.mxu0 0.0
  %3433 = vmatpush.xpose.msra.mxu0 0.0
  %3434 = vmatpush.xpose.msra.mxu0 0.0
  %3435 = vmatpush.xpose.msra.mxu0 0.0
  %3436 = vmatpush.xpose.msra.mxu0 0.0
  %3437 = vmatpush.xpose.msra.mxu0 %v3420
  %3438 = vmatmul.f32.gmra.mxu0 %v3417
  %v3439 = vpop.f32.mrf.mxu0
  %v3440 = vadd.f32 0.0, %v3439
  %3441 = vdwg.mxu0
  %v3443 = vsel %vm296, %v3362, 0
  %v3446 = vsel %vm296, %v3388, 0
  %3448 = vmatpush.xpose.msra.mxu0 0.0
  %3449 = vmatpush.xpose.msra.mxu0 0.0
  %3450 = vmatpush.xpose.msra.mxu0 0.0
  %3451 = vmatpush.xpose.msra.mxu0 0.0
  %3452 = vmatpush.xpose.msra.mxu0 0.0
  %3453 = vmatpush.xpose.msra.mxu0 0.0
  %3454 = vmatpush.xpose.msra.mxu0 0.0
  %3455 = vmatpush.xpose.msra.mxu0 0.0
  %3456 = vmatpush.xpose.msra.mxu0 0.0
  %3457 = vmatpush.xpose.msra.mxu0 0.0
  %3458 = vmatpush.xpose.msra.mxu0 0.0
  %3459 = vmatpush.xpose.msra.mxu0 0.0
  %3460 = vmatpush.xpose.msra.mxu0 0.0
  %3461 = vmatpush.xpose.msra.mxu0 0.0
  %3462 = vmatpush.xpose.msra.mxu0 0.0
  %3463 = vmatpush.xpose.msra.mxu0 %v3446
  %3464 = vmatmul.f32.gmra.mxu0 %v3443
  %v3465 = vpop.f32.mrf.mxu0
  %v3466 = vadd.f32 0.0, %v3465
  %3467 = vdwg.mxu0
  %v3468 = vsel %vm349, %v3440, -inf
  %3469 = vmax.xlane.f32.xlu0 %v3468
  %v3470 = vpop.xlane.xlu0 %3469
  %v3471 = vsel %vm349, %v3466, -inf
  %3472 = vmax.xlane.f32.xlu0 %v3471
  %v3473 = vpop.xlane.xlu0 %3472
  %v3474 = vsub.f32 %v3440, %v3470
  %v3475 = vsub.f32 %v3466, %v3473
  %v3476 = vmul.f32 %v3474, 1.442695
  %v3477 = vpow.pop %v3476
  %v3478 = vmul.f32 %v3475, 1.442695
  %v3479 = vpow.pop %v3478
  %v3480 = vsel %vm349, %v3477, 0.0
  %3481 = vadd.xlane.f32.xlu0 %v3480
  %v3482 = vpop.xlane.xlu0 %3481
  %v3483 = vsel %vm349, %v3479, 0.0
  %3484 = vadd.xlane.f32.xlu0 %v3483
  %v3485 = vpop.xlane.xlu0 %3484
  %v3486 = vrcp.pop %v3482
  %v3487 = vrcp.pop %v3485
  %v3488 = vmul.f32 %v3477, %v3486
  %v3489 = vmul.f32 %v3479, %v3487
  %v3491 = vsel %vm349, %v3488, 0
  %3493 = vmatpush.msra.mxu0 0.0
  %3494 = vmatpush.msra.mxu0 0.0
  %3495 = vmatpush.msra.mxu0 0.0
  %3496 = vmatpush.msra.mxu0 0.0
  %3497 = vmatpush.msra.mxu0 0.0
  %3498 = vmatpush.msra.mxu0 0.0
  %3499 = vmatpush.msra.mxu0 0.0
  %3500 = vmatpush.msra.mxu0 0.0
  %3501 = vmatpush.msra.mxu0 0.0
  %3502 = vmatpush.msra.mxu0 0.0
  %3503 = vmatpush.msra.mxu0 0.0
  %3504 = vmatpush.msra.mxu0 0.0
  %3505 = vmatpush.msra.mxu0 0.0
  %3506 = vmatpush.msra.mxu0 0.0
  %3507 = vmatpush.msra.mxu0 0.0
  %3508 = vmatpush.msra.mxu0 %v3411
  %3509 = vmatmul.f32.gmra.mxu0 %v3491
  %v3510 = vpop.f32.mrf.mxu0
  %v3511 = vadd.f32 0.0, %v3510
  %3512 = vdwg.mxu0
  %v3514 = vsel %vm349, %v3489, 0
  %3516 = vmatpush.msra.mxu0 0.0
  %3517 = vmatpush.msra.mxu0 0.0
  %3518 = vmatpush.msra.mxu0 0.0
  %3519 = vmatpush.msra.mxu0 0.0
  %3520 = vmatpush.msra.mxu0 0.0
  %3521 = vmatpush.msra.mxu0 0.0
  %3522 = vmatpush.msra.mxu0 0.0
  %3523 = vmatpush.msra.mxu0 0.0
  %3524 = vmatpush.msra.mxu0 0.0
  %3525 = vmatpush.msra.mxu0 0.0
  %3526 = vmatpush.msra.mxu0 0.0
  %3527 = vmatpush.msra.mxu0 0.0
  %3528 = vmatpush.msra.mxu0 0.0
  %3529 = vmatpush.msra.mxu0 0.0
  %3530 = vmatpush.msra.mxu0 0.0
  %3531 = vmatpush.msra.mxu0 %v3414
  %3532 = vmatmul.f32.gmra.mxu0 %v3514
  %v3533 = vpop.f32.mrf.mxu0
  %v3534 = vadd.f32 0.0, %v3533
  %3535 = vdwg.mxu0
  %v3537 = vperm.slane %v3244, 0
  %3539 = vmatpush.msra.mxu0 0.0
  %3540 = vmatpush.msra.mxu0 0.0
  %3541 = vmatpush.msra.mxu0 0.0
  %3542 = vmatpush.msra.mxu0 0.0
  %3543 = vmatpush.msra.mxu0 0.0
  %3544 = vmatpush.msra.mxu0 0.0
  %3545 = vmatpush.msra.mxu0 0.0
  %3546 = vmatpush.msra.mxu0 0.0
  %3547 = vmatpush.msra.mxu0 %v3225
  %3548 = vmatpush.msra.mxu0 %v3224
  %3549 = vmatpush.msra.mxu0 %v3223
  %3550 = vmatpush.msra.mxu0 %v3222
  %3551 = vmatpush.msra.mxu0 %v3221
  %3552 = vmatpush.msra.mxu0 %v3220
  %3553 = vmatpush.msra.mxu0 %v3219
  %3554 = vmatpush.msra.mxu0 %v3218
  %3555 = vmatmul.f32.gmra.mxu0 %v3336
  %v3556 = vpop.f32.mrf.mxu0
  %v3557 = vadd.f32 %v3537, %v3556
  %3558 = vmatmul.f32.gmra.mxu0 %v3339
  %v3559 = vpop.f32.mrf.mxu0
  %v3560 = vadd.f32 %v3537, %v3559
  %3561 = vdwg.mxu0
  %v3563 = vperm.slane %v3282, 0
  %3565 = vmatpush.msra.mxu0 0.0
  %3566 = vmatpush.msra.mxu0 0.0
  %3567 = vmatpush.msra.mxu0 0.0
  %3568 = vmatpush.msra.mxu0 0.0
  %3569 = vmatpush.msra.mxu0 0.0
  %3570 = vmatpush.msra.mxu0 0.0
  %3571 = vmatpush.msra.mxu0 0.0
  %3572 = vmatpush.msra.mxu0 0.0
  %3573 = vmatpush.msra.mxu0 %v3263
  %3574 = vmatpush.msra.mxu0 %v3262
  %3575 = vmatpush.msra.mxu0 %v3261
  %3576 = vmatpush.msra.mxu0 %v3260
  %3577 = vmatpush.msra.mxu0 %v3259
  %3578 = vmatpush.msra.mxu0 %v3258
  %3579 = vmatpush.msra.mxu0 %v3257
  %3580 = vmatpush.msra.mxu0 %v3256
  %3581 = vmatmul.f32.gmra.mxu0 %v3336
  %v3582 = vpop.f32.mrf.mxu0
  %v3583 = vadd.f32 %v3563, %v3582
  %3584 = vmatmul.f32.gmra.mxu0 %v3339
  %v3585 = vpop.f32.mrf.mxu0
  %v3586 = vadd.f32 %v3563, %v3585
  %3587 = vdwg.mxu0
  %v3589 = vperm.slane %v3320, 0
  %3591 = vmatpush.msra.mxu0 0.0
  %3592 = vmatpush.msra.mxu0 0.0
  %3593 = vmatpush.msra.mxu0 0.0
  %3594 = vmatpush.msra.mxu0 0.0
  %3595 = vmatpush.msra.mxu0 0.0
  %3596 = vmatpush.msra.mxu0 0.0
  %3597 = vmatpush.msra.mxu0 0.0
  %3598 = vmatpush.msra.mxu0 0.0
  %3599 = vmatpush.msra.mxu0 %v3301
  %3600 = vmatpush.msra.mxu0 %v3300
  %3601 = vmatpush.msra.mxu0 %v3299
  %3602 = vmatpush.msra.mxu0 %v3298
  %3603 = vmatpush.msra.mxu0 %v3297
  %3604 = vmatpush.msra.mxu0 %v3296
  %3605 = vmatpush.msra.mxu0 %v3295
  %3606 = vmatpush.msra.mxu0 %v3294
  %3607 = vmatmul.f32.gmra.mxu0 %v3336
  %v3608 = vpop.f32.mrf.mxu0
  %v3609 = vadd.f32 %v3589, %v3608
  %3610 = vmatmul.f32.gmra.mxu0 %v3339
  %v3611 = vpop.f32.mrf.mxu0
  %v3612 = vadd.f32 %v3589, %v3611
  %3613 = vdwg.mxu0
  %v3615 = vsel %vm296, %v3557, 0
  %v3618 = vsel %vm296, %v3583, 0
  %3620 = vmatpush.xpose.msra.mxu0 0.0
  %3621 = vmatpush.xpose.msra.mxu0 0.0
  %3622 = vmatpush.xpose.msra.mxu0 0.0
  %3623 = vmatpush.xpose.msra.mxu0 0.0
  %3624 = vmatpush.xpose.msra.mxu0 0.0
  %3625 = vmatpush.xpose.msra.mxu0 0.0
  %3626 = vmatpush.xpose.msra.mxu0 0.0
  %3627 = vmatpush.xpose.msra.mxu0 0.0
  %3628 = vmatpush.xpose.msra.mxu0 0.0
  %3629 = vmatpush.xpose.msra.mxu0 0.0
  %3630 = vmatpush.xpose.msra.mxu0 0.0
  %3631 = vmatpush.xpose.msra.mxu0 0.0
  %3632 = vmatpush.xpose.msra.mxu0 0.0
  %3633 = vmatpush.xpose.msra.mxu0 0.0
  %3634 = vmatpush.xpose.msra.mxu0 0.0
  %3635 = vmatpush.xpose.msra.mxu0 %v3618
  %3636 = vmatmul.f32.gmra.mxu0 %v3615
  %v3637 = vpop.f32.mrf.mxu0
  %v3638 = vadd.f32 0.0, %v3637
  %3639 = vdwg.mxu0
  %v3641 = vsel %vm296, %v3560, 0
  %v3644 = vsel %vm296, %v3586, 0
  %3646 = vmatpush.xpose.msra.mxu0 0.0
  %3647 = vmatpush.xpose.msra.mxu0 0.0
  %3648 = vmatpush.xpose.msra.mxu0 0.0
  %3649 = vmatpush.xpose.msra.mxu0 0.0
  %3650 = vmatpush.xpose.msra.mxu0 0.0
  %3651 = vmatpush.xpose.msra.mxu0 0.0
  %3652 = vmatpush.xpose.msra.mxu0 0.0
  %3653 = vmatpush.xpose.msra.mxu0 0.0
  %3654 = vmatpush.xpose.msra.mxu0 0.0
  %3655 = vmatpush.xpose.msra.mxu0 0.0
  %3656 = vmatpush.xpose.msra.mxu0 0.0
  %3657 = vmatpush.xpose.msra.mxu0 0.0
  %3658 = vmatpush.xpose.msra.mxu0 0.0
  %3659 = vmatpush.xpose.msra.mxu0 0.0
  %3660 = vmatpush.xpose.msra.mxu0 0.0
  %3661 = vmatpush.xpose.msra.mxu0 %v3644
  %3662 = vmatmul.f32.gmra.mxu0 %v3641
  %v3663 = vpop.f32.mrf.mxu0
  %v3664 = vadd.f32 0.0, %v3663
  %3665 = vdwg.mxu0
  %v3666 = vsel %vm349, %v3638, -inf
  %3667 = vmax.xlane.f32.xlu0 %v3666
  %v3668 = vpop.xlane.xlu0 %3667
  %v3669 = vsel %vm349, %v3664, -inf
  %3670 = vmax.xlane.f32.xlu0 %v3669
  %v3671 = vpop.xlane.xlu0 %3670
  %v3672 = vsub.f32 %v3638, %v3668
  %v3673 = vsub.f32 %v3664, %v3671
  %v3674 = vmul.f32 %v3672, 1.442695
  %v3675 = vpow.pop %v3674
  %v3676 = vmul.f32 %v3673, 1.442695
  %v3677 = vpow.pop %v3676
  %v3678 = vsel %vm349, %v3675, 0.0
  %3679 = vadd.xlane.f32.xlu0 %v3678
  %v3680 = vpop.xlane.xlu0 %3679
  %v3681 = vsel %vm349, %v3677, 0.0
  %3682 = vadd.xlane.f32.xlu0 %v3681
  %v3683 = vpop.xlane.xlu0 %3682
  %v3684 = vrcp.pop %v3680
  %v3685 = vrcp.pop %v3683
  %v3686 = vmul.f32 %v3675, %v3684
  %v3687 = vmul.f32 %v3677, %v3685
  %v3689 = vsel %vm349, %v3686, 0
  %3691 = vmatpush.msra.mxu0 0.0
  %3692 = vmatpush.msra.mxu0 0.0
  %3693 = vmatpush.msra.mxu0 0.0
  %3694 = vmatpush.msra.mxu0 0.0
  %3695 = vmatpush.msra.mxu0 0.0
  %3696 = vmatpush.msra.mxu0 0.0
  %3697 = vmatpush.msra.mxu0 0.0
  %3698 = vmatpush.msra.mxu0 0.0
  %3699 = vmatpush.msra.mxu0 0.0
  %3700 = vmatpush.msra.mxu0 0.0
  %3701 = vmatpush.msra.mxu0 0.0
  %3702 = vmatpush.msra.mxu0 0.0
  %3703 = vmatpush.msra.mxu0 0.0
  %3704 = vmatpush.msra.mxu0 0.0
  %3705 = vmatpush.msra.mxu0 0.0
  %3706 = vmatpush.msra.mxu0 %v3609
  %3707 = vmatmul.f32.gmra.mxu0 %v3689
  %v3708 = vpop.f32.mrf.mxu0
  %v3709 = vadd.f32 0.0, %v3708
  %3710 = vdwg.mxu0
  %v3712 = vsel %vm349, %v3687, 0
  %3714 = vmatpush.msra.mxu0 0.0
  %3715 = vmatpush.msra.mxu0 0.0
  %3716 = vmatpush.msra.mxu0 0.0
  %3717 = vmatpush.msra.mxu0 0.0
  %3718 = vmatpush.msra.mxu0 0.0
  %3719 = vmatpush.msra.mxu0 0.0
  %3720 = vmatpush.msra.mxu0 0.0
  %3721 = vmatpush.msra.mxu0 0.0
  %3722 = vmatpush.msra.mxu0 0.0
  %3723 = vmatpush.msra.mxu0 0.0
  %3724 = vmatpush.msra.mxu0 0.0
  %3725 = vmatpush.msra.mxu0 0.0
  %3726 = vmatpush.msra.mxu0 0.0
  %3727 = vmatpush.msra.mxu0 0.0
  %3728 = vmatpush.msra.mxu0 0.0
  %3729 = vmatpush.msra.mxu0 %v3612
  %3730 = vmatmul.f32.gmra.mxu0 %v3712
  %v3731 = vpop.f32.mrf.mxu0
  %v3732 = vadd.f32 0.0, %v3731
  %3733 = vdwg.mxu0
  %v3735 = vsel %vm296, %v3709, 0
  %v3738 = vsel %vm296, %v3732, 0
  %3740 = vmatpush.msra.mxu0 0.0
  %3741 = vmatpush.msra.mxu0 0.0
  %3742 = vmatpush.msra.mxu0 0.0
  %3743 = vmatpush.msra.mxu0 0.0
  %3744 = vmatpush.msra.mxu0 0.0
  %3745 = vmatpush.msra.mxu0 0.0
  %3746 = vmatpush.msra.mxu0 0.0
  %3747 = vmatpush.msra.mxu0 0.0
  %3748 = vmatpush.msra.mxu0 0.0
  %3749 = vmatpush.msra.mxu0 0.0
  %3750 = vmatpush.msra.mxu0 0.0
  %3751 = vmatpush.msra.mxu0 0.0
  %3752 = vmatpush.msra.mxu0 0.0
  %3753 = vmatpush.msra.mxu0 0.0
  %3754 = vmatpush.msra.mxu0 %v3327
  %3755 = vmatpush.msra.mxu0 %v3326
  %3756 = vmatmul.f32.gmra.mxu0 %v3735
  %v3757 = vpop.f32.mrf.mxu0
  %v3758 = vadd.f32 0.0, %v3757
  %3759 = vmatmul.f32.gmra.mxu0 %v3738
  %v3760 = vpop.f32.mrf.mxu0
  %v3761 = vadd.f32 0.0, %v3760
  %3762 = vdwg.mxu0
  %v3764 = vsel %vm296, %v3511, 0
  %v3767 = vsel %vm296, %v3534, 0
  %3769 = vmatpush.msra.mxu0 0.0
  %3770 = vmatpush.msra.mxu0 0.0
  %3771 = vmatpush.msra.mxu0 0.0
  %3772 = vmatpush.msra.mxu0 0.0
  %3773 = vmatpush.msra.mxu0 0.0
  %3774 = vmatpush.msra.mxu0 0.0
  %3775 = vmatpush.msra.mxu0 0.0
  %3776 = vmatpush.msra.mxu0 0.0
  %3777 = vmatpush.msra.mxu0 0.0
  %3778 = vmatpush.msra.mxu0 0.0
  %3779 = vmatpush.msra.mxu0 0.0
  %3780 = vmatpush.msra.mxu0 0.0
  %3781 = vmatpush.msra.mxu0 0.0
  %3782 = vmatpush.msra.mxu0 0.0
  %3783 = vmatpush.msra.mxu0 %v3325
  %3784 = vmatpush.msra.mxu0 %v3324
  %3785 = vmatmul.f32.gmra.mxu0 %v3764
  %v3786 = vpop.f32.mrf.mxu0
  %v3787 = vadd.f32 %v3758, %v3786
  %3788 = vmatmul.f32.gmra.mxu0 %v3767
  %v3789 = vpop.f32.mrf.mxu0
  %v3790 = vadd.f32 %v3761, %v3789
  %3791 = vdwg.mxu0
  %v3793 = vperm.slane %v3245, 0
  %3795 = vmatpush.msra.mxu0 0.0
  %3796 = vmatpush.msra.mxu0 0.0
  %3797 = vmatpush.msra.mxu0 0.0
  %3798 = vmatpush.msra.mxu0 0.0
  %3799 = vmatpush.msra.mxu0 0.0
  %3800 = vmatpush.msra.mxu0 0.0
  %3801 = vmatpush.msra.mxu0 0.0
  %3802 = vmatpush.msra.mxu0 0.0
  %3803 = vmatpush.msra.mxu0 %v3233
  %3804 = vmatpush.msra.mxu0 %v3232
  %3805 = vmatpush.msra.mxu0 %v3231
  %3806 = vmatpush.msra.mxu0 %v3230
  %3807 = vmatpush.msra.mxu0 %v3229
  %3808 = vmatpush.msra.mxu0 %v3228
  %3809 = vmatpush.msra.mxu0 %v3227
  %3810 = vmatpush.msra.mxu0 %v3226
  %3811 = vmatmul.f32.gmra.mxu0 %v3336
  %v3812 = vpop.f32.mrf.mxu0
  %v3813 = vadd.f32 %v3793, %v3812
  %3814 = vmatmul.f32.gmra.mxu0 %v3339
  %v3815 = vpop.f32.mrf.mxu0
  %v3816 = vadd.f32 %v3793, %v3815
  %3817 = vdwg.mxu0
  %v3819 = vperm.slane %v3283, 0
  %3821 = vmatpush.msra.mxu0 0.0
  %3822 = vmatpush.msra.mxu0 0.0
  %3823 = vmatpush.msra.mxu0 0.0
  %3824 = vmatpush.msra.mxu0 0.0
  %3825 = vmatpush.msra.mxu0 0.0
  %3826 = vmatpush.msra.mxu0 0.0
  %3827 = vmatpush.msra.mxu0 0.0
  %3828 = vmatpush.msra.mxu0 0.0
  %3829 = vmatpush.msra.mxu0 %v3271
  %3830 = vmatpush.msra.mxu0 %v3270
  %3831 = vmatpush.msra.mxu0 %v3269
  %3832 = vmatpush.msra.mxu0 %v3268
  %3833 = vmatpush.msra.mxu0 %v3267
  %3834 = vmatpush.msra.mxu0 %v3266
  %3835 = vmatpush.msra.mxu0 %v3265
  %3836 = vmatpush.msra.mxu0 %v3264
  %3837 = vmatmul.f32.gmra.mxu0 %v3336
  %v3838 = vpop.f32.mrf.mxu0
  %v3839 = vadd.f32 %v3819, %v3838
  %3840 = vmatmul.f32.gmra.mxu0 %v3339
  %v3841 = vpop.f32.mrf.mxu0
  %v3842 = vadd.f32 %v3819, %v3841
  %3843 = vdwg.mxu0
  %v3845 = vperm.slane %v3321, 0
  %3847 = vmatpush.msra.mxu0 0.0
  %3848 = vmatpush.msra.mxu0 0.0
  %3849 = vmatpush.msra.mxu0 0.0
  %3850 = vmatpush.msra.mxu0 0.0
  %3851 = vmatpush.msra.mxu0 0.0
  %3852 = vmatpush.msra.mxu0 0.0
  %3853 = vmatpush.msra.mxu0 0.0
  %3854 = vmatpush.msra.mxu0 0.0
  %3855 = vmatpush.msra.mxu0 %v3309
  %3856 = vmatpush.msra.mxu0 %v3308
  %3857 = vmatpush.msra.mxu0 %v3307
  %3858 = vmatpush.msra.mxu0 %v3306
  %3859 = vmatpush.msra.mxu0 %v3305
  %3860 = vmatpush.msra.mxu0 %v3304
  %3861 = vmatpush.msra.mxu0 %v3303
  %3862 = vmatpush.msra.mxu0 %v3302
  %3863 = vmatmul.f32.gmra.mxu0 %v3336
  %v3864 = vpop.f32.mrf.mxu0
  %v3865 = vadd.f32 %v3845, %v3864
  %3866 = vmatmul.f32.gmra.mxu0 %v3339
  %v3867 = vpop.f32.mrf.mxu0
  %v3868 = vadd.f32 %v3845, %v3867
  %3869 = vdwg.mxu0
  %v3871 = vsel %vm296, %v3813, 0
  %v3874 = vsel %vm296, %v3839, 0
  %3876 = vmatpush.xpose.msra.mxu0 0.0
  %3877 = vmatpush.xpose.msra.mxu0 0.0
  %3878 = vmatpush.xpose.msra.mxu0 0.0
  %3879 = vmatpush.xpose.msra.mxu0 0.0
  %3880 = vmatpush.xpose.msra.mxu0 0.0
  %3881 = vmatpush.xpose.msra.mxu0 0.0
  %3882 = vmatpush.xpose.msra.mxu0 0.0
  %3883 = vmatpush.xpose.msra.mxu0 0.0
  %3884 = vmatpush.xpose.msra.mxu0 0.0
  %3885 = vmatpush.xpose.msra.mxu0 0.0
  %3886 = vmatpush.xpose.msra.mxu0 0.0
  %3887 = vmatpush.xpose.msra.mxu0 0.0
  %3888 = vmatpush.xpose.msra.mxu0 0.0
  %3889 = vmatpush.xpose.msra.mxu0 0.0
  %3890 = vmatpush.xpose.msra.mxu0 0.0
  %3891 = vmatpush.xpose.msra.mxu0 %v3874
  %3892 = vmatmul.f32.gmra.mxu0 %v3871
  %v3893 = vpop.f32.mrf.mxu0
  %v3894 = vadd.f32 0.0, %v3893
  %3895 = vdwg.mxu0
  %v3897 = vsel %vm296, %v3816, 0
  %v3900 = vsel %vm296, %v3842, 0
  %3902 = vmatpush.xpose.msra.mxu0 0.0
  %3903 = vmatpush.xpose.msra.mxu0 0.0
  %3904 = vmatpush.xpose.msra.mxu0 0.0
  %3905 = vmatpush.xpose.msra.mxu0 0.0
  %3906 = vmatpush.xpose.msra.mxu0 0.0
  %3907 = vmatpush.xpose.msra.mxu0 0.0
  %3908 = vmatpush.xpose.msra.mxu0 0.0
  %3909 = vmatpush.xpose.msra.mxu0 0.0
  %3910 = vmatpush.xpose.msra.mxu0 0.0
  %3911 = vmatpush.xpose.msra.mxu0 0.0
  %3912 = vmatpush.xpose.msra.mxu0 0.0
  %3913 = vmatpush.xpose.msra.mxu0 0.0
  %3914 = vmatpush.xpose.msra.mxu0 0.0
  %3915 = vmatpush.xpose.msra.mxu0 0.0
  %3916 = vmatpush.xpose.msra.mxu0 0.0
  %3917 = vmatpush.xpose.msra.mxu0 %v3900
  %3918 = vmatmul.f32.gmra.mxu0 %v3897
  %v3919 = vpop.f32.mrf.mxu0
  %v3920 = vadd.f32 0.0, %v3919
  %3921 = vdwg.mxu0
  %v3922 = vsel %vm349, %v3894, -inf
  %3923 = vmax.xlane.f32.xlu0 %v3922
  %v3924 = vpop.xlane.xlu0 %3923
  %v3925 = vsel %vm349, %v3920, -inf
  %3926 = vmax.xlane.f32.xlu0 %v3925
  %v3927 = vpop.xlane.xlu0 %3926
  %v3928 = vsub.f32 %v3894, %v3924
  %v3929 = vsub.f32 %v3920, %v3927
  %v3930 = vmul.f32 %v3928, 1.442695
  %v3931 = vpow.pop %v3930
  %v3932 = vmul.f32 %v3929, 1.442695
  %v3933 = vpow.pop %v3932
  %v3934 = vsel %vm349, %v3931, 0.0
  %3935 = vadd.xlane.f32.xlu0 %v3934
  %v3936 = vpop.xlane.xlu0 %3935
  %v3937 = vsel %vm349, %v3933, 0.0
  %3938 = vadd.xlane.f32.xlu0 %v3937
  %v3939 = vpop.xlane.xlu0 %3938
  %v3940 = vrcp.pop %v3936
  %v3941 = vrcp.pop %v3939
  %v3942 = vmul.f32 %v3931, %v3940
  %v3943 = vmul.f32 %v3933, %v3941
  %v3945 = vsel %vm349, %v3942, 0
  %3947 = vmatpush.msra.mxu0 0.0
  %3948 = vmatpush.msra.mxu0 0.0
  %3949 = vmatpush.msra.mxu0 0.0
  %3950 = vmatpush.msra.mxu0 0.0
  %3951 = vmatpush.msra.mxu0 0.0
  %3952 = vmatpush.msra.mxu0 0.0
  %3953 = vmatpush.msra.mxu0 0.0
  %3954 = vmatpush.msra.mxu0 0.0
  %3955 = vmatpush.msra.mxu0 0.0
  %3956 = vmatpush.msra.mxu0 0.0
  %3957 = vmatpush.msra.mxu0 0.0
  %3958 = vmatpush.msra.mxu0 0.0
  %3959 = vmatpush.msra.mxu0 0.0
  %3960 = vmatpush.msra.mxu0 0.0
  %3961 = vmatpush.msra.mxu0 0.0
  %3962 = vmatpush.msra.mxu0 %v3865
  %3963 = vmatmul.f32.gmra.mxu0 %v3945
  %v3964 = vpop.f32.mrf.mxu0
  %v3965 = vadd.f32 0.0, %v3964
  %3966 = vdwg.mxu0
  %v3968 = vsel %vm349, %v3943, 0
  %3970 = vmatpush.msra.mxu0 0.0
  %3971 = vmatpush.msra.mxu0 0.0
  %3972 = vmatpush.msra.mxu0 0.0
  %3973 = vmatpush.msra.mxu0 0.0
  %3974 = vmatpush.msra.mxu0 0.0
  %3975 = vmatpush.msra.mxu0 0.0
  %3976 = vmatpush.msra.mxu0 0.0
  %3977 = vmatpush.msra.mxu0 0.0
  %3978 = vmatpush.msra.mxu0 0.0
  %3979 = vmatpush.msra.mxu0 0.0
  %3980 = vmatpush.msra.mxu0 0.0
  %3981 = vmatpush.msra.mxu0 0.0
  %3982 = vmatpush.msra.mxu0 0.0
  %3983 = vmatpush.msra.mxu0 0.0
  %3984 = vmatpush.msra.mxu0 0.0
  %3985 = vmatpush.msra.mxu0 %v3868
  %3986 = vmatmul.f32.gmra.mxu0 %v3968
  %v3987 = vpop.f32.mrf.mxu0
  %v3988 = vadd.f32 0.0, %v3987
  %3989 = vdwg.mxu0
  %v3991 = vsel %vm296, %v3965, 0
  %v3994 = vsel %vm296, %v3988, 0
  %3996 = vmatpush.msra.mxu0 0.0
  %3997 = vmatpush.msra.mxu0 0.0
  %3998 = vmatpush.msra.mxu0 0.0
  %3999 = vmatpush.msra.mxu0 0.0
  %4000 = vmatpush.msra.mxu0 0.0
  %4001 = vmatpush.msra.mxu0 0.0
  %4002 = vmatpush.msra.mxu0 0.0
  %4003 = vmatpush.msra.mxu0 0.0
  %4004 = vmatpush.msra.mxu0 0.0
  %4005 = vmatpush.msra.mxu0 0.0
  %4006 = vmatpush.msra.mxu0 0.0
  %4007 = vmatpush.msra.mxu0 0.0
  %4008 = vmatpush.msra.mxu0 0.0
  %4009 = vmatpush.msra.mxu0 0.0
  %4010 = vmatpush.msra.mxu0 %v3329
  %4011 = vmatpush.msra.mxu0 %v3328
  %4012 = vmatmul.f32.gmra.mxu0 %v3991
  %v4013 = vpop.f32.mrf.mxu0
  %v4014 = vadd.f32 0.0, %v4013
  %4015 = vmatmul.f32.gmra.mxu0 %v3994
  %v4016 = vpop.f32.mrf.mxu0
  %v4017 = vadd.f32 0.0, %v4016
  %4018 = vdwg.mxu0
  %v4019 = vadd.f32 %v3787, %v4014
  %v4020 = vadd.f32 %v3790, %v4017
  %v4022 = vperm.slane %v3246, 0
  %4024 = vmatpush.msra.mxu0 0.0
  %4025 = vmatpush.msra.mxu0 0.0
  %4026 = vmatpush.msra.mxu0 0.0
  %4027 = vmatpush.msra.mxu0 0.0
  %4028 = vmatpush.msra.mxu0 0.0
  %4029 = vmatpush.msra.mxu0 0.0
  %4030 = vmatpush.msra.mxu0 0.0
  %4031 = vmatpush.msra.mxu0 0.0
  %4032 = vmatpush.msra.mxu0 %v3241
  %4033 = vmatpush.msra.mxu0 %v3240
  %4034 = vmatpush.msra.mxu0 %v3239
  %4035 = vmatpush.msra.mxu0 %v3238
  %4036 = vmatpush.msra.mxu0 %v3237
  %4037 = vmatpush.msra.mxu0 %v3236
  %4038 = vmatpush.msra.mxu0 %v3235
  %4039 = vmatpush.msra.mxu0 %v3234
  %4040 = vmatmul.f32.gmra.mxu0 %v3336
  %v4041 = vpop.f32.mrf.mxu0
  %v4042 = vadd.f32 %v4022, %v4041
  %4043 = vmatmul.f32.gmra.mxu0 %v3339
  %v4044 = vpop.f32.mrf.mxu0
  %v4045 = vadd.f32 %v4022, %v4044
  %4046 = vdwg.mxu0
  %v4048 = vperm.slane %v3284, 0
  %4050 = vmatpush.msra.mxu0 0.0
  %4051 = vmatpush.msra.mxu0 0.0
  %4052 = vmatpush.msra.mxu0 0.0
  %4053 = vmatpush.msra.mxu0 0.0
  %4054 = vmatpush.msra.mxu0 0.0
  %4055 = vmatpush.msra.mxu0 0.0
  %4056 = vmatpush.msra.mxu0 0.0
  %4057 = vmatpush.msra.mxu0 0.0
  %4058 = vmatpush.msra.mxu0 %v3279
  %4059 = vmatpush.msra.mxu0 %v3278
  %4060 = vmatpush.msra.mxu0 %v3277
  %4061 = vmatpush.msra.mxu0 %v3276
  %4062 = vmatpush.msra.mxu0 %v3275
  %4063 = vmatpush.msra.mxu0 %v3274
  %4064 = vmatpush.msra.mxu0 %v3273
  %4065 = vmatpush.msra.mxu0 %v3272
  %4066 = vmatmul.f32.gmra.mxu0 %v3336
  %v4067 = vpop.f32.mrf.mxu0
  %v4068 = vadd.f32 %v4048, %v4067
  %4069 = vmatmul.f32.gmra.mxu0 %v3339
  %v4070 = vpop.f32.mrf.mxu0
  %v4071 = vadd.f32 %v4048, %v4070
  %4072 = vdwg.mxu0
  %v4074 = vperm.slane %v3322, 0
  %4076 = vmatpush.msra.mxu0 0.0
  %4077 = vmatpush.msra.mxu0 0.0
  %4078 = vmatpush.msra.mxu0 0.0
  %4079 = vmatpush.msra.mxu0 0.0
  %4080 = vmatpush.msra.mxu0 0.0
  %4081 = vmatpush.msra.mxu0 0.0
  %4082 = vmatpush.msra.mxu0 0.0
  %4083 = vmatpush.msra.mxu0 0.0
  %4084 = vmatpush.msra.mxu0 %v3317
  %4085 = vmatpush.msra.mxu0 %v3316
  %4086 = vmatpush.msra.mxu0 %v3315
  %4087 = vmatpush.msra.mxu0 %v3314
  %4088 = vmatpush.msra.mxu0 %v3313
  %4089 = vmatpush.msra.mxu0 %v3312
  %4090 = vmatpush.msra.mxu0 %v3311
  %4091 = vmatpush.msra.mxu0 %v3310
  %4092 = vmatmul.f32.gmra.mxu0 %v3336
  %v4093 = vpop.f32.mrf.mxu0
  %v4094 = vadd.f32 %v4074, %v4093
  %4095 = vmatmul.f32.gmra.mxu0 %v3339
  %v4096 = vpop.f32.mrf.mxu0
  %v4097 = vadd.f32 %v4074, %v4096
  %4098 = vdwg.mxu0
  %v4100 = vsel %vm296, %v4042, 0
  %v4103 = vsel %vm296, %v4068, 0
  %4105 = vmatpush.xpose.msra.mxu0 0.0
  %4106 = vmatpush.xpose.msra.mxu0 0.0
  %4107 = vmatpush.xpose.msra.mxu0 0.0
  %4108 = vmatpush.xpose.msra.mxu0 0.0
  %4109 = vmatpush.xpose.msra.mxu0 0.0
  %4110 = vmatpush.xpose.msra.mxu0 0.0
  %4111 = vmatpush.xpose.msra.mxu0 0.0
  %4112 = vmatpush.xpose.msra.mxu0 0.0
  %4113 = vmatpush.xpose.msra.mxu0 0.0
  %4114 = vmatpush.xpose.msra.mxu0 0.0
  %4115 = vmatpush.xpose.msra.mxu0 0.0
  %4116 = vmatpush.xpose.msra.mxu0 0.0
  %4117 = vmatpush.xpose.msra.mxu0 0.0
  %4118 = vmatpush.xpose.msra.mxu0 0.0
  %4119 = vmatpush.xpose.msra.mxu0 0.0
  %4120 = vmatpush.xpose.msra.mxu0 %v4103
  %4121 = vmatmul.f32.gmra.mxu0 %v4100
  %v4122 = vpop.f32.mrf.mxu0
  %v4123 = vadd.f32 0.0, %v4122
  %4124 = vdwg.mxu0
  %v4126 = vsel %vm296, %v4045, 0
  %v4129 = vsel %vm296, %v4071, 0
  %4131 = vmatpush.xpose.msra.mxu0 0.0
  %4132 = vmatpush.xpose.msra.mxu0 0.0
  %4133 = vmatpush.xpose.msra.mxu0 0.0
  %4134 = vmatpush.xpose.msra.mxu0 0.0
  %4135 = vmatpush.xpose.msra.mxu0 0.0
  %4136 = vmatpush.xpose.msra.mxu0 0.0
  %4137 = vmatpush.xpose.msra.mxu0 0.0
  %4138 = vmatpush.xpose.msra.mxu0 0.0
  %4139 = vmatpush.xpose.msra.mxu0 0.0
  %4140 = vmatpush.xpose.msra.mxu0 0.0
  %4141 = vmatpush.xpose.msra.mxu0 0.0
  %4142 = vmatpush.xpose.msra.mxu0 0.0
  %4143 = vmatpush.xpose.msra.mxu0 0.0
  %4144 = vmatpush.xpose.msra.mxu0 0.0
  %4145 = vmatpush.xpose.msra.mxu0 0.0
  %4146 = vmatpush.xpose.msra.mxu0 %v4129
  %4147 = vmatmul.f32.gmra.mxu0 %v4126
  %v4148 = vpop.f32.mrf.mxu0
  %v4149 = vadd.f32 0.0, %v4148
  %4150 = vdwg.mxu0
  %v4151 = vsel %vm349, %v4123, -inf
  %4152 = vmax.xlane.f32.xlu0 %v4151
  %v4153 = vpop.xlane.xlu0 %4152
  %v4154 = vsel %vm349, %v4149, -inf
  %4155 = vmax.xlane.f32.xlu0 %v4154
  %v4156 = vpop.xlane.xlu0 %4155
  %v4157 = vsub.f32 %v4123, %v4153
  %v4158 = vsub.f32 %v4149, %v4156
  %v4159 = vmul.f32 %v4157, 1.442695
  %v4160 = vpow.pop %v4159
  %v4161 = vmul.f32 %v4158, 1.442695
  %v4162 = vpow.pop %v4161
  %v4163 = vsel %vm349, %v4160, 0.0
  %4164 = vadd.xlane.f32.xlu0 %v4163
  %v4165 = vpop.xlane.xlu0 %4164
  %v4166 = vsel %vm349, %v4162, 0.0
  %4167 = vadd.xlane.f32.xlu0 %v4166
  %v4168 = vpop.xlane.xlu0 %4167
  %v4169 = vrcp.pop %v4165
  %v4170 = vrcp.pop %v4168
  %v4171 = vmul.f32 %v4160, %v4169
  %v4172 = vmul.f32 %v4162, %v4170
  %v4174 = vsel %vm349, %v4171, 0
  %4176 = vmatpush.msra.mxu0 0.0
  %4177 = vmatpush.msra.mxu0 0.0
  %4178 = vmatpush.msra.mxu0 0.0
  %4179 = vmatpush.msra.mxu0 0.0
  %4180 = vmatpush.msra.mxu0 0.0
  %4181 = vmatpush.msra.mxu0 0.0
  %4182 = vmatpush.msra.mxu0 0.0
  %4183 = vmatpush.msra.mxu0 0.0
  %4184 = vmatpush.msra.mxu0 0.0
  %4185 = vmatpush.msra.mxu0 0.0
  %4186 = vmatpush.msra.mxu0 0.0
  %4187 = vmatpush.msra.mxu0 0.0
  %4188 = vmatpush.msra.mxu0 0.0
  %4189 = vmatpush.msra.mxu0 0.0
  %4190 = vmatpush.msra.mxu0 0.0
  %4191 = vmatpush.msra.mxu0 %v4094
  %4192 = vmatmul.f32.gmra.mxu0 %v4174
  %v4193 = vpop.f32.mrf.mxu0
  %v4194 = vadd.f32 0.0, %v4193
  %4195 = vdwg.mxu0
  %v4197 = vsel %vm349, %v4172, 0
  %4199 = vmatpush.msra.mxu0 0.0
  %4200 = vmatpush.msra.mxu0 0.0
  %4201 = vmatpush.msra.mxu0 0.0
  %4202 = vmatpush.msra.mxu0 0.0
  %4203 = vmatpush.msra.mxu0 0.0
  %4204 = vmatpush.msra.mxu0 0.0
  %4205 = vmatpush.msra.mxu0 0.0
  %4206 = vmatpush.msra.mxu0 0.0
  %4207 = vmatpush.msra.mxu0 0.0
  %4208 = vmatpush.msra.mxu0 0.0
  %4209 = vmatpush.msra.mxu0 0.0
  %4210 = vmatpush.msra.mxu0 0.0
  %4211 = vmatpush.msra.mxu0 0.0
  %4212 = vmatpush.msra.mxu0 0.0
  %4213 = vmatpush.msra.mxu0 0.0
  %4214 = vmatpush.msra.mxu0 %v4097
  %4215 = vmatmul.f32.gmra.mxu0 %v4197
  %v4216 = vpop.f32.mrf.mxu0
  %v4217 = vadd.f32 0.0, %v4216
  %4218 = vdwg.mxu0
  %v4220 = vsel %vm296, %v4194, 0
  %v4223 = vsel %vm296, %v4217, 0
  %4225 = vmatpush.msra.mxu0 0.0
  %4226 = vmatpush.msra.mxu0 0.0
  %4227 = vmatpush.msra.mxu0 0.0
  %4228 = vmatpush.msra.mxu0 0.0
  %4229 = vmatpush.msra.mxu0 0.0
  %4230 = vmatpush.msra.mxu0 0.0
  %4231 = vmatpush.msra.mxu0 0.0
  %4232 = vmatpush.msra.mxu0 0.0
  %4233 = vmatpush.msra.mxu0 0.0
  %4234 = vmatpush.msra.mxu0 0.0
  %4235 = vmatpush.msra.mxu0 0.0
  %4236 = vmatpush.msra.mxu0 0.0
  %4237 = vmatpush.msra.mxu0 0.0
  %4238 = vmatpush.msra.mxu0 0.0
  %4239 = vmatpush.msra.mxu0 %v3331
  %4240 = vmatpush.msra.mxu0 %v3330
  %4241 = vmatmul.f32.gmra.mxu0 %v4220
  %v4242 = vpop.f32.mrf.mxu0
  %v4243 = vadd.f32 0.0, %v4242
  %4244 = vmatmul.f32.gmra.mxu0 %v4223
  %v4245 = vpop.f32.mrf.mxu0
  %v4246 = vadd.f32 0.0, %v4245
  %4247 = vdwg.mxu0
  %v4248 = vadd.f32 %v4019, %v4243
  %v4249 = vadd.f32 %v4020, %v4246
  %s4250 = scalar_lea.vmem %s10, 1
  %v4251 = vld [vmem:[%s4250] sm:$0x1]
  %v4253 = vperm.slane %v4251, 0
  %v4255 = vadd.f32 %v4248, %v4253
  %v4256 = vadd.f32 %v4249, %v4253
  %v4257 = vadd.f32 %v3207, %v4255
  %v4258 = vadd.f32 %v3208, %v4256
  %s4259 = scalar_lea.vmem %s11, 1
  %v4260 = vld [vmem:[%s4259] sm:$0x1]
  %s4261 = scalar_lea.vmem %s12, 1
  %v4262 = vld [vmem:[%s4261] sm:$0x1]
  %v4263 = vsel %vm214, %v4257, 0.0
  %4264 = vadd.xlane.f32.xlu0 %v4263
  %v4265 = vpop.xlane.xlu0 %4264
  %v4266 = vsel %vm214, %v4258, 0.0
  %4267 = vadd.xlane.f32.xlu0 %v4266
  %v4268 = vpop.xlane.xlu0 %4267
  %v4269 = vmul.f32 %v4265, %v1154
  %v4270 = vmul.f32 %v4268, %v1154
  %v4271 = vsub.f32 %v4257, %v4269
  %v4272 = vsub.f32 %v4258, %v4270
  %v4273 = vmul.f32 %v4271, %v4271
  %v4274 = vmul.f32 %v4272, %v4272
  %v4275 = vsel %vm214, %v4273, 0.0
  %4276 = vadd.xlane.f32.xlu0 %v4275
  %v4277 = vpop.xlane.xlu0 %4276
  %v4278 = vsel %vm214, %v4274, 0.0
  %4279 = vadd.xlane.f32.xlu0 %v4278
  %v4280 = vpop.xlane.xlu0 %4279
  %v4281 = vmul.f32 %v4277, %v1154
  %v4282 = vmul.f32 %v4280, %v1154
  %v4283 = vadd.f32 %v4281, 1e-05
  %v4284 = vadd.f32 %v4282, 1e-05
  %v4285 = vrsqrt.pop %v4283
  %v4286 = vmul.f32 %v4285, %v4283
  %v4287 = vmul.f32 %v4286, %v4285
  %v4288 = vmul.f32 0.5, %v4287
  %v4289 = vsub.f32 1.5, %v4288
  %v4290 = vmul.f32 %v4285, %v4289
  %vm4291 = vweird.f32 %v4283
  %vm4292 = vweird.f32 %v4285
  %vm4293 = vmor %vm4291, %vm4292
  %v4294 = vsel %vm4293, %v4285, %v4290
  %v4295 = vrsqrt.pop %v4284
  %v4296 = vmul.f32 %v4295, %v4284
  %v4297 = vmul.f32 %v4296, %v4295
  %v4298 = vmul.f32 0.5, %v4297
  %v4299 = vsub.f32 1.5, %v4298
  %v4300 = vmul.f32 %v4295, %v4299
  %vm4301 = vweird.f32 %v4284
  %vm4302 = vweird.f32 %v4295
  %vm4303 = vmor %vm4301, %vm4302
  %v4304 = vsel %vm4303, %v4295, %v4300
  %v4305 = vmul.f32 %v4271, %v4294
  %v4306 = vmul.f32 %v4272, %v4304
  %v4308 = vperm.slane %v4260, 0
  %v4310 = vmul.f32 %v4305, %v4308
  %v4311 = vmul.f32 %v4306, %v4308
  %v4313 = vperm.slane %v4262, 0
  %v4315 = vadd.f32 %v4310, %v4313
  %v4316 = vadd.f32 %v4311, %v4313
  %v4317 = vpack.c.bf16 %v4316, %v4315
  %s4318 = scalar_lea.vmem %s13, 512
  %v4319 = vld [vmem:[%s4318] sm:$0xff]
  %v4320 = vld [vmem:[%s4318 + $0x8] sm:$0xff]
  %v4321 = vld [vmem:[%s4318 + $0x10] sm:$0xff]
  %v4322 = vld [vmem:[%s4318 + $0x18] sm:$0xff]
  %v4323 = vld [vmem:[%s4318 + $0x20] sm:$0xff]
  %v4324 = vld [vmem:[%s4318 + $0x28] sm:$0xff]
  %v4325 = vld [vmem:[%s4318 + $0x30] sm:$0xff]
  %v4326 = vld [vmem:[%s4318 + $0x38] sm:$0xff]
  %v4327 = vld [vmem:[%s4318 + $0x40] sm:$0xff]
  %v4328 = vld [vmem:[%s4318 + $0x48] sm:$0xff]
  %v4329 = vld [vmem:[%s4318 + $0x50] sm:$0xff]
  %v4330 = vld [vmem:[%s4318 + $0x58] sm:$0xff]
  %v4331 = vld [vmem:[%s4318 + $0x60] sm:$0xff]
  %v4332 = vld [vmem:[%s4318 + $0x68] sm:$0xff]
  %v4333 = vld [vmem:[%s4318 + $0x70] sm:$0xff]
  %v4334 = vld [vmem:[%s4318 + $0x78] sm:$0xff]
  %v4335 = vld [vmem:[%s4318 + $0x80] sm:$0xff]
  %v4336 = vld [vmem:[%s4318 + $0x88] sm:$0xff]
  %v4337 = vld [vmem:[%s4318 + $0x90] sm:$0xff]
  %v4338 = vld [vmem:[%s4318 + $0x98] sm:$0xff]
  %v4339 = vld [vmem:[%s4318 + $0xa0] sm:$0xff]
  %v4340 = vld [vmem:[%s4318 + $0xa8] sm:$0xff]
  %v4341 = vld [vmem:[%s4318 + $0xb0] sm:$0xff]
  %v4342 = vld [vmem:[%s4318 + $0xb8] sm:$0xff]
  %v4343 = vld [vmem:[%s4318 + $0xc0] sm:$0xff]
  %v4344 = vld [vmem:[%s4318 + $0xc8] sm:$0xff]
  %v4345 = vld [vmem:[%s4318 + $0xd0] sm:$0xff]
  %v4346 = vld [vmem:[%s4318 + $0xd8] sm:$0xff]
  %v4347 = vld [vmem:[%s4318 + $0xe0] sm:$0xff]
  %v4348 = vld [vmem:[%s4318 + $0xe8] sm:$0xff]
  %v4349 = vld [vmem:[%s4318 + $0xf0] sm:$0xff]
  %v4350 = vld [vmem:[%s4318 + $0xf8] sm:$0xff]
  %v4351 = vld [vmem:[%s4318 + $0x100] sm:$0xff]
  %v4352 = vld [vmem:[%s4318 + $0x108] sm:$0xff]
  %v4353 = vld [vmem:[%s4318 + $0x110] sm:$0xff]
  %v4354 = vld [vmem:[%s4318 + $0x118] sm:$0xff]
  %v4355 = vld [vmem:[%s4318 + $0x120] sm:$0xff]
  %v4356 = vld [vmem:[%s4318 + $0x128] sm:$0xff]
  %v4357 = vld [vmem:[%s4318 + $0x130] sm:$0xff]
  %v4358 = vld [vmem:[%s4318 + $0x138] sm:$0xff]
  %v4359 = vld [vmem:[%s4318 + $0x140] sm:$0xff]
  %v4360 = vld [vmem:[%s4318 + $0x148] sm:$0xff]
  %v4361 = vld [vmem:[%s4318 + $0x150] sm:$0xff]
  %v4362 = vld [vmem:[%s4318 + $0x158] sm:$0xff]
  %v4363 = vld [vmem:[%s4318 + $0x160] sm:$0xff]
  %v4364 = vld [vmem:[%s4318 + $0x168] sm:$0xff]
  %v4365 = vld [vmem:[%s4318 + $0x170] sm:$0xff]
  %v4366 = vld [vmem:[%s4318 + $0x178] sm:$0xff]
  %v4367 = vld [vmem:[%s4318 + $0x180] sm:$0xff]
  %v4368 = vld [vmem:[%s4318 + $0x188] sm:$0xff]
  %v4369 = vld [vmem:[%s4318 + $0x190] sm:$0xff]
  %v4370 = vld [vmem:[%s4318 + $0x198] sm:$0xff]
  %v4371 = vld [vmem:[%s4318 + $0x1a0] sm:$0xff]
  %v4372 = vld [vmem:[%s4318 + $0x1a8] sm:$0xff]
  %v4373 = vld [vmem:[%s4318 + $0x1b0] sm:$0xff]
  %v4374 = vld [vmem:[%s4318 + $0x1b8] sm:$0xff]
  %v4375 = vld [vmem:[%s4318 + $0x1c0] sm:$0xff]
  %v4376 = vld [vmem:[%s4318 + $0x1c8] sm:$0xff]
  %v4377 = vld [vmem:[%s4318 + $0x1d0] sm:$0xff]
  %v4378 = vld [vmem:[%s4318 + $0x1d8] sm:$0xff]
  %v4379 = vld [vmem:[%s4318 + $0x1e0] sm:$0xff]
  %v4380 = vld [vmem:[%s4318 + $0x1e8] sm:$0xff]
  %v4381 = vld [vmem:[%s4318 + $0x1f0] sm:$0xff]
  %v4382 = vld [vmem:[%s4318 + $0x1f8] sm:$0xff]
  %s4383 = scalar_lea.vmem %s14, 16
  %v4384 = vld [vmem:[%s4383] sm:$0xff]
  %v4385 = vld [vmem:[%s4383 + $0x8] sm:$0xff]
  %v4388 = vperm.slane %v4384, 0
  %v4389 = vperm.slane %v4384, 1
  %v4390 = vperm.slane %v4384, 2
  %v4391 = vperm.slane %v4384, 3
  %v4392 = vperm.slane %v4384, 4
  %v4393 = vperm.slane %v4384, 5
  %v4394 = vperm.slane %v4384, 6
  %v4395 = vperm.slane %v4384, 7
  %v4396 = vperm.slane %v4385, 0
  %v4397 = vperm.slane %v4385, 1
  %v4398 = vperm.slane %v4385, 2
  %v4399 = vperm.slane %v4385, 3
  %v4400 = vperm.slane %v4385, 4
  %v4401 = vperm.slane %v4385, 5
  %v4402 = vperm.slane %v4385, 6
  %v4403 = vperm.slane %v4385, 7
  %v4484 = vunpack.c.l.b16 %v4319
  %v4485 = vunpack.c.h.b16 %v4319
  %v4486 = vunpack.c.l.b16 %v4320
  %v4487 = vunpack.c.h.b16 %v4320
  %v4488 = vunpack.c.l.b16 %v4321
  %v4489 = vunpack.c.h.b16 %v4321
  %v4490 = vunpack.c.l.b16 %v4322
  %v4491 = vunpack.c.h.b16 %v4322
  %v4492 = vunpack.c.l.b16 %v4323
  %v4493 = vunpack.c.h.b16 %v4323
  %v4494 = vunpack.c.l.b16 %v4324
  %v4495 = vunpack.c.h.b16 %v4324
  %v4496 = vunpack.c.l.b16 %v4325
  %v4497 = vunpack.c.h.b16 %v4325
  %v4498 = vunpack.c.l.b16 %v4326
  %v4499 = vunpack.c.h.b16 %v4326
  %v4500 = vunpack.c.l.b16 %v4327
  %v4501 = vunpack.c.h.b16 %v4327
  %v4502 = vunpack.c.l.b16 %v4328
  %v4503 = vunpack.c.h.b16 %v4328
  %v4504 = vunpack.c.l.b16 %v4329
  %v4505 = vunpack.c.h.b16 %v4329
  %v4506 = vunpack.c.l.b16 %v4330
  %v4507 = vunpack.c.h.b16 %v4330
  %v4508 = vunpack.c.l.b16 %v4331
  %v4509 = vunpack.c.h.b16 %v4331
  %v4510 = vunpack.c.l.b16 %v4332
  %v4511 = vunpack.c.h.b16 %v4332
  %v4512 = vunpack.c.l.b16 %v4333
  %v4513 = vunpack.c.h.b16 %v4333
  %v4514 = vunpack.c.l.b16 %v4334
  %v4515 = vunpack.c.h.b16 %v4334
  %v4516 = vunpack.c.l.b16 %v4335
  %v4517 = vunpack.c.h.b16 %v4335
  %v4518 = vunpack.c.l.b16 %v4336
  %v4519 = vunpack.c.h.b16 %v4336
  %v4520 = vunpack.c.l.b16 %v4337
  %v4521 = vunpack.c.h.b16 %v4337
  %v4522 = vunpack.c.l.b16 %v4338
  %v4523 = vunpack.c.h.b16 %v4338
  %v4524 = vunpack.c.l.b16 %v4339
  %v4525 = vunpack.c.h.b16 %v4339
  %v4526 = vunpack.c.l.b16 %v4340
  %v4527 = vunpack.c.h.b16 %v4340
  %v4528 = vunpack.c.l.b16 %v4341
  %v4529 = vunpack.c.h.b16 %v4341
  %v4530 = vunpack.c.l.b16 %v4342
  %v4531 = vunpack.c.h.b16 %v4342
  %v4532 = vunpack.c.l.b16 %v4343
  %v4533 = vunpack.c.h.b16 %v4343
  %v4534 = vunpack.c.l.b16 %v4344
  %v4535 = vunpack.c.h.b16 %v4344
  %v4536 = vunpack.c.l.b16 %v4345
  %v4537 = vunpack.c.h.b16 %v4345
  %v4538 = vunpack.c.l.b16 %v4346
  %v4539 = vunpack.c.h.b16 %v4346
  %v4540 = vunpack.c.l.b16 %v4347
  %v4541 = vunpack.c.h.b16 %v4347
  %v4542 = vunpack.c.l.b16 %v4348
  %v4543 = vunpack.c.h.b16 %v4348
  %v4544 = vunpack.c.l.b16 %v4349
  %v4545 = vunpack.c.h.b16 %v4349
  %v4546 = vunpack.c.l.b16 %v4350
  %v4547 = vunpack.c.h.b16 %v4350
  %v4548 = vunpack.c.l.b16 %v4351
  %v4549 = vunpack.c.h.b16 %v4351
  %v4550 = vunpack.c.l.b16 %v4352
  %v4551 = vunpack.c.h.b16 %v4352
  %v4552 = vunpack.c.l.b16 %v4353
  %v4553 = vunpack.c.h.b16 %v4353
  %v4554 = vunpack.c.l.b16 %v4354
  %v4555 = vunpack.c.h.b16 %v4354
  %v4556 = vunpack.c.l.b16 %v4355
  %v4557 = vunpack.c.h.b16 %v4355
  %v4558 = vunpack.c.l.b16 %v4356
  %v4559 = vunpack.c.h.b16 %v4356
  %v4560 = vunpack.c.l.b16 %v4357
  %v4561 = vunpack.c.h.b16 %v4357
  %v4562 = vunpack.c.l.b16 %v4358
  %v4563 = vunpack.c.h.b16 %v4358
  %v4564 = vunpack.c.l.b16 %v4359
  %v4565 = vunpack.c.h.b16 %v4359
  %v4566 = vunpack.c.l.b16 %v4360
  %v4567 = vunpack.c.h.b16 %v4360
  %v4568 = vunpack.c.l.b16 %v4361
  %v4569 = vunpack.c.h.b16 %v4361
  %v4570 = vunpack.c.l.b16 %v4362
  %v4571 = vunpack.c.h.b16 %v4362
  %v4572 = vunpack.c.l.b16 %v4363
  %v4573 = vunpack.c.h.b16 %v4363
  %v4574 = vunpack.c.l.b16 %v4364
  %v4575 = vunpack.c.h.b16 %v4364
  %v4576 = vunpack.c.l.b16 %v4365
  %v4577 = vunpack.c.h.b16 %v4365
  %v4578 = vunpack.c.l.b16 %v4366
  %v4579 = vunpack.c.h.b16 %v4366
  %v4580 = vunpack.c.l.b16 %v4367
  %v4581 = vunpack.c.h.b16 %v4367
  %v4582 = vunpack.c.l.b16 %v4368
  %v4583 = vunpack.c.h.b16 %v4368
  %v4584 = vunpack.c.l.b16 %v4369
  %v4585 = vunpack.c.h.b16 %v4369
  %v4586 = vunpack.c.l.b16 %v4370
  %v4587 = vunpack.c.h.b16 %v4370
  %v4588 = vunpack.c.l.b16 %v4371
  %v4589 = vunpack.c.h.b16 %v4371
  %v4590 = vunpack.c.l.b16 %v4372
  %v4591 = vunpack.c.h.b16 %v4372
  %v4592 = vunpack.c.l.b16 %v4373
  %v4593 = vunpack.c.h.b16 %v4373
  %v4594 = vunpack.c.l.b16 %v4374
  %v4595 = vunpack.c.h.b16 %v4374
  %v4596 = vunpack.c.l.b16 %v4375
  %v4597 = vunpack.c.h.b16 %v4375
  %v4598 = vunpack.c.l.b16 %v4376
  %v4599 = vunpack.c.h.b16 %v4376
  %v4600 = vunpack.c.l.b16 %v4377
  %v4601 = vunpack.c.h.b16 %v4377
  %v4602 = vunpack.c.l.b16 %v4378
  %v4603 = vunpack.c.h.b16 %v4378
  %v4604 = vunpack.c.l.b16 %v4379
  %v4605 = vunpack.c.h.b16 %v4379
  %v4606 = vunpack.c.l.b16 %v4380
  %v4607 = vunpack.c.h.b16 %v4380
  %v4608 = vunpack.c.l.b16 %v4381
  %v4609 = vunpack.c.h.b16 %v4381
  %v4610 = vunpack.c.l.b16 %v4382
  %v4611 = vunpack.c.h.b16 %v4382
  %v4612 = vpack.c.b16 %v4500, %v4484
  %v4613 = vpack.c.b16 %v4501, %v4485
  %v4614 = vpack.c.b16 %v4502, %v4486
  %v4615 = vpack.c.b16 %v4503, %v4487
  %v4616 = vpack.c.b16 %v4504, %v4488
  %v4617 = vpack.c.b16 %v4505, %v4489
  %v4618 = vpack.c.b16 %v4506, %v4490
  %v4619 = vpack.c.b16 %v4507, %v4491
  %v4620 = vpack.c.b16 %v4508, %v4492
  %v4621 = vpack.c.b16 %v4509, %v4493
  %v4622 = vpack.c.b16 %v4510, %v4494
  %v4623 = vpack.c.b16 %v4511, %v4495
  %v4624 = vpack.c.b16 %v4512, %v4496
  %v4625 = vpack.c.b16 %v4513, %v4497
  %v4626 = vpack.c.b16 %v4514, %v4498
  %v4627 = vpack.c.b16 %v4515, %v4499
  %v4628 = vpack.c.b16 %v4532, %v4516
  %v4629 = vpack.c.b16 %v4533, %v4517
  %v4630 = vpack.c.b16 %v4534, %v4518
  %v4631 = vpack.c.b16 %v4535, %v4519
  %v4632 = vpack.c.b16 %v4536, %v4520
  %v4633 = vpack.c.b16 %v4537, %v4521
  %v4634 = vpack.c.b16 %v4538, %v4522
  %v4635 = vpack.c.b16 %v4539, %v4523
  %v4636 = vpack.c.b16 %v4540, %v4524
  %v4637 = vpack.c.b16 %v4541, %v4525
  %v4638 = vpack.c.b16 %v4542, %v4526
  %v4639 = vpack.c.b16 %v4543, %v4527
  %v4640 = vpack.c.b16 %v4544, %v4528
  %v4641 = vpack.c.b16 %v4545, %v4529
  %v4642 = vpack.c.b16 %v4546, %v4530
  %v4643 = vpack.c.b16 %v4547, %v4531
  %v4644 = vpack.c.b16 %v4564, %v4548
  %v4645 = vpack.c.b16 %v4565, %v4549
  %v4646 = vpack.c.b16 %v4566, %v4550
  %v4647 = vpack.c.b16 %v4567, %v4551
  %v4648 = vpack.c.b16 %v4568, %v4552
  %v4649 = vpack.c.b16 %v4569, %v4553
  %v4650 = vpack.c.b16 %v4570, %v4554
  %v4651 = vpack.c.b16 %v4571, %v4555
  %v4652 = vpack.c.b16 %v4572, %v4556
  %v4653 = vpack.c.b16 %v4573, %v4557
  %v4654 = vpack.c.b16 %v4574, %v4558
  %v4655 = vpack.c.b16 %v4575, %v4559
  %v4656 = vpack.c.b16 %v4576, %v4560
  %v4657 = vpack.c.b16 %v4577, %v4561
  %v4658 = vpack.c.b16 %v4578, %v4562
  %v4659 = vpack.c.b16 %v4579, %v4563
  %v4660 = vpack.c.b16 %v4596, %v4580
  %v4661 = vpack.c.b16 %v4597, %v4581
  %v4662 = vpack.c.b16 %v4598, %v4582
  %v4663 = vpack.c.b16 %v4599, %v4583
  %v4664 = vpack.c.b16 %v4600, %v4584
  %v4665 = vpack.c.b16 %v4601, %v4585
  %v4666 = vpack.c.b16 %v4602, %v4586
  %v4667 = vpack.c.b16 %v4603, %v4587
  %v4668 = vpack.c.b16 %v4604, %v4588
  %v4669 = vpack.c.b16 %v4605, %v4589
  %v4670 = vpack.c.b16 %v4606, %v4590
  %v4671 = vpack.c.b16 %v4607, %v4591
  %v4672 = vpack.c.b16 %v4608, %v4592
  %v4673 = vpack.c.b16 %v4609, %v4593
  %v4674 = vpack.c.b16 %v4610, %v4594
  %v4675 = vpack.c.b16 %v4611, %v4595
  %v4741 = vsel %vm214, %v4317, 0
  %4743 = vmatpush.bf16.msra.mxu0 0
  %4744 = vmatpush.bf16.msra.mxu0 0
  %4745 = vmatpush.bf16.msra.mxu0 0
  %4746 = vmatpush.bf16.msra.mxu0 0
  %4747 = vmatpush.bf16.msra.mxu0 %v4660
  %4748 = vmatpush.bf16.msra.mxu0 %v4644
  %4749 = vmatpush.bf16.msra.mxu0 %v4628
  %4750 = vmatpush.bf16.msra.mxu0 %v4612
  %4751 = vmatmul.bf16.gmra.mxu0 %v4741
  %v4752 = vpop.f32.mrf.mxu0
  %v4753 = vadd.f32 %v4388, %v4752
  %v4754 = vpop.f32.mrf.mxu0
  %v4755 = vadd.f32 %v4388, %v4754
  %4756 = vdwg.mxu0
  %4757 = vmatpush.bf16.msra.mxu0 0
  %4758 = vmatpush.bf16.msra.mxu0 0
  %4759 = vmatpush.bf16.msra.mxu0 0
  %4760 = vmatpush.bf16.msra.mxu0 0
  %4761 = vmatpush.bf16.msra.mxu0 %v4661
  %4762 = vmatpush.bf16.msra.mxu0 %v4645
  %4763 = vmatpush.bf16.msra.mxu0 %v4629
  %4764 = vmatpush.bf16.msra.mxu0 %v4613
  %4765 = vmatmul.bf16.gmra.mxu0 %v4741
  %v4766 = vpop.f32.mrf.mxu0
  %v4767 = vadd.f32 %v4389, %v4766
  %v4768 = vpop.f32.mrf.mxu0
  %v4769 = vadd.f32 %v4389, %v4768
  %4770 = vdwg.mxu0
  %4771 = vmatpush.bf16.msra.mxu0 0
  %4772 = vmatpush.bf16.msra.mxu0 0
  %4773 = vmatpush.bf16.msra.mxu0 0
  %4774 = vmatpush.bf16.msra.mxu0 0
  %4775 = vmatpush.bf16.msra.mxu0 %v4662
  %4776 = vmatpush.bf16.msra.mxu0 %v4646
  %4777 = vmatpush.bf16.msra.mxu0 %v4630
  %4778 = vmatpush.bf16.msra.mxu0 %v4614
  %4779 = vmatmul.bf16.gmra.mxu0 %v4741
  %v4780 = vpop.f32.mrf.mxu0
  %v4781 = vadd.f32 %v4390, %v4780
  %v4782 = vpop.f32.mrf.mxu0
  %v4783 = vadd.f32 %v4390, %v4782
  %4784 = vdwg.mxu0
  %4785 = vmatpush.bf16.msra.mxu0 0
  %4786 = vmatpush.bf16.msra.mxu0 0
  %4787 = vmatpush.bf16.msra.mxu0 0
  %4788 = vmatpush.bf16.msra.mxu0 0
  %4789 = vmatpush.bf16.msra.mxu0 %v4663
  %4790 = vmatpush.bf16.msra.mxu0 %v4647
  %4791 = vmatpush.bf16.msra.mxu0 %v4631
  %4792 = vmatpush.bf16.msra.mxu0 %v4615
  %4793 = vmatmul.bf16.gmra.mxu0 %v4741
  %v4794 = vpop.f32.mrf.mxu0
  %v4795 = vadd.f32 %v4391, %v4794
  %v4796 = vpop.f32.mrf.mxu0
  %v4797 = vadd.f32 %v4391, %v4796
  %4798 = vdwg.mxu0
  %4799 = vmatpush.bf16.msra.mxu0 0
  %4800 = vmatpush.bf16.msra.mxu0 0
  %4801 = vmatpush.bf16.msra.mxu0 0
  %4802 = vmatpush.bf16.msra.mxu0 0
  %4803 = vmatpush.bf16.msra.mxu0 %v4664
  %4804 = vmatpush.bf16.msra.mxu0 %v4648
  %4805 = vmatpush.bf16.msra.mxu0 %v4632
  %4806 = vmatpush.bf16.msra.mxu0 %v4616
  %4807 = vmatmul.bf16.gmra.mxu0 %v4741
  %v4808 = vpop.f32.mrf.mxu0
  %v4809 = vadd.f32 %v4392, %v4808
  %v4810 = vpop.f32.mrf.mxu0
  %v4811 = vadd.f32 %v4392, %v4810
  %4812 = vdwg.mxu0
  %4813 = vmatpush.bf16.msra.mxu0 0
  %4814 = vmatpush.bf16.msra.mxu0 0
  %4815 = vmatpush.bf16.msra.mxu0 0
  %4816 = vmatpush.bf16.msra.mxu0 0
  %4817 = vmatpush.bf16.msra.mxu0 %v4665
  %4818 = vmatpush.bf16.msra.mxu0 %v4649
  %4819 = vmatpush.bf16.msra.mxu0 %v4633
  %4820 = vmatpush.bf16.msra.mxu0 %v4617
  %4821 = vmatmul.bf16.gmra.mxu0 %v4741
  %v4822 = vpop.f32.mrf.mxu0
  %v4823 = vadd.f32 %v4393, %v4822
  %v4824 = vpop.f32.mrf.mxu0
  %v4825 = vadd.f32 %v4393, %v4824
  %4826 = vdwg.mxu0
  %4827 = vmatpush.bf16.msra.mxu0 0
  %4828 = vmatpush.bf16.msra.mxu0 0
  %4829 = vmatpush.bf16.msra.mxu0 0
  %4830 = vmatpush.bf16.msra.mxu0 0
  %4831 = vmatpush.bf16.msra.mxu0 %v4666
  %4832 = vmatpush.bf16.msra.mxu0 %v4650
  %4833 = vmatpush.bf16.msra.mxu0 %v4634
  %4834 = vmatpush.bf16.msra.mxu0 %v4618
  %4835 = vmatmul.bf16.gmra.mxu0 %v4741
  %v4836 = vpop.f32.mrf.mxu0
  %v4837 = vadd.f32 %v4394, %v4836
  %v4838 = vpop.f32.mrf.mxu0
  %v4839 = vadd.f32 %v4394, %v4838
  %4840 = vdwg.mxu0
  %4841 = vmatpush.bf16.msra.mxu0 0
  %4842 = vmatpush.bf16.msra.mxu0 0
  %4843 = vmatpush.bf16.msra.mxu0 0
  %4844 = vmatpush.bf16.msra.mxu0 0
  %4845 = vmatpush.bf16.msra.mxu0 %v4667
  %4846 = vmatpush.bf16.msra.mxu0 %v4651
  %4847 = vmatpush.bf16.msra.mxu0 %v4635
  %4848 = vmatpush.bf16.msra.mxu0 %v4619
  %4849 = vmatmul.bf16.gmra.mxu0 %v4741
  %v4850 = vpop.f32.mrf.mxu0
  %v4851 = vadd.f32 %v4395, %v4850
  %v4852 = vpop.f32.mrf.mxu0
  %v4853 = vadd.f32 %v4395, %v4852
  %4854 = vdwg.mxu0
  %4855 = vmatpush.bf16.msra.mxu0 0
  %4856 = vmatpush.bf16.msra.mxu0 0
  %4857 = vmatpush.bf16.msra.mxu0 0
  %4858 = vmatpush.bf16.msra.mxu0 0
  %4859 = vmatpush.bf16.msra.mxu0 %v4668
  %4860 = vmatpush.bf16.msra.mxu0 %v4652
  %4861 = vmatpush.bf16.msra.mxu0 %v4636
  %4862 = vmatpush.bf16.msra.mxu0 %v4620
  %4863 = vmatmul.bf16.gmra.mxu0 %v4741
  %v4864 = vpop.f32.mrf.mxu0
  %v4865 = vadd.f32 %v4396, %v4864
  %v4866 = vpop.f32.mrf.mxu0
  %v4867 = vadd.f32 %v4396, %v4866
  %4868 = vdwg.mxu0
  %4869 = vmatpush.bf16.msra.mxu0 0
  %4870 = vmatpush.bf16.msra.mxu0 0
  %4871 = vmatpush.bf16.msra.mxu0 0
  %4872 = vmatpush.bf16.msra.mxu0 0
  %4873 = vmatpush.bf16.msra.mxu0 %v4669
  %4874 = vmatpush.bf16.msra.mxu0 %v4653
  %4875 = vmatpush.bf16.msra.mxu0 %v4637
  %4876 = vmatpush.bf16.msra.mxu0 %v4621
  %4877 = vmatmul.bf16.gmra.mxu0 %v4741
  %v4878 = vpop.f32.mrf.mxu0
  %v4879 = vadd.f32 %v4397, %v4878
  %v4880 = vpop.f32.mrf.mxu0
  %v4881 = vadd.f32 %v4397, %v4880
  %4882 = vdwg.mxu0
  %4883 = vmatpush.bf16.msra.mxu0 0
  %4884 = vmatpush.bf16.msra.mxu0 0
  %4885 = vmatpush.bf16.msra.mxu0 0
  %4886 = vmatpush.bf16.msra.mxu0 0
  %4887 = vmatpush.bf16.msra.mxu0 %v4670
  %4888 = vmatpush.bf16.msra.mxu0 %v4654
  %4889 = vmatpush.bf16.msra.mxu0 %v4638
  %4890 = vmatpush.bf16.msra.mxu0 %v4622
  %4891 = vmatmul.bf16.gmra.mxu0 %v4741
  %v4892 = vpop.f32.mrf.mxu0
  %v4893 = vadd.f32 %v4398, %v4892
  %v4894 = vpop.f32.mrf.mxu0
  %v4895 = vadd.f32 %v4398, %v4894
  %4896 = vdwg.mxu0
  %4897 = vmatpush.bf16.msra.mxu0 0
  %4898 = vmatpush.bf16.msra.mxu0 0
  %4899 = vmatpush.bf16.msra.mxu0 0
  %4900 = vmatpush.bf16.msra.mxu0 0
  %4901 = vmatpush.bf16.msra.mxu0 %v4671
  %4902 = vmatpush.bf16.msra.mxu0 %v4655
  %4903 = vmatpush.bf16.msra.mxu0 %v4639
  %4904 = vmatpush.bf16.msra.mxu0 %v4623
  %4905 = vmatmul.bf16.gmra.mxu0 %v4741
  %v4906 = vpop.f32.mrf.mxu0
  %v4907 = vadd.f32 %v4399, %v4906
  %v4908 = vpop.f32.mrf.mxu0
  %v4909 = vadd.f32 %v4399, %v4908
  %4910 = vdwg.mxu0
  %4911 = vmatpush.bf16.msra.mxu0 0
  %4912 = vmatpush.bf16.msra.mxu0 0
  %4913 = vmatpush.bf16.msra.mxu0 0
  %4914 = vmatpush.bf16.msra.mxu0 0
  %4915 = vmatpush.bf16.msra.mxu0 %v4672
  %4916 = vmatpush.bf16.msra.mxu0 %v4656
  %4917 = vmatpush.bf16.msra.mxu0 %v4640
  %4918 = vmatpush.bf16.msra.mxu0 %v4624
  %4919 = vmatmul.bf16.gmra.mxu0 %v4741
  %v4920 = vpop.f32.mrf.mxu0
  %v4921 = vadd.f32 %v4400, %v4920
  %v4922 = vpop.f32.mrf.mxu0
  %v4923 = vadd.f32 %v4400, %v4922
  %4924 = vdwg.mxu0
  %4925 = vmatpush.bf16.msra.mxu0 0
  %4926 = vmatpush.bf16.msra.mxu0 0
  %4927 = vmatpush.bf16.msra.mxu0 0
  %4928 = vmatpush.bf16.msra.mxu0 0
  %4929 = vmatpush.bf16.msra.mxu0 %v4673
  %4930 = vmatpush.bf16.msra.mxu0 %v4657
  %4931 = vmatpush.bf16.msra.mxu0 %v4641
  %4932 = vmatpush.bf16.msra.mxu0 %v4625
  %4933 = vmatmul.bf16.gmra.mxu0 %v4741
  %v4934 = vpop.f32.mrf.mxu0
  %v4935 = vadd.f32 %v4401, %v4934
  %v4936 = vpop.f32.mrf.mxu0
  %v4937 = vadd.f32 %v4401, %v4936
  %4938 = vdwg.mxu0
  %4939 = vmatpush.bf16.msra.mxu0 0
  %4940 = vmatpush.bf16.msra.mxu0 0
  %4941 = vmatpush.bf16.msra.mxu0 0
  %4942 = vmatpush.bf16.msra.mxu0 0
  %4943 = vmatpush.bf16.msra.mxu0 %v4674
  %4944 = vmatpush.bf16.msra.mxu0 %v4658
  %4945 = vmatpush.bf16.msra.mxu0 %v4642
  %4946 = vmatpush.bf16.msra.mxu0 %v4626
  %4947 = vmatmul.bf16.gmra.mxu0 %v4741
  %v4948 = vpop.f32.mrf.mxu0
  %v4949 = vadd.f32 %v4402, %v4948
  %v4950 = vpop.f32.mrf.mxu0
  %v4951 = vadd.f32 %v4402, %v4950
  %4952 = vdwg.mxu0
  %4953 = vmatpush.bf16.msra.mxu0 0
  %4954 = vmatpush.bf16.msra.mxu0 0
  %4955 = vmatpush.bf16.msra.mxu0 0
  %4956 = vmatpush.bf16.msra.mxu0 0
  %4957 = vmatpush.bf16.msra.mxu0 %v4675
  %4958 = vmatpush.bf16.msra.mxu0 %v4659
  %4959 = vmatpush.bf16.msra.mxu0 %v4643
  %4960 = vmatpush.bf16.msra.mxu0 %v4627
  %4961 = vmatmul.bf16.gmra.mxu0 %v4741
  %v4962 = vpop.f32.mrf.mxu0
  %v4963 = vadd.f32 %v4403, %v4962
  %v4964 = vpop.f32.mrf.mxu0
  %v4965 = vadd.f32 %v4403, %v4964
  %4966 = vdwg.mxu0
  %v4967 = vmax.f32 %v4753, 0.0
  %v4968 = vmax.f32 %v4767, 0.0
  %v4969 = vmax.f32 %v4781, 0.0
  %v4970 = vmax.f32 %v4795, 0.0
  %v4971 = vmax.f32 %v4809, 0.0
  %v4972 = vmax.f32 %v4823, 0.0
  %v4973 = vmax.f32 %v4837, 0.0
  %v4974 = vmax.f32 %v4851, 0.0
  %v4975 = vmax.f32 %v4865, 0.0
  %v4976 = vmax.f32 %v4879, 0.0
  %v4977 = vmax.f32 %v4893, 0.0
  %v4978 = vmax.f32 %v4907, 0.0
  %v4979 = vmax.f32 %v4921, 0.0
  %v4980 = vmax.f32 %v4935, 0.0
  %v4981 = vmax.f32 %v4949, 0.0
  %v4982 = vmax.f32 %v4963, 0.0
  %v4983 = vmax.f32 %v4755, 0.0
  %v4984 = vmax.f32 %v4769, 0.0
  %v4985 = vmax.f32 %v4783, 0.0
  %v4986 = vmax.f32 %v4797, 0.0
  %v4987 = vmax.f32 %v4811, 0.0
  %v4988 = vmax.f32 %v4825, 0.0
  %v4989 = vmax.f32 %v4839, 0.0
  %v4990 = vmax.f32 %v4853, 0.0
  %v4991 = vmax.f32 %v4867, 0.0
  %v4992 = vmax.f32 %v4881, 0.0
  %v4993 = vmax.f32 %v4895, 0.0
  %v4994 = vmax.f32 %v4909, 0.0
  %v4995 = vmax.f32 %v4923, 0.0
  %v4996 = vmax.f32 %v4937, 0.0
  %v4997 = vmax.f32 %v4951, 0.0
  %v4998 = vmax.f32 %v4965, 0.0
  %v4999 = vpack.c.bf16 %v4983, %v4967
  %v5000 = vpack.c.bf16 %v4984, %v4968
  %v5001 = vpack.c.bf16 %v4985, %v4969
  %v5002 = vpack.c.bf16 %v4986, %v4970
  %v5003 = vpack.c.bf16 %v4987, %v4971
  %v5004 = vpack.c.bf16 %v4988, %v4972
  %v5005 = vpack.c.bf16 %v4989, %v4973
  %v5006 = vpack.c.bf16 %v4990, %v4974
  %v5007 = vpack.c.bf16 %v4991, %v4975
  %v5008 = vpack.c.bf16 %v4992, %v4976
  %v5009 = vpack.c.bf16 %v4993, %v4977
  %v5010 = vpack.c.bf16 %v4994, %v4978
  %v5011 = vpack.c.bf16 %v4995, %v4979
  %v5012 = vpack.c.bf16 %v4996, %v4980
  %v5013 = vpack.c.bf16 %v4997, %v4981
  %v5014 = vpack.c.bf16 %v4998, %v4982
  %s5015 = scalar_lea.vmem %s15, 1024
  %v5016 = vld [vmem:[%s5015] sm:$0xf]
  %v5017 = vld [vmem:[%s5015 + $0x4] sm:$0xf]
  %v5018 = vld [vmem:[%s5015 + $0x8] sm:$0xf]
  %v5019 = vld [vmem:[%s5015 + $0xc] sm:$0xf]
  %v5020 = vld [vmem:[%s5015 + $0x10] sm:$0xf]
  %v5021 = vld [vmem:[%s5015 + $0x14] sm:$0xf]
  %v5022 = vld [vmem:[%s5015 + $0x18] sm:$0xf]
  %v5023 = vld [vmem:[%s5015 + $0x1c] sm:$0xf]
  %v5024 = vld [vmem:[%s5015 + $0x20] sm:$0xf]
  %v5025 = vld [vmem:[%s5015 + $0x24] sm:$0xf]
  %v5026 = vld [vmem:[%s5015 + $0x28] sm:$0xf]
  %v5027 = vld [vmem:[%s5015 + $0x2c] sm:$0xf]
  %v5028 = vld [vmem:[%s5015 + $0x30] sm:$0xf]
  %v5029 = vld [vmem:[%s5015 + $0x34] sm:$0xf]
  %v5030 = vld [vmem:[%s5015 + $0x38] sm:$0xf]
  %v5031 = vld [vmem:[%s5015 + $0x3c] sm:$0xf]
  %v5032 = vld [vmem:[%s5015 + $0x40] sm:$0xf]
  %v5033 = vld [vmem:[%s5015 + $0x44] sm:$0xf]
  %v5034 = vld [vmem:[%s5015 + $0x48] sm:$0xf]
  %v5035 = vld [vmem:[%s5015 + $0x4c] sm:$0xf]
  %v5036 = vld [vmem:[%s5015 + $0x50] sm:$0xf]
  %v5037 = vld [vmem:[%s5015 + $0x54] sm:$0xf]
  %v5038 = vld [vmem:[%s5015 + $0x58] sm:$0xf]
  %v5039 = vld [vmem:[%s5015 + $0x5c] sm:$0xf]
  %v5040 = vld [vmem:[%s5015 + $0x60] sm:$0xf]
  %v5041 = vld [vmem:[%s5015 + $0x64] sm:$0xf]
  %v5042 = vld [vmem:[%s5015 + $0x68] sm:$0xf]
  %v5043 = vld [vmem:[%s5015 + $0x6c] sm:$0xf]
  %v5044 = vld [vmem:[%s5015 + $0x70] sm:$0xf]
  %v5045 = vld [vmem:[%s5015 + $0x74] sm:$0xf]
  %v5046 = vld [vmem:[%s5015 + $0x78] sm:$0xf]
  %v5047 = vld [vmem:[%s5015 + $0x7c] sm:$0xf]
  %v5048 = vld [vmem:[%s5015 + $0x80] sm:$0xf]
  %v5049 = vld [vmem:[%s5015 + $0x84] sm:$0xf]
  %v5050 = vld [vmem:[%s5015 + $0x88] sm:$0xf]
  %v5051 = vld [vmem:[%s5015 + $0x8c] sm:$0xf]
  %v5052 = vld [vmem:[%s5015 + $0x90] sm:$0xf]
  %v5053 = vld [vmem:[%s5015 + $0x94] sm:$0xf]
  %v5054 = vld [vmem:[%s5015 + $0x98] sm:$0xf]
  %v5055 = vld [vmem:[%s5015 + $0x9c] sm:$0xf]
  %v5056 = vld [vmem:[%s5015 + $0xa0] sm:$0xf]
  %v5057 = vld [vmem:[%s5015 + $0xa4] sm:$0xf]
  %v5058 = vld [vmem:[%s5015 + $0xa8] sm:$0xf]
  %v5059 = vld [vmem:[%s5015 + $0xac] sm:$0xf]
  %v5060 = vld [vmem:[%s5015 + $0xb0] sm:$0xf]
  %v5061 = vld [vmem:[%s5015 + $0xb4] sm:$0xf]
  %v5062 = vld [vmem:[%s5015 + $0xb8] sm:$0xf]
  %v5063 = vld [vmem:[%s5015 + $0xbc] sm:$0xf]
  %v5064 = vld [vmem:[%s5015 + $0xc0] sm:$0xf]
  %v5065 = vld [vmem:[%s5015 + $0xc4] sm:$0xf]
  %v5066 = vld [vmem:[%s5015 + $0xc8] sm:$0xf]
  %v5067 = vld [vmem:[%s5015 + $0xcc] sm:$0xf]
  %v5068 = vld [vmem:[%s5015 + $0xd0] sm:$0xf]
  %v5069 = vld [vmem:[%s5015 + $0xd4] sm:$0xf]
  %v5070 = vld [vmem:[%s5015 + $0xd8] sm:$0xf]
  %v5071 = vld [vmem:[%s5015 + $0xdc] sm:$0xf]
  %v5072 = vld [vmem:[%s5015 + $0xe0] sm:$0xf]
  %v5073 = vld [vmem:[%s5015 + $0xe4] sm:$0xf]
  %v5074 = vld [vmem:[%s5015 + $0xe8] sm:$0xf]
  %v5075 = vld [vmem:[%s5015 + $0xec] sm:$0xf]
  %v5076 = vld [vmem:[%s5015 + $0xf0] sm:$0xf]
  %v5077 = vld [vmem:[%s5015 + $0xf4] sm:$0xf]
  %v5078 = vld [vmem:[%s5015 + $0xf8] sm:$0xf]
  %v5079 = vld [vmem:[%s5015 + $0xfc] sm:$0xf]
  %v5080 = vld [vmem:[%s5015 + $0x100] sm:$0xf]
  %v5081 = vld [vmem:[%s5015 + $0x104] sm:$0xf]
  %v5082 = vld [vmem:[%s5015 + $0x108] sm:$0xf]
  %v5083 = vld [vmem:[%s5015 + $0x10c] sm:$0xf]
  %v5084 = vld [vmem:[%s5015 + $0x110] sm:$0xf]
  %v5085 = vld [vmem:[%s5015 + $0x114] sm:$0xf]
  %v5086 = vld [vmem:[%s5015 + $0x118] sm:$0xf]
  %v5087 = vld [vmem:[%s5015 + $0x11c] sm:$0xf]
  %v5088 = vld [vmem:[%s5015 + $0x120] sm:$0xf]
  %v5089 = vld [vmem:[%s5015 + $0x124] sm:$0xf]
  %v5090 = vld [vmem:[%s5015 + $0x128] sm:$0xf]
  %v5091 = vld [vmem:[%s5015 + $0x12c] sm:$0xf]
  %v5092 = vld [vmem:[%s5015 + $0x130] sm:$0xf]
  %v5093 = vld [vmem:[%s5015 + $0x134] sm:$0xf]
  %v5094 = vld [vmem:[%s5015 + $0x138] sm:$0xf]
  %v5095 = vld [vmem:[%s5015 + $0x13c] sm:$0xf]
  %v5096 = vld [vmem:[%s5015 + $0x140] sm:$0xf]
  %v5097 = vld [vmem:[%s5015 + $0x144] sm:$0xf]
  %v5098 = vld [vmem:[%s5015 + $0x148] sm:$0xf]
  %v5099 = vld [vmem:[%s5015 + $0x14c] sm:$0xf]
  %v5100 = vld [vmem:[%s5015 + $0x150] sm:$0xf]
  %v5101 = vld [vmem:[%s5015 + $0x154] sm:$0xf]
  %v5102 = vld [vmem:[%s5015 + $0x158] sm:$0xf]
  %v5103 = vld [vmem:[%s5015 + $0x15c] sm:$0xf]
  %v5104 = vld [vmem:[%s5015 + $0x160] sm:$0xf]
  %v5105 = vld [vmem:[%s5015 + $0x164] sm:$0xf]
  %v5106 = vld [vmem:[%s5015 + $0x168] sm:$0xf]
  %v5107 = vld [vmem:[%s5015 + $0x16c] sm:$0xf]
  %v5108 = vld [vmem:[%s5015 + $0x170] sm:$0xf]
  %v5109 = vld [vmem:[%s5015 + $0x174] sm:$0xf]
  %v5110 = vld [vmem:[%s5015 + $0x178] sm:$0xf]
  %v5111 = vld [vmem:[%s5015 + $0x17c] sm:$0xf]
  %v5112 = vld [vmem:[%s5015 + $0x180] sm:$0xf]
  %v5113 = vld [vmem:[%s5015 + $0x184] sm:$0xf]
  %v5114 = vld [vmem:[%s5015 + $0x188] sm:$0xf]
  %v5115 = vld [vmem:[%s5015 + $0x18c] sm:$0xf]
  %v5116 = vld [vmem:[%s5015 + $0x190] sm:$0xf]
  %v5117 = vld [vmem:[%s5015 + $0x194] sm:$0xf]
  %v5118 = vld [vmem:[%s5015 + $0x198] sm:$0xf]
  %v5119 = vld [vmem:[%s5015 + $0x19c] sm:$0xf]
  %v5120 = vld [vmem:[%s5015 + $0x1a0] sm:$0xf]
  %v5121 = vld [vmem:[%s5015 + $0x1a4] sm:$0xf]
  %v5122 = vld [vmem:[%s5015 + $0x1a8] sm:$0xf]
  %v5123 = vld [vmem:[%s5015 + $0x1ac] sm:$0xf]
  %v5124 = vld [vmem:[%s5015 + $0x1b0] sm:$0xf]
  %v5125 = vld [vmem:[%s5015 + $0x1b4] sm:$0xf]
  %v5126 = vld [vmem:[%s5015 + $0x1b8] sm:$0xf]
  %v5127 = vld [vmem:[%s5015 + $0x1bc] sm:$0xf]
  %v5128 = vld [vmem:[%s5015 + $0x1c0] sm:$0xf]
  %v5129 = vld [vmem:[%s5015 + $0x1c4] sm:$0xf]
  %v5130 = vld [vmem:[%s5015 + $0x1c8] sm:$0xf]
  %v5131 = vld [vmem:[%s5015 + $0x1cc] sm:$0xf]
  %v5132 = vld [vmem:[%s5015 + $0x1d0] sm:$0xf]
  %v5133 = vld [vmem:[%s5015 + $0x1d4] sm:$0xf]
  %v5134 = vld [vmem:[%s5015 + $0x1d8] sm:$0xf]
  %v5135 = vld [vmem:[%s5015 + $0x1dc] sm:$0xf]
  %v5136 = vld [vmem:[%s5015 + $0x1e0] sm:$0xf]
  %v5137 = vld [vmem:[%s5015 + $0x1e4] sm:$0xf]
  %v5138 = vld [vmem:[%s5015 + $0x1e8] sm:$0xf]
  %v5139 = vld [vmem:[%s5015 + $0x1ec] sm:$0xf]
  %v5140 = vld [vmem:[%s5015 + $0x1f0] sm:$0xf]
  %v5141 = vld [vmem:[%s5015 + $0x1f4] sm:$0xf]
  %v5142 = vld [vmem:[%s5015 + $0x1f8] sm:$0xf]
  %v5143 = vld [vmem:[%s5015 + $0x1fc] sm:$0xf]
  %v5144 = vld [vmem:[%s5015 + $0x200] sm:$0xf]
  %v5145 = vld [vmem:[%s5015 + $0x204] sm:$0xf]
  %v5146 = vld [vmem:[%s5015 + $0x208] sm:$0xf]
  %v5147 = vld [vmem:[%s5015 + $0x20c] sm:$0xf]
  %v5148 = vld [vmem:[%s5015 + $0x210] sm:$0xf]
  %v5149 = vld [vmem:[%s5015 + $0x214] sm:$0xf]
  %v5150 = vld [vmem:[%s5015 + $0x218] sm:$0xf]
  %v5151 = vld [vmem:[%s5015 + $0x21c] sm:$0xf]
  %v5152 = vld [vmem:[%s5015 + $0x220] sm:$0xf]
  %v5153 = vld [vmem:[%s5015 + $0x224] sm:$0xf]
  %v5154 = vld [vmem:[%s5015 + $0x228] sm:$0xf]
  %v5155 = vld [vmem:[%s5015 + $0x22c] sm:$0xf]
  %v5156 = vld [vmem:[%s5015 + $0x230] sm:$0xf]
  %v5157 = vld [vmem:[%s5015 + $0x234] sm:$0xf]
  %v5158 = vld [vmem:[%s5015 + $0x238] sm:$0xf]
  %v5159 = vld [vmem:[%s5015 + $0x23c] sm:$0xf]
  %v5160 = vld [vmem:[%s5015 + $0x240] sm:$0xf]
  %v5161 = vld [vmem:[%s5015 + $0x244] sm:$0xf]
  %v5162 = vld [vmem:[%s5015 + $0x248] sm:$0xf]
  %v5163 = vld [vmem:[%s5015 + $0x24c] sm:$0xf]
  %v5164 = vld [vmem:[%s5015 + $0x250] sm:$0xf]
  %v5165 = vld [vmem:[%s5015 + $0x254] sm:$0xf]
  %v5166 = vld [vmem:[%s5015 + $0x258] sm:$0xf]
  %v5167 = vld [vmem:[%s5015 + $0x25c] sm:$0xf]
  %v5168 = vld [vmem:[%s5015 + $0x260] sm:$0xf]
  %v5169 = vld [vmem:[%s5015 + $0x264] sm:$0xf]
  %v5170 = vld [vmem:[%s5015 + $0x268] sm:$0xf]
  %v5171 = vld [vmem:[%s5015 + $0x26c] sm:$0xf]
  %v5172 = vld [vmem:[%s5015 + $0x270] sm:$0xf]
  %v5173 = vld [vmem:[%s5015 + $0x274] sm:$0xf]
  %v5174 = vld [vmem:[%s5015 + $0x278] sm:$0xf]
  %v5175 = vld [vmem:[%s5015 + $0x27c] sm:$0xf]
  %v5176 = vld [vmem:[%s5015 + $0x280] sm:$0xf]
  %v5177 = vld [vmem:[%s5015 + $0x284] sm:$0xf]
  %v5178 = vld [vmem:[%s5015 + $0x288] sm:$0xf]
  %v5179 = vld [vmem:[%s5015 + $0x28c] sm:$0xf]
  %v5180 = vld [vmem:[%s5015 + $0x290] sm:$0xf]
  %v5181 = vld [vmem:[%s5015 + $0x294] sm:$0xf]
  %v5182 = vld [vmem:[%s5015 + $0x298] sm:$0xf]
  %v5183 = vld [vmem:[%s5015 + $0x29c] sm:$0xf]
  %v5184 = vld [vmem:[%s5015 + $0x2a0] sm:$0xf]
  %v5185 = vld [vmem:[%s5015 + $0x2a4] sm:$0xf]
  %v5186 = vld [vmem:[%s5015 + $0x2a8] sm:$0xf]
  %v5187 = vld [vmem:[%s5015 + $0x2ac] sm:$0xf]
  %v5188 = vld [vmem:[%s5015 + $0x2b0] sm:$0xf]
  %v5189 = vld [vmem:[%s5015 + $0x2b4] sm:$0xf]
  %v5190 = vld [vmem:[%s5015 + $0x2b8] sm:$0xf]
  %v5191 = vld [vmem:[%s5015 + $0x2bc] sm:$0xf]
  %v5192 = vld [vmem:[%s5015 + $0x2c0] sm:$0xf]
  %v5193 = vld [vmem:[%s5015 + $0x2c4] sm:$0xf]
  %v5194 = vld [vmem:[%s5015 + $0x2c8] sm:$0xf]
  %v5195 = vld [vmem:[%s5015 + $0x2cc] sm:$0xf]
  %v5196 = vld [vmem:[%s5015 + $0x2d0] sm:$0xf]
  %v5197 = vld [vmem:[%s5015 + $0x2d4] sm:$0xf]
  %v5198 = vld [vmem:[%s5015 + $0x2d8] sm:$0xf]
  %v5199 = vld [vmem:[%s5015 + $0x2dc] sm:$0xf]
  %v5200 = vld [vmem:[%s5015 + $0x2e0] sm:$0xf]
  %v5201 = vld [vmem:[%s5015 + $0x2e4] sm:$0xf]
  %v5202 = vld [vmem:[%s5015 + $0x2e8] sm:$0xf]
  %v5203 = vld [vmem:[%s5015 + $0x2ec] sm:$0xf]
  %v5204 = vld [vmem:[%s5015 + $0x2f0] sm:$0xf]
  %v5205 = vld [vmem:[%s5015 + $0x2f4] sm:$0xf]
  %v5206 = vld [vmem:[%s5015 + $0x2f8] sm:$0xf]
  %v5207 = vld [vmem:[%s5015 + $0x2fc] sm:$0xf]
  %v5208 = vld [vmem:[%s5015 + $0x300] sm:$0xf]
  %v5209 = vld [vmem:[%s5015 + $0x304] sm:$0xf]
  %v5210 = vld [vmem:[%s5015 + $0x308] sm:$0xf]
  %v5211 = vld [vmem:[%s5015 + $0x30c] sm:$0xf]
  %v5212 = vld [vmem:[%s5015 + $0x310] sm:$0xf]
  %v5213 = vld [vmem:[%s5015 + $0x314] sm:$0xf]
  %v5214 = vld [vmem:[%s5015 + $0x318] sm:$0xf]
  %v5215 = vld [vmem:[%s5015 + $0x31c] sm:$0xf]
  %v5216 = vld [vmem:[%s5015 + $0x320] sm:$0xf]
  %v5217 = vld [vmem:[%s5015 + $0x324] sm:$0xf]
  %v5218 = vld [vmem:[%s5015 + $0x328] sm:$0xf]
  %v5219 = vld [vmem:[%s5015 + $0x32c] sm:$0xf]
  %v5220 = vld [vmem:[%s5015 + $0x330] sm:$0xf]
  %v5221 = vld [vmem:[%s5015 + $0x334] sm:$0xf]
  %v5222 = vld [vmem:[%s5015 + $0x338] sm:$0xf]
  %v5223 = vld [vmem:[%s5015 + $0x33c] sm:$0xf]
  %v5224 = vld [vmem:[%s5015 + $0x340] sm:$0xf]
  %v5225 = vld [vmem:[%s5015 + $0x344] sm:$0xf]
  %v5226 = vld [vmem:[%s5015 + $0x348] sm:$0xf]
  %v5227 = vld [vmem:[%s5015 + $0x34c] sm:$0xf]
  %v5228 = vld [vmem:[%s5015 + $0x350] sm:$0xf]
  %v5229 = vld [vmem:[%s5015 + $0x354] sm:$0xf]
  %v5230 = vld [vmem:[%s5015 + $0x358] sm:$0xf]
  %v5231 = vld [vmem:[%s5015 + $0x35c] sm:$0xf]
  %v5232 = vld [vmem:[%s5015 + $0x360] sm:$0xf]
  %v5233 = vld [vmem:[%s5015 + $0x364] sm:$0xf]
  %v5234 = vld [vmem:[%s5015 + $0x368] sm:$0xf]
  %v5235 = vld [vmem:[%s5015 + $0x36c] sm:$0xf]
  %v5236 = vld [vmem:[%s5015 + $0x370] sm:$0xf]
  %v5237 = vld [vmem:[%s5015 + $0x374] sm:$0xf]
  %v5238 = vld [vmem:[%s5015 + $0x378] sm:$0xf]
  %v5239 = vld [vmem:[%s5015 + $0x37c] sm:$0xf]
  %v5240 = vld [vmem:[%s5015 + $0x380] sm:$0xf]
  %v5241 = vld [vmem:[%s5015 + $0x384] sm:$0xf]
  %v5242 = vld [vmem:[%s5015 + $0x388] sm:$0xf]
  %v5243 = vld [vmem:[%s5015 + $0x38c] sm:$0xf]
  %v5244 = vld [vmem:[%s5015 + $0x390] sm:$0xf]
  %v5245 = vld [vmem:[%s5015 + $0x394] sm:$0xf]
  %v5246 = vld [vmem:[%s5015 + $0x398] sm:$0xf]
  %v5247 = vld [vmem:[%s5015 + $0x39c] sm:$0xf]
  %v5248 = vld [vmem:[%s5015 + $0x3a0] sm:$0xf]
  %v5249 = vld [vmem:[%s5015 + $0x3a4] sm:$0xf]
  %v5250 = vld [vmem:[%s5015 + $0x3a8] sm:$0xf]
  %v5251 = vld [vmem:[%s5015 + $0x3ac] sm:$0xf]
  %v5252 = vld [vmem:[%s5015 + $0x3b0] sm:$0xf]
  %v5253 = vld [vmem:[%s5015 + $0x3b4] sm:$0xf]
  %v5254 = vld [vmem:[%s5015 + $0x3b8] sm:$0xf]
  %v5255 = vld [vmem:[%s5015 + $0x3bc] sm:$0xf]
  %v5256 = vld [vmem:[%s5015 + $0x3c0] sm:$0xf]
  %v5257 = vld [vmem:[%s5015 + $0x3c4] sm:$0xf]
  %v5258 = vld [vmem:[%s5015 + $0x3c8] sm:$0xf]
  %v5259 = vld [vmem:[%s5015 + $0x3cc] sm:$0xf]
  %v5260 = vld [vmem:[%s5015 + $0x3d0] sm:$0xf]
  %v5261 = vld [vmem:[%s5015 + $0x3d4] sm:$0xf]
  %v5262 = vld [vmem:[%s5015 + $0x3d8] sm:$0xf]
  %v5263 = vld [vmem:[%s5015 + $0x3dc] sm:$0xf]
  %v5264 = vld [vmem:[%s5015 + $0x3e0] sm:$0xf]
  %v5265 = vld [vmem:[%s5015 + $0x3e4] sm:$0xf]
  %v5266 = vld [vmem:[%s5015 + $0x3e8] sm:$0xf]
  %v5267 = vld [vmem:[%s5015 + $0x3ec] sm:$0xf]
  %v5268 = vld [vmem:[%s5015 + $0x3f0] sm:$0xf]
  %v5269 = vld [vmem:[%s5015 + $0x3f4] sm:$0xf]
  %v5270 = vld [vmem:[%s5015 + $0x3f8] sm:$0xf]
  %v5271 = vld [vmem:[%s5015 + $0x3fc] sm:$0xf]
  %s5272 = scalar_lea.vmem %s16, 1
  %v5273 = vld [vmem:[%s5272] sm:$0x1]
  %v5275 = vperm.slane %v5273, 0
  %v5533 = vunpack.c.l.b16 %v5016
  %v5534 = vunpack.c.l.b16 %v5017
  %v5535 = vunpack.c.l.b16 %v5018
  %v5536 = vunpack.c.l.b16 %v5019
  %v5537 = vunpack.c.l.b16 %v5020
  %v5538 = vunpack.c.l.b16 %v5021
  %v5539 = vunpack.c.l.b16 %v5022
  %v5540 = vunpack.c.l.b16 %v5023
  %v5541 = vunpack.c.l.b16 %v5024
  %v5542 = vunpack.c.l.b16 %v5025
  %v5543 = vunpack.c.l.b16 %v5026
  %v5544 = vunpack.c.l.b16 %v5027
  %v5545 = vunpack.c.l.b16 %v5028
  %v5546 = vunpack.c.l.b16 %v5029
  %v5547 = vunpack.c.l.b16 %v5030
  %v5548 = vunpack.c.l.b16 %v5031
  %v5549 = vunpack.c.l.b16 %v5032
  %v5550 = vunpack.c.l.b16 %v5033
  %v5551 = vunpack.c.l.b16 %v5034
  %v5552 = vunpack.c.l.b16 %v5035
  %v5553 = vunpack.c.l.b16 %v5036
  %v5554 = vunpack.c.l.b16 %v5037
  %v5555 = vunpack.c.l.b16 %v5038
  %v5556 = vunpack.c.l.b16 %v5039
  %v5557 = vunpack.c.l.b16 %v5040
  %v5558 = vunpack.c.l.b16 %v5041
  %v5559 = vunpack.c.l.b16 %v5042
  %v5560 = vunpack.c.l.b16 %v5043
  %v5561 = vunpack.c.l.b16 %v5044
  %v5562 = vunpack.c.l.b16 %v5045
  %v5563 = vunpack.c.l.b16 %v5046
  %v5564 = vunpack.c.l.b16 %v5047
  %v5565 = vunpack.c.l.b16 %v5048
  %v5566 = vunpack.c.l.b16 %v5049
  %v5567 = vunpack.c.l.b16 %v5050
  %v5568 = vunpack.c.l.b16 %v5051
  %v5569 = vunpack.c.l.b16 %v5052
  %v5570 = vunpack.c.l.b16 %v5053
  %v5571 = vunpack.c.l.b16 %v5054
  %v5572 = vunpack.c.l.b16 %v5055
  %v5573 = vunpack.c.l.b16 %v5056
  %v5574 = vunpack.c.l.b16 %v5057
  %v5575 = vunpack.c.l.b16 %v5058
  %v5576 = vunpack.c.l.b16 %v5059
  %v5577 = vunpack.c.l.b16 %v5060
  %v5578 = vunpack.c.l.b16 %v5061
  %v5579 = vunpack.c.l.b16 %v5062
  %v5580 = vunpack.c.l.b16 %v5063
  %v5581 = vunpack.c.l.b16 %v5064
  %v5582 = vunpack.c.l.b16 %v5065
  %v5583 = vunpack.c.l.b16 %v5066
  %v5584 = vunpack.c.l.b16 %v5067
  %v5585 = vunpack.c.l.b16 %v5068
  %v5586 = vunpack.c.l.b16 %v5069
  %v5587 = vunpack.c.l.b16 %v5070
  %v5588 = vunpack.c.l.b16 %v5071
  %v5589 = vunpack.c.l.b16 %v5072
  %v5590 = vunpack.c.l.b16 %v5073
  %v5591 = vunpack.c.l.b16 %v5074
  %v5592 = vunpack.c.l.b16 %v5075
  %v5593 = vunpack.c.l.b16 %v5076
  %v5594 = vunpack.c.l.b16 %v5077
  %v5595 = vunpack.c.l.b16 %v5078
  %v5596 = vunpack.c.l.b16 %v5079
  %v5597 = vunpack.c.l.b16 %v5080
  %v5598 = vunpack.c.l.b16 %v5081
  %v5599 = vunpack.c.l.b16 %v5082
  %v5600 = vunpack.c.l.b16 %v5083
  %v5601 = vunpack.c.l.b16 %v5084
  %v5602 = vunpack.c.l.b16 %v5085
  %v5603 = vunpack.c.l.b16 %v5086
  %v5604 = vunpack.c.l.b16 %v5087
  %v5605 = vunpack.c.l.b16 %v5088
  %v5606 = vunpack.c.l.b16 %v5089
  %v5607 = vunpack.c.l.b16 %v5090
  %v5608 = vunpack.c.l.b16 %v5091
  %v5609 = vunpack.c.l.b16 %v5092
  %v5610 = vunpack.c.l.b16 %v5093
  %v5611 = vunpack.c.l.b16 %v5094
  %v5612 = vunpack.c.l.b16 %v5095
  %v5613 = vunpack.c.l.b16 %v5096
  %v5614 = vunpack.c.l.b16 %v5097
  %v5615 = vunpack.c.l.b16 %v5098
  %v5616 = vunpack.c.l.b16 %v5099
  %v5617 = vunpack.c.l.b16 %v5100
  %v5618 = vunpack.c.l.b16 %v5101
  %v5619 = vunpack.c.l.b16 %v5102
  %v5620 = vunpack.c.l.b16 %v5103
  %v5621 = vunpack.c.l.b16 %v5104
  %v5622 = vunpack.c.l.b16 %v5105
  %v5623 = vunpack.c.l.b16 %v5106
  %v5624 = vunpack.c.l.b16 %v5107
  %v5625 = vunpack.c.l.b16 %v5108
  %v5626 = vunpack.c.l.b16 %v5109
  %v5627 = vunpack.c.l.b16 %v5110
  %v5628 = vunpack.c.l.b16 %v5111
  %v5629 = vunpack.c.l.b16 %v5112
  %v5630 = vunpack.c.l.b16 %v5113
  %v5631 = vunpack.c.l.b16 %v5114
  %v5632 = vunpack.c.l.b16 %v5115
  %v5633 = vunpack.c.l.b16 %v5116
  %v5634 = vunpack.c.l.b16 %v5117
  %v5635 = vunpack.c.l.b16 %v5118
  %v5636 = vunpack.c.l.b16 %v5119
  %v5637 = vunpack.c.l.b16 %v5120
  %v5638 = vunpack.c.l.b16 %v5121
  %v5639 = vunpack.c.l.b16 %v5122
  %v5640 = vunpack.c.l.b16 %v5123
  %v5641 = vunpack.c.l.b16 %v5124
  %v5642 = vunpack.c.l.b16 %v5125
  %v5643 = vunpack.c.l.b16 %v5126
  %v5644 = vunpack.c.l.b16 %v5127
  %v5645 = vunpack.c.l.b16 %v5128
  %v5646 = vunpack.c.l.b16 %v5129
  %v5647 = vunpack.c.l.b16 %v5130
  %v5648 = vunpack.c.l.b16 %v5131
  %v5649 = vunpack.c.l.b16 %v5132
  %v5650 = vunpack.c.l.b16 %v5133
  %v5651 = vunpack.c.l.b16 %v5134
  %v5652 = vunpack.c.l.b16 %v5135
  %v5653 = vunpack.c.l.b16 %v5136
  %v5654 = vunpack.c.l.b16 %v5137
  %v5655 = vunpack.c.l.b16 %v5138
  %v5656 = vunpack.c.l.b16 %v5139
  %v5657 = vunpack.c.l.b16 %v5140
  %v5658 = vunpack.c.l.b16 %v5141
  %v5659 = vunpack.c.l.b16 %v5142
  %v5660 = vunpack.c.l.b16 %v5143
  %v5661 = vunpack.c.l.b16 %v5144
  %v5662 = vunpack.c.l.b16 %v5145
  %v5663 = vunpack.c.l.b16 %v5146
  %v5664 = vunpack.c.l.b16 %v5147
  %v5665 = vunpack.c.l.b16 %v5148
  %v5666 = vunpack.c.l.b16 %v5149
  %v5667 = vunpack.c.l.b16 %v5150
  %v5668 = vunpack.c.l.b16 %v5151
  %v5669 = vunpack.c.l.b16 %v5152
  %v5670 = vunpack.c.l.b16 %v5153
  %v5671 = vunpack.c.l.b16 %v5154
  %v5672 = vunpack.c.l.b16 %v5155
  %v5673 = vunpack.c.l.b16 %v5156
  %v5674 = vunpack.c.l.b16 %v5157
  %v5675 = vunpack.c.l.b16 %v5158
  %v5676 = vunpack.c.l.b16 %v5159
  %v5677 = vunpack.c.l.b16 %v5160
  %v5678 = vunpack.c.l.b16 %v5161
  %v5679 = vunpack.c.l.b16 %v5162
  %v5680 = vunpack.c.l.b16 %v5163
  %v5681 = vunpack.c.l.b16 %v5164
  %v5682 = vunpack.c.l.b16 %v5165
  %v5683 = vunpack.c.l.b16 %v5166
  %v5684 = vunpack.c.l.b16 %v5167
  %v5685 = vunpack.c.l.b16 %v5168
  %v5686 = vunpack.c.l.b16 %v5169
  %v5687 = vunpack.c.l.b16 %v5170
  %v5688 = vunpack.c.l.b16 %v5171
  %v5689 = vunpack.c.l.b16 %v5172
  %v5690 = vunpack.c.l.b16 %v5173
  %v5691 = vunpack.c.l.b16 %v5174
  %v5692 = vunpack.c.l.b16 %v5175
  %v5693 = vunpack.c.l.b16 %v5176
  %v5694 = vunpack.c.l.b16 %v5177
  %v5695 = vunpack.c.l.b16 %v5178
  %v5696 = vunpack.c.l.b16 %v5179
  %v5697 = vunpack.c.l.b16 %v5180
  %v5698 = vunpack.c.l.b16 %v5181
  %v5699 = vunpack.c.l.b16 %v5182
  %v5700 = vunpack.c.l.b16 %v5183
  %v5701 = vunpack.c.l.b16 %v5184
  %v5702 = vunpack.c.l.b16 %v5185
  %v5703 = vunpack.c.l.b16 %v5186
  %v5704 = vunpack.c.l.b16 %v5187
  %v5705 = vunpack.c.l.b16 %v5188
  %v5706 = vunpack.c.l.b16 %v5189
  %v5707 = vunpack.c.l.b16 %v5190
  %v5708 = vunpack.c.l.b16 %v5191
  %v5709 = vunpack.c.l.b16 %v5192
  %v5710 = vunpack.c.l.b16 %v5193
  %v5711 = vunpack.c.l.b16 %v5194
  %v5712 = vunpack.c.l.b16 %v5195
  %v5713 = vunpack.c.l.b16 %v5196
  %v5714 = vunpack.c.l.b16 %v5197
  %v5715 = vunpack.c.l.b16 %v5198
  %v5716 = vunpack.c.l.b16 %v5199
  %v5717 = vunpack.c.l.b16 %v5200
  %v5718 = vunpack.c.l.b16 %v5201
  %v5719 = vunpack.c.l.b16 %v5202
  %v5720 = vunpack.c.l.b16 %v5203
  %v5721 = vunpack.c.l.b16 %v5204
  %v5722 = vunpack.c.l.b16 %v5205
  %v5723 = vunpack.c.l.b16 %v5206
  %v5724 = vunpack.c.l.b16 %v5207
  %v5725 = vunpack.c.l.b16 %v5208
  %v5726 = vunpack.c.l.b16 %v5209
  %v5727 = vunpack.c.l.b16 %v5210
  %v5728 = vunpack.c.l.b16 %v5211
  %v5729 = vunpack.c.l.b16 %v5212
  %v5730 = vunpack.c.l.b16 %v5213
  %v5731 = vunpack.c.l.b16 %v5214
  %v5732 = vunpack.c.l.b16 %v5215
  %v5733 = vunpack.c.l.b16 %v5216
  %v5734 = vunpack.c.l.b16 %v5217
  %v5735 = vunpack.c.l.b16 %v5218
  %v5736 = vunpack.c.l.b16 %v5219
  %v5737 = vunpack.c.l.b16 %v5220
  %v5738 = vunpack.c.l.b16 %v5221
  %v5739 = vunpack.c.l.b16 %v5222
  %v5740 = vunpack.c.l.b16 %v5223
  %v5741 = vunpack.c.l.b16 %v5224
  %v5742 = vunpack.c.l.b16 %v5225
  %v5743 = vunpack.c.l.b16 %v5226
  %v5744 = vunpack.c.l.b16 %v5227
  %v5745 = vunpack.c.l.b16 %v5228
  %v5746 = vunpack.c.l.b16 %v5229
  %v5747 = vunpack.c.l.b16 %v5230
  %v5748 = vunpack.c.l.b16 %v5231
  %v5749 = vunpack.c.l.b16 %v5232
  %v5750 = vunpack.c.l.b16 %v5233
  %v5751 = vunpack.c.l.b16 %v5234
  %v5752 = vunpack.c.l.b16 %v5235
  %v5753 = vunpack.c.l.b16 %v5236
  %v5754 = vunpack.c.l.b16 %v5237
  %v5755 = vunpack.c.l.b16 %v5238
  %v5756 = vunpack.c.l.b16 %v5239
  %v5757 = vunpack.c.l.b16 %v5240
  %v5758 = vunpack.c.l.b16 %v5241
  %v5759 = vunpack.c.l.b16 %v5242
  %v5760 = vunpack.c.l.b16 %v5243
  %v5761 = vunpack.c.l.b16 %v5244
  %v5762 = vunpack.c.l.b16 %v5245
  %v5763 = vunpack.c.l.b16 %v5246
  %v5764 = vunpack.c.l.b16 %v5247
  %v5765 = vunpack.c.l.b16 %v5248
  %v5766 = vunpack.c.l.b16 %v5249
  %v5767 = vunpack.c.l.b16 %v5250
  %v5768 = vunpack.c.l.b16 %v5251
  %v5769 = vunpack.c.l.b16 %v5252
  %v5770 = vunpack.c.l.b16 %v5253
  %v5771 = vunpack.c.l.b16 %v5254
  %v5772 = vunpack.c.l.b16 %v5255
  %v5773 = vunpack.c.l.b16 %v5256
  %v5774 = vunpack.c.l.b16 %v5257
  %v5775 = vunpack.c.l.b16 %v5258
  %v5776 = vunpack.c.l.b16 %v5259
  %v5777 = vunpack.c.l.b16 %v5260
  %v5778 = vunpack.c.l.b16 %v5261
  %v5779 = vunpack.c.l.b16 %v5262
  %v5780 = vunpack.c.l.b16 %v5263
  %v5781 = vunpack.c.l.b16 %v5264
  %v5782 = vunpack.c.l.b16 %v5265
  %v5783 = vunpack.c.l.b16 %v5266
  %v5784 = vunpack.c.l.b16 %v5267
  %v5785 = vunpack.c.l.b16 %v5268
  %v5786 = vunpack.c.l.b16 %v5269
  %v5787 = vunpack.c.l.b16 %v5270
  %v5788 = vunpack.c.l.b16 %v5271
  %v5789 = vpack.c.b16 %v5534, %v5533
  %v5790 = vpack.c.b16 %v5536, %v5535
  %v5791 = vpack.c.b16 %v5538, %v5537
  %v5792 = vpack.c.b16 %v5540, %v5539
  %v5793 = vpack.c.b16 %v5542, %v5541
  %v5794 = vpack.c.b16 %v5544, %v5543
  %v5795 = vpack.c.b16 %v5546, %v5545
  %v5796 = vpack.c.b16 %v5548, %v5547
  %v5797 = vpack.c.b16 %v5550, %v5549
  %v5798 = vpack.c.b16 %v5552, %v5551
  %v5799 = vpack.c.b16 %v5554, %v5553
  %v5800 = vpack.c.b16 %v5556, %v5555
  %v5801 = vpack.c.b16 %v5558, %v5557
  %v5802 = vpack.c.b16 %v5560, %v5559
  %v5803 = vpack.c.b16 %v5562, %v5561
  %v5804 = vpack.c.b16 %v5564, %v5563
  %v5805 = vpack.c.b16 %v5566, %v5565
  %v5806 = vpack.c.b16 %v5568, %v5567
  %v5807 = vpack.c.b16 %v5570, %v5569
  %v5808 = vpack.c.b16 %v5572, %v5571
  %v5809 = vpack.c.b16 %v5574, %v5573
  %v5810 = vpack.c.b16 %v5576, %v5575
  %v5811 = vpack.c.b16 %v5578, %v5577
  %v5812 = vpack.c.b16 %v5580, %v5579
  %v5813 = vpack.c.b16 %v5582, %v5581
  %v5814 = vpack.c.b16 %v5584, %v5583
  %v5815 = vpack.c.b16 %v5586, %v5585
  %v5816 = vpack.c.b16 %v5588, %v5587
  %v5817 = vpack.c.b16 %v5590, %v5589
  %v5818 = vpack.c.b16 %v5592, %v5591
  %v5819 = vpack.c.b16 %v5594, %v5593
  %v5820 = vpack.c.b16 %v5596, %v5595
  %v5821 = vpack.c.b16 %v5598, %v5597
  %v5822 = vpack.c.b16 %v5600, %v5599
  %v5823 = vpack.c.b16 %v5602, %v5601
  %v5824 = vpack.c.b16 %v5604, %v5603
  %v5825 = vpack.c.b16 %v5606, %v5605
  %v5826 = vpack.c.b16 %v5608, %v5607
  %v5827 = vpack.c.b16 %v5610, %v5609
  %v5828 = vpack.c.b16 %v5612, %v5611
  %v5829 = vpack.c.b16 %v5614, %v5613
  %v5830 = vpack.c.b16 %v5616, %v5615
  %v5831 = vpack.c.b16 %v5618, %v5617
  %v5832 = vpack.c.b16 %v5620, %v5619
  %v5833 = vpack.c.b16 %v5622, %v5621
  %v5834 = vpack.c.b16 %v5624, %v5623
  %v5835 = vpack.c.b16 %v5626, %v5625
  %v5836 = vpack.c.b16 %v5628, %v5627
  %v5837 = vpack.c.b16 %v5630, %v5629
  %v5838 = vpack.c.b16 %v5632, %v5631
  %v5839 = vpack.c.b16 %v5634, %v5633
  %v5840 = vpack.c.b16 %v5636, %v5635
  %v5841 = vpack.c.b16 %v5638, %v5637
  %v5842 = vpack.c.b16 %v5640, %v5639
  %v5843 = vpack.c.b16 %v5642, %v5641
  %v5844 = vpack.c.b16 %v5644, %v5643
  %v5845 = vpack.c.b16 %v5646, %v5645
  %v5846 = vpack.c.b16 %v5648, %v5647
  %v5847 = vpack.c.b16 %v5650, %v5649
  %v5848 = vpack.c.b16 %v5652, %v5651
  %v5849 = vpack.c.b16 %v5654, %v5653
  %v5850 = vpack.c.b16 %v5656, %v5655
  %v5851 = vpack.c.b16 %v5658, %v5657
  %v5852 = vpack.c.b16 %v5660, %v5659
  %v5853 = vpack.c.b16 %v5662, %v5661
  %v5854 = vpack.c.b16 %v5664, %v5663
  %v5855 = vpack.c.b16 %v5666, %v5665
  %v5856 = vpack.c.b16 %v5668, %v5667
  %v5857 = vpack.c.b16 %v5670, %v5669
  %v5858 = vpack.c.b16 %v5672, %v5671
  %v5859 = vpack.c.b16 %v5674, %v5673
  %v5860 = vpack.c.b16 %v5676, %v5675
  %v5861 = vpack.c.b16 %v5678, %v5677
  %v5862 = vpack.c.b16 %v5680, %v5679
  %v5863 = vpack.c.b16 %v5682, %v5681
  %v5864 = vpack.c.b16 %v5684, %v5683
  %v5865 = vpack.c.b16 %v5686, %v5685
  %v5866 = vpack.c.b16 %v5688, %v5687
  %v5867 = vpack.c.b16 %v5690, %v5689
  %v5868 = vpack.c.b16 %v5692, %v5691
  %v5869 = vpack.c.b16 %v5694, %v5693
  %v5870 = vpack.c.b16 %v5696, %v5695
  %v5871 = vpack.c.b16 %v5698, %v5697
  %v5872 = vpack.c.b16 %v5700, %v5699
  %v5873 = vpack.c.b16 %v5702, %v5701
  %v5874 = vpack.c.b16 %v5704, %v5703
  %v5875 = vpack.c.b16 %v5706, %v5705
  %v5876 = vpack.c.b16 %v5708, %v5707
  %v5877 = vpack.c.b16 %v5710, %v5709
  %v5878 = vpack.c.b16 %v5712, %v5711
  %v5879 = vpack.c.b16 %v5714, %v5713
  %v5880 = vpack.c.b16 %v5716, %v5715
  %v5881 = vpack.c.b16 %v5718, %v5717
  %v5882 = vpack.c.b16 %v5720, %v5719
  %v5883 = vpack.c.b16 %v5722, %v5721
  %v5884 = vpack.c.b16 %v5724, %v5723
  %v5885 = vpack.c.b16 %v5726, %v5725
  %v5886 = vpack.c.b16 %v5728, %v5727
  %v5887 = vpack.c.b16 %v5730, %v5729
  %v5888 = vpack.c.b16 %v5732, %v5731
  %v5889 = vpack.c.b16 %v5734, %v5733
  %v5890 = vpack.c.b16 %v5736, %v5735
  %v5891 = vpack.c.b16 %v5738, %v5737
  %v5892 = vpack.c.b16 %v5740, %v5739
  %v5893 = vpack.c.b16 %v5742, %v5741
  %v5894 = vpack.c.b16 %v5744, %v5743
  %v5895 = vpack.c.b16 %v5746, %v5745
  %v5896 = vpack.c.b16 %v5748, %v5747
  %v5897 = vpack.c.b16 %v5750, %v5749
  %v5898 = vpack.c.b16 %v5752, %v5751
  %v5899 = vpack.c.b16 %v5754, %v5753
  %v5900 = vpack.c.b16 %v5756, %v5755
  %v5901 = vpack.c.b16 %v5758, %v5757
  %v5902 = vpack.c.b16 %v5760, %v5759
  %v5903 = vpack.c.b16 %v5762, %v5761
  %v5904 = vpack.c.b16 %v5764, %v5763
  %v5905 = vpack.c.b16 %v5766, %v5765
  %v5906 = vpack.c.b16 %v5768, %v5767
  %v5907 = vpack.c.b16 %v5770, %v5769
  %v5908 = vpack.c.b16 %v5772, %v5771
  %v5909 = vpack.c.b16 %v5774, %v5773
  %v5910 = vpack.c.b16 %v5776, %v5775
  %v5911 = vpack.c.b16 %v5778, %v5777
  %v5912 = vpack.c.b16 %v5780, %v5779
  %v5913 = vpack.c.b16 %v5782, %v5781
  %v5914 = vpack.c.b16 %v5784, %v5783
  %v5915 = vpack.c.b16 %v5786, %v5785
  %v5916 = vpack.c.b16 %v5788, %v5787
  %6045 = vmatpush.bf16.msra.mxu0 %v5796
  %6046 = vmatpush.bf16.msra.mxu0 %v5795
  %6047 = vmatpush.bf16.msra.mxu0 %v5794
  %6048 = vmatpush.bf16.msra.mxu0 %v5793
  %6049 = vmatpush.bf16.msra.mxu0 %v5792
  %6050 = vmatpush.bf16.msra.mxu0 %v5791
  %6051 = vmatpush.bf16.msra.mxu0 %v5790
  %6052 = vmatpush.bf16.msra.mxu0 %v5789
  %6053 = vmatmul.bf16.gmra.mxu0 %v4999
  %v6054 = vpop.f32.mrf.mxu0
  %v6055 = vadd.f32 %v5275, %v6054
  %v6056 = vpop.f32.mrf.mxu0
  %v6057 = vadd.f32 %v5275, %v6056
  %6058 = vdwg.mxu0
  %6059 = vmatpush.bf16.msra.mxu0 %v5804
  %6060 = vmatpush.bf16.msra.mxu0 %v5803
  %6061 = vmatpush.bf16.msra.mxu0 %v5802
  %6062 = vmatpush.bf16.msra.mxu0 %v5801
  %6063 = vmatpush.bf16.msra.mxu0 %v5800
  %6064 = vmatpush.bf16.msra.mxu0 %v5799
  %6065 = vmatpush.bf16.msra.mxu0 %v5798
  %6066 = vmatpush.bf16.msra.mxu0 %v5797
  %6067 = vmatmul.bf16.gmra.mxu0 %v5000
  %v6068 = vpop.f32.mrf.mxu0
  %v6069 = vadd.f32 %v6055, %v6068
  %v6070 = vpop.f32.mrf.mxu0
  %v6071 = vadd.f32 %v6057, %v6070
  %6072 = vdwg.mxu0
  %6073 = vmatpush.bf16.msra.mxu0 %v5812
  %6074 = vmatpush.bf16.msra.mxu0 %v5811
  %6075 = vmatpush.bf16.msra.mxu0 %v5810
  %6076 = vmatpush.bf16.msra.mxu0 %v5809
  %6077 = vmatpush.bf16.msra.mxu0 %v5808
  %6078 = vmatpush.bf16.msra.mxu0 %v5807
  %6079 = vmatpush.bf16.msra.mxu0 %v5806
  %6080 = vmatpush.bf16.msra.mxu0 %v5805
  %6081 = vmatmul.bf16.gmra.mxu0 %v5001
  %v6082 = vpop.f32.mrf.mxu0
  %v6083 = vadd.f32 %v6069, %v6082
  %v6084 = vpop.f32.mrf.mxu0
  %v6085 = vadd.f32 %v6071, %v6084
  %6086 = vdwg.mxu0
  %6087 = vmatpush.bf16.msra.mxu0 %v5820
  %6088 = vmatpush.bf16.msra.mxu0 %v5819
  %6089 = vmatpush.bf16.msra.mxu0 %v5818
  %6090 = vmatpush.bf16.msra.mxu0 %v5817
  %6091 = vmatpush.bf16.msra.mxu0 %v5816
  %6092 = vmatpush.bf16.msra.mxu0 %v5815
  %6093 = vmatpush.bf16.msra.mxu0 %v5814
  %6094 = vmatpush.bf16.msra.mxu0 %v5813
  %6095 = vmatmul.bf16.gmra.mxu0 %v5002
  %v6096 = vpop.f32.mrf.mxu0
  %v6097 = vadd.f32 %v6083, %v6096
  %v6098 = vpop.f32.mrf.mxu0
  %v6099 = vadd.f32 %v6085, %v6098
  %6100 = vdwg.mxu0
  %6101 = vmatpush.bf16.msra.mxu0 %v5828
  %6102 = vmatpush.bf16.msra.mxu0 %v5827
  %6103 = vmatpush.bf16.msra.mxu0 %v5826
  %6104 = vmatpush.bf16.msra.mxu0 %v5825
  %6105 = vmatpush.bf16.msra.mxu0 %v5824
  %6106 = vmatpush.bf16.msra.mxu0 %v5823
  %6107 = vmatpush.bf16.msra.mxu0 %v5822
  %6108 = vmatpush.bf16.msra.mxu0 %v5821
  %6109 = vmatmul.bf16.gmra.mxu0 %v5003
  %v6110 = vpop.f32.mrf.mxu0
  %v6111 = vadd.f32 %v6097, %v6110
  %v6112 = vpop.f32.mrf.mxu0
  %v6113 = vadd.f32 %v6099, %v6112
  %6114 = vdwg.mxu0
  %6115 = vmatpush.bf16.msra.mxu0 %v5836
  %6116 = vmatpush.bf16.msra.mxu0 %v5835
  %6117 = vmatpush.bf16.msra.mxu0 %v5834
  %6118 = vmatpush.bf16.msra.mxu0 %v5833
  %6119 = vmatpush.bf16.msra.mxu0 %v5832
  %6120 = vmatpush.bf16.msra.mxu0 %v5831
  %6121 = vmatpush.bf16.msra.mxu0 %v5830
  %6122 = vmatpush.bf16.msra.mxu0 %v5829
  %6123 = vmatmul.bf16.gmra.mxu0 %v5004
  %v6124 = vpop.f32.mrf.mxu0
  %v6125 = vadd.f32 %v6111, %v6124
  %v6126 = vpop.f32.mrf.mxu0
  %v6127 = vadd.f32 %v6113, %v6126
  %6128 = vdwg.mxu0
  %6129 = vmatpush.bf16.msra.mxu0 %v5844
  %6130 = vmatpush.bf16.msra.mxu0 %v5843
  %6131 = vmatpush.bf16.msra.mxu0 %v5842
  %6132 = vmatpush.bf16.msra.mxu0 %v5841
  %6133 = vmatpush.bf16.msra.mxu0 %v5840
  %6134 = vmatpush.bf16.msra.mxu0 %v5839
  %6135 = vmatpush.bf16.msra.mxu0 %v5838
  %6136 = vmatpush.bf16.msra.mxu0 %v5837
  %6137 = vmatmul.bf16.gmra.mxu0 %v5005
  %v6138 = vpop.f32.mrf.mxu0
  %v6139 = vadd.f32 %v6125, %v6138
  %v6140 = vpop.f32.mrf.mxu0
  %v6141 = vadd.f32 %v6127, %v6140
  %6142 = vdwg.mxu0
  %6143 = vmatpush.bf16.msra.mxu0 %v5852
  %6144 = vmatpush.bf16.msra.mxu0 %v5851
  %6145 = vmatpush.bf16.msra.mxu0 %v5850
  %6146 = vmatpush.bf16.msra.mxu0 %v5849
  %6147 = vmatpush.bf16.msra.mxu0 %v5848
  %6148 = vmatpush.bf16.msra.mxu0 %v5847
  %6149 = vmatpush.bf16.msra.mxu0 %v5846
  %6150 = vmatpush.bf16.msra.mxu0 %v5845
  %6151 = vmatmul.bf16.gmra.mxu0 %v5006
  %v6152 = vpop.f32.mrf.mxu0
  %v6153 = vadd.f32 %v6139, %v6152
  %v6154 = vpop.f32.mrf.mxu0
  %v6155 = vadd.f32 %v6141, %v6154
  %6156 = vdwg.mxu0
  %6157 = vmatpush.bf16.msra.mxu0 %v5860
  %6158 = vmatpush.bf16.msra.mxu0 %v5859
  %6159 = vmatpush.bf16.msra.mxu0 %v5858
  %6160 = vmatpush.bf16.msra.mxu0 %v5857
  %6161 = vmatpush.bf16.msra.mxu0 %v5856
  %6162 = vmatpush.bf16.msra.mxu0 %v5855
  %6163 = vmatpush.bf16.msra.mxu0 %v5854
  %6164 = vmatpush.bf16.msra.mxu0 %v5853
  %6165 = vmatmul.bf16.gmra.mxu0 %v5007
  %v6166 = vpop.f32.mrf.mxu0
  %v6167 = vadd.f32 %v6153, %v6166
  %v6168 = vpop.f32.mrf.mxu0
  %v6169 = vadd.f32 %v6155, %v6168
  %6170 = vdwg.mxu0
  %6171 = vmatpush.bf16.msra.mxu0 %v5868
  %6172 = vmatpush.bf16.msra.mxu0 %v5867
  %6173 = vmatpush.bf16.msra.mxu0 %v5866
  %6174 = vmatpush.bf16.msra.mxu0 %v5865
  %6175 = vmatpush.bf16.msra.mxu0 %v5864
  %6176 = vmatpush.bf16.msra.mxu0 %v5863
  %6177 = vmatpush.bf16.msra.mxu0 %v5862
  %6178 = vmatpush.bf16.msra.mxu0 %v5861
  %6179 = vmatmul.bf16.gmra.mxu0 %v5008
  %v6180 = vpop.f32.mrf.mxu0
  %v6181 = vadd.f32 %v6167, %v6180
  %v6182 = vpop.f32.mrf.mxu0
  %v6183 = vadd.f32 %v6169, %v6182
  %6184 = vdwg.mxu0
  %6185 = vmatpush.bf16.msra.mxu0 %v5876
  %6186 = vmatpush.bf16.msra.mxu0 %v5875
  %6187 = vmatpush.bf16.msra.mxu0 %v5874
  %6188 = vmatpush.bf16.msra.mxu0 %v5873
  %6189 = vmatpush.bf16.msra.mxu0 %v5872
  %6190 = vmatpush.bf16.msra.mxu0 %v5871
  %6191 = vmatpush.bf16.msra.mxu0 %v5870
  %6192 = vmatpush.bf16.msra.mxu0 %v5869
  %6193 = vmatmul.bf16.gmra.mxu0 %v5009
  %v6194 = vpop.f32.mrf.mxu0
  %v6195 = vadd.f32 %v6181, %v6194
  %v6196 = vpop.f32.mrf.mxu0
  %v6197 = vadd.f32 %v6183, %v6196
  %6198 = vdwg.mxu0
  %6199 = vmatpush.bf16.msra.mxu0 %v5884
  %6200 = vmatpush.bf16.msra.mxu0 %v5883
  %6201 = vmatpush.bf16.msra.mxu0 %v5882
  %6202 = vmatpush.bf16.msra.mxu0 %v5881
  %6203 = vmatpush.bf16.msra.mxu0 %v5880
  %6204 = vmatpush.bf16.msra.mxu0 %v5879
  %6205 = vmatpush.bf16.msra.mxu0 %v5878
  %6206 = vmatpush.bf16.msra.mxu0 %v5877
  %6207 = vmatmul.bf16.gmra.mxu0 %v5010
  %v6208 = vpop.f32.mrf.mxu0
  %v6209 = vadd.f32 %v6195, %v6208
  %v6210 = vpop.f32.mrf.mxu0
  %v6211 = vadd.f32 %v6197, %v6210
  %6212 = vdwg.mxu0
  %6213 = vmatpush.bf16.msra.mxu0 %v5892
  %6214 = vmatpush.bf16.msra.mxu0 %v5891
  %6215 = vmatpush.bf16.msra.mxu0 %v5890
  %6216 = vmatpush.bf16.msra.mxu0 %v5889
  %6217 = vmatpush.bf16.msra.mxu0 %v5888
  %6218 = vmatpush.bf16.msra.mxu0 %v5887
  %6219 = vmatpush.bf16.msra.mxu0 %v5886
  %6220 = vmatpush.bf16.msra.mxu0 %v5885
  %6221 = vmatmul.bf16.gmra.mxu0 %v5011
  %v6222 = vpop.f32.mrf.mxu0
  %v6223 = vadd.f32 %v6209, %v6222
  %v6224 = vpop.f32.mrf.mxu0
  %v6225 = vadd.f32 %v6211, %v6224
  %6226 = vdwg.mxu0
  %6227 = vmatpush.bf16.msra.mxu0 %v5900
  %6228 = vmatpush.bf16.msra.mxu0 %v5899
  %6229 = vmatpush.bf16.msra.mxu0 %v5898
  %6230 = vmatpush.bf16.msra.mxu0 %v5897
  %6231 = vmatpush.bf16.msra.mxu0 %v5896
  %6232 = vmatpush.bf16.msra.mxu0 %v5895
  %6233 = vmatpush.bf16.msra.mxu0 %v5894
  %6234 = vmatpush.bf16.msra.mxu0 %v5893
  %6235 = vmatmul.bf16.gmra.mxu0 %v5012
  %v6236 = vpop.f32.mrf.mxu0
  %v6237 = vadd.f32 %v6223, %v6236
  %v6238 = vpop.f32.mrf.mxu0
  %v6239 = vadd.f32 %v6225, %v6238
  %6240 = vdwg.mxu0
  %6241 = vmatpush.bf16.msra.mxu0 %v5908
  %6242 = vmatpush.bf16.msra.mxu0 %v5907
  %6243 = vmatpush.bf16.msra.mxu0 %v5906
  %6244 = vmatpush.bf16.msra.mxu0 %v5905
  %6245 = vmatpush.bf16.msra.mxu0 %v5904
  %6246 = vmatpush.bf16.msra.mxu0 %v5903
  %6247 = vmatpush.bf16.msra.mxu0 %v5902
  %6248 = vmatpush.bf16.msra.mxu0 %v5901
  %6249 = vmatmul.bf16.gmra.mxu0 %v5013
  %v6250 = vpop.f32.mrf.mxu0
  %v6251 = vadd.f32 %v6237, %v6250
  %v6252 = vpop.f32.mrf.mxu0
  %v6253 = vadd.f32 %v6239, %v6252
  %6254 = vdwg.mxu0
  %6255 = vmatpush.bf16.msra.mxu0 %v5916
  %6256 = vmatpush.bf16.msra.mxu0 %v5915
  %6257 = vmatpush.bf16.msra.mxu0 %v5914
  %6258 = vmatpush.bf16.msra.mxu0 %v5913
  %6259 = vmatpush.bf16.msra.mxu0 %v5912
  %6260 = vmatpush.bf16.msra.mxu0 %v5911
  %6261 = vmatpush.bf16.msra.mxu0 %v5910
  %6262 = vmatpush.bf16.msra.mxu0 %v5909
  %6263 = vmatmul.bf16.gmra.mxu0 %v5014
  %v6264 = vpop.f32.mrf.mxu0
  %v6265 = vadd.f32 %v6251, %v6264
  %v6266 = vpop.f32.mrf.mxu0
  %v6267 = vadd.f32 %v6253, %v6266
  %6268 = vdwg.mxu0
  %v6269 = vadd.f32 %v4315, %v6265
  %v6270 = vadd.f32 %v4316, %v6267
  %s6271 = scalar_lea.vmem %s17, 1
  %v6272 = vld [vmem:[%s6271] sm:$0x1]
  %s6273 = scalar_lea.vmem %s18, 1
  %v6274 = vld [vmem:[%s6273] sm:$0x1]
  %v6275 = vsel %vm214, %v6269, 0.0
  %6276 = vadd.xlane.f32.xlu0 %v6275
  %v6277 = vpop.xlane.xlu0 %6276
  %v6278 = vsel %vm214, %v6270, 0.0
  %6279 = vadd.xlane.f32.xlu0 %v6278
  %v6280 = vpop.xlane.xlu0 %6279
  %v6281 = vmul.f32 %v6277, %v1154
  %v6282 = vmul.f32 %v6280, %v1154
  %v6283 = vsub.f32 %v6269, %v6281
  %v6284 = vsub.f32 %v6270, %v6282
  %v6285 = vmul.f32 %v6283, %v6283
  %v6286 = vmul.f32 %v6284, %v6284
  %v6287 = vsel %vm214, %v6285, 0.0
  %6288 = vadd.xlane.f32.xlu0 %v6287
  %v6289 = vpop.xlane.xlu0 %6288
  %v6290 = vsel %vm214, %v6286, 0.0
  %6291 = vadd.xlane.f32.xlu0 %v6290
  %v6292 = vpop.xlane.xlu0 %6291
  %v6293 = vmul.f32 %v6289, %v1154
  %v6294 = vmul.f32 %v6292, %v1154
  %v6295 = vadd.f32 %v6293, 1e-05
  %v6296 = vadd.f32 %v6294, 1e-05
  %v6297 = vrsqrt.pop %v6295
  %v6298 = vmul.f32 %v6297, %v6295
  %v6299 = vmul.f32 %v6298, %v6297
  %v6300 = vmul.f32 0.5, %v6299
  %v6301 = vsub.f32 1.5, %v6300
  %v6302 = vmul.f32 %v6297, %v6301
  %vm6303 = vweird.f32 %v6295
  %vm6304 = vweird.f32 %v6297
  %vm6305 = vmor %vm6303, %vm6304
  %v6306 = vsel %vm6305, %v6297, %v6302
  %v6307 = vrsqrt.pop %v6296
  %v6308 = vmul.f32 %v6307, %v6296
  %v6309 = vmul.f32 %v6308, %v6307
  %v6310 = vmul.f32 0.5, %v6309
  %v6311 = vsub.f32 1.5, %v6310
  %v6312 = vmul.f32 %v6307, %v6311
  %vm6313 = vweird.f32 %v6296
  %vm6314 = vweird.f32 %v6307
  %vm6315 = vmor %vm6313, %vm6314
  %v6316 = vsel %vm6315, %v6307, %v6312
  %v6317 = vmul.f32 %v6283, %v6306
  %v6318 = vmul.f32 %v6284, %v6316
  %v6320 = vperm.slane %v6272, 0
  %v6322 = vmul.f32 %v6317, %v6320
  %v6323 = vmul.f32 %v6318, %v6320
  %v6325 = vperm.slane %v6274, 0
  %v6327 = vadd.f32 %v6322, %v6325
  %v6328 = vadd.f32 %v6323, %v6325
  %v6329 = vsel %vm214, %v6327, 0.0
  %v6330 = vrot.slane %v6329, 4
  %v6331 = vadd.f32 %v6329, %v6330
  %v6332 = vrot.slane %v6331, 2
  %v6333 = vadd.f32 %v6331, %v6332
  %v6334 = vrot.slane %v6333, 1
  %v6335 = vadd.f32 %v6333, %v6334
  %v6336 = vsel %vm214, %v6328, 0.0
  %v6337 = vrot.slane %v6336, 4
  %v6338 = vadd.f32 %v6336, %v6337
  %v6339 = vrot.slane %v6338, 2
  %v6340 = vadd.f32 %v6338, %v6339
  %v6341 = vrot.slane %v6340, 1
  %v6342 = vadd.f32 %v6340, %v6341
  %v6343 = vrcp.pop 8.0
  %v6344 = vmul.f32 8.0, %v6343
  %v6345 = vsub.f32 1.0, %v6344
  %v6346 = vmul.f32 %v6343, %v6345
  %v6347 = vadd.f32 %v6343, %v6346
  %vm6348 = vweird.f32 %v6343
  %v6349 = vsel %vm6348, %v6343, %v6347
  %v6350 = vmul.f32 %v6335, %v6349
  %v6351 = vmul.f32 %v6342, %v6349
  %v6352 = vld [vmem:[%s19] sm:$0x1]
  %v6354 = vperm.slane %v6352, 0
  %v6356 = vmul.f32 %v6350, %v6354
  %v6357 = vmul.f32 %v6351, %v6354
  %v6360 = vrot.slane %v6357, 7
  %vm6361 = vcmask 1041409
  %v6362 = vsel %vm6361, %v6360, %v6356
  %vm6364 = vcmask 517120
  %v6365 = vsel %vm6364, %v6362, 0.0
  %6366 = vadd.xlane.f32.xlu0 %v6365
  %v6367 = vpop.xlane.xlu0 %6366
  %v6368 = vld [vmem:[#allocation2] sm:$0x1]
  %v6370 = vperm.slane %v6368, 0
  %v6372 = vadd.f32 %v6367, %v6370
  %vm6373 = vcmask 1024
  %6374 = vst.msk [vmem:[%s21] sm:$0x3] %vm6373, %v6372
  // Predicated region
  $region86: #{transformer_forward.1} parent=0 // pred_check
    _
  $region87: #{transformer_forward.1} parent=0 // pred_check_branch
    %6376 = sbr.rel (0) target = $region89
  $region88: #{transformer_forward.1} parent=0 // pred_region
    _
  $region89: #{transformer_forward.1} parent=0 // pred_fallthru
    _
  // Predicated region
  $region90: #{transformer_forward.1} parent=0 // pred_check
    _
  $region91: #{transformer_forward.1} parent=0 // pred_check_branch
    %6378 = sbr.rel (0) target = $region93
  $region92: #{transformer_forward.1} parent=0 // pred_region
    _
  $region93: #{transformer_forward.1} parent=0 // pred_fallthru
    _

</llo_original>
